<compile_context>
chip_gen: v7x
topology: tpu7x:2x2x1
jax: 0.10.0
libtpu: 0.0.40
codegen_flags: <defaults>
</compile_context>

<pallas_src>
import numpy as np
import jax
import jax.numpy as jnp
from jax import lax
from jax.experimental import pallas as pl
from jax.experimental.pallas import tpu as pltpu

# ----- problem constants (from the PyTorch module) -----
N_PERIODS = 12
N_UNITS = 6
X_LENGTH = 12            # input node-feature dim
Y_LENGTH = 12
N_NODES = 30             # IEEE-30: 30 buses per graph
SEQ_LEN = 30             # time dim inside the TCN (== #nodes after reshape)
TCN_CHANNELS = (256, 128, 64)
KERNEL_SIZE = 3
LN_EPS = 1e-5
LEAKY_SLOPE = 0.01       # torch.nn.LeakyReLU() default
N_OUT = Y_LENGTH * N_UNITS                                  # 72
N_CON = 2 * N_OUT + 2 * N_UNITS * (N_PERIODS - 1)           # 276
N_CON_PAD = 384                                             # 3 lane tiles
SHIFT_VALUES = (1, 2, 4, 8)                                 # all causal shifts used
FC_WIDE = SEQ_LEN * N_OUT                                   # 2160


# =====================================================================
# Fused per-graph kernel: GCN x2 -> TCN x3 -> fc -> constraint projection
# =====================================================================
def _net_kernel(a_ref, x_ref,
                g1wg_ref, g1wr_ref, g1b_ref,
                g2wg_ref, g2wr_ref, g2b_ref,
                w0_ref, b0_ref, d0w_ref, d0b_ref,
                w1_ref, b1_ref, d1w_ref, d1b_ref,
                w2_ref, b2_ref, d2w_ref, d2b_ref,
                aux_ref, sh_ref,
                fcw_ref, fold_ref, fcb_ref,
                at_ref, slack_ref, cen_ref,
                o_ref):
    f32 = jnp.float32
    a = a_ref[0]                      # [30, 30] normalized adjacency (one graph)
    x = x_ref[0]                      # [30, 12] node features

    # ---- GCN layer 1 & 2:  h = relu(A@x @ Wg + x @ Wr + b)   (no lane concat) ----
    ax = jnp.dot(a, x, preferred_element_type=f32)
    h = (jnp.dot(ax, g1wg_ref[...], preferred_element_type=f32)
         + jnp.dot(x, g1wr_ref[...], preferred_element_type=f32) + g1b_ref[...])
    h = jnp.maximum(h, 0.0)
    ah = jnp.dot(a, h, preferred_element_type=f32)
    h = (jnp.dot(ah, g2wg_ref[...], preferred_element_type=f32)
         + jnp.dot(h, g2wr_ref[...], preferred_element_type=f32) + g2b_ref[...])
    h = jnp.maximum(h, 0.0)           # [30, 48]  rows = time, lanes = channels

    aux = aux_ref[...]                # [30, 8] = (g0, b0, g1, b1, g2, b2, 0, 0)

    # ---- TemporalBlock: causal dilated conv + LeakyReLU + LayerNorm(time)
    #      + 1x1-conv residual + ReLU.  Taps use [30,30] shift matrices
    #      (S_s @ h)[t] = h[t-s] (zero for t < s), so no concat / slice relayouts.
    def tblock(h_in, w_ref, b_ref, dw_ref, db_ref, gcol, bcol, s_hi, s_lo):
        # tap k=2 -> shift 0, k=1 -> shift d, k=0 -> shift 2d
        conv = jnp.dot(h_in, w_ref[2], preferred_element_type=f32)
        sh1 = jnp.dot(sh_ref[s_lo], h_in, preferred_element_type=f32)
        conv = conv + jnp.dot(sh1, w_ref[1], preferred_element_type=f32)
        sh2 = jnp.dot(sh_ref[s_hi], h_in, preferred_element_type=f32)
        conv = conv + jnp.dot(sh2, w_ref[0], preferred_element_type=f32)
        conv = conv + b_ref[...]
        y = jnp.where(conv > 0, conv, LEAKY_SLOPE * conv)            # LeakyReLU
        # LayerNorm over the 30 time steps (axis 0) per channel column
        mean = jnp.mean(y, axis=0, keepdims=True)
        cent = y - mean
        var = jnp.mean(cent * cent, axis=0, keepdims=True)
        yn = cent * lax.rsqrt(var + LN_EPS)
        yn = yn * gcol + bcol                                        # per-time gamma/beta
        res = jnp.dot(h_in, dw_ref[...], preferred_element_type=f32) + db_ref[...]
        return jnp.maximum(yn + res, 0.0)

    h = tblock(h, w0_ref, b0_ref, d0w_ref, d0b_ref, aux[:, 0:1], aux[:, 1:2], 1, 0)  # d=1
    h = tblock(h, w1_ref, b1_ref, d1w_ref, d1b_ref, aux[:, 2:3], aux[:, 3:4], 2, 1)  # d=2
    h = tblock(h, w2_ref, b2_ref, d2w_ref, d2b_ref, aux[:, 4:5], aux[:, 5:6], 3, 2)  # d=4
    # trailing F.relu is a no-op: each block already ends in ReLU.

    # ---- fc head (torch channel-major flatten folded into Wbig):
    #   y[o] = sum_t sum_c h[t,c] * Wbig[c, t*72+o]
    # One wide matmul, a (time == lane-block) select, a sublane sum, one fold matmul.
    z = jnp.dot(h, fcw_ref[...], preferred_element_type=f32)         # [30, 2160]
    lane = lax.broadcasted_iota(jnp.int32, (1, FC_WIDE), 1)
    lo = lax.broadcasted_iota(jnp.int32, (SEQ_LEN, 1), 0) * N_OUT
    diff = lane - lo
    sel = (diff >= 0) & (diff < N_OUT)                               # [30, 2160]
    zsel = jnp.where(sel, z, 0.0)
    colsum = jnp.sum(zsel, axis=0, keepdims=True)                    # [1, 2160]
    y = jnp.dot(colsum, fold_ref[...], preferred_element_type=f32) + fcb_ref[...]  # [1, 72]

    # ---- ConstraiNetLayer ('center_projection'): out = c + t*(y-c),
    #      t = min(1, min_i (b_i - A_i c) / (A_i (y-c)))  over A_i (y-c) > 0 ----
    # TODO(synk): analytic ray-to-center projection onto {A x <= b} with the box
    # midpoint as interior center; the library's internal center search is not
    # reproduced (the ramp-up rows have A == 0, so the feasible set is the box).
    c = cen_ref[...]                                                 # [1, 72]
    d = y - c
    ad = jnp.dot(d, at_ref[...], preferred_element_type=f32)         # [1, 384]
    eps = 1e-9
    safe = jnp.where(ad > eps, ad, 1.0)
    ratio = jnp.where(ad > eps, slack_ref[...] / safe, 1e30)
    tsc = jnp.minimum(1.0, jnp.min(ratio, axis=-1, keepdims=True))   # [1, 1]
    o_ref[0] = (c + tsc * d).astype(o_ref.dtype)


def _const_spec(arr):
    nd = arr.ndim
    return pl.BlockSpec(tuple(arr.shape), lambda b, _nd=nd: (0,) * _nd)


def net_forward(params, x, a):
    """x: [B, 30, 12] node features; a: [B, 30, 30] per-graph normalized adjacency."""
    B = x.shape[0]
    inputs = [a, x,
              params["gcn1_wg"], params["gcn1_wr"], params["gcn1_b"],
              params["gcn2_wg"], params["gcn2_wr"], params["gcn2_b"]]
    for i in range(len(TCN_CHANNELS)):
        inputs += [params[f"tcn{i}_w"], params[f"tcn{i}_b"],
                   params[f"tcn{i}_dw"], params[f"tcn{i}_db"]]
    inputs += [params["ln_aux"], params["shift_mats"],
               params["fc_w"], params["fc_fold"], params["fc_b"],
               params["A_T"], params["slack"], params["center"]]

    in_specs = ([pl.BlockSpec((1, SEQ_LEN, SEQ_LEN), lambda b: (b, 0, 0)),
                 pl.BlockSpec((1, SEQ_LEN, X_LENGTH), lambda b: (b, 0, 0))]
                + [_const_spec(t) for t in inputs[2:]])

    out = pl.pallas_call(
        _net_kernel,
        out_shape=jax.ShapeDtypeStruct((B, 1, N_OUT), jnp.float32),
        grid=(B,),
        in_specs=in_specs,
        out_specs=pl.BlockSpec((1, 1, N_OUT), lambda b: (b, 0, 0)),
        compiler_params=pltpu.CompilerParams(
            dimension_semantics=("parallel",)),
    )(*inputs)
    return out.reshape(B, N_OUT)


# =====================================================================
# Parameters, constraints, GCN adjacency (host-side, built once)
# =====================================================================
def gcn_norm_adj(edge_index, num_nodes):
    src, dst = edge_index[0], edge_index[1]
    a = jnp.zeros((num_nodes, num_nodes), jnp.float32).at[dst, src].set(1.0)
    a = a + jnp.eye(num_nodes, dtype=jnp.float32)          # self loops
    deg = jnp.sum(a, axis=1)
    dinv = 1.0 / jnp.sqrt(deg)
    return a * dinv[:, None] * dinv[None, :]


def build_constraints():
    p_max = np.array([80, 80, 50, 55, 30, 40], np.float32)
    p_max_12 = np.tile(p_max, N_PERIODS)                    # [72]
    p_min_12 = np.zeros_like(p_max_12)
    rampup = np.zeros((N_UNITS * (N_PERIODS - 1), N_UNITS * N_PERIODS), np.float32)
    bru = np.ones(N_UNITS * (N_PERIODS - 1), np.float32) * 8.25
    A = np.concatenate([-np.eye(N_OUT, dtype=np.float32),
                        np.eye(N_OUT, dtype=np.float32),
                        rampup, -rampup], axis=0)           # [276, 72]
    b = np.concatenate([-p_min_12, p_max_12, bru, bru]).astype(np.float32)
    # pad with inert constraints (A row = 0, b = 1) to a lane-aligned count
    A_pad = np.zeros((N_CON_PAD, N_OUT), np.float32)
    A_pad[:N_CON] = A
    b_pad = np.ones((N_CON_PAD,), np.float32)
    b_pad[:N_CON] = b
    center = (p_min_12 + p_max_12) / 2.0                    # interior point
    slack = b_pad - A_pad @ center                          # precomputed b - A c
    return (jnp.asarray(A_pad.T),                           # [72, 384]
            jnp.asarray(slack[None, :]),                    # [1, 384]
            jnp.asarray(center[None, :]))                   # [1, 72]


def _xavier(key, shape):
    fan_in, fan_out = shape[-2], shape[-1]
    scale = np.sqrt(2.0 / (fan_in + fan_out))
    return scale * jax.random.normal(key, shape, jnp.float32)


def init_params(key):
    keys = jax.random.split(key, 16)
    ki = iter(keys)
    p = {}
    # GCN + residual Linear, split:  h = relu(A@x @ Wg + x @ Wr + b)
    # (b = gcn bias + residual bias; GCNConv applies its weight before propagation)
    p["gcn1_wg"] = _xavier(next(ki), (X_LENGTH, 2 * X_LENGTH))
    p["gcn1_wr"] = _xavier(next(ki), (X_LENGTH, 2 * X_LENGTH))
    p["gcn1_b"] = jnp.zeros((1, 2 * X_LENGTH), jnp.float32)
    p["gcn2_wg"] = _xavier(next(ki), (2 * X_LENGTH, 4 * X_LENGTH))
    p["gcn2_wr"] = _xavier(next(ki), (2 * X_LENGTH, 4 * X_LENGTH))
    p["gcn2_b"] = jnp.zeros((1, 4 * X_LENGTH), jnp.float32)
    # TCN blocks (weight_norm folded: effective weight == raw weight at init).
    # Conv weight per tap: tcn{i}_w[k, ci, co] == w_torch[co, ci, k].
    cin = 4 * X_LENGTH
    for i, cout in enumerate(TCN_CHANNELS):
        p[f"tcn{i}_w"] = _xavier(next(ki), (KERNEL_SIZE, cin, cout))
        p[f"tcn{i}_b"] = jnp.zeros((1, cout), jnp.float32)
        p[f"tcn{i}_dw"] = _xavier(next(ki), (cin, cout))      # 1x1 downsample
        p[f"tcn{i}_db"] = jnp.zeros((1, cout), jnp.float32)
        cin = cout
    # LayerNorm(30) gamma/beta for the 3 blocks, packed into one [30, 8] array
    aux = np.zeros((SEQ_LEN, 8), np.float32)
    aux[:, 0] = 1.0
    aux[:, 2] = 1.0
    aux[:, 4] = 1.0
    p["ln_aux"] = jnp.asarray(aux)
    # causal shift matrices: (S_s @ h)[t] = h[t-s] for t >= s else 0
    p["shift_mats"] = jnp.asarray(
        np.stack([np.eye(SEQ_LEN, k=-s, dtype=np.float32) for s in SHIFT_VALUES]))
    # fc head: torch flattens [B, 64, 30] channel-major (in-index = c*30 + t).
    # Wbig[c, t*72 + o] = Wfc[c*30 + t, o]  (Wfc already stored input-major).
    wfc = _xavier(next(ki), (SEQ_LEN * TCN_CHANNELS[-1], N_OUT))      # [1920, 72]
    p["fc_w"] = jnp.reshape(wfc, (TCN_CHANNELS[-1], FC_WIDE))         # [64, 2160]
    p["fc_b"] = jnp.zeros((1, N_OUT), jnp.float32)
    fold = np.zeros((FC_WIDE, N_OUT), np.float32)                     # [2160, 72]
    fold[np.arange(FC_WIDE), np.arange(FC_WIDE) % N_OUT] = 1.0
    p["fc_fold"] = jnp.asarray(fold)
    # constraints
    p["A_T"], p["slack"], p["center"] = build_constraints()
    return p


if __name__ == "__main__":
    key = jax.random.PRNGKey(0)
    k_x, k_p = jax.random.split(key)

    B = 2                                   # batch of graphs
    N = B * N_NODES                         # 60 nodes total
    x = jax.random.normal(k_x, (N, X_LENGTH), jnp.float32)

    # deterministic edge_index: ring + chord per 30-node graph, both directions
    edges = []
    for g in range(B):
        off = g * N_NODES
        for i in range(N_NODES):
            j = (i + 1) % N_NODES
            edges.append((off + i, off + j)); edges.append((off + j, off + i))
            j2 = (i + 7) % N_NODES
            edges.append((off + i, off + j2)); edges.append((off + j2, off + i))
    edge_index = jnp.asarray(np.array(edges, np.int32).T)   # [2, 240]

    a_full = gcn_norm_adj(edge_index, N)                    # [60, 60], block-diagonal
    a_blocks = jnp.stack(
        [a_full[g * N_NODES:(g + 1) * N_NODES, g * N_NODES:(g + 1) * N_NODES]
         for g in range(B)])                                # [B, 30, 30]
    x_blocks = x.reshape(B, N_NODES, X_LENGTH)              # [B, 30, 12]

    params = init_params(k_p)

    fwd = jax.jit(net_forward)
    out = jax.block_until_ready(fwd(params, x_blocks, a_blocks))
    assert out.shape == (B, Y_LENGTH * N_UNITS)
    assert bool(jnp.all(jnp.isfinite(out)))
    print("KERNEL_OK")
</pallas_src>

<mosaic_0001>
module attributes {stable_mosaic.version = 11 : i64} {
  func.func @_net_kernel(%arg0: i32, %arg1: memref<1x30x30xf32, #tpu.memory_space<vmem>>, %arg2: memref<1x30x12xf32, #tpu.memory_space<vmem>>, %arg3: memref<12x24xf32, #tpu.memory_space<vmem>>, %arg4: memref<12x24xf32, #tpu.memory_space<vmem>>, %arg5: memref<1x24xf32, #tpu.memory_space<vmem>>, %arg6: memref<24x48xf32, #tpu.memory_space<vmem>>, %arg7: memref<24x48xf32, #tpu.memory_space<vmem>>, %arg8: memref<1x48xf32, #tpu.memory_space<vmem>>, %arg9: memref<3x48x256xf32, #tpu.memory_space<vmem>>, %arg10: memref<1x256xf32, #tpu.memory_space<vmem>>, %arg11: memref<48x256xf32, #tpu.memory_space<vmem>>, %arg12: memref<1x256xf32, #tpu.memory_space<vmem>>, %arg13: memref<3x256x128xf32, #tpu.memory_space<vmem>>, %arg14: memref<1x128xf32, #tpu.memory_space<vmem>>, %arg15: memref<256x128xf32, #tpu.memory_space<vmem>>, %arg16: memref<1x128xf32, #tpu.memory_space<vmem>>, %arg17: memref<3x128x64xf32, #tpu.memory_space<vmem>>, %arg18: memref<1x64xf32, #tpu.memory_space<vmem>>, %arg19: memref<128x64xf32, #tpu.memory_space<vmem>>, %arg20: memref<1x64xf32, #tpu.memory_space<vmem>>, %arg21: memref<30x8xf32, #tpu.memory_space<vmem>>, %arg22: memref<4x30x30xf32, #tpu.memory_space<vmem>>, %arg23: memref<64x2160xf32, #tpu.memory_space<vmem>>, %arg24: memref<2160x72xf32, #tpu.memory_space<vmem>>, %arg25: memref<1x72xf32, #tpu.memory_space<vmem>>, %arg26: memref<72x384xf32, #tpu.memory_space<vmem>>, %arg27: memref<1x384xf32, #tpu.memory_space<vmem>>, %arg28: memref<1x72xf32, #tpu.memory_space<vmem>>, %arg29: memref<1x1x72xf32, #tpu.memory_space<vmem>>) attributes {dimension_semantics = [#tpu.dimension_semantics<parallel>], iteration_bounds = array<i64: 2>, scalar_prefetch = 0 : i64, scratch_operands = 0 : i64, tpu.core_type = #tpu.core_type<tc>, window_params = [{transform_indices = @transform_0, window_bounds = array<i64: 1, 30, 30>}, {transform_indices = @transform_1, window_bounds = array<i64: 1, 30, 12>}, {pipeline_mode = #tpu.pipeline_mode<synchronous>, transform_indices = @transform_2, window_bounds = array<i64: 12, 24>}, {pipeline_mode = #tpu.pipeline_mode<synchronous>, transform_indices = @transform_3, window_bounds = array<i64: 12, 24>}, {pipeline_mode = #tpu.pipeline_mode<synchronous>, transform_indices = @transform_4, window_bounds = array<i64: 1, 24>}, {pipeline_mode = #tpu.pipeline_mode<synchronous>, transform_indices = @transform_5, window_bounds = array<i64: 24, 48>}, {pipeline_mode = #tpu.pipeline_mode<synchronous>, transform_indices = @transform_6, window_bounds = array<i64: 24, 48>}, {pipeline_mode = #tpu.pipeline_mode<synchronous>, transform_indices = @transform_7, window_bounds = array<i64: 1, 48>}, {pipeline_mode = #tpu.pipeline_mode<synchronous>, transform_indices = @transform_8, window_bounds = array<i64: 3, 48, 256>}, {pipeline_mode = #tpu.pipeline_mode<synchronous>, transform_indices = @transform_9, window_bounds = array<i64: 1, 256>}, {pipeline_mode = #tpu.pipeline_mode<synchronous>, transform_indices = @transform_10, window_bounds = array<i64: 48, 256>}, {pipeline_mode = #tpu.pipeline_mode<synchronous>, transform_indices = @transform_11, window_bounds = array<i64: 1, 256>}, {pipeline_mode = #tpu.pipeline_mode<synchronous>, transform_indices = @transform_12, window_bounds = array<i64: 3, 256, 128>}, {pipeline_mode = #tpu.pipeline_mode<synchronous>, transform_indices = @transform_13, window_bounds = array<i64: 1, 128>}, {pipeline_mode = #tpu.pipeline_mode<synchronous>, transform_indices = @transform_14, window_bounds = array<i64: 256, 128>}, {pipeline_mode = #tpu.pipeline_mode<synchronous>, transform_indices = @transform_15, window_bounds = array<i64: 1, 128>}, {pipeline_mode = #tpu.pipeline_mode<synchronous>, transform_indices = @transform_16, window_bounds = array<i64: 3, 128, 64>}, {pipeline_mode = #tpu.pipeline_mode<synchronous>, transform_indices = @transform_17, window_bounds = array<i64: 1, 64>}, {pipeline_mode = #tpu.pipeline_mode<synchronous>, transform_indices = @transform_18, window_bounds = array<i64: 128, 64>}, {pipeline_mode = #tpu.pipeline_mode<synchronous>, transform_indices = @transform_19, window_bounds = array<i64: 1, 64>}, {pipeline_mode = #tpu.pipeline_mode<synchronous>, transform_indices = @transform_20, window_bounds = array<i64: 30, 8>}, {pipeline_mode = #tpu.pipeline_mode<synchronous>, transform_indices = @transform_21, window_bounds = array<i64: 4, 30, 30>}, {pipeline_mode = #tpu.pipeline_mode<synchronous>, transform_indices = @transform_22, window_bounds = array<i64: 64, 2160>}, {pipeline_mode = #tpu.pipeline_mode<synchronous>, transform_indices = @transform_23, window_bounds = array<i64: 2160, 72>}, {pipeline_mode = #tpu.pipeline_mode<synchronous>, transform_indices = @transform_24, window_bounds = array<i64: 1, 72>}, {pipeline_mode = #tpu.pipeline_mode<synchronous>, transform_indices = @transform_25, window_bounds = array<i64: 72, 384>}, {pipeline_mode = #tpu.pipeline_mode<synchronous>, transform_indices = @transform_26, window_bounds = array<i64: 1, 384>}, {pipeline_mode = #tpu.pipeline_mode<synchronous>, transform_indices = @transform_27, window_bounds = array<i64: 1, 72>}, {transform_indices = @transform_28, window_bounds = array<i64: 1, 1, 72>}]} {
    %c0 = arith.constant 0 : index
    %c0_0 = arith.constant 0 : index
    %c0_1 = arith.constant 0 : index
    %0 = vector.load %arg1[%c0, %c0_0, %c0_1] : memref<1x30x30xf32, #tpu.memory_space<vmem>>, vector<1x30x30xf32>
    %1 = vector.shape_cast %0 : vector<1x30x30xf32> to vector<30x30xf32>
    %c0_2 = arith.constant 0 : index
    %c0_3 = arith.constant 0 : index
    %c0_4 = arith.constant 0 : index
    %2 = vector.load %arg2[%c0_2, %c0_3, %c0_4] : memref<1x30x12xf32, #tpu.memory_space<vmem>>, vector<1x30x12xf32>
    %3 = vector.shape_cast %2 : vector<1x30x12xf32> to vector<30x12xf32>
    %cst = arith.constant dense<0.000000e+00> : vector<30x12xf32>
    %4 = tpu.matmul %1, %3, %cst {dimension_numbers = #tpu.dot_dimension_numbers<[1], [0], [0], [1], [0, 0, 1, 1], [], []>} : vector<30x30xf32>, vector<30x12xf32>, vector<30x12xf32> -> vector<30x12xf32>
    %c0_5 = arith.constant 0 : index
    %c0_6 = arith.constant 0 : index
    %5 = vector.load %arg3[%c0_5, %c0_6] : memref<12x24xf32, #tpu.memory_space<vmem>>, vector<12x24xf32>
    %cst_7 = arith.constant dense<0.000000e+00> : vector<30x24xf32>
    %6 = tpu.matmul %4, %5, %cst_7 {dimension_numbers = #tpu.dot_dimension_numbers<[1], [0], [0], [1], [0, 0, 1, 1], [], []>} : vector<30x12xf32>, vector<12x24xf32>, vector<30x24xf32> -> vector<30x24xf32>
    %c0_8 = arith.constant 0 : index
    %c0_9 = arith.constant 0 : index
    %7 = vector.load %arg4[%c0_8, %c0_9] : memref<12x24xf32, #tpu.memory_space<vmem>>, vector<12x24xf32>
    %cst_10 = arith.constant dense<0.000000e+00> : vector<30x24xf32>
    %8 = tpu.matmul %3, %7, %cst_10 {dimension_numbers = #tpu.dot_dimension_numbers<[1], [0], [0], [1], [0, 0, 1, 1], [], []>} : vector<30x12xf32>, vector<12x24xf32>, vector<30x24xf32> -> vector<30x24xf32>
    %9 = arith.addf %6, %8 : vector<30x24xf32>
    %c0_11 = arith.constant 0 : index
    %c0_12 = arith.constant 0 : index
    %10 = vector.load %arg5[%c0_11, %c0_12] : memref<1x24xf32, #tpu.memory_space<vmem>>, vector<1x24xf32>
    %11 = vector.broadcast %10 : vector<1x24xf32> to vector<30x24xf32>
    %12 = arith.addf %9, %11 : vector<30x24xf32>
    %cst_13 = arith.constant 0.000000e+00 : f32
    %13 = vector.broadcast %cst_13 : f32 to vector<30x24xf32>
    %14 = arith.maximumf %12, %13 : vector<30x24xf32>
    %cst_14 = arith.constant dense<0.000000e+00> : vector<30x24xf32>
    %15 = tpu.matmul %1, %14, %cst_14 {dimension_numbers = #tpu.dot_dimension_numbers<[1], [0], [0], [1], [0, 0, 1, 1], [], []>} : vector<30x30xf32>, vector<30x24xf32>, vector<30x24xf32> -> vector<30x24xf32>
    %c0_15 = arith.constant 0 : index
    %c0_16 = arith.constant 0 : index
    %16 = vector.load %arg6[%c0_15, %c0_16] : memref<24x48xf32, #tpu.memory_space<vmem>>, vector<24x48xf32>
    %cst_17 = arith.constant dense<0.000000e+00> : vector<30x48xf32>
    %17 = tpu.matmul %15, %16, %cst_17 {dimension_numbers = #tpu.dot_dimension_numbers<[1], [0], [0], [1], [0, 0, 1, 1], [], []>} : vector<30x24xf32>, vector<24x48xf32>, vector<30x48xf32> -> vector<30x48xf32>
    %c0_18 = arith.constant 0 : index
    %c0_19 = arith.constant 0 : index
    %18 = vector.load %arg7[%c0_18, %c0_19] : memref<24x48xf32, #tpu.memory_space<vmem>>, vector<24x48xf32>
    %cst_20 = arith.constant dense<0.000000e+00> : vector<30x48xf32>
    %19 = tpu.matmul %14, %18, %cst_20 {dimension_numbers = #tpu.dot_dimension_numbers<[1], [0], [0], [1], [0, 0, 1, 1], [], []>} : vector<30x24xf32>, vector<24x48xf32>, vector<30x48xf32> -> vector<30x48xf32>
    %20 = arith.addf %17, %19 : vector<30x48xf32>
    %c0_21 = arith.constant 0 : index
    %c0_22 = arith.constant 0 : index
    %21 = vector.load %arg8[%c0_21, %c0_22] : memref<1x48xf32, #tpu.memory_space<vmem>>, vector<1x48xf32>
    %22 = vector.broadcast %21 : vector<1x48xf32> to vector<30x48xf32>
    %23 = arith.addf %20, %22 : vector<30x48xf32>
    %cst_23 = arith.constant 0.000000e+00 : f32
    %24 = vector.broadcast %cst_23 : f32 to vector<30x48xf32>
    %25 = arith.maximumf %23, %24 : vector<30x48xf32>
    %c0_24 = arith.constant 0 : index
    %c0_25 = arith.constant 0 : index
    %26 = vector.load %arg21[%c0_24, %c0_25] : memref<30x8xf32, #tpu.memory_space<vmem>>, vector<30x8xf32>
    %27 = vector.extract_strided_slice %26 {offsets = [0, 0], sizes = [30, 1], strides = [1, 1]} : vector<30x8xf32> to vector<30x1xf32>
    %28 = vector.extract_strided_slice %26 {offsets = [0, 1], sizes = [30, 1], strides = [1, 1]} : vector<30x8xf32> to vector<30x1xf32>
    %c2 = arith.constant 2 : index
    %c0_26 = arith.constant 0 : index
    %c0_27 = arith.constant 0 : index
    %29 = vector.load %arg9[%c2, %c0_26, %c0_27] : memref<3x48x256xf32, #tpu.memory_space<vmem>>, vector<1x48x256xf32>
    %30 = vector.shape_cast %29 : vector<1x48x256xf32> to vector<48x256xf32>
    %cst_28 = arith.constant dense<0.000000e+00> : vector<30x256xf32>
    %31 = tpu.matmul %25, %30, %cst_28 {dimension_numbers = #tpu.dot_dimension_numbers<[1], [0], [0], [1], [0, 0, 1, 1], [], []>} : vector<30x48xf32>, vector<48x256xf32>, vector<30x256xf32> -> vector<30x256xf32>
    %c0_29 = arith.constant 0 : index
    %c0_30 = arith.constant 0 : index
    %c0_31 = arith.constant 0 : index
    %32 = vector.load %arg22[%c0_29, %c0_30, %c0_31] : memref<4x30x30xf32, #tpu.memory_space<vmem>>, vector<1x30x30xf32>
    %33 = vector.shape_cast %32 : vector<1x30x30xf32> to vector<30x30xf32>
    %cst_32 = arith.constant dense<0.000000e+00> : vector<30x48xf32>
    %34 = tpu.matmul %33, %25, %cst_32 {dimension_numbers = #tpu.dot_dimension_numbers<[1], [0], [0], [1], [0, 0, 1, 1], [], []>} : vector<30x30xf32>, vector<30x48xf32>, vector<30x48xf32> -> vector<30x48xf32>
    %c1 = arith.constant 1 : index
    %c0_33 = arith.constant 0 : index
    %c0_34 = arith.constant 0 : index
    %35 = vector.load %arg9[%c1, %c0_33, %c0_34] : memref<3x48x256xf32, #tpu.memory_space<vmem>>, vector<1x48x256xf32>
    %36 = vector.shape_cast %35 : vector<1x48x256xf32> to vector<48x256xf32>
    %cst_35 = arith.constant dense<0.000000e+00> : vector<30x256xf32>
    %37 = tpu.matmul %34, %36, %cst_35 {dimension_numbers = #tpu.dot_dimension_numbers<[1], [0], [0], [1], [0, 0, 1, 1], [], []>} : vector<30x48xf32>, vector<48x256xf32>, vector<30x256xf32> -> vector<30x256xf32>
    %38 = arith.addf %31, %37 : vector<30x256xf32>
    %c1_36 = arith.constant 1 : index
    %c0_37 = arith.constant 0 : index
    %c0_38 = arith.constant 0 : index
    %39 = vector.load %arg22[%c1_36, %c0_37, %c0_38] : memref<4x30x30xf32, #tpu.memory_space<vmem>>, vector<1x30x30xf32>
    %40 = vector.shape_cast %39 : vector<1x30x30xf32> to vector<30x30xf32>
    %cst_39 = arith.constant dense<0.000000e+00> : vector<30x48xf32>
    %41 = tpu.matmul %40, %25, %cst_39 {dimension_numbers = #tpu.dot_dimension_numbers<[1], [0], [0], [1], [0, 0, 1, 1], [], []>} : vector<30x30xf32>, vector<30x48xf32>, vector<30x48xf32> -> vector<30x48xf32>
    %c0_40 = arith.constant 0 : index
    %c0_41 = arith.constant 0 : index
    %c0_42 = arith.constant 0 : index
    %42 = vector.load %arg9[%c0_40, %c0_41, %c0_42] : memref<3x48x256xf32, #tpu.memory_space<vmem>>, vector<1x48x256xf32>
    %43 = vector.shape_cast %42 : vector<1x48x256xf32> to vector<48x256xf32>
    %cst_43 = arith.constant dense<0.000000e+00> : vector<30x256xf32>
    %44 = tpu.matmul %41, %43, %cst_43 {dimension_numbers = #tpu.dot_dimension_numbers<[1], [0], [0], [1], [0, 0, 1, 1], [], []>} : vector<30x48xf32>, vector<48x256xf32>, vector<30x256xf32> -> vector<30x256xf32>
    %45 = arith.addf %38, %44 : vector<30x256xf32>
    %c0_44 = arith.constant 0 : index
    %c0_45 = arith.constant 0 : index
    %46 = vector.load %arg10[%c0_44, %c0_45] : memref<1x256xf32, #tpu.memory_space<vmem>>, vector<1x256xf32>
    %47 = vector.broadcast %46 : vector<1x256xf32> to vector<30x256xf32>
    %48 = arith.addf %45, %47 : vector<30x256xf32>
    %cst_46 = arith.constant 0.000000e+00 : f32
    %49 = vector.broadcast %cst_46 : f32 to vector<30x256xf32>
    %50 = arith.cmpf ogt, %48, %49 : vector<30x256xf32>
    %cst_47 = arith.constant 0.00999999977 : f32
    %51 = vector.broadcast %cst_47 : f32 to vector<30x256xf32>
    %52 = arith.mulf %51, %48 : vector<30x256xf32>
    %53 = arith.select %50, %48, %52 : vector<30x256xi1>, vector<30x256xf32>
    %cst_48 = arith.constant dense<0.000000e+00> : vector<256xf32>
    %54 = vector.multi_reduction <add>, %53, %cst_48 [0] : vector<30x256xf32> to vector<256xf32>
    %55 = vector.shape_cast %54 : vector<256xf32> to vector<1x256xf32>
    %cst_49 = arith.constant 3.000000e+01 : f32
    %56 = vector.broadcast %cst_49 : f32 to vector<1x256xf32>
    %57 = arith.divf %55, %56 : vector<1x256xf32>
    %58 = vector.broadcast %57 : vector<1x256xf32> to vector<30x256xf32>
    %59 = arith.subf %53, %58 : vector<30x256xf32>
    %60 = arith.mulf %59, %59 : vector<30x256xf32>
    %cst_50 = arith.constant dense<0.000000e+00> : vector<256xf32>
    %61 = vector.multi_reduction <add>, %60, %cst_50 [0] : vector<30x256xf32> to vector<256xf32>
    %62 = vector.shape_cast %61 : vector<256xf32> to vector<1x256xf32>
    %cst_51 = arith.constant 3.000000e+01 : f32
    %63 = vector.broadcast %cst_51 : f32 to vector<1x256xf32>
    %64 = arith.divf %62, %63 : vector<1x256xf32>
    %cst_52 = arith.constant 9.99999974E-6 : f32
    %65 = vector.broadcast %cst_52 : f32 to vector<1x256xf32>
    %66 = arith.addf %64, %65 : vector<1x256xf32>
    %67 = math.rsqrt %66 : vector<1x256xf32>
    %68 = vector.broadcast %67 : vector<1x256xf32> to vector<30x256xf32>
    %69 = arith.mulf %59, %68 : vector<30x256xf32>
    %70 = vector.broadcast %27 : vector<30x1xf32> to vector<30x256xf32>
    %71 = arith.mulf %69, %70 : vector<30x256xf32>
    %72 = vector.broadcast %28 : vector<30x1xf32> to vector<30x256xf32>
    %73 = arith.addf %71, %72 : vector<30x256xf32>
    %c0_53 = arith.constant 0 : index
    %c0_54 = arith.constant 0 : index
    %74 = vector.load %arg11[%c0_53, %c0_54] : memref<48x256xf32, #tpu.memory_space<vmem>>, vector<48x256xf32>
    %cst_55 = arith.constant dense<0.000000e+00> : vector<30x256xf32>
    %75 = tpu.matmul %25, %74, %cst_55 {dimension_numbers = #tpu.dot_dimension_numbers<[1], [0], [0], [1], [0, 0, 1, 1], [], []>} : vector<30x48xf32>, vector<48x256xf32>, vector<30x256xf32> -> vector<30x256xf32>
    %c0_56 = arith.constant 0 : index
    %c0_57 = arith.constant 0 : index
    %76 = vector.load %arg12[%c0_56, %c0_57] : memref<1x256xf32, #tpu.memory_space<vmem>>, vector<1x256xf32>
    %77 = vector.broadcast %76 : vector<1x256xf32> to vector<30x256xf32>
    %78 = arith.addf %75, %77 : vector<30x256xf32>
    %79 = arith.addf %73, %78 : vector<30x256xf32>
    %cst_58 = arith.constant 0.000000e+00 : f32
    %80 = vector.broadcast %cst_58 : f32 to vector<30x256xf32>
    %81 = arith.maximumf %79, %80 : vector<30x256xf32>
    %82 = vector.extract_strided_slice %26 {offsets = [0, 2], sizes = [30, 1], strides = [1, 1]} : vector<30x8xf32> to vector<30x1xf32>
    %83 = vector.extract_strided_slice %26 {offsets = [0, 3], sizes = [30, 1], strides = [1, 1]} : vector<30x8xf32> to vector<30x1xf32>
    %c2_59 = arith.constant 2 : index
    %c0_60 = arith.constant 0 : index
    %c0_61 = arith.constant 0 : index
    %84 = vector.load %arg13[%c2_59, %c0_60, %c0_61] : memref<3x256x128xf32, #tpu.memory_space<vmem>>, vector<1x256x128xf32>
    %85 = vector.shape_cast %84 : vector<1x256x128xf32> to vector<256x128xf32>
    %cst_62 = arith.constant dense<0.000000e+00> : vector<30x128xf32>
    %86 = tpu.matmul %81, %85, %cst_62 {dimension_numbers = #tpu.dot_dimension_numbers<[1], [0], [0], [1], [0, 0, 1, 1], [], []>} : vector<30x256xf32>, vector<256x128xf32>, vector<30x128xf32> -> vector<30x128xf32>
    %c1_63 = arith.constant 1 : index
    %c0_64 = arith.constant 0 : index
    %c0_65 = arith.constant 0 : index
    %87 = vector.load %arg22[%c1_63, %c0_64, %c0_65] : memref<4x30x30xf32, #tpu.memory_space<vmem>>, vector<1x30x30xf32>
    %88 = vector.shape_cast %87 : vector<1x30x30xf32> to vector<30x30xf32>
    %cst_66 = arith.constant dense<0.000000e+00> : vector<30x256xf32>
    %89 = tpu.matmul %88, %81, %cst_66 {dimension_numbers = #tpu.dot_dimension_numbers<[1], [0], [0], [1], [0, 0, 1, 1], [], []>} : vector<30x30xf32>, vector<30x256xf32>, vector<30x256xf32> -> vector<30x256xf32>
    %c1_67 = arith.constant 1 : index
    %c0_68 = arith.constant 0 : index
    %c0_69 = arith.constant 0 : index
    %90 = vector.load %arg13[%c1_67, %c0_68, %c0_69] : memref<3x256x128xf32, #tpu.memory_space<vmem>>, vector<1x256x128xf32>
    %91 = vector.shape_cast %90 : vector<1x256x128xf32> to vector<256x128xf32>
    %cst_70 = arith.constant dense<0.000000e+00> : vector<30x128xf32>
    %92 = tpu.matmul %89, %91, %cst_70 {dimension_numbers = #tpu.dot_dimension_numbers<[1], [0], [0], [1], [0, 0, 1, 1], [], []>} : vector<30x256xf32>, vector<256x128xf32>, vector<30x128xf32> -> vector<30x128xf32>
    %93 = arith.addf %86, %92 : vector<30x128xf32>
    %c2_71 = arith.constant 2 : index
    %c0_72 = arith.constant 0 : index
    %c0_73 = arith.constant 0 : index
    %94 = vector.load %arg22[%c2_71, %c0_72, %c0_73] : memref<4x30x30xf32, #tpu.memory_space<vmem>>, vector<1x30x30xf32>
    %95 = vector.shape_cast %94 : vector<1x30x30xf32> to vector<30x30xf32>
    %cst_74 = arith.constant dense<0.000000e+00> : vector<30x256xf32>
    %96 = tpu.matmul %95, %81, %cst_74 {dimension_numbers = #tpu.dot_dimension_numbers<[1], [0], [0], [1], [0, 0, 1, 1], [], []>} : vector<30x30xf32>, vector<30x256xf32>, vector<30x256xf32> -> vector<30x256xf32>
    %c0_75 = arith.constant 0 : index
    %c0_76 = arith.constant 0 : index
    %c0_77 = arith.constant 0 : index
    %97 = vector.load %arg13[%c0_75, %c0_76, %c0_77] : memref<3x256x128xf32, #tpu.memory_space<vmem>>, vector<1x256x128xf32>
    %98 = vector.shape_cast %97 : vector<1x256x128xf32> to vector<256x128xf32>
    %cst_78 = arith.constant dense<0.000000e+00> : vector<30x128xf32>
    %99 = tpu.matmul %96, %98, %cst_78 {dimension_numbers = #tpu.dot_dimension_numbers<[1], [0], [0], [1], [0, 0, 1, 1], [], []>} : vector<30x256xf32>, vector<256x128xf32>, vector<30x128xf32> -> vector<30x128xf32>
    %100 = arith.addf %93, %99 : vector<30x128xf32>
    %c0_79 = arith.constant 0 : index
    %c0_80 = arith.constant 0 : index
    %101 = vector.load %arg14[%c0_79, %c0_80] : memref<1x128xf32, #tpu.memory_space<vmem>>, vector<1x128xf32>
    %102 = vector.broadcast %101 : vector<1x128xf32> to vector<30x128xf32>
    %103 = arith.addf %100, %102 : vector<30x128xf32>
    %cst_81 = arith.constant 0.000000e+00 : f32
    %104 = vector.broadcast %cst_81 : f32 to vector<30x128xf32>
    %105 = arith.cmpf ogt, %103, %104 : vector<30x128xf32>
    %cst_82 = arith.constant 0.00999999977 : f32
    %106 = vector.broadcast %cst_82 : f32 to vector<30x128xf32>
    %107 = arith.mulf %106, %103 : vector<30x128xf32>
    %108 = arith.select %105, %103, %107 : vector<30x128xi1>, vector<30x128xf32>
    %cst_83 = arith.constant dense<0.000000e+00> : vector<128xf32>
    %109 = vector.multi_reduction <add>, %108, %cst_83 [0] : vector<30x128xf32> to vector<128xf32>
    %110 = vector.shape_cast %109 : vector<128xf32> to vector<1x128xf32>
    %cst_84 = arith.constant 3.000000e+01 : f32
    %111 = vector.broadcast %cst_84 : f32 to vector<1x128xf32>
    %112 = arith.divf %110, %111 : vector<1x128xf32>
    %113 = vector.broadcast %112 : vector<1x128xf32> to vector<30x128xf32>
    %114 = arith.subf %108, %113 : vector<30x128xf32>
    %115 = arith.mulf %114, %114 : vector<30x128xf32>
    %cst_85 = arith.constant dense<0.000000e+00> : vector<128xf32>
    %116 = vector.multi_reduction <add>, %115, %cst_85 [0] : vector<30x128xf32> to vector<128xf32>
    %117 = vector.shape_cast %116 : vector<128xf32> to vector<1x128xf32>
    %cst_86 = arith.constant 3.000000e+01 : f32
    %118 = vector.broadcast %cst_86 : f32 to vector<1x128xf32>
    %119 = arith.divf %117, %118 : vector<1x128xf32>
    %cst_87 = arith.constant 9.99999974E-6 : f32
    %120 = vector.broadcast %cst_87 : f32 to vector<1x128xf32>
    %121 = arith.addf %119, %120 : vector<1x128xf32>
    %122 = math.rsqrt %121 : vector<1x128xf32>
    %123 = vector.broadcast %122 : vector<1x128xf32> to vector<30x128xf32>
    %124 = arith.mulf %114, %123 : vector<30x128xf32>
    %125 = vector.broadcast %82 : vector<30x1xf32> to vector<30x128xf32>
    %126 = arith.mulf %124, %125 : vector<30x128xf32>
    %127 = vector.broadcast %83 : vector<30x1xf32> to vector<30x128xf32>
    %128 = arith.addf %126, %127 : vector<30x128xf32>
    %c0_88 = arith.constant 0 : index
    %c0_89 = arith.constant 0 : index
    %129 = vector.load %arg15[%c0_88, %c0_89] : memref<256x128xf32, #tpu.memory_space<vmem>>, vector<256x128xf32>
    %cst_90 = arith.constant dense<0.000000e+00> : vector<30x128xf32>
    %130 = tpu.matmul %81, %129, %cst_90 {dimension_numbers = #tpu.dot_dimension_numbers<[1], [0], [0], [1], [0, 0, 1, 1], [], []>} : vector<30x256xf32>, vector<256x128xf32>, vector<30x128xf32> -> vector<30x128xf32>
    %c0_91 = arith.constant 0 : index
    %c0_92 = arith.constant 0 : index
    %131 = vector.load %arg16[%c0_91, %c0_92] : memref<1x128xf32, #tpu.memory_space<vmem>>, vector<1x128xf32>
    %132 = vector.broadcast %131 : vector<1x128xf32> to vector<30x128xf32>
    %133 = arith.addf %130, %132 : vector<30x128xf32>
    %134 = arith.addf %128, %133 : vector<30x128xf32>
    %cst_93 = arith.constant 0.000000e+00 : f32
    %135 = vector.broadcast %cst_93 : f32 to vector<30x128xf32>
    %136 = arith.maximumf %134, %135 : vector<30x128xf32>
    %137 = vector.extract_strided_slice %26 {offsets = [0, 4], sizes = [30, 1], strides = [1, 1]} : vector<30x8xf32> to vector<30x1xf32>
    %138 = vector.extract_strided_slice %26 {offsets = [0, 5], sizes = [30, 1], strides = [1, 1]} : vector<30x8xf32> to vector<30x1xf32>
    %c2_94 = arith.constant 2 : index
    %c0_95 = arith.constant 0 : index
    %c0_96 = arith.constant 0 : index
    %139 = vector.load %arg17[%c2_94, %c0_95, %c0_96] : memref<3x128x64xf32, #tpu.memory_space<vmem>>, vector<1x128x64xf32>
    %140 = vector.shape_cast %139 : vector<1x128x64xf32> to vector<128x64xf32>
    %cst_97 = arith.constant dense<0.000000e+00> : vector<30x64xf32>
    %141 = tpu.matmul %136, %140, %cst_97 {dimension_numbers = #tpu.dot_dimension_numbers<[1], [0], [0], [1], [0, 0, 1, 1], [], []>} : vector<30x128xf32>, vector<128x64xf32>, vector<30x64xf32> -> vector<30x64xf32>
    %c2_98 = arith.constant 2 : index
    %c0_99 = arith.constant 0 : index
    %c0_100 = arith.constant 0 : index
    %142 = vector.load %arg22[%c2_98, %c0_99, %c0_100] : memref<4x30x30xf32, #tpu.memory_space<vmem>>, vector<1x30x30xf32>
    %143 = vector.shape_cast %142 : vector<1x30x30xf32> to vector<30x30xf32>
    %cst_101 = arith.constant dense<0.000000e+00> : vector<30x128xf32>
    %144 = tpu.matmul %143, %136, %cst_101 {dimension_numbers = #tpu.dot_dimension_numbers<[1], [0], [0], [1], [0, 0, 1, 1], [], []>} : vector<30x30xf32>, vector<30x128xf32>, vector<30x128xf32> -> vector<30x128xf32>
    %c1_102 = arith.constant 1 : index
    %c0_103 = arith.constant 0 : index
    %c0_104 = arith.constant 0 : index
    %145 = vector.load %arg17[%c1_102, %c0_103, %c0_104] : memref<3x128x64xf32, #tpu.memory_space<vmem>>, vector<1x128x64xf32>
    %146 = vector.shape_cast %145 : vector<1x128x64xf32> to vector<128x64xf32>
    %cst_105 = arith.constant dense<0.000000e+00> : vector<30x64xf32>
    %147 = tpu.matmul %144, %146, %cst_105 {dimension_numbers = #tpu.dot_dimension_numbers<[1], [0], [0], [1], [0, 0, 1, 1], [], []>} : vector<30x128xf32>, vector<128x64xf32>, vector<30x64xf32> -> vector<30x64xf32>
    %148 = arith.addf %141, %147 : vector<30x64xf32>
    %c3 = arith.constant 3 : index
    %c0_106 = arith.constant 0 : index
    %c0_107 = arith.constant 0 : index
    %149 = vector.load %arg22[%c3, %c0_106, %c0_107] : memref<4x30x30xf32, #tpu.memory_space<vmem>>, vector<1x30x30xf32>
    %150 = vector.shape_cast %149 : vector<1x30x30xf32> to vector<30x30xf32>
    %cst_108 = arith.constant dense<0.000000e+00> : vector<30x128xf32>
    %151 = tpu.matmul %150, %136, %cst_108 {dimension_numbers = #tpu.dot_dimension_numbers<[1], [0], [0], [1], [0, 0, 1, 1], [], []>} : vector<30x30xf32>, vector<30x128xf32>, vector<30x128xf32> -> vector<30x128xf32>
    %c0_109 = arith.constant 0 : index
    %c0_110 = arith.constant 0 : index
    %c0_111 = arith.constant 0 : index
    %152 = vector.load %arg17[%c0_109, %c0_110, %c0_111] : memref<3x128x64xf32, #tpu.memory_space<vmem>>, vector<1x128x64xf32>
    %153 = vector.shape_cast %152 : vector<1x128x64xf32> to vector<128x64xf32>
    %cst_112 = arith.constant dense<0.000000e+00> : vector<30x64xf32>
    %154 = tpu.matmul %151, %153, %cst_112 {dimension_numbers = #tpu.dot_dimension_numbers<[1], [0], [0], [1], [0, 0, 1, 1], [], []>} : vector<30x128xf32>, vector<128x64xf32>, vector<30x64xf32> -> vector<30x64xf32>
    %155 = arith.addf %148, %154 : vector<30x64xf32>
    %c0_113 = arith.constant 0 : index
    %c0_114 = arith.constant 0 : index
    %156 = vector.load %arg18[%c0_113, %c0_114] : memref<1x64xf32, #tpu.memory_space<vmem>>, vector<1x64xf32>
    %157 = vector.broadcast %156 : vector<1x64xf32> to vector<30x64xf32>
    %158 = arith.addf %155, %157 : vector<30x64xf32>
    %cst_115 = arith.constant 0.000000e+00 : f32
    %159 = vector.broadcast %cst_115 : f32 to vector<30x64xf32>
    %160 = arith.cmpf ogt, %158, %159 : vector<30x64xf32>
    %cst_116 = arith.constant 0.00999999977 : f32
    %161 = vector.broadcast %cst_116 : f32 to vector<30x64xf32>
    %162 = arith.mulf %161, %158 : vector<30x64xf32>
    %163 = arith.select %160, %158, %162 : vector<30x64xi1>, vector<30x64xf32>
    %cst_117 = arith.constant dense<0.000000e+00> : vector<64xf32>
    %164 = vector.multi_reduction <add>, %163, %cst_117 [0] : vector<30x64xf32> to vector<64xf32>
    %165 = vector.shape_cast %164 : vector<64xf32> to vector<1x64xf32>
    %cst_118 = arith.constant 3.000000e+01 : f32
    %166 = vector.broadcast %cst_118 : f32 to vector<1x64xf32>
    %167 = arith.divf %165, %166 : vector<1x64xf32>
    %168 = vector.broadcast %167 : vector<1x64xf32> to vector<30x64xf32>
    %169 = arith.subf %163, %168 : vector<30x64xf32>
    %170 = arith.mulf %169, %169 : vector<30x64xf32>
    %cst_119 = arith.constant dense<0.000000e+00> : vector<64xf32>
    %171 = vector.multi_reduction <add>, %170, %cst_119 [0] : vector<30x64xf32> to vector<64xf32>
    %172 = vector.shape_cast %171 : vector<64xf32> to vector<1x64xf32>
    %cst_120 = arith.constant 3.000000e+01 : f32
    %173 = vector.broadcast %cst_120 : f32 to vector<1x64xf32>
    %174 = arith.divf %172, %173 : vector<1x64xf32>
    %cst_121 = arith.constant 9.99999974E-6 : f32
    %175 = vector.broadcast %cst_121 : f32 to vector<1x64xf32>
    %176 = arith.addf %174, %175 : vector<1x64xf32>
    %177 = math.rsqrt %176 : vector<1x64xf32>
    %178 = vector.broadcast %177 : vector<1x64xf32> to vector<30x64xf32>
    %179 = arith.mulf %169, %178 : vector<30x64xf32>
    %180 = vector.broadcast %137 : vector<30x1xf32> to vector<30x64xf32>
    %181 = arith.mulf %179, %180 : vector<30x64xf32>
    %182 = vector.broadcast %138 : vector<30x1xf32> to vector<30x64xf32>
    %183 = arith.addf %181, %182 : vector<30x64xf32>
    %c0_122 = arith.constant 0 : index
    %c0_123 = arith.constant 0 : index
    %184 = vector.load %arg19[%c0_122, %c0_123] : memref<128x64xf32, #tpu.memory_space<vmem>>, vector<128x64xf32>
    %cst_124 = arith.constant dense<0.000000e+00> : vector<30x64xf32>
    %185 = tpu.matmul %136, %184, %cst_124 {dimension_numbers = #tpu.dot_dimension_numbers<[1], [0], [0], [1], [0, 0, 1, 1], [], []>} : vector<30x128xf32>, vector<128x64xf32>, vector<30x64xf32> -> vector<30x64xf32>
    %c0_125 = arith.constant 0 : index
    %c0_126 = arith.constant 0 : index
    %186 = vector.load %arg20[%c0_125, %c0_126] : memref<1x64xf32, #tpu.memory_space<vmem>>, vector<1x64xf32>
    %187 = vector.broadcast %186 : vector<1x64xf32> to vector<30x64xf32>
    %188 = arith.addf %185, %187 : vector<30x64xf32>
    %189 = arith.addf %183, %188 : vector<30x64xf32>
    %cst_127 = arith.constant 0.000000e+00 : f32
    %190 = vector.broadcast %cst_127 : f32 to vector<30x64xf32>
    %191 = arith.maximumf %189, %190 : vector<30x64xf32>
    %c0_128 = arith.constant 0 : index
    %c0_129 = arith.constant 0 : index
    %192 = vector.load %arg23[%c0_128, %c0_129] : memref<64x2160xf32, #tpu.memory_space<vmem>>, vector<64x2160xf32>
    %cst_130 = arith.constant dense<0.000000e+00> : vector<30x2160xf32>
    %193 = tpu.matmul %191, %192, %cst_130 {dimension_numbers = #tpu.dot_dimension_numbers<[1], [0], [0], [1], [0, 0, 1, 1], [], []>} : vector<30x64xf32>, vector<64x2160xf32>, vector<30x2160xf32> -> vector<30x2160xf32>
    %194 = tpu.iota {dimensions = array<i32: 1>} : vector<1x2160xi32>
    %195 = tpu.iota {dimensions = array<i32: 0>} : vector<30x1xi32>
    %c72_i32 = arith.constant 72 : i32
    %196 = vector.broadcast %c72_i32 : i32 to vector<30x1xi32>
    %197 = arith.muli %195, %196 : vector<30x1xi32>
    %198 = vector.broadcast %194 : vector<1x2160xi32> to vector<30x2160xi32>
    %199 = vector.broadcast %197 : vector<30x1xi32> to vector<30x2160xi32>
    %200 = arith.subi %198, %199 : vector<30x2160xi32>
    %c0_i32 = arith.constant 0 : i32
    %201 = vector.broadcast %c0_i32 : i32 to vector<30x2160xi32>
    %202 = arith.cmpi sge, %200, %201 : vector<30x2160xi32>
    %c72_i32_131 = arith.constant 72 : i32
    %203 = vector.broadcast %c72_i32_131 : i32 to vector<30x2160xi32>
    %204 = arith.cmpi slt, %200, %203 : vector<30x2160xi32>
    %205 = arith.andi %202, %204 : vector<30x2160xi1>
    %cst_132 = arith.constant 0.000000e+00 : f32
    %206 = vector.broadcast %cst_132 : f32 to vector<30x2160xf32>
    %207 = arith.select %205, %193, %206 : vector<30x2160xi1>, vector<30x2160xf32>
    %cst_133 = arith.constant dense<0.000000e+00> : vector<2160xf32>
    %208 = vector.multi_reduction <add>, %207, %cst_133 [0] : vector<30x2160xf32> to vector<2160xf32>
    %209 = vector.shape_cast %208 : vector<2160xf32> to vector<1x2160xf32>
    %c0_134 = arith.constant 0 : index
    %c0_135 = arith.constant 0 : index
    %210 = vector.load %arg24[%c0_134, %c0_135] : memref<2160x72xf32, #tpu.memory_space<vmem>>, vector<2160x72xf32>
    %cst_136 = arith.constant dense<0.000000e+00> : vector<1x72xf32>
    %211 = tpu.matmul %209, %210, %cst_136 {dimension_numbers = #tpu.dot_dimension_numbers<[1], [0], [0], [1], [0, 0, 1, 1], [], []>} : vector<1x2160xf32>, vector<2160x72xf32>, vector<1x72xf32> -> vector<1x72xf32>
    %c0_137 = arith.constant 0 : index
    %c0_138 = arith.constant 0 : index
    %212 = vector.load %arg25[%c0_137, %c0_138] : memref<1x72xf32, #tpu.memory_space<vmem>>, vector<1x72xf32>
    %213 = arith.addf %211, %212 : vector<1x72xf32>
    %c0_139 = arith.constant 0 : index
    %c0_140 = arith.constant 0 : index
    %214 = vector.load %arg28[%c0_139, %c0_140] : memref<1x72xf32, #tpu.memory_space<vmem>>, vector<1x72xf32>
    %215 = arith.subf %213, %214 : vector<1x72xf32>
    %c0_141 = arith.constant 0 : index
    %c0_142 = arith.constant 0 : index
    %216 = vector.load %arg26[%c0_141, %c0_142] : memref<72x384xf32, #tpu.memory_space<vmem>>, vector<72x384xf32>
    %cst_143 = arith.constant dense<0.000000e+00> : vector<1x384xf32>
    %217 = tpu.matmul %215, %216, %cst_143 {dimension_numbers = #tpu.dot_dimension_numbers<[1], [0], [0], [1], [0, 0, 1, 1], [], []>} : vector<1x72xf32>, vector<72x384xf32>, vector<1x384xf32> -> vector<1x384xf32>
    %cst_144 = arith.constant 9.99999971E-10 : f32
    %218 = vector.broadcast %cst_144 : f32 to vector<1x384xf32>
    %219 = arith.cmpf ogt, %217, %218 : vector<1x384xf32>
    %cst_145 = arith.constant 1.000000e+00 : f32
    %220 = vector.broadcast %cst_145 : f32 to vector<1x384xf32>
    %221 = arith.select %219, %217, %220 : vector<1x384xi1>, vector<1x384xf32>
    %cst_146 = arith.constant 9.99999971E-10 : f32
    %222 = vector.broadcast %cst_146 : f32 to vector<1x384xf32>
    %223 = arith.cmpf ogt, %217, %222 : vector<1x384xf32>
    %c0_147 = arith.constant 0 : index
    %c0_148 = arith.constant 0 : index
    %224 = vector.load %arg27[%c0_147, %c0_148] : memref<1x384xf32, #tpu.memory_space<vmem>>, vector<1x384xf32>
    %225 = arith.divf %224, %221 : vector<1x384xf32>
    %cst_149 = arith.constant 1.000000e+30 : f32
    %226 = vector.broadcast %cst_149 : f32 to vector<1x384xf32>
    %227 = arith.select %223, %225, %226 : vector<1x384xi1>, vector<1x384xf32>
    %cst_150 = arith.constant dense<0x7F800000> : vector<1xf32>
    %228 = vector.multi_reduction <minimumf>, %227, %cst_150 [1] : vector<1x384xf32> to vector<1xf32>
    %229 = vector.shape_cast %228 : vector<1xf32> to vector<1x1xf32>
    %cst_151 = arith.constant 1.000000e+00 : f32
    %230 = vector.broadcast %cst_151 : f32 to vector<1x1xf32>
    %231 = arith.minimumf %230, %229 : vector<1x1xf32>
    %232 = vector.broadcast %231 : vector<1x1xf32> to vector<1x72xf32>
    %233 = arith.mulf %232, %215 : vector<1x72xf32>
    %234 = arith.addf %214, %233 : vector<1x72xf32>
    %c0_152 = arith.constant 0 : index
    %c0_153 = arith.constant 0 : index
    %c0_154 = arith.constant 0 : index
    %235 = vector.load %arg29[%c0_152, %c0_153, %c0_154] : memref<1x1x72xf32, #tpu.memory_space<vmem>>, vector<1x1x72xf32>
    %236 = vector.shape_cast %235 : vector<1x1x72xf32> to vector<1x72xf32>
    %237 = vector.shape_cast %234 : vector<1x72xf32> to vector<1x1x72xf32>
    tpu.vector_store %arg29[%c0_152, %c0_153, %c0_154], %237 {strides = array<i32>} : memref<1x1x72xf32, #tpu.memory_space<vmem>>, vector<1x1x72xf32>,
    return
  }
  func.func @transform_0(%arg0: i32) -> (i32, i32, i32) {
    %c0_i32 = arith.constant 0 : i32
    %c0_i32_0 = arith.constant 0 : i32
    %c0_i32_1 = arith.constant 0 : i32
    return %arg0, %c0_i32, %c0_i32_0 : i32, i32, i32
  }
  func.func @transform_1(%arg0: i32) -> (i32, i32, i32) {
    %c0_i32 = arith.constant 0 : i32
    %c0_i32_0 = arith.constant 0 : i32
    %c0_i32_1 = arith.constant 0 : i32
    return %arg0, %c0_i32, %c0_i32_0 : i32, i32, i32
  }
  func.func @transform_2(%arg0: i32) -> (i32, i32) {
    %c0_i32 = arith.constant 0 : i32
    %c0_i32_0 = arith.constant 0 : i32
    %c0_i32_1 = arith.constant 0 : i32
    return %c0_i32, %c0_i32_0 : i32, i32
  }
  func.func @transform_3(%arg0: i32) -> (i32, i32) {
    %c0_i32 = arith.constant 0 : i32
    %c0_i32_0 = arith.constant 0 : i32
    %c0_i32_1 = arith.constant 0 : i32
    return %c0_i32, %c0_i32_0 : i32, i32
  }
  func.func @transform_4(%arg0: i32) -> (i32, i32) {
    %c0_i32 = arith.constant 0 : i32
    %c0_i32_0 = arith.constant 0 : i32
    %c0_i32_1 = arith.constant 0 : i32
    return %c0_i32, %c0_i32_0 : i32, i32
  }
  func.func @transform_5(%arg0: i32) -> (i32, i32) {
    %c0_i32 = arith.constant 0 : i32
    %c0_i32_0 = arith.constant 0 : i32
    %c0_i32_1 = arith.constant 0 : i32
    return %c0_i32, %c0_i32_0 : i32, i32
  }
  func.func @transform_6(%arg0: i32) -> (i32, i32) {
    %c0_i32 = arith.constant 0 : i32
    %c0_i32_0 = arith.constant 0 : i32
    %c0_i32_1 = arith.constant 0 : i32
    return %c0_i32, %c0_i32_0 : i32, i32
  }
  func.func @transform_7(%arg0: i32) -> (i32, i32) {
    %c0_i32 = arith.constant 0 : i32
    %c0_i32_0 = arith.constant 0 : i32
    %c0_i32_1 = arith.constant 0 : i32
    return %c0_i32, %c0_i32_0 : i32, i32
  }
  func.func @transform_8(%arg0: i32) -> (i32, i32, i32) {
    %c0_i32 = arith.constant 0 : i32
    %c0_i32_0 = arith.constant 0 : i32
    %c0_i32_1 = arith.constant 0 : i32
    %c0_i32_2 = arith.constant 0 : i32
    return %c0_i32, %c0_i32_0, %c0_i32_1 : i32, i32, i32
  }
  func.func @transform_9(%arg0: i32) -> (i32, i32) {
    %c0_i32 = arith.constant 0 : i32
    %c0_i32_0 = arith.constant 0 : i32
    %c0_i32_1 = arith.constant 0 : i32
    return %c0_i32, %c0_i32_0 : i32, i32
  }
  func.func @transform_10(%arg0: i32) -> (i32, i32) {
    %c0_i32 = arith.constant 0 : i32
    %c0_i32_0 = arith.constant 0 : i32
    %c0_i32_1 = arith.constant 0 : i32
    return %c0_i32, %c0_i32_0 : i32, i32
  }
  func.func @transform_11(%arg0: i32) -> (i32, i32) {
    %c0_i32 = arith.constant 0 : i32
    %c0_i32_0 = arith.constant 0 : i32
    %c0_i32_1 = arith.constant 0 : i32
    return %c0_i32, %c0_i32_0 : i32, i32
  }
  func.func @transform_12(%arg0: i32) -> (i32, i32, i32) {
    %c0_i32 = arith.constant 0 : i32
    %c0_i32_0 = arith.constant 0 : i32
    %c0_i32_1 = arith.constant 0 : i32
    %c0_i32_2 = arith.constant 0 : i32
    return %c0_i32, %c0_i32_0, %c0_i32_1 : i32, i32, i32
  }
  func.func @transform_13(%arg0: i32) -> (i32, i32) {
    %c0_i32 = arith.constant 0 : i32
    %c0_i32_0 = arith.constant 0 : i32
    %c0_i32_1 = arith.constant 0 : i32
    return %c0_i32, %c0_i32_0 : i32, i32
  }
  func.func @transform_14(%arg0: i32) -> (i32, i32) {
    %c0_i32 = arith.constant 0 : i32
    %c0_i32_0 = arith.constant 0 : i32
    %c0_i32_1 = arith.constant 0 : i32
    return %c0_i32, %c0_i32_0 : i32, i32
  }
  func.func @transform_15(%arg0: i32) -> (i32, i32) {
    %c0_i32 = arith.constant 0 : i32
    %c0_i32_0 = arith.constant 0 : i32
    %c0_i32_1 = arith.constant 0 : i32
    return %c0_i32, %c0_i32_0 : i32, i32
  }
  func.func @transform_16(%arg0: i32) -> (i32, i32, i32) {
    %c0_i32 = arith.constant 0 : i32
    %c0_i32_0 = arith.constant 0 : i32
    %c0_i32_1 = arith.constant 0 : i32
    %c0_i32_2 = arith.constant 0 : i32
    return %c0_i32, %c0_i32_0, %c0_i32_1 : i32, i32, i32
  }
  func.func @transform_17(%arg0: i32) -> (i32, i32) {
    %c0_i32 = arith.constant 0 : i32
    %c0_i32_0 = arith.constant 0 : i32
    %c0_i32_1 = arith.constant 0 : i32
    return %c0_i32, %c0_i32_0 : i32, i32
  }
  func.func @transform_18(%arg0: i32) -> (i32, i32) {
    %c0_i32 = arith.constant 0 : i32
    %c0_i32_0 = arith.constant 0 : i32
    %c0_i32_1 = arith.constant 0 : i32
    return %c0_i32, %c0_i32_0 : i32, i32
  }
  func.func @transform_19(%arg0: i32) -> (i32, i32) {
    %c0_i32 = arith.constant 0 : i32
    %c0_i32_0 = arith.constant 0 : i32
    %c0_i32_1 = arith.constant 0 : i32
    return %c0_i32, %c0_i32_0 : i32, i32
  }
  func.func @transform_20(%arg0: i32) -> (i32, i32) {
    %c0_i32 = arith.constant 0 : i32
    %c0_i32_0 = arith.constant 0 : i32
    %c0_i32_1 = arith.constant 0 : i32
    return %c0_i32, %c0_i32_0 : i32, i32
  }
  func.func @transform_21(%arg0: i32) -> (i32, i32, i32) {
    %c0_i32 = arith.constant 0 : i32
    %c0_i32_0 = arith.constant 0 : i32
    %c0_i32_1 = arith.constant 0 : i32
    %c0_i32_2 = arith.constant 0 : i32
    return %c0_i32, %c0_i32_0, %c0_i32_1 : i32, i32, i32
  }
  func.func @transform_22(%arg0: i32) -> (i32, i32) {
    %c0_i32 = arith.constant 0 : i32
    %c0_i32_0 = arith.constant 0 : i32
    %c0_i32_1 = arith.constant 0 : i32
    return %c0_i32, %c0_i32_0 : i32, i32
  }
  func.func @transform_23(%arg0: i32) -> (i32, i32) {
    %c0_i32 = arith.constant 0 : i32
    %c0_i32_0 = arith.constant 0 : i32
    %c0_i32_1 = arith.constant 0 : i32
    return %c0_i32, %c0_i32_0 : i32, i32
  }
  func.func @transform_24(%arg0: i32) -> (i32, i32) {
    %c0_i32 = arith.constant 0 : i32
    %c0_i32_0 = arith.constant 0 : i32
    %c0_i32_1 = arith.constant 0 : i32
    return %c0_i32, %c0_i32_0 : i32, i32
  }
  func.func @transform_25(%arg0: i32) -> (i32, i32) {
    %c0_i32 = arith.constant 0 : i32
    %c0_i32_0 = arith.constant 0 : i32
    %c0_i32_1 = arith.constant 0 : i32
    return %c0_i32, %c0_i32_0 : i32, i32
  }
  func.func @transform_26(%arg0: i32) -> (i32, i32) {
    %c0_i32 = arith.constant 0 : i32
    %c0_i32_0 = arith.constant 0 : i32
    %c0_i32_1 = arith.constant 0 : i32
    return %c0_i32, %c0_i32_0 : i32, i32
  }
  func.func @transform_27(%arg0: i32) -> (i32, i32) {
    %c0_i32 = arith.constant 0 : i32
    %c0_i32_0 = arith.constant 0 : i32
    %c0_i32_1 = arith.constant 0 : i32
    return %c0_i32, %c0_i32_0 : i32, i32
  }
  func.func @transform_28(%arg0: i32) -> (i32, i32, i32) {
    %c0_i32 = arith.constant 0 : i32
    %c0_i32_0 = arith.constant 0 : i32
    %c0_i32_1 = arith.constant 0 : i32
    return %arg0, %c0_i32, %c0_i32_0 : i32, i32, i32
  }
}

</mosaic_0001>

<llo_original>
// kernel: net_forward.1
$region0: #{net_forward.1}
  #allocation0 [shape = 'u32[]', space=smem, size = 0x4, offset = 0x4, fixed_abs, tag = 'smem constant byte address 0x4 - core index']
  #allocation1 [shape = 'u32[144,128]{1,0:T(1,128)}', space=vmem, size = 0x12000, scoped, tag = 'internal scratch']
  %s0 = inlined_call_operand.vmem [shape: f32[2,30,30], index: 0, kind: input, shape index: {}]
  %s1 = inlined_call_operand.vmem [shape: f32[2,30,12], index: 1, kind: input, shape index: {}]
  %s2 = inlined_call_operand.vmem [shape: f32[12,24], index: 2, kind: input, shape index: {}]
  %s3 = inlined_call_operand.vmem [shape: f32[12,24], index: 3, kind: input, shape index: {}]
  %s4 = inlined_call_operand.vmem [shape: f32[1,24], index: 4, kind: input, shape index: {}]
  %s5 = inlined_call_operand.vmem [shape: f32[24,48], index: 5, kind: input, shape index: {}]
  %s6 = inlined_call_operand.vmem [shape: f32[24,48], index: 6, kind: input, shape index: {}]
  %s7 = inlined_call_operand.vmem [shape: f32[1,48], index: 7, kind: input, shape index: {}]
  %s8 = inlined_call_operand.vmem [shape: f32[3,48,256], index: 8, kind: input, shape index: {}]
  %s9 = inlined_call_operand.vmem [shape: f32[1,256], index: 9, kind: input, shape index: {}]
  %s10 = inlined_call_operand.vmem [shape: f32[48,256], index: 10, kind: input, shape index: {}]
  %s11 = inlined_call_operand.vmem [shape: f32[1,256], index: 11, kind: input, shape index: {}]
  %s12 = inlined_call_operand.vmem [shape: f32[3,256,128], index: 12, kind: input, shape index: {}]
  %s13 = inlined_call_operand.vmem [shape: f32[1,128], index: 13, kind: input, shape index: {}]
  %s14 = inlined_call_operand.vmem [shape: f32[256,128], index: 14, kind: input, shape index: {}]
  %s15 = inlined_call_operand.vmem [shape: f32[1,128], index: 15, kind: input, shape index: {}]
  %s16 = inlined_call_operand.vmem [shape: f32[3,128,64], index: 16, kind: input, shape index: {}]
  %s17 = inlined_call_operand.vmem [shape: f32[1,64], index: 17, kind: input, shape index: {}]
  %s18 = inlined_call_operand.vmem [shape: f32[128,64], index: 18, kind: input, shape index: {}]
  %s19 = inlined_call_operand.vmem [shape: f32[1,64], index: 19, kind: input, shape index: {}]
  %s20 = inlined_call_operand.vmem [shape: f32[30,8], index: 20, kind: input, shape index: {}]
  %s21 = inlined_call_operand.vmem [shape: f32[4,30,30], index: 21, kind: input, shape index: {}]
  %s22 = inlined_call_operand.vmem [shape: f32[64,2160], index: 22, kind: input, shape index: {}]
  %s23 = inlined_call_operand.vmem [shape: f32[2160,72], index: 23, kind: input, shape index: {}]
  %s24 = inlined_call_operand.vmem [shape: f32[1,72], index: 24, kind: input, shape index: {}]
  %s25 = inlined_call_operand.vmem [shape: f32[72,384], index: 25, kind: input, shape index: {}]
  %s26 = inlined_call_operand.vmem [shape: f32[1,384], index: 26, kind: input, shape index: {}]
  %s27 = inlined_call_operand.vmem [shape: f32[1,72], index: 27, kind: input, shape index: {}]
  %s28 = inlined_call_operand.hbm [shape: f32[2,1,72], index: 28, kind: output, shape index: {}]
  %s29 = sld [smem:[#allocation0]]
  $region145: #{net_forward.1} parent=0
    _
  %s31 = ssub.s32 1, %s29
  %s32 = scalar_select 0, %s31, %s29
  $region1: #{net_forward.1} parent=0
    #allocation2 [shape = 'u8[1024]{0}', space=vmem, size = 0x400, scoped, tag = 'output window, operand 0']
    #allocation3 [shape = 's32[2]{0}', space=sflag, size = 0x8, scoped, tag = 'scoped memory for net_forward.1']
    %33 = vsyncpa [#allocation3], 0
    %s34 = scalar_lea.sflag [#allocation3], 1
    %35 = vsyncpa %s34, 0
    loop: start=0, step=1, limit=4
    $region2: #{net_forward.1} parent=1 // loop_pre_header
      _
    $region3: #{net_forward.1} parent=1 // loop_header
      %s37 = sphi 0, %s41
      %p38 = scmp.ge.s32.totalorder %s37, 4
      %s47 = sphi 0, %s49
      %s50 = sphi 0, %s47
      %s51 = sphi 0, %s50
      %s67 = sphi 0, %s51
      %s73 = sphi 0, %s75
      %s76 = sphi 0, %s73
      %s77 = sphi 0, %s76
      %s93 = sphi 0, %s77
      %s97 = sphi 0, %s97
      %s99 = sphi 0, %s97
      %s100 = sphi 0, %s99
      %s114 = sphi 0, %s100
      %s118 = sphi 0, %s118
      %s120 = sphi 0, %s118
      %s121 = sphi 0, %s120
      %s135 = sphi 0, %s121
      %s139 = sphi 0, %s139
      %s141 = sphi 0, %s139
      %s142 = sphi 0, %s141
      %s156 = sphi 0, %s142
      %s160 = sphi 0, %s160
      %s162 = sphi 0, %s160
      %s163 = sphi 0, %s162
      %s177 = sphi 0, %s163
      %s181 = sphi 0, %s181
      %s183 = sphi 0, %s181
      %s184 = sphi 0, %s183
      %s198 = sphi 0, %s184
      %s202 = sphi 0, %s202
      %s204 = sphi 0, %s202
      %s205 = sphi 0, %s204
      %s219 = sphi 0, %s205
      %s223 = sphi 0, %s223
      %s225 = sphi 0, %s223
      %s226 = sphi 0, %s225
      %s240 = sphi 0, %s226
      %s244 = sphi 0, %s244
      %s246 = sphi 0, %s244
      %s247 = sphi 0, %s246
      %s261 = sphi 0, %s247
      %s265 = sphi 0, %s265
      %s267 = sphi 0, %s265
      %s268 = sphi 0, %s267
      %s282 = sphi 0, %s268
      %s286 = sphi 0, %s286
      %s288 = sphi 0, %s286
      %s289 = sphi 0, %s288
      %s303 = sphi 0, %s289
      %s307 = sphi 0, %s307
      %s309 = sphi 0, %s307
      %s310 = sphi 0, %s309
      %s324 = sphi 0, %s310
      %s328 = sphi 0, %s328
      %s330 = sphi 0, %s328
      %s331 = sphi 0, %s330
      %s345 = sphi 0, %s331
      %s349 = sphi 0, %s349
      %s351 = sphi 0, %s349
      %s352 = sphi 0, %s351
      %s366 = sphi 0, %s352
      %s370 = sphi 0, %s370
      %s372 = sphi 0, %s370
      %s373 = sphi 0, %s372
      %s387 = sphi 0, %s373
      %s391 = sphi 0, %s391
      %s393 = sphi 0, %s391
      %s394 = sphi 0, %s393
      %s408 = sphi 0, %s394
      %s412 = sphi 0, %s412
      %s414 = sphi 0, %s412
      %s415 = sphi 0, %s414
      %s429 = sphi 0, %s415
      %s433 = sphi 0, %s433
      %s435 = sphi 0, %s433
      %s436 = sphi 0, %s435
      %s450 = sphi 0, %s436
      %s454 = sphi 0, %s454
      %s456 = sphi 0, %s454
      %s457 = sphi 0, %s456
      %s471 = sphi 0, %s457
      %s475 = sphi 0, %s475
      %s477 = sphi 0, %s475
      %s478 = sphi 0, %s477
      %s492 = sphi 0, %s478
      %s496 = sphi 0, %s496
      %s498 = sphi 0, %s496
      %s499 = sphi 0, %s498
      %s513 = sphi 0, %s499
      %s517 = sphi 0, %s517
      %s519 = sphi 0, %s517
      %s520 = sphi 0, %s519
      %s534 = sphi 0, %s520
      %s538 = sphi 0, %s538
      %s540 = sphi 0, %s538
      %s541 = sphi 0, %s540
      %s555 = sphi 0, %s541
      %s559 = sphi 0, %s559
      %s561 = sphi 0, %s559
      %s562 = sphi 0, %s561
      %s576 = sphi 0, %s562
      %s580 = sphi 0, %s580
      %s582 = sphi 0, %s580
      %s583 = sphi 0, %s582
      %s597 = sphi 0, %s583
      %s601 = sphi 0, %s601
      %s603 = sphi 0, %s601
      %s604 = sphi 0, %s603
      %s618 = sphi 0, %s604
      %s622 = sphi 0, %s622
      %s624 = sphi 0, %s622
      %s625 = sphi 0, %s624
      %s639 = sphi 0, %s625
      %s645 = sphi 0, %s647
      %s648 = sphi 0, %s645
      %s649 = sphi 0, %s648
      %s665 = sphi 0, %s649
    $region4: #{net_forward.1} parent=1 // loop_header_branch
      %40 = sbr.rel (%p38) target = $region8
    $region5: #{net_forward.1} parent=1 // loop_body
      %s42 = ssub.s32 %s37, 1
      %s43 = ssub.s32 %s37, 2
      %s44 = sadd.s32 %s37, 1
      %s45 = ssub.s32 %s37, %s44
      %p46 = scmp.eq.s32.totalorder %s45, 0
      %s48 = sadd.s32 %s47, 1
      %s49 = scalar_select %p46, %s47, %s48
      %p52 = pneg %p46
      %p53 = scmp.eq.s32.totalorder %s37, 1
      %p54 = por %p52, %p53
      %p55 = scmp.ne.s32.totalorder %s47, %s50
      %p56 = scmp.eq.s32.totalorder %s37, 0
      %p57 = por %p55, %p56
      %p58 = scmp.ne.s32.totalorder %s47, %s50
      %p59 = scmp.eq.s32.totalorder %s42, 1
      %p60 = por %p58, %p59
      %p61 = scmp.ne.s32.totalorder %s50, %s51
      %p62 = scmp.eq.s32.totalorder %s42, 0
      %p63 = por %p61, %p62
      %p64 = scmp.ne.s32.totalorder %s50, %s51
      %p65 = scmp.eq.s32.totalorder %s43, 1
      %p66 = por %p64, %p65
      %p68 = scmp.ne.s32.totalorder %s51, %s67
      %p69 = scmp.eq.s32.totalorder %s43, 0
      %p70 = por %p68, %p69
      %s71 = ssub.s32 %s37, %s44
      %p72 = scmp.eq.s32.totalorder %s71, 0
      %s74 = sadd.s32 %s73, 1
      %s75 = scalar_select %p72, %s73, %s74
      %p78 = pneg %p72
      %p79 = scmp.eq.s32.totalorder %s37, 1
      %p80 = por %p78, %p79
      %p81 = scmp.ne.s32.totalorder %s73, %s76
      %p82 = scmp.eq.s32.totalorder %s37, 0
      %p83 = por %p81, %p82
      %p84 = scmp.ne.s32.totalorder %s73, %s76
      %p85 = scmp.eq.s32.totalorder %s42, 1
      %p86 = por %p84, %p85
      %p87 = scmp.ne.s32.totalorder %s76, %s77
      %p88 = scmp.eq.s32.totalorder %s42, 0
      %p89 = por %p87, %p88
      %p90 = scmp.ne.s32.totalorder %s76, %s77
      %p91 = scmp.eq.s32.totalorder %s43, 1
      %p92 = por %p90, %p91
      %p94 = scmp.ne.s32.totalorder %s77, %s93
      %p95 = scmp.eq.s32.totalorder %s43, 0
      %p96 = por %p94, %p95
      %s98 = sadd.s32 %s97, 1
      %p101 = scmp.eq.s32.totalorder %s37, 1
      %p102 = scmp.ne.s32.totalorder %s97, %s99
      %p103 = scmp.eq.s32.totalorder %s37, 0
      %p104 = por %p102, %p103
      %p105 = scmp.ne.s32.totalorder %s97, %s99
      %p106 = scmp.eq.s32.totalorder %s42, 1
      %p107 = por %p105, %p106
      %p108 = scmp.ne.s32.totalorder %s99, %s100
      %p109 = scmp.eq.s32.totalorder %s42, 0
      %p110 = por %p108, %p109
      %p111 = scmp.ne.s32.totalorder %s99, %s100
      %p112 = scmp.eq.s32.totalorder %s43, 1
      %p113 = por %p111, %p112
      %p115 = scmp.ne.s32.totalorder %s100, %s114
      %p116 = scmp.eq.s32.totalorder %s43, 0
      %p117 = por %p115, %p116
      %s119 = sadd.s32 %s118, 1
      %p122 = scmp.eq.s32.totalorder %s37, 1
      %p123 = scmp.ne.s32.totalorder %s118, %s120
      %p124 = scmp.eq.s32.totalorder %s37, 0
      %p125 = por %p123, %p124
      %p126 = scmp.ne.s32.totalorder %s118, %s120
      %p127 = scmp.eq.s32.totalorder %s42, 1
      %p128 = por %p126, %p127
      %p129 = scmp.ne.s32.totalorder %s120, %s121
      %p130 = scmp.eq.s32.totalorder %s42, 0
      %p131 = por %p129, %p130
      %p132 = scmp.ne.s32.totalorder %s120, %s121
      %p133 = scmp.eq.s32.totalorder %s43, 1
      %p134 = por %p132, %p133
      %p136 = scmp.ne.s32.totalorder %s121, %s135
      %p137 = scmp.eq.s32.totalorder %s43, 0
      %p138 = por %p136, %p137
      %s140 = sadd.s32 %s139, 1
      %p143 = scmp.eq.s32.totalorder %s37, 1
      %p144 = scmp.ne.s32.totalorder %s139, %s141
      %p145 = scmp.eq.s32.totalorder %s37, 0
      %p146 = por %p144, %p145
      %p147 = scmp.ne.s32.totalorder %s139, %s141
      %p148 = scmp.eq.s32.totalorder %s42, 1
      %p149 = por %p147, %p148
      %p150 = scmp.ne.s32.totalorder %s141, %s142
      %p151 = scmp.eq.s32.totalorder %s42, 0
      %p152 = por %p150, %p151
      %p153 = scmp.ne.s32.totalorder %s141, %s142
      %p154 = scmp.eq.s32.totalorder %s43, 1
      %p155 = por %p153, %p154
      %p157 = scmp.ne.s32.totalorder %s142, %s156
      %p158 = scmp.eq.s32.totalorder %s43, 0
      %p159 = por %p157, %p158
      %s161 = sadd.s32 %s160, 1
      %p164 = scmp.eq.s32.totalorder %s37, 1
      %p165 = scmp.ne.s32.totalorder %s160, %s162
      %p166 = scmp.eq.s32.totalorder %s37, 0
      %p167 = por %p165, %p166
      %p168 = scmp.ne.s32.totalorder %s160, %s162
      %p169 = scmp.eq.s32.totalorder %s42, 1
      %p170 = por %p168, %p169
      %p171 = scmp.ne.s32.totalorder %s162, %s163
      %p172 = scmp.eq.s32.totalorder %s42, 0
      %p173 = por %p171, %p172
      %p174 = scmp.ne.s32.totalorder %s162, %s163
      %p175 = scmp.eq.s32.totalorder %s43, 1
      %p176 = por %p174, %p175
      %p178 = scmp.ne.s32.totalorder %s163, %s177
      %p179 = scmp.eq.s32.totalorder %s43, 0
      %p180 = por %p178, %p179
      %s182 = sadd.s32 %s181, 1
      %p185 = scmp.eq.s32.totalorder %s37, 1
      %p186 = scmp.ne.s32.totalorder %s181, %s183
      %p187 = scmp.eq.s32.totalorder %s37, 0
      %p188 = por %p186, %p187
      %p189 = scmp.ne.s32.totalorder %s181, %s183
      %p190 = scmp.eq.s32.totalorder %s42, 1
      %p191 = por %p189, %p190
      %p192 = scmp.ne.s32.totalorder %s183, %s184
      %p193 = scmp.eq.s32.totalorder %s42, 0
      %p194 = por %p192, %p193
      %p195 = scmp.ne.s32.totalorder %s183, %s184
      %p196 = scmp.eq.s32.totalorder %s43, 1
      %p197 = por %p195, %p196
      %p199 = scmp.ne.s32.totalorder %s184, %s198
      %p200 = scmp.eq.s32.totalorder %s43, 0
      %p201 = por %p199, %p200
      %s203 = sadd.s32 %s202, 1
      %p206 = scmp.eq.s32.totalorder %s37, 1
      %p207 = scmp.ne.s32.totalorder %s202, %s204
      %p208 = scmp.eq.s32.totalorder %s37, 0
      %p209 = por %p207, %p208
      %p210 = scmp.ne.s32.totalorder %s202, %s204
      %p211 = scmp.eq.s32.totalorder %s42, 1
      %p212 = por %p210, %p211
      %p213 = scmp.ne.s32.totalorder %s204, %s205
      %p214 = scmp.eq.s32.totalorder %s42, 0
      %p215 = por %p213, %p214
      %p216 = scmp.ne.s32.totalorder %s204, %s205
      %p217 = scmp.eq.s32.totalorder %s43, 1
      %p218 = por %p216, %p217
      %p220 = scmp.ne.s32.totalorder %s205, %s219
      %p221 = scmp.eq.s32.totalorder %s43, 0
      %p222 = por %p220, %p221
      %s224 = sadd.s32 %s223, 1
      %p227 = scmp.eq.s32.totalorder %s37, 1
      %p228 = scmp.ne.s32.totalorder %s223, %s225
      %p229 = scmp.eq.s32.totalorder %s37, 0
      %p230 = por %p228, %p229
      %p231 = scmp.ne.s32.totalorder %s223, %s225
      %p232 = scmp.eq.s32.totalorder %s42, 1
      %p233 = por %p231, %p232
      %p234 = scmp.ne.s32.totalorder %s225, %s226
      %p235 = scmp.eq.s32.totalorder %s42, 0
      %p236 = por %p234, %p235
      %p237 = scmp.ne.s32.totalorder %s225, %s226
      %p238 = scmp.eq.s32.totalorder %s43, 1
      %p239 = por %p237, %p238
      %p241 = scmp.ne.s32.totalorder %s226, %s240
      %p242 = scmp.eq.s32.totalorder %s43, 0
      %p243 = por %p241, %p242
      %s245 = sadd.s32 %s244, 1
      %p248 = scmp.eq.s32.totalorder %s37, 1
      %p249 = scmp.ne.s32.totalorder %s244, %s246
      %p250 = scmp.eq.s32.totalorder %s37, 0
      %p251 = por %p249, %p250
      %p252 = scmp.ne.s32.totalorder %s244, %s246
      %p253 = scmp.eq.s32.totalorder %s42, 1
      %p254 = por %p252, %p253
      %p255 = scmp.ne.s32.totalorder %s246, %s247
      %p256 = scmp.eq.s32.totalorder %s42, 0
      %p257 = por %p255, %p256
      %p258 = scmp.ne.s32.totalorder %s246, %s247
      %p259 = scmp.eq.s32.totalorder %s43, 1
      %p260 = por %p258, %p259
      %p262 = scmp.ne.s32.totalorder %s247, %s261
      %p263 = scmp.eq.s32.totalorder %s43, 0
      %p264 = por %p262, %p263
      %s266 = sadd.s32 %s265, 1
      %p269 = scmp.eq.s32.totalorder %s37, 1
      %p270 = scmp.ne.s32.totalorder %s265, %s267
      %p271 = scmp.eq.s32.totalorder %s37, 0
      %p272 = por %p270, %p271
      %p273 = scmp.ne.s32.totalorder %s265, %s267
      %p274 = scmp.eq.s32.totalorder %s42, 1
      %p275 = por %p273, %p274
      %p276 = scmp.ne.s32.totalorder %s267, %s268
      %p277 = scmp.eq.s32.totalorder %s42, 0
      %p278 = por %p276, %p277
      %p279 = scmp.ne.s32.totalorder %s267, %s268
      %p280 = scmp.eq.s32.totalorder %s43, 1
      %p281 = por %p279, %p280
      %p283 = scmp.ne.s32.totalorder %s268, %s282
      %p284 = scmp.eq.s32.totalorder %s43, 0
      %p285 = por %p283, %p284
      %s287 = sadd.s32 %s286, 1
      %p290 = scmp.eq.s32.totalorder %s37, 1
      %p291 = scmp.ne.s32.totalorder %s286, %s288
      %p292 = scmp.eq.s32.totalorder %s37, 0
      %p293 = por %p291, %p292
      %p294 = scmp.ne.s32.totalorder %s286, %s288
      %p295 = scmp.eq.s32.totalorder %s42, 1
      %p296 = por %p294, %p295
      %p297 = scmp.ne.s32.totalorder %s288, %s289
      %p298 = scmp.eq.s32.totalorder %s42, 0
      %p299 = por %p297, %p298
      %p300 = scmp.ne.s32.totalorder %s288, %s289
      %p301 = scmp.eq.s32.totalorder %s43, 1
      %p302 = por %p300, %p301
      %p304 = scmp.ne.s32.totalorder %s289, %s303
      %p305 = scmp.eq.s32.totalorder %s43, 0
      %p306 = por %p304, %p305
      %s308 = sadd.s32 %s307, 1
      %p311 = scmp.eq.s32.totalorder %s37, 1
      %p312 = scmp.ne.s32.totalorder %s307, %s309
      %p313 = scmp.eq.s32.totalorder %s37, 0
      %p314 = por %p312, %p313
      %p315 = scmp.ne.s32.totalorder %s307, %s309
      %p316 = scmp.eq.s32.totalorder %s42, 1
      %p317 = por %p315, %p316
      %p318 = scmp.ne.s32.totalorder %s309, %s310
      %p319 = scmp.eq.s32.totalorder %s42, 0
      %p320 = por %p318, %p319
      %p321 = scmp.ne.s32.totalorder %s309, %s310
      %p322 = scmp.eq.s32.totalorder %s43, 1
      %p323 = por %p321, %p322
      %p325 = scmp.ne.s32.totalorder %s310, %s324
      %p326 = scmp.eq.s32.totalorder %s43, 0
      %p327 = por %p325, %p326
      %s329 = sadd.s32 %s328, 1
      %p332 = scmp.eq.s32.totalorder %s37, 1
      %p333 = scmp.ne.s32.totalorder %s328, %s330
      %p334 = scmp.eq.s32.totalorder %s37, 0
      %p335 = por %p333, %p334
      %p336 = scmp.ne.s32.totalorder %s328, %s330
      %p337 = scmp.eq.s32.totalorder %s42, 1
      %p338 = por %p336, %p337
      %p339 = scmp.ne.s32.totalorder %s330, %s331
      %p340 = scmp.eq.s32.totalorder %s42, 0
      %p341 = por %p339, %p340
      %p342 = scmp.ne.s32.totalorder %s330, %s331
      %p343 = scmp.eq.s32.totalorder %s43, 1
      %p344 = por %p342, %p343
      %p346 = scmp.ne.s32.totalorder %s331, %s345
      %p347 = scmp.eq.s32.totalorder %s43, 0
      %p348 = por %p346, %p347
      %s350 = sadd.s32 %s349, 1
      %p353 = scmp.eq.s32.totalorder %s37, 1
      %p354 = scmp.ne.s32.totalorder %s349, %s351
      %p355 = scmp.eq.s32.totalorder %s37, 0
      %p356 = por %p354, %p355
      %p357 = scmp.ne.s32.totalorder %s349, %s351
      %p358 = scmp.eq.s32.totalorder %s42, 1
      %p359 = por %p357, %p358
      %p360 = scmp.ne.s32.totalorder %s351, %s352
      %p361 = scmp.eq.s32.totalorder %s42, 0
      %p362 = por %p360, %p361
      %p363 = scmp.ne.s32.totalorder %s351, %s352
      %p364 = scmp.eq.s32.totalorder %s43, 1
      %p365 = por %p363, %p364
      %p367 = scmp.ne.s32.totalorder %s352, %s366
      %p368 = scmp.eq.s32.totalorder %s43, 0
      %p369 = por %p367, %p368
      %s371 = sadd.s32 %s370, 1
      %p374 = scmp.eq.s32.totalorder %s37, 1
      %p375 = scmp.ne.s32.totalorder %s370, %s372
      %p376 = scmp.eq.s32.totalorder %s37, 0
      %p377 = por %p375, %p376
      %p378 = scmp.ne.s32.totalorder %s370, %s372
      %p379 = scmp.eq.s32.totalorder %s42, 1
      %p380 = por %p378, %p379
      %p381 = scmp.ne.s32.totalorder %s372, %s373
      %p382 = scmp.eq.s32.totalorder %s42, 0
      %p383 = por %p381, %p382
      %p384 = scmp.ne.s32.totalorder %s372, %s373
      %p385 = scmp.eq.s32.totalorder %s43, 1
      %p386 = por %p384, %p385
      %p388 = scmp.ne.s32.totalorder %s373, %s387
      %p389 = scmp.eq.s32.totalorder %s43, 0
      %p390 = por %p388, %p389
      %s392 = sadd.s32 %s391, 1
      %p395 = scmp.eq.s32.totalorder %s37, 1
      %p396 = scmp.ne.s32.totalorder %s391, %s393
      %p397 = scmp.eq.s32.totalorder %s37, 0
      %p398 = por %p396, %p397
      %p399 = scmp.ne.s32.totalorder %s391, %s393
      %p400 = scmp.eq.s32.totalorder %s42, 1
      %p401 = por %p399, %p400
      %p402 = scmp.ne.s32.totalorder %s393, %s394
      %p403 = scmp.eq.s32.totalorder %s42, 0
      %p404 = por %p402, %p403
      %p405 = scmp.ne.s32.totalorder %s393, %s394
      %p406 = scmp.eq.s32.totalorder %s43, 1
      %p407 = por %p405, %p406
      %p409 = scmp.ne.s32.totalorder %s394, %s408
      %p410 = scmp.eq.s32.totalorder %s43, 0
      %p411 = por %p409, %p410
      %s413 = sadd.s32 %s412, 1
      %p416 = scmp.eq.s32.totalorder %s37, 1
      %p417 = scmp.ne.s32.totalorder %s412, %s414
      %p418 = scmp.eq.s32.totalorder %s37, 0
      %p419 = por %p417, %p418
      %p420 = scmp.ne.s32.totalorder %s412, %s414
      %p421 = scmp.eq.s32.totalorder %s42, 1
      %p422 = por %p420, %p421
      %p423 = scmp.ne.s32.totalorder %s414, %s415
      %p424 = scmp.eq.s32.totalorder %s42, 0
      %p425 = por %p423, %p424
      %p426 = scmp.ne.s32.totalorder %s414, %s415
      %p427 = scmp.eq.s32.totalorder %s43, 1
      %p428 = por %p426, %p427
      %p430 = scmp.ne.s32.totalorder %s415, %s429
      %p431 = scmp.eq.s32.totalorder %s43, 0
      %p432 = por %p430, %p431
      %s434 = sadd.s32 %s433, 1
      %p437 = scmp.eq.s32.totalorder %s37, 1
      %p438 = scmp.ne.s32.totalorder %s433, %s435
      %p439 = scmp.eq.s32.totalorder %s37, 0
      %p440 = por %p438, %p439
      %p441 = scmp.ne.s32.totalorder %s433, %s435
      %p442 = scmp.eq.s32.totalorder %s42, 1
      %p443 = por %p441, %p442
      %p444 = scmp.ne.s32.totalorder %s435, %s436
      %p445 = scmp.eq.s32.totalorder %s42, 0
      %p446 = por %p444, %p445
      %p447 = scmp.ne.s32.totalorder %s435, %s436
      %p448 = scmp.eq.s32.totalorder %s43, 1
      %p449 = por %p447, %p448
      %p451 = scmp.ne.s32.totalorder %s436, %s450
      %p452 = scmp.eq.s32.totalorder %s43, 0
      %p453 = por %p451, %p452
      %s455 = sadd.s32 %s454, 1
      %p458 = scmp.eq.s32.totalorder %s37, 1
      %p459 = scmp.ne.s32.totalorder %s454, %s456
      %p460 = scmp.eq.s32.totalorder %s37, 0
      %p461 = por %p459, %p460
      %p462 = scmp.ne.s32.totalorder %s454, %s456
      %p463 = scmp.eq.s32.totalorder %s42, 1
      %p464 = por %p462, %p463
      %p465 = scmp.ne.s32.totalorder %s456, %s457
      %p466 = scmp.eq.s32.totalorder %s42, 0
      %p467 = por %p465, %p466
      %p468 = scmp.ne.s32.totalorder %s456, %s457
      %p469 = scmp.eq.s32.totalorder %s43, 1
      %p470 = por %p468, %p469
      %p472 = scmp.ne.s32.totalorder %s457, %s471
      %p473 = scmp.eq.s32.totalorder %s43, 0
      %p474 = por %p472, %p473
      %s476 = sadd.s32 %s475, 1
      %p479 = scmp.eq.s32.totalorder %s37, 1
      %p480 = scmp.ne.s32.totalorder %s475, %s477
      %p481 = scmp.eq.s32.totalorder %s37, 0
      %p482 = por %p480, %p481
      %p483 = scmp.ne.s32.totalorder %s475, %s477
      %p484 = scmp.eq.s32.totalorder %s42, 1
      %p485 = por %p483, %p484
      %p486 = scmp.ne.s32.totalorder %s477, %s478
      %p487 = scmp.eq.s32.totalorder %s42, 0
      %p488 = por %p486, %p487
      %p489 = scmp.ne.s32.totalorder %s477, %s478
      %p490 = scmp.eq.s32.totalorder %s43, 1
      %p491 = por %p489, %p490
      %p493 = scmp.ne.s32.totalorder %s478, %s492
      %p494 = scmp.eq.s32.totalorder %s43, 0
      %p495 = por %p493, %p494
      %s497 = sadd.s32 %s496, 1
      %p500 = scmp.eq.s32.totalorder %s37, 1
      %p501 = scmp.ne.s32.totalorder %s496, %s498
      %p502 = scmp.eq.s32.totalorder %s37, 0
      %p503 = por %p501, %p502
      %p504 = scmp.ne.s32.totalorder %s496, %s498
      %p505 = scmp.eq.s32.totalorder %s42, 1
      %p506 = por %p504, %p505
      %p507 = scmp.ne.s32.totalorder %s498, %s499
      %p508 = scmp.eq.s32.totalorder %s42, 0
      %p509 = por %p507, %p508
      %p510 = scmp.ne.s32.totalorder %s498, %s499
      %p511 = scmp.eq.s32.totalorder %s43, 1
      %p512 = por %p510, %p511
      %p514 = scmp.ne.s32.totalorder %s499, %s513
      %p515 = scmp.eq.s32.totalorder %s43, 0
      %p516 = por %p514, %p515
      %s518 = sadd.s32 %s517, 1
      %p521 = scmp.eq.s32.totalorder %s37, 1
      %p522 = scmp.ne.s32.totalorder %s517, %s519
      %p523 = scmp.eq.s32.totalorder %s37, 0
      %p524 = por %p522, %p523
      %p525 = scmp.ne.s32.totalorder %s517, %s519
      %p526 = scmp.eq.s32.totalorder %s42, 1
      %p527 = por %p525, %p526
      %p528 = scmp.ne.s32.totalorder %s519, %s520
      %p529 = scmp.eq.s32.totalorder %s42, 0
      %p530 = por %p528, %p529
      %p531 = scmp.ne.s32.totalorder %s519, %s520
      %p532 = scmp.eq.s32.totalorder %s43, 1
      %p533 = por %p531, %p532
      %p535 = scmp.ne.s32.totalorder %s520, %s534
      %p536 = scmp.eq.s32.totalorder %s43, 0
      %p537 = por %p535, %p536
      %s539 = sadd.s32 %s538, 1
      %p542 = scmp.eq.s32.totalorder %s37, 1
      %p543 = scmp.ne.s32.totalorder %s538, %s540
      %p544 = scmp.eq.s32.totalorder %s37, 0
      %p545 = por %p543, %p544
      %p546 = scmp.ne.s32.totalorder %s538, %s540
      %p547 = scmp.eq.s32.totalorder %s42, 1
      %p548 = por %p546, %p547
      %p549 = scmp.ne.s32.totalorder %s540, %s541
      %p550 = scmp.eq.s32.totalorder %s42, 0
      %p551 = por %p549, %p550
      %p552 = scmp.ne.s32.totalorder %s540, %s541
      %p553 = scmp.eq.s32.totalorder %s43, 1
      %p554 = por %p552, %p553
      %p556 = scmp.ne.s32.totalorder %s541, %s555
      %p557 = scmp.eq.s32.totalorder %s43, 0
      %p558 = por %p556, %p557
      %s560 = sadd.s32 %s559, 1
      %p563 = scmp.eq.s32.totalorder %s37, 1
      %p564 = scmp.ne.s32.totalorder %s559, %s561
      %p565 = scmp.eq.s32.totalorder %s37, 0
      %p566 = por %p564, %p565
      %p567 = scmp.ne.s32.totalorder %s559, %s561
      %p568 = scmp.eq.s32.totalorder %s42, 1
      %p569 = por %p567, %p568
      %p570 = scmp.ne.s32.totalorder %s561, %s562
      %p571 = scmp.eq.s32.totalorder %s42, 0
      %p572 = por %p570, %p571
      %p573 = scmp.ne.s32.totalorder %s561, %s562
      %p574 = scmp.eq.s32.totalorder %s43, 1
      %p575 = por %p573, %p574
      %p577 = scmp.ne.s32.totalorder %s562, %s576
      %p578 = scmp.eq.s32.totalorder %s43, 0
      %p579 = por %p577, %p578
      %s581 = sadd.s32 %s580, 1
      %p584 = scmp.eq.s32.totalorder %s37, 1
      %p585 = scmp.ne.s32.totalorder %s580, %s582
      %p586 = scmp.eq.s32.totalorder %s37, 0
      %p587 = por %p585, %p586
      %p588 = scmp.ne.s32.totalorder %s580, %s582
      %p589 = scmp.eq.s32.totalorder %s42, 1
      %p590 = por %p588, %p589
      %p591 = scmp.ne.s32.totalorder %s582, %s583
      %p592 = scmp.eq.s32.totalorder %s42, 0
      %p593 = por %p591, %p592
      %p594 = scmp.ne.s32.totalorder %s582, %s583
      %p595 = scmp.eq.s32.totalorder %s43, 1
      %p596 = por %p594, %p595
      %p598 = scmp.ne.s32.totalorder %s583, %s597
      %p599 = scmp.eq.s32.totalorder %s43, 0
      %p600 = por %p598, %p599
      %s602 = sadd.s32 %s601, 1
      %p605 = scmp.eq.s32.totalorder %s37, 1
      %p606 = scmp.ne.s32.totalorder %s601, %s603
      %p607 = scmp.eq.s32.totalorder %s37, 0
      %p608 = por %p606, %p607
      %p609 = scmp.ne.s32.totalorder %s601, %s603
      %p610 = scmp.eq.s32.totalorder %s42, 1
      %p611 = por %p609, %p610
      %p612 = scmp.ne.s32.totalorder %s603, %s604
      %p613 = scmp.eq.s32.totalorder %s42, 0
      %p614 = por %p612, %p613
      %p615 = scmp.ne.s32.totalorder %s603, %s604
      %p616 = scmp.eq.s32.totalorder %s43, 1
      %p617 = por %p615, %p616
      %p619 = scmp.ne.s32.totalorder %s604, %s618
      %p620 = scmp.eq.s32.totalorder %s43, 0
      %p621 = por %p619, %p620
      %s623 = sadd.s32 %s622, 1
      %p626 = scmp.eq.s32.totalorder %s37, 1
      %p627 = scmp.ne.s32.totalorder %s622, %s624
      %p628 = scmp.eq.s32.totalorder %s37, 0
      %p629 = por %p627, %p628
      %p630 = scmp.ne.s32.totalorder %s622, %s624
      %p631 = scmp.eq.s32.totalorder %s42, 1
      %p632 = por %p630, %p631
      %p633 = scmp.ne.s32.totalorder %s624, %s625
      %p634 = scmp.eq.s32.totalorder %s42, 0
      %p635 = por %p633, %p634
      %p636 = scmp.ne.s32.totalorder %s624, %s625
      %p637 = scmp.eq.s32.totalorder %s43, 1
      %p638 = por %p636, %p637
      %p640 = scmp.ne.s32.totalorder %s625, %s639
      %p641 = scmp.eq.s32.totalorder %s43, 0
      %p642 = por %p640, %p641
      %s643 = ssub.s32 %s37, %s44
      %p644 = scmp.eq.s32.totalorder %s643, 0
      %s646 = sadd.s32 %s645, 1
      %s647 = scalar_select %p644, %s645, %s646
      %p650 = pneg %p644
      %p651 = scmp.eq.s32.totalorder %s37, 1
      %p652 = por %p650, %p651
      %p653 = scmp.ne.s32.totalorder %s645, %s648
      %p654 = scmp.eq.s32.totalorder %s37, 0
      %p655 = por %p653, %p654
      %p656 = scmp.ne.s32.totalorder %s645, %s648
      %p657 = scmp.eq.s32.totalorder %s42, 1
      %p658 = por %p656, %p657
      %p659 = scmp.ne.s32.totalorder %s648, %s649
      %p660 = scmp.eq.s32.totalorder %s42, 0
      %p661 = por %p659, %p660
      %p662 = scmp.ne.s32.totalorder %s648, %s649
      %p663 = scmp.eq.s32.totalorder %s43, 1
      %p664 = por %p662, %p663
      %p666 = scmp.ne.s32.totalorder %s649, %s665
      %p667 = scmp.eq.s32.totalorder %s43, 0
      %p668 = por %p666, %p667
      %p669 = scmp.le.s32.totalorder 1, %s37
      %p670 = scmp.lt.s32.totalorder %s37, 3
      %p671 = pnand %p669, %p670
      %p672 = pneg %p671
      // Predicated region
      $region9: #{net_forward.1} parent=5 // pred_check
        _
      $region10: #{net_forward.1} parent=5 // pred_check_branch
        %674 = sbr.rel (%p671) target = $region12
      $region11: #{net_forward.1} parent=5 // pred_region
        %s675 = ssub.s32 %s37, 1
        // Predicated region
        $region13: #{net_forward.1} parent=11 // pred_check
          %p676 = pneg %p110
        $region14: #{net_forward.1} parent=11 // pred_check_branch
          %678 = sbr.rel (%p676) target = $region16
        $region15: #{net_forward.1} parent=11 // pred_region
          _
        $region16: #{net_forward.1} parent=11 // pred_fallthru
          _
        // Predicated region
        $region17: #{net_forward.1} parent=11 // pred_check
          %p679 = pneg %p131
        $region18: #{net_forward.1} parent=11 // pred_check_branch
          %681 = sbr.rel (%p679) target = $region20
        $region19: #{net_forward.1} parent=11 // pred_region
          _
        $region20: #{net_forward.1} parent=11 // pred_fallthru
          _
        // Predicated region
        $region21: #{net_forward.1} parent=11 // pred_check
          %p682 = pneg %p152
        $region22: #{net_forward.1} parent=11 // pred_check_branch
          %684 = sbr.rel (%p682) target = $region24
        $region23: #{net_forward.1} parent=11 // pred_region
          _
        $region24: #{net_forward.1} parent=11 // pred_fallthru
          _
        // Predicated region
        $region25: #{net_forward.1} parent=11 // pred_check
          %p685 = pneg %p173
        $region26: #{net_forward.1} parent=11 // pred_check_branch
          %687 = sbr.rel (%p685) target = $region28
        $region27: #{net_forward.1} parent=11 // pred_region
          _
        $region28: #{net_forward.1} parent=11 // pred_fallthru
          _
        // Predicated region
        $region29: #{net_forward.1} parent=11 // pred_check
          %p688 = pneg %p194
        $region30: #{net_forward.1} parent=11 // pred_check_branch
          %690 = sbr.rel (%p688) target = $region32
        $region31: #{net_forward.1} parent=11 // pred_region
          _
        $region32: #{net_forward.1} parent=11 // pred_fallthru
          _
        // Predicated region
        $region33: #{net_forward.1} parent=11 // pred_check
          %p691 = pneg %p215
        $region34: #{net_forward.1} parent=11 // pred_check_branch
          %693 = sbr.rel (%p691) target = $region36
        $region35: #{net_forward.1} parent=11 // pred_region
          _
        $region36: #{net_forward.1} parent=11 // pred_fallthru
          _
        // Predicated region
        $region37: #{net_forward.1} parent=11 // pred_check
          %p694 = pneg %p236
        $region38: #{net_forward.1} parent=11 // pred_check_branch
          %696 = sbr.rel (%p694) target = $region40
        $region39: #{net_forward.1} parent=11 // pred_region
          _
        $region40: #{net_forward.1} parent=11 // pred_fallthru
          _
        // Predicated region
        $region41: #{net_forward.1} parent=11 // pred_check
          %p697 = pneg %p257
        $region42: #{net_forward.1} parent=11 // pred_check_branch
          %699 = sbr.rel (%p697) target = $region44
        $region43: #{net_forward.1} parent=11 // pred_region
          _
        $region44: #{net_forward.1} parent=11 // pred_fallthru
          _
        // Predicated region
        $region45: #{net_forward.1} parent=11 // pred_check
          %p700 = pneg %p278
        $region46: #{net_forward.1} parent=11 // pred_check_branch
          %702 = sbr.rel (%p700) target = $region48
        $region47: #{net_forward.1} parent=11 // pred_region
          _
        $region48: #{net_forward.1} parent=11 // pred_fallthru
          _
        // Predicated region
        $region49: #{net_forward.1} parent=11 // pred_check
          %p703 = pneg %p299
        $region50: #{net_forward.1} parent=11 // pred_check_branch
          %705 = sbr.rel (%p703) target = $region52
        $region51: #{net_forward.1} parent=11 // pred_region
          _
        $region52: #{net_forward.1} parent=11 // pred_fallthru
          _
        // Predicated region
        $region53: #{net_forward.1} parent=11 // pred_check
          %p706 = pneg %p320
        $region54: #{net_forward.1} parent=11 // pred_check_branch
          %708 = sbr.rel (%p706) target = $region56
        $region55: #{net_forward.1} parent=11 // pred_region
          _
        $region56: #{net_forward.1} parent=11 // pred_fallthru
          _
        // Predicated region
        $region57: #{net_forward.1} parent=11 // pred_check
          %p709 = pneg %p341
        $region58: #{net_forward.1} parent=11 // pred_check_branch
          %711 = sbr.rel (%p709) target = $region60
        $region59: #{net_forward.1} parent=11 // pred_region
          _
        $region60: #{net_forward.1} parent=11 // pred_fallthru
          _
        // Predicated region
        $region61: #{net_forward.1} parent=11 // pred_check
          %p712 = pneg %p362
        $region62: #{net_forward.1} parent=11 // pred_check_branch
          %714 = sbr.rel (%p712) target = $region64
        $region63: #{net_forward.1} parent=11 // pred_region
          _
        $region64: #{net_forward.1} parent=11 // pred_fallthru
          _
        // Predicated region
        $region65: #{net_forward.1} parent=11 // pred_check
          %p715 = pneg %p383
        $region66: #{net_forward.1} parent=11 // pred_check_branch
          %717 = sbr.rel (%p715) target = $region68
        $region67: #{net_forward.1} parent=11 // pred_region
          _
        $region68: #{net_forward.1} parent=11 // pred_fallthru
          _
        // Predicated region
        $region69: #{net_forward.1} parent=11 // pred_check
          %p718 = pneg %p404
        $region70: #{net_forward.1} parent=11 // pred_check_branch
          %720 = sbr.rel (%p718) target = $region72
        $region71: #{net_forward.1} parent=11 // pred_region
          _
        $region72: #{net_forward.1} parent=11 // pred_fallthru
          _
        // Predicated region
        $region73: #{net_forward.1} parent=11 // pred_check
          %p721 = pneg %p425
        $region74: #{net_forward.1} parent=11 // pred_check_branch
          %723 = sbr.rel (%p721) target = $region76
        $region75: #{net_forward.1} parent=11 // pred_region
          _
        $region76: #{net_forward.1} parent=11 // pred_fallthru
          _
        // Predicated region
        $region77: #{net_forward.1} parent=11 // pred_check
          %p724 = pneg %p446
        $region78: #{net_forward.1} parent=11 // pred_check_branch
          %726 = sbr.rel (%p724) target = $region80
        $region79: #{net_forward.1} parent=11 // pred_region
          _
        $region80: #{net_forward.1} parent=11 // pred_fallthru
          _
        // Predicated region
        $region81: #{net_forward.1} parent=11 // pred_check
          %p727 = pneg %p467
        $region82: #{net_forward.1} parent=11 // pred_check_branch
          %729 = sbr.rel (%p727) target = $region84
        $region83: #{net_forward.1} parent=11 // pred_region
          _
        $region84: #{net_forward.1} parent=11 // pred_fallthru
          _
        // Predicated region
        $region85: #{net_forward.1} parent=11 // pred_check
          %p730 = pneg %p488
        $region86: #{net_forward.1} parent=11 // pred_check_branch
          %732 = sbr.rel (%p730) target = $region88
        $region87: #{net_forward.1} parent=11 // pred_region
          _
        $region88: #{net_forward.1} parent=11 // pred_fallthru
          _
        // Predicated region
        $region89: #{net_forward.1} parent=11 // pred_check
          %p733 = pneg %p509
        $region90: #{net_forward.1} parent=11 // pred_check_branch
          %735 = sbr.rel (%p733) target = $region92
        $region91: #{net_forward.1} parent=11 // pred_region
          _
        $region92: #{net_forward.1} parent=11 // pred_fallthru
          _
        // Predicated region
        $region93: #{net_forward.1} parent=11 // pred_check
          %p736 = pneg %p530
        $region94: #{net_forward.1} parent=11 // pred_check_branch
          %738 = sbr.rel (%p736) target = $region96
        $region95: #{net_forward.1} parent=11 // pred_region
          _
        $region96: #{net_forward.1} parent=11 // pred_fallthru
          _
        // Predicated region
        $region97: #{net_forward.1} parent=11 // pred_check
          %p739 = pneg %p551
        $region98: #{net_forward.1} parent=11 // pred_check_branch
          %741 = sbr.rel (%p739) target = $region100
        $region99: #{net_forward.1} parent=11 // pred_region
          _
        $region100: #{net_forward.1} parent=11 // pred_fallthru
          _
        // Predicated region
        $region101: #{net_forward.1} parent=11 // pred_check
          %p742 = pneg %p572
        $region102: #{net_forward.1} parent=11 // pred_check_branch
          %744 = sbr.rel (%p742) target = $region104
        $region103: #{net_forward.1} parent=11 // pred_region
          _
        $region104: #{net_forward.1} parent=11 // pred_fallthru
          _
        // Predicated region
        $region105: #{net_forward.1} parent=11 // pred_check
          %p745 = pneg %p593
        $region106: #{net_forward.1} parent=11 // pred_check_branch
          %747 = sbr.rel (%p745) target = $region108
        $region107: #{net_forward.1} parent=11 // pred_region
          _
        $region108: #{net_forward.1} parent=11 // pred_fallthru
          _
        // Predicated region
        $region109: #{net_forward.1} parent=11 // pred_check
          %p748 = pneg %p614
        $region110: #{net_forward.1} parent=11 // pred_check_branch
          %750 = sbr.rel (%p748) target = $region112
        $region111: #{net_forward.1} parent=11 // pred_region
          _
        $region112: #{net_forward.1} parent=11 // pred_fallthru
          _
        // Predicated region
        $region113: #{net_forward.1} parent=11 // pred_check
          %p751 = pneg %p635
        $region114: #{net_forward.1} parent=11 // pred_check_branch
          %753 = sbr.rel (%p751) target = $region116
        $region115: #{net_forward.1} parent=11 // pred_region
          _
        $region116: #{net_forward.1} parent=11 // pred_fallthru
          _
      $region12: #{net_forward.1} parent=5 // pred_fallthru
        _
      %p754 = scmp.lt.s32.totalorder %s37, 2
      // Predicated region
      $region117: #{net_forward.1} parent=5 // pred_check
        %p755 = pneg %p754
      $region118: #{net_forward.1} parent=5 // pred_check_branch
        %757 = sbr.rel (%p755) target = $region120
      $region119: #{net_forward.1} parent=5 // pred_region
        // Predicated region
        $region121: #{net_forward.1} parent=119 // pred_check
          %p758 = pneg %p57
        $region122: #{net_forward.1} parent=119 // pred_check_branch
          %760 = sbr.rel (%p758) target = $region124
        $region123: #{net_forward.1} parent=119 // pred_region
          %p761 = scmp.lt.s32.totalorder %s37, 1
          %s762 = scalar_select %p761, %s37, 1
          %s763 = smul.addr %s762, 4
          %s764 = smul.addr %s763, 8
          %s765 = scalar_lea.vmem %s0, %s764
        $region124: #{net_forward.1} parent=119 // pred_fallthru
          _
        // Predicated region
        $region125: #{net_forward.1} parent=119 // pred_check
          %p766 = pneg %p83
        $region126: #{net_forward.1} parent=119 // pred_check_branch
          %768 = sbr.rel (%p766) target = $region128
        $region127: #{net_forward.1} parent=119 // pred_region
          %p769 = scmp.lt.s32.totalorder %s37, 1
          %s770 = scalar_select %p769, %s37, 1
          %s771 = smul.addr %s770, 4
          %s772 = smul.addr %s771, 8
          %s773 = scalar_lea.vmem %s1, %s772
        $region128: #{net_forward.1} parent=119 // pred_fallthru
          _
      $region120: #{net_forward.1} parent=5 // pred_fallthru
        _
      %p774 = scmp.le.s32.totalorder 1, %s37
      %p775 = scmp.lt.s32.totalorder %s37, 3
      %p776 = pnand %p774, %p775
      %p777 = pneg %p776
      // Predicated region
      $region129: #{net_forward.1} parent=5 // pred_check
        _
      $region130: #{net_forward.1} parent=5 // pred_check_branch
        %779 = sbr.rel (%p776) target = $region132
      $region131: #{net_forward.1} parent=5 // pred_region
        %s780 = ssub.s32 %s37, 1
        %p781 = scmp.lt.s32.totalorder %s42, 1
        %s782 = scalar_select %p781, %s42, 1
        %s783 = smul.addr %s782, 4
        %s784 = smul.addr %s783, 8
        %s785 = scalar_lea.vmem %s0, %s784
        %p786 = pneg %p63
        %p787 = pneg %p60
        %p788 = scmp.lt.s32.totalorder %s42, 1
        %s789 = scalar_select %p788, %s42, 1
        %s790 = smul.addr %s789, 4
        %s791 = smul.addr %s790, 8
        %s792 = scalar_lea.vmem %s1, %s791
        %p793 = pneg %p89
        %p794 = pneg %p86
        %p795 = pneg %p110
        %p796 = pneg %p107
        %p797 = pneg %p131
        %p798 = pneg %p128
        %p799 = pneg %p152
        %p800 = pneg %p149
        %p801 = pneg %p173
        %p802 = pneg %p170
        %p803 = pneg %p194
        %p804 = pneg %p191
        %p805 = pneg %p215
        %p806 = pneg %p212
        %p807 = pneg %p236
        %p808 = pneg %p233
        %p809 = pneg %p257
        %p810 = pneg %p254
        %p811 = pneg %p278
        %p812 = pneg %p275
        %p813 = pneg %p299
        %p814 = pneg %p296
        %p815 = pneg %p320
        %p816 = pneg %p317
        %p817 = pneg %p341
        %p818 = pneg %p338
        %p819 = pneg %p362
        %p820 = pneg %p359
        %p821 = pneg %p383
        %p822 = pneg %p380
        %p823 = pneg %p404
        %p824 = pneg %p401
        %p825 = pneg %p425
        %p826 = pneg %p422
        %p827 = pneg %p446
        %p828 = pneg %p443
        %p829 = pneg %p467
        %p830 = pneg %p464
        %p831 = pneg %p488
        %p832 = pneg %p485
        %p833 = pneg %p509
        %p834 = pneg %p506
        %p835 = pneg %p530
        %p836 = pneg %p527
        %p837 = pneg %p551
        %p838 = pneg %p548
        %p839 = pneg %p572
        %p840 = pneg %p569
        %p841 = pneg %p593
        %p842 = pneg %p590
        %p843 = pneg %p614
        %p844 = pneg %p611
        %p845 = pneg %p635
        %p846 = pneg %p632
        %p847 = pneg %p661
        %p848 = pneg %p658
        %s849 = sand.u32 %s648, 1
        %s850 = scalar_lea.sflag [#allocation3], %s849
        %s851 = sand.u32 %s648, 1
        %s852 = scalar_lea.vmem [#allocation2], %s851
        %p853 = scmp.lt.s32.totalorder %s42, 1
        %s854 = scalar_select %p853, %s42, 1
        %s855 = smul.addr %s854, 4
        %s856 = smul.addr %s855, 8
        %s857 = scalar_lea.vmem %s0, %s856
        %p858 = scmp.lt.s32.totalorder %s42, 1
        %s859 = scalar_select %p858, %s42, 1
        %s860 = smul.addr %s859, 4
        %s861 = smul.addr %s860, 8
        %s862 = scalar_lea.vmem %s1, %s861
        %v863 = vld [vmem:[%s857] sm:$0xff]
        %v864 = vld [vmem:[%s857 + $0x8] sm:$0xff]
        %v865 = vld [vmem:[%s857 + $0x10] sm:$0xff]
        %v866 = vld [vmem:[%s857 + $0x18] sm:$0x3f]
        %v867 = vld [vmem:[%s862] sm:$0xff]
        %v868 = vld [vmem:[%s862 + $0x8] sm:$0xff]
        %v869 = vld [vmem:[%s862 + $0x10] sm:$0xff]
        %v870 = vld [vmem:[%s862 + $0x18] sm:$0x3f]
        %vm871 = vcmask 244736
        %v873 = vsel %vm871, %v863, 0
        %v876 = vsel %vm871, %v864, 0
        %v879 = vsel %vm871, %v865, 0
        %v882 = vsel %vm871, %v866, 0
        %vm884 = vcmask 1045504
        %v886 = vsel %vm884, %v870, 0
        %888 = vmatprep.subr.mxu0 0.0
        %889 = vmatpush1.msra.mxu0 %v867
        %890 = vmatprep.subr.mxu0 0.0
        %891 = vmatpush1.msra.mxu0 %v868
        %892 = vmatprep.subr.mxu0 0.0
        %893 = vmatpush1.msra.mxu0 %v869
        %894 = vmatprep.subr.mxu0 0.0
        %895 = vmatpush1.msra.mxu0 %v886
        %896 = vmatprep.subr.mxu0 0.0
        %897 = vmatpush1.msra.mxu0 0.0
        %898 = vmatprep.subr.mxu0 0.0
        %899 = vmatpush1.msra.mxu0 0.0
        %900 = vmatprep.subr.mxu0 0.0
        %901 = vmatpush1.msra.mxu0 0.0
        %902 = vmatprep.subr.mxu0 0.0
        %903 = vmatpush1.msra.mxu0 0.0
        %904 = vmatprep.subr.mxu0 0.0
        %905 = vmatpush1.msra.mxu0 0.0
        %906 = vmatprep.subr.mxu0 0.0
        %907 = vmatpush1.msra.mxu0 0.0
        %908 = vmatprep.subr.mxu0 0.0
        %909 = vmatpush1.msra.mxu0 0.0
        %910 = vmatprep.subr.mxu0 0.0
        %911 = vmatpush1.msra.mxu0 0.0
        %912 = vmatprep.subr.mxu0 0.0
        %913 = vmatpush1.msra.mxu0 0.0
        %914 = vmatprep.subr.mxu0 0.0
        %915 = vmatpush1.msra.mxu0 0.0
        %916 = vmatprep.subr.mxu0 0.0
        %917 = vmatpush1.msra.mxu0 0.0
        %918 = vmatprep.subr.mxu0 0.0
        %919 = vmatpush1.msra.mxu0 0.0
        %920 = vmatprep.subr.mxu0 0.0
        %921 = vmatpush1.msra.mxu0 0.0
        %922 = vmatprep.subr.mxu0 0.0
        %923 = vmatpush1.msra.mxu0 0.0
        %924 = vmatprep.subr.mxu0 0.0
        %925 = vmatpush1.msra.mxu0 0.0
        %926 = vmatprep.subr.mxu0 0.0
        %927 = vmatpush1.msra.mxu0 0.0
        %928 = vmatprep.subr.mxu0 0.0
        %929 = vmatpush1.msra.mxu0 0.0
        %930 = vmatprep.subr.mxu0 0.0
        %931 = vmatpush1.msra.mxu0 0.0
        %932 = vmatprep.subr.mxu0 0.0
        %933 = vmatpush1.msra.mxu0 0.0
        %934 = vmatprep.subr.mxu0 0.0
        %935 = vmatpush1.msra.mxu0 0.0
        %936 = vmatprep.subr.mxu0 0.0
        %937 = vmatpush1.msra.mxu0 0.0
        %938 = vmatprep.subr.mxu0 0.0
        %939 = vmatpush1.msra.mxu0 0.0
        %940 = vmatprep.subr.mxu0 0.0
        %941 = vmatpush1.msra.mxu0 0.0
        %942 = vmatprep.subr.mxu0 0.0
        %943 = vmatpush1.msra.mxu0 0.0
        %944 = vmatprep.subr.mxu0 0.0
        %945 = vmatpush1.msra.mxu0 0.0
        %946 = vmatprep.subr.mxu0 0.0
        %947 = vmatpush1.msra.mxu0 0.0
        %948 = vmatprep.subr.mxu0 0.0
        %949 = vmatpush1.msra.mxu0 0.0
        %950 = vmatprep.subr.mxu0 0.0
        %951 = vmatpush1.msra.mxu0 0.0
        %952 = vmatprep.mubr.f32.mxu0 0.0
        %953 = vmatmul.mubr.f32.gmra.mrb[0].mxu0 %v873
        %v954 = vpop.f32.mrb[0].mxu0
        %v955 = vadd.f32 0.0, %v954
        %v956 = vpop.f32.mrb[0].mxu0
        %957 = vmatprep.mubr.f32.mxu0 0.0
        %958 = vmatmul.mubr.f32.gmra.mrb[0].mxu0 %v876
        %v959 = vpop.f32.mrb[0].mxu0
        %v960 = vadd.f32 0.0, %v959
        %v961 = vpop.f32.mrb[0].mxu0
        %962 = vmatprep.mubr.f32.mxu0 0.0
        %963 = vmatmul.mubr.f32.gmra.mrb[0].mxu0 %v879
        %v964 = vpop.f32.mrb[0].mxu0
        %v965 = vadd.f32 0.0, %v964
        %v966 = vpop.f32.mrb[0].mxu0
        %967 = vmatprep.mubr.f32.mxu0 0.0
        %968 = vmatmul.mubr.f32.gmra.mrb[0].mxu0 %v882
        %v969 = vpop.f32.mrb[0].mxu0
        %v970 = vadd.f32 0.0, %v969
        %v971 = vpop.f32.mrb[0].mxu0
        %972 = vdwg.mxu0
        %v973 = vld [vmem:[%s2] sm:$0xff]
        %v974 = vld [vmem:[%s2 + $0x8] sm:$0xf]
        %v975 = vld [vmem:[%s3] sm:$0xff]
        %v976 = vld [vmem:[%s3 + $0x8] sm:$0xf]
        %vm977 = vcmask 97280
        %v979 = vsel %vm977, %v867, 0
        %v982 = vsel %vm977, %v868, 0
        %v985 = vsel %vm977, %v869, 0
        %v987 = vsel %vm977, %v870, 0
        %vm989 = vcmask 1043456
        %v991 = vsel %vm989, %v976, 0
        %993 = vmatprep.subr.mxu0 0.0
        %994 = vmatpush1.msra.mxu0 %v975
        %995 = vmatprep.subr.mxu0 0.0
        %996 = vmatpush1.msra.mxu0 %v991
        %997 = vmatprep.subr.mxu0 0.0
        %998 = vmatpush1.msra.mxu0 0.0
        %999 = vmatprep.subr.mxu0 0.0
        %1000 = vmatpush1.msra.mxu0 0.0
        %1001 = vmatprep.subr.mxu0 0.0
        %1002 = vmatpush1.msra.mxu0 0.0
        %1003 = vmatprep.subr.mxu0 0.0
        %1004 = vmatpush1.msra.mxu0 0.0
        %1005 = vmatprep.subr.mxu0 0.0
        %1006 = vmatpush1.msra.mxu0 0.0
        %1007 = vmatprep.subr.mxu0 0.0
        %1008 = vmatpush1.msra.mxu0 0.0
        %1009 = vmatprep.subr.mxu0 0.0
        %1010 = vmatpush1.msra.mxu0 0.0
        %1011 = vmatprep.subr.mxu0 0.0
        %1012 = vmatpush1.msra.mxu0 0.0
        %1013 = vmatprep.subr.mxu0 0.0
        %1014 = vmatpush1.msra.mxu0 0.0
        %1015 = vmatprep.subr.mxu0 0.0
        %1016 = vmatpush1.msra.mxu0 0.0
        %1017 = vmatprep.subr.mxu0 0.0
        %1018 = vmatpush1.msra.mxu0 0.0
        %1019 = vmatprep.subr.mxu0 0.0
        %1020 = vmatpush1.msra.mxu0 0.0
        %1021 = vmatprep.subr.mxu0 0.0
        %1022 = vmatpush1.msra.mxu0 0.0
        %1023 = vmatprep.subr.mxu0 0.0
        %1024 = vmatpush1.msra.mxu0 0.0
        %1025 = vmatprep.subr.mxu0 0.0
        %1026 = vmatpush1.msra.mxu0 0.0
        %1027 = vmatprep.subr.mxu0 0.0
        %1028 = vmatpush1.msra.mxu0 0.0
        %1029 = vmatprep.subr.mxu0 0.0
        %1030 = vmatpush1.msra.mxu0 0.0
        %1031 = vmatprep.subr.mxu0 0.0
        %1032 = vmatpush1.msra.mxu0 0.0
        %1033 = vmatprep.subr.mxu0 0.0
        %1034 = vmatpush1.msra.mxu0 0.0
        %1035 = vmatprep.subr.mxu0 0.0
        %1036 = vmatpush1.msra.mxu0 0.0
        %1037 = vmatprep.subr.mxu0 0.0
        %1038 = vmatpush1.msra.mxu0 0.0
        %1039 = vmatprep.subr.mxu0 0.0
        %1040 = vmatpush1.msra.mxu0 0.0
        %1041 = vmatprep.subr.mxu0 0.0
        %1042 = vmatpush1.msra.mxu0 0.0
        %1043 = vmatprep.subr.mxu0 0.0
        %1044 = vmatpush1.msra.mxu0 0.0
        %1045 = vmatprep.subr.mxu0 0.0
        %1046 = vmatpush1.msra.mxu0 0.0
        %1047 = vmatprep.subr.mxu0 0.0
        %1048 = vmatpush1.msra.mxu0 0.0
        %1049 = vmatprep.subr.mxu0 0.0
        %1050 = vmatpush1.msra.mxu0 0.0
        %1051 = vmatprep.subr.mxu0 0.0
        %1052 = vmatpush1.msra.mxu0 0.0
        %1053 = vmatprep.subr.mxu0 0.0
        %1054 = vmatpush1.msra.mxu0 0.0
        %1055 = vmatprep.subr.mxu0 0.0
        %1056 = vmatpush1.msra.mxu0 0.0
        %1057 = vmatprep.mubr.f32.mxu0 0.0
        %1058 = vmatmul.mubr.f32.gmra.mrb[0].mxu0 %v979
        %v1059 = vpop.f32.mrb[0].mxu0
        %v1060 = vadd.f32 0.0, %v1059
        %v1061 = vpop.f32.mrb[0].mxu0
        %1062 = vmatprep.mubr.f32.mxu0 0.0
        %1063 = vmatmul.mubr.f32.gmra.mrb[0].mxu0 %v982
        %v1064 = vpop.f32.mrb[0].mxu0
        %v1065 = vadd.f32 0.0, %v1064
        %v1066 = vpop.f32.mrb[0].mxu0
        %1067 = vmatprep.mubr.f32.mxu0 0.0
        %1068 = vmatmul.mubr.f32.gmra.mrb[0].mxu0 %v985
        %v1069 = vpop.f32.mrb[0].mxu0
        %v1070 = vadd.f32 0.0, %v1069
        %v1071 = vpop.f32.mrb[0].mxu0
        %1072 = vmatprep.mubr.f32.mxu0 0.0
        %1073 = vmatmul.mubr.f32.gmra.mrb[0].mxu0 %v987
        %v1074 = vpop.f32.mrb[0].mxu0
        %v1075 = vadd.f32 0.0, %v1074
        %v1076 = vpop.f32.mrb[0].mxu0
        %1077 = vdwg.mxu0
        %v1079 = vsel %vm977, %v955, 0
        %v1082 = vsel %vm977, %v960, 0
        %v1085 = vsel %vm977, %v965, 0
        %v1088 = vsel %vm977, %v970, 0
        %v1091 = vsel %vm989, %v974, 0
        %1093 = vmatprep.subr.mxu0 0.0
        %1094 = vmatpush1.msra.mxu0 %v973
        %1095 = vmatprep.subr.mxu0 0.0
        %1096 = vmatpush1.msra.mxu0 %v1091
        %1097 = vmatprep.subr.mxu0 0.0
        %1098 = vmatpush1.msra.mxu0 0.0
        %1099 = vmatprep.subr.mxu0 0.0
        %1100 = vmatpush1.msra.mxu0 0.0
        %1101 = vmatprep.subr.mxu0 0.0
        %1102 = vmatpush1.msra.mxu0 0.0
        %1103 = vmatprep.subr.mxu0 0.0
        %1104 = vmatpush1.msra.mxu0 0.0
        %1105 = vmatprep.subr.mxu0 0.0
        %1106 = vmatpush1.msra.mxu0 0.0
        %1107 = vmatprep.subr.mxu0 0.0
        %1108 = vmatpush1.msra.mxu0 0.0
        %1109 = vmatprep.subr.mxu0 0.0
        %1110 = vmatpush1.msra.mxu0 0.0
        %1111 = vmatprep.subr.mxu0 0.0
        %1112 = vmatpush1.msra.mxu0 0.0
        %1113 = vmatprep.subr.mxu0 0.0
        %1114 = vmatpush1.msra.mxu0 0.0
        %1115 = vmatprep.subr.mxu0 0.0
        %1116 = vmatpush1.msra.mxu0 0.0
        %1117 = vmatprep.subr.mxu0 0.0
        %1118 = vmatpush1.msra.mxu0 0.0
        %1119 = vmatprep.subr.mxu0 0.0
        %1120 = vmatpush1.msra.mxu0 0.0
        %1121 = vmatprep.subr.mxu0 0.0
        %1122 = vmatpush1.msra.mxu0 0.0
        %1123 = vmatprep.subr.mxu0 0.0
        %1124 = vmatpush1.msra.mxu0 0.0
        %1125 = vmatprep.subr.mxu0 0.0
        %1126 = vmatpush1.msra.mxu0 0.0
        %1127 = vmatprep.subr.mxu0 0.0
        %1128 = vmatpush1.msra.mxu0 0.0
        %1129 = vmatprep.subr.mxu0 0.0
        %1130 = vmatpush1.msra.mxu0 0.0
        %1131 = vmatprep.subr.mxu0 0.0
        %1132 = vmatpush1.msra.mxu0 0.0
        %1133 = vmatprep.subr.mxu0 0.0
        %1134 = vmatpush1.msra.mxu0 0.0
        %1135 = vmatprep.subr.mxu0 0.0
        %1136 = vmatpush1.msra.mxu0 0.0
        %1137 = vmatprep.subr.mxu0 0.0
        %1138 = vmatpush1.msra.mxu0 0.0
        %1139 = vmatprep.subr.mxu0 0.0
        %1140 = vmatpush1.msra.mxu0 0.0
        %1141 = vmatprep.subr.mxu0 0.0
        %1142 = vmatpush1.msra.mxu0 0.0
        %1143 = vmatprep.subr.mxu0 0.0
        %1144 = vmatpush1.msra.mxu0 0.0
        %1145 = vmatprep.subr.mxu0 0.0
        %1146 = vmatpush1.msra.mxu0 0.0
        %1147 = vmatprep.subr.mxu0 0.0
        %1148 = vmatpush1.msra.mxu0 0.0
        %1149 = vmatprep.subr.mxu0 0.0
        %1150 = vmatpush1.msra.mxu0 0.0
        %1151 = vmatprep.subr.mxu0 0.0
        %1152 = vmatpush1.msra.mxu0 0.0
        %1153 = vmatprep.subr.mxu0 0.0
        %1154 = vmatpush1.msra.mxu0 0.0
        %1155 = vmatprep.subr.mxu0 0.0
        %1156 = vmatpush1.msra.mxu0 0.0
        %1157 = vmatprep.mubr.f32.mxu0 0.0
        %1158 = vmatmul.mubr.f32.gmra.mrb[0].mxu0 %v1079
        %v1159 = vpop.f32.mrb[0].mxu0
        %v1160 = vadd.f32 %v1060, %v1159
        %v1161 = vpop.f32.mrb[0].mxu0
        %1162 = vmatprep.mubr.f32.mxu0 0.0
        %1163 = vmatmul.mubr.f32.gmra.mrb[0].mxu0 %v1082
        %v1164 = vpop.f32.mrb[0].mxu0
        %v1165 = vadd.f32 %v1065, %v1164
        %v1166 = vpop.f32.mrb[0].mxu0
        %1167 = vmatprep.mubr.f32.mxu0 0.0
        %1168 = vmatmul.mubr.f32.gmra.mrb[0].mxu0 %v1085
        %v1169 = vpop.f32.mrb[0].mxu0
        %v1170 = vadd.f32 %v1070, %v1169
        %v1171 = vpop.f32.mrb[0].mxu0
        %1172 = vmatprep.mubr.f32.mxu0 0.0
        %1173 = vmatmul.mubr.f32.gmra.mrb[0].mxu0 %v1088
        %v1174 = vpop.f32.mrb[0].mxu0
        %v1175 = vadd.f32 %v1075, %v1174
        %v1176 = vpop.f32.mrb[0].mxu0
        %1177 = vdwg.mxu0
        %v1178 = vld [vmem:[%s4] sm:$0x1]
        %v1180 = vlaneseq
        %v1181 = vshrl.u32 %v1180, 7
        %v1182 = vsub.s32 0, %v1181
        %v1183 = vrot.slane %v1178, %v1182
        %v1185 = vadd.f32 %v1160, %v1183
        %v1186 = vadd.f32 %v1165, %v1183
        %v1187 = vadd.f32 %v1170, %v1183
        %v1188 = vadd.f32 %v1175, %v1183
        %v1189 = vmax.f32 %v1185, 0.0
        %v1190 = vmax.f32 %v1186, 0.0
        %v1191 = vmax.f32 %v1187, 0.0
        %v1192 = vmax.f32 %v1188, 0.0
        %v1194 = vsel %vm884, %v1192, 0
        %1196 = vmatprep.subr.mxu0 0.0
        %1197 = vmatpush1.msra.mxu0 %v1189
        %1198 = vmatprep.subr.mxu0 0.0
        %1199 = vmatpush1.msra.mxu0 %v1190
        %1200 = vmatprep.subr.mxu0 0.0
        %1201 = vmatpush1.msra.mxu0 %v1191
        %1202 = vmatprep.subr.mxu0 0.0
        %1203 = vmatpush1.msra.mxu0 %v1194
        %1204 = vmatprep.subr.mxu0 0.0
        %1205 = vmatpush1.msra.mxu0 0.0
        %1206 = vmatprep.subr.mxu0 0.0
        %1207 = vmatpush1.msra.mxu0 0.0
        %1208 = vmatprep.subr.mxu0 0.0
        %1209 = vmatpush1.msra.mxu0 0.0
        %1210 = vmatprep.subr.mxu0 0.0
        %1211 = vmatpush1.msra.mxu0 0.0
        %1212 = vmatprep.subr.mxu0 0.0
        %1213 = vmatpush1.msra.mxu0 0.0
        %1214 = vmatprep.subr.mxu0 0.0
        %1215 = vmatpush1.msra.mxu0 0.0
        %1216 = vmatprep.subr.mxu0 0.0
        %1217 = vmatpush1.msra.mxu0 0.0
        %1218 = vmatprep.subr.mxu0 0.0
        %1219 = vmatpush1.msra.mxu0 0.0
        %1220 = vmatprep.subr.mxu0 0.0
        %1221 = vmatpush1.msra.mxu0 0.0
        %1222 = vmatprep.subr.mxu0 0.0
        %1223 = vmatpush1.msra.mxu0 0.0
        %1224 = vmatprep.subr.mxu0 0.0
        %1225 = vmatpush1.msra.mxu0 0.0
        %1226 = vmatprep.subr.mxu0 0.0
        %1227 = vmatpush1.msra.mxu0 0.0
        %1228 = vmatprep.subr.mxu0 0.0
        %1229 = vmatpush1.msra.mxu0 0.0
        %1230 = vmatprep.subr.mxu0 0.0
        %1231 = vmatpush1.msra.mxu0 0.0
        %1232 = vmatprep.subr.mxu0 0.0
        %1233 = vmatpush1.msra.mxu0 0.0
        %1234 = vmatprep.subr.mxu0 0.0
        %1235 = vmatpush1.msra.mxu0 0.0
        %1236 = vmatprep.subr.mxu0 0.0
        %1237 = vmatpush1.msra.mxu0 0.0
        %1238 = vmatprep.subr.mxu0 0.0
        %1239 = vmatpush1.msra.mxu0 0.0
        %1240 = vmatprep.subr.mxu0 0.0
        %1241 = vmatpush1.msra.mxu0 0.0
        %1242 = vmatprep.subr.mxu0 0.0
        %1243 = vmatpush1.msra.mxu0 0.0
        %1244 = vmatprep.subr.mxu0 0.0
        %1245 = vmatpush1.msra.mxu0 0.0
        %1246 = vmatprep.subr.mxu0 0.0
        %1247 = vmatpush1.msra.mxu0 0.0
        %1248 = vmatprep.subr.mxu0 0.0
        %1249 = vmatpush1.msra.mxu0 0.0
        %1250 = vmatprep.subr.mxu0 0.0
        %1251 = vmatpush1.msra.mxu0 0.0
        %1252 = vmatprep.subr.mxu0 0.0
        %1253 = vmatpush1.msra.mxu0 0.0
        %1254 = vmatprep.subr.mxu0 0.0
        %1255 = vmatpush1.msra.mxu0 0.0
        %1256 = vmatprep.subr.mxu0 0.0
        %1257 = vmatpush1.msra.mxu0 0.0
        %1258 = vmatprep.subr.mxu0 0.0
        %1259 = vmatpush1.msra.mxu0 0.0
        %1260 = vmatprep.mubr.f32.mxu0 0.0
        %1261 = vmatmul.mubr.f32.gmra.mrb[0].mxu0 %v873
        %v1262 = vpop.f32.mrb[0].mxu0
        %v1263 = vadd.f32 0.0, %v1262
        %v1264 = vpop.f32.mrb[0].mxu0
        %1265 = vmatprep.mubr.f32.mxu0 0.0
        %1266 = vmatmul.mubr.f32.gmra.mrb[0].mxu0 %v876
        %v1267 = vpop.f32.mrb[0].mxu0
        %v1268 = vadd.f32 0.0, %v1267
        %v1269 = vpop.f32.mrb[0].mxu0
        %1270 = vmatprep.mubr.f32.mxu0 0.0
        %1271 = vmatmul.mubr.f32.gmra.mrb[0].mxu0 %v879
        %v1272 = vpop.f32.mrb[0].mxu0
        %v1273 = vadd.f32 0.0, %v1272
        %v1274 = vpop.f32.mrb[0].mxu0
        %1275 = vmatprep.mubr.f32.mxu0 0.0
        %1276 = vmatmul.mubr.f32.gmra.mrb[0].mxu0 %v882
        %v1277 = vpop.f32.mrb[0].mxu0
        %v1278 = vadd.f32 0.0, %v1277
        %v1279 = vpop.f32.mrb[0].mxu0
        %1280 = vdwg.mxu0
        %v1281 = vld [vmem:[%s5] sm:$0xff]
        %v1282 = vld [vmem:[%s5 + $0x8] sm:$0xff]
        %v1283 = vld [vmem:[%s5 + $0x10] sm:$0xff]
        %v1284 = vld [vmem:[%s6] sm:$0xff]
        %v1285 = vld [vmem:[%s6 + $0x8] sm:$0xff]
        %v1286 = vld [vmem:[%s6 + $0x10] sm:$0xff]
        %vm1287 = vcmask 195584
        %v1289 = vsel %vm1287, %v1189, 0
        %v1292 = vsel %vm1287, %v1190, 0
        %v1295 = vsel %vm1287, %v1191, 0
        %v1297 = vsel %vm1287, %v1192, 0
        %1299 = vmatprep.subr.mxu0 0.0
        %1300 = vmatpush1.msra.mxu0 %v1284
        %1301 = vmatprep.subr.mxu0 0.0
        %1302 = vmatpush1.msra.mxu0 %v1285
        %1303 = vmatprep.subr.mxu0 0.0
        %1304 = vmatpush1.msra.mxu0 %v1286
        %1305 = vmatprep.subr.mxu0 0.0
        %1306 = vmatpush1.msra.mxu0 0.0
        %1307 = vmatprep.subr.mxu0 0.0
        %1308 = vmatpush1.msra.mxu0 0.0
        %1309 = vmatprep.subr.mxu0 0.0
        %1310 = vmatpush1.msra.mxu0 0.0
        %1311 = vmatprep.subr.mxu0 0.0
        %1312 = vmatpush1.msra.mxu0 0.0
        %1313 = vmatprep.subr.mxu0 0.0
        %1314 = vmatpush1.msra.mxu0 0.0
        %1315 = vmatprep.subr.mxu0 0.0
        %1316 = vmatpush1.msra.mxu0 0.0
        %1317 = vmatprep.subr.mxu0 0.0
        %1318 = vmatpush1.msra.mxu0 0.0
        %1319 = vmatprep.subr.mxu0 0.0
        %1320 = vmatpush1.msra.mxu0 0.0
        %1321 = vmatprep.subr.mxu0 0.0
        %1322 = vmatpush1.msra.mxu0 0.0
        %1323 = vmatprep.subr.mxu0 0.0
        %1324 = vmatpush1.msra.mxu0 0.0
        %1325 = vmatprep.subr.mxu0 0.0
        %1326 = vmatpush1.msra.mxu0 0.0
        %1327 = vmatprep.subr.mxu0 0.0
        %1328 = vmatpush1.msra.mxu0 0.0
        %1329 = vmatprep.subr.mxu0 0.0
        %1330 = vmatpush1.msra.mxu0 0.0
        %1331 = vmatprep.subr.mxu0 0.0
        %1332 = vmatpush1.msra.mxu0 0.0
        %1333 = vmatprep.subr.mxu0 0.0
        %1334 = vmatpush1.msra.mxu0 0.0
        %1335 = vmatprep.subr.mxu0 0.0
        %1336 = vmatpush1.msra.mxu0 0.0
        %1337 = vmatprep.subr.mxu0 0.0
        %1338 = vmatpush1.msra.mxu0 0.0
        %1339 = vmatprep.subr.mxu0 0.0
        %1340 = vmatpush1.msra.mxu0 0.0
        %1341 = vmatprep.subr.mxu0 0.0
        %1342 = vmatpush1.msra.mxu0 0.0
        %1343 = vmatprep.subr.mxu0 0.0
        %1344 = vmatpush1.msra.mxu0 0.0
        %1345 = vmatprep.subr.mxu0 0.0
        %1346 = vmatpush1.msra.mxu0 0.0
        %1347 = vmatprep.subr.mxu0 0.0
        %1348 = vmatpush1.msra.mxu0 0.0
        %1349 = vmatprep.subr.mxu0 0.0
        %1350 = vmatpush1.msra.mxu0 0.0
        %1351 = vmatprep.subr.mxu0 0.0
        %1352 = vmatpush1.msra.mxu0 0.0
        %1353 = vmatprep.subr.mxu0 0.0
        %1354 = vmatpush1.msra.mxu0 0.0
        %1355 = vmatprep.subr.mxu0 0.0
        %1356 = vmatpush1.msra.mxu0 0.0
        %1357 = vmatprep.subr.mxu0 0.0
        %1358 = vmatpush1.msra.mxu0 0.0
        %1359 = vmatprep.subr.mxu0 0.0
        %1360 = vmatpush1.msra.mxu0 0.0
        %1361 = vmatprep.subr.mxu0 0.0
        %1362 = vmatpush1.msra.mxu0 0.0
        %1363 = vmatprep.mubr.f32.mxu0 0.0
        %1364 = vmatmul.mubr.f32.gmra.mrb[0].mxu0 %v1289
        %v1365 = vpop.f32.mrb[0].mxu0
        %v1366 = vadd.f32 0.0, %v1365
        %v1367 = vpop.f32.mrb[0].mxu0
        %1368 = vmatprep.mubr.f32.mxu0 0.0
        %1369 = vmatmul.mubr.f32.gmra.mrb[0].mxu0 %v1292
        %v1370 = vpop.f32.mrb[0].mxu0
        %v1371 = vadd.f32 0.0, %v1370
        %v1372 = vpop.f32.mrb[0].mxu0
        %1373 = vmatprep.mubr.f32.mxu0 0.0
        %1374 = vmatmul.mubr.f32.gmra.mrb[0].mxu0 %v1295
        %v1375 = vpop.f32.mrb[0].mxu0
        %v1376 = vadd.f32 0.0, %v1375
        %v1377 = vpop.f32.mrb[0].mxu0
        %1378 = vmatprep.mubr.f32.mxu0 0.0
        %1379 = vmatmul.mubr.f32.gmra.mrb[0].mxu0 %v1297
        %v1380 = vpop.f32.mrb[0].mxu0
        %v1381 = vadd.f32 0.0, %v1380
        %v1382 = vpop.f32.mrb[0].mxu0
        %1383 = vdwg.mxu0
        %v1385 = vsel %vm1287, %v1263, 0
        %v1388 = vsel %vm1287, %v1268, 0
        %v1391 = vsel %vm1287, %v1273, 0
        %v1394 = vsel %vm1287, %v1278, 0
        %1396 = vmatprep.subr.mxu0 0.0
        %1397 = vmatpush1.msra.mxu0 %v1281
        %1398 = vmatprep.subr.mxu0 0.0
        %1399 = vmatpush1.msra.mxu0 %v1282
        %1400 = vmatprep.subr.mxu0 0.0
        %1401 = vmatpush1.msra.mxu0 %v1283
        %1402 = vmatprep.subr.mxu0 0.0
        %1403 = vmatpush1.msra.mxu0 0.0
        %1404 = vmatprep.subr.mxu0 0.0
        %1405 = vmatpush1.msra.mxu0 0.0
        %1406 = vmatprep.subr.mxu0 0.0
        %1407 = vmatpush1.msra.mxu0 0.0
        %1408 = vmatprep.subr.mxu0 0.0
        %1409 = vmatpush1.msra.mxu0 0.0
        %1410 = vmatprep.subr.mxu0 0.0
        %1411 = vmatpush1.msra.mxu0 0.0
        %1412 = vmatprep.subr.mxu0 0.0
        %1413 = vmatpush1.msra.mxu0 0.0
        %1414 = vmatprep.subr.mxu0 0.0
        %1415 = vmatpush1.msra.mxu0 0.0
        %1416 = vmatprep.subr.mxu0 0.0
        %1417 = vmatpush1.msra.mxu0 0.0
        %1418 = vmatprep.subr.mxu0 0.0
        %1419 = vmatpush1.msra.mxu0 0.0
        %1420 = vmatprep.subr.mxu0 0.0
        %1421 = vmatpush1.msra.mxu0 0.0
        %1422 = vmatprep.subr.mxu0 0.0
        %1423 = vmatpush1.msra.mxu0 0.0
        %1424 = vmatprep.subr.mxu0 0.0
        %1425 = vmatpush1.msra.mxu0 0.0
        %1426 = vmatprep.subr.mxu0 0.0
        %1427 = vmatpush1.msra.mxu0 0.0
        %1428 = vmatprep.subr.mxu0 0.0
        %1429 = vmatpush1.msra.mxu0 0.0
        %1430 = vmatprep.subr.mxu0 0.0
        %1431 = vmatpush1.msra.mxu0 0.0
        %1432 = vmatprep.subr.mxu0 0.0
        %1433 = vmatpush1.msra.mxu0 0.0
        %1434 = vmatprep.subr.mxu0 0.0
        %1435 = vmatpush1.msra.mxu0 0.0
        %1436 = vmatprep.subr.mxu0 0.0
        %1437 = vmatpush1.msra.mxu0 0.0
        %1438 = vmatprep.subr.mxu0 0.0
        %1439 = vmatpush1.msra.mxu0 0.0
        %1440 = vmatprep.subr.mxu0 0.0
        %1441 = vmatpush1.msra.mxu0 0.0
        %1442 = vmatprep.subr.mxu0 0.0
        %1443 = vmatpush1.msra.mxu0 0.0
        %1444 = vmatprep.subr.mxu0 0.0
        %1445 = vmatpush1.msra.mxu0 0.0
        %1446 = vmatprep.subr.mxu0 0.0
        %1447 = vmatpush1.msra.mxu0 0.0
        %1448 = vmatprep.subr.mxu0 0.0
        %1449 = vmatpush1.msra.mxu0 0.0
        %1450 = vmatprep.subr.mxu0 0.0
        %1451 = vmatpush1.msra.mxu0 0.0
        %1452 = vmatprep.subr.mxu0 0.0
        %1453 = vmatpush1.msra.mxu0 0.0
        %1454 = vmatprep.subr.mxu0 0.0
        %1455 = vmatpush1.msra.mxu0 0.0
        %1456 = vmatprep.subr.mxu0 0.0
        %1457 = vmatpush1.msra.mxu0 0.0
        %1458 = vmatprep.subr.mxu0 0.0
        %1459 = vmatpush1.msra.mxu0 0.0
        %1460 = vmatprep.mubr.f32.mxu0 0.0
        %1461 = vmatmul.mubr.f32.gmra.mrb[0].mxu0 %v1385
        %v1462 = vpop.f32.mrb[0].mxu0
        %v1463 = vadd.f32 %v1366, %v1462
        %v1464 = vpop.f32.mrb[0].mxu0
        %1465 = vmatprep.mubr.f32.mxu0 0.0
        %1466 = vmatmul.mubr.f32.gmra.mrb[0].mxu0 %v1388
        %v1467 = vpop.f32.mrb[0].mxu0
        %v1468 = vadd.f32 %v1371, %v1467
        %v1469 = vpop.f32.mrb[0].mxu0
        %1470 = vmatprep.mubr.f32.mxu0 0.0
        %1471 = vmatmul.mubr.f32.gmra.mrb[0].mxu0 %v1391
        %v1472 = vpop.f32.mrb[0].mxu0
        %v1473 = vadd.f32 %v1376, %v1472
        %v1474 = vpop.f32.mrb[0].mxu0
        %1475 = vmatprep.mubr.f32.mxu0 0.0
        %1476 = vmatmul.mubr.f32.gmra.mrb[0].mxu0 %v1394
        %v1477 = vpop.f32.mrb[0].mxu0
        %v1478 = vadd.f32 %v1381, %v1477
        %v1479 = vpop.f32.mrb[0].mxu0
        %1480 = vdwg.mxu0
        %v1481 = vld [vmem:[%s7] sm:$0x1]
        %v1483 = vlaneseq
        %v1484 = vshrl.u32 %v1483, 7
        %v1485 = vsub.s32 0, %v1484
        %v1486 = vrot.slane %v1481, %v1485
        %v1488 = vadd.f32 %v1463, %v1486
        %v1489 = vadd.f32 %v1468, %v1486
        %v1490 = vadd.f32 %v1473, %v1486
        %v1491 = vadd.f32 %v1478, %v1486
        %v1492 = vmax.f32 %v1488, 0.0
        %v1493 = vmax.f32 %v1489, 0.0
        %v1494 = vmax.f32 %v1490, 0.0
        %v1495 = vmax.f32 %v1491, 0.0
        %v1496 = vld [vmem:[%s20] sm:$0xff]
        %v1497 = vld [vmem:[%s20 + $0x8] sm:$0xff]
        %v1498 = vld [vmem:[%s20 + $0x10] sm:$0xff]
        %v1499 = vld [vmem:[%s20 + $0x18] sm:$0x3f]
        %s1500 = scalar_lea.vmem %s8, 192
        %v1501 = vld [vmem:[%s1500] sm:$0xff]
        %v1502 = vld [vmem:[%s1500 + $0x8] sm:$0xff]
        %v1503 = vld [vmem:[%s1500 + $0x10] sm:$0xff]
        %v1504 = vld [vmem:[%s1500 + $0x18] sm:$0xff]
        %v1505 = vld [vmem:[%s1500 + $0x20] sm:$0xff]
        %v1506 = vld [vmem:[%s1500 + $0x28] sm:$0xff]
        %v1507 = vld [vmem:[%s1500 + $0x30] sm:$0xff]
        %v1508 = vld [vmem:[%s1500 + $0x38] sm:$0xff]
        %v1509 = vld [vmem:[%s1500 + $0x40] sm:$0xff]
        %v1510 = vld [vmem:[%s1500 + $0x48] sm:$0xff]
        %v1511 = vld [vmem:[%s1500 + $0x50] sm:$0xff]
        %v1512 = vld [vmem:[%s1500 + $0x58] sm:$0xff]
        %v1513 = vld [vmem:[%s21] sm:$0xff]
        %v1514 = vld [vmem:[%s21 + $0x8] sm:$0xff]
        %v1515 = vld [vmem:[%s21 + $0x10] sm:$0xff]
        %v1516 = vld [vmem:[%s21 + $0x18] sm:$0x3f]
        %v1518 = vsel %vm871, %v1513, 0
        %v1521 = vsel %vm871, %v1514, 0
        %v1524 = vsel %vm871, %v1515, 0
        %v1527 = vsel %vm871, %v1516, 0
        %v1530 = vsel %vm884, %v1495, 0
        %1532 = vmatprep.subr.mxu0 0.0
        %1533 = vmatpush1.msra.mxu0 %v1492
        %1534 = vmatprep.subr.mxu0 0.0
        %1535 = vmatpush1.msra.mxu0 %v1493
        %1536 = vmatprep.subr.mxu0 0.0
        %1537 = vmatpush1.msra.mxu0 %v1494
        %1538 = vmatprep.subr.mxu0 0.0
        %1539 = vmatpush1.msra.mxu0 %v1530
        %1540 = vmatprep.subr.mxu0 0.0
        %1541 = vmatpush1.msra.mxu0 0.0
        %1542 = vmatprep.subr.mxu0 0.0
        %1543 = vmatpush1.msra.mxu0 0.0
        %1544 = vmatprep.subr.mxu0 0.0
        %1545 = vmatpush1.msra.mxu0 0.0
        %1546 = vmatprep.subr.mxu0 0.0
        %1547 = vmatpush1.msra.mxu0 0.0
        %1548 = vmatprep.subr.mxu0 0.0
        %1549 = vmatpush1.msra.mxu0 0.0
        %1550 = vmatprep.subr.mxu0 0.0
        %1551 = vmatpush1.msra.mxu0 0.0
        %1552 = vmatprep.subr.mxu0 0.0
        %1553 = vmatpush1.msra.mxu0 0.0
        %1554 = vmatprep.subr.mxu0 0.0
        %1555 = vmatpush1.msra.mxu0 0.0
        %1556 = vmatprep.subr.mxu0 0.0
        %1557 = vmatpush1.msra.mxu0 0.0
        %1558 = vmatprep.subr.mxu0 0.0
        %1559 = vmatpush1.msra.mxu0 0.0
        %1560 = vmatprep.subr.mxu0 0.0
        %1561 = vmatpush1.msra.mxu0 0.0
        %1562 = vmatprep.subr.mxu0 0.0
        %1563 = vmatpush1.msra.mxu0 0.0
        %1564 = vmatprep.subr.mxu0 0.0
        %1565 = vmatpush1.msra.mxu0 0.0
        %1566 = vmatprep.subr.mxu0 0.0
        %1567 = vmatpush1.msra.mxu0 0.0
        %1568 = vmatprep.subr.mxu0 0.0
        %1569 = vmatpush1.msra.mxu0 0.0
        %1570 = vmatprep.subr.mxu0 0.0
        %1571 = vmatpush1.msra.mxu0 0.0
        %1572 = vmatprep.subr.mxu0 0.0
        %1573 = vmatpush1.msra.mxu0 0.0
        %1574 = vmatprep.subr.mxu0 0.0
        %1575 = vmatpush1.msra.mxu0 0.0
        %1576 = vmatprep.subr.mxu0 0.0
        %1577 = vmatpush1.msra.mxu0 0.0
        %1578 = vmatprep.subr.mxu0 0.0
        %1579 = vmatpush1.msra.mxu0 0.0
        %1580 = vmatprep.subr.mxu0 0.0
        %1581 = vmatpush1.msra.mxu0 0.0
        %1582 = vmatprep.subr.mxu0 0.0
        %1583 = vmatpush1.msra.mxu0 0.0
        %1584 = vmatprep.subr.mxu0 0.0
        %1585 = vmatpush1.msra.mxu0 0.0
        %1586 = vmatprep.subr.mxu0 0.0
        %1587 = vmatpush1.msra.mxu0 0.0
        %1588 = vmatprep.subr.mxu0 0.0
        %1589 = vmatpush1.msra.mxu0 0.0
        %1590 = vmatprep.subr.mxu0 0.0
        %1591 = vmatpush1.msra.mxu0 0.0
        %1592 = vmatprep.subr.mxu0 0.0
        %1593 = vmatpush1.msra.mxu0 0.0
        %1594 = vmatprep.subr.mxu0 0.0
        %1595 = vmatpush1.msra.mxu0 0.0
        %1596 = vmatprep.mubr.f32.mxu0 0.0
        %1597 = vmatmul.mubr.f32.gmra.mrb[0].mxu0 %v1518
        %v1598 = vpop.f32.mrb[0].mxu0
        %v1599 = vadd.f32 0.0, %v1598
        %v1600 = vpop.f32.mrb[0].mxu0
        %1601 = vmatprep.mubr.f32.mxu0 0.0
        %1602 = vmatmul.mubr.f32.gmra.mrb[0].mxu0 %v1521
        %v1603 = vpop.f32.mrb[0].mxu0
        %v1604 = vadd.f32 0.0, %v1603
        %v1605 = vpop.f32.mrb[0].mxu0
        %1606 = vmatprep.mubr.f32.mxu0 0.0
        %1607 = vmatmul.mubr.f32.gmra.mrb[0].mxu0 %v1524
        %v1608 = vpop.f32.mrb[0].mxu0
        %v1609 = vadd.f32 0.0, %v1608
        %v1610 = vpop.f32.mrb[0].mxu0
        %1611 = vmatprep.mubr.f32.mxu0 0.0
        %1612 = vmatmul.mubr.f32.gmra.mrb[0].mxu0 %v1527
        %v1613 = vpop.f32.mrb[0].mxu0
        %v1614 = vadd.f32 0.0, %v1613
        %v1615 = vpop.f32.mrb[0].mxu0
        %1616 = vdwg.mxu0
        %s1617 = scalar_lea.vmem %s8, 96
        %v1618 = vld [vmem:[%s1617] sm:$0xff]
        %v1619 = vld [vmem:[%s1617 + $0x8] sm:$0xff]
        %v1620 = vld [vmem:[%s1617 + $0x10] sm:$0xff]
        %v1621 = vld [vmem:[%s1617 + $0x18] sm:$0xff]
        %v1622 = vld [vmem:[%s1617 + $0x20] sm:$0xff]
        %v1623 = vld [vmem:[%s1617 + $0x28] sm:$0xff]
        %v1624 = vld [vmem:[%s1617 + $0x30] sm:$0xff]
        %v1625 = vld [vmem:[%s1617 + $0x38] sm:$0xff]
        %v1626 = vld [vmem:[%s1617 + $0x40] sm:$0xff]
        %v1627 = vld [vmem:[%s1617 + $0x48] sm:$0xff]
        %v1628 = vld [vmem:[%s1617 + $0x50] sm:$0xff]
        %v1629 = vld [vmem:[%s1617 + $0x58] sm:$0xff]
        %vm1630 = vcmask 392192
        %v1632 = vsel %vm1630, %v1599, 0
        %v1635 = vsel %vm1630, %v1604, 0
        %v1638 = vsel %vm1630, %v1609, 0
        %v1641 = vsel %vm1630, %v1614, 0
        %1643 = vmatprep.subr.mxu0 %v1619
        %1644 = vmatpush1.msra.mxu0 %v1618
        %1645 = vmatprep.subr.mxu0 %v1621
        %1646 = vmatpush1.msra.mxu0 %v1620
        %1647 = vmatprep.subr.mxu0 %v1623
        %1648 = vmatpush1.msra.mxu0 %v1622
        %1649 = vmatprep.subr.mxu0 %v1625
        %1650 = vmatpush1.msra.mxu0 %v1624
        %1651 = vmatprep.subr.mxu0 %v1627
        %1652 = vmatpush1.msra.mxu0 %v1626
        %1653 = vmatprep.subr.mxu0 %v1629
        %1654 = vmatpush1.msra.mxu0 %v1628
        %1655 = vmatprep.subr.mxu0 0.0
        %1656 = vmatpush1.msra.mxu0 0.0
        %1657 = vmatprep.subr.mxu0 0.0
        %1658 = vmatpush1.msra.mxu0 0.0
        %1659 = vmatprep.subr.mxu0 0.0
        %1660 = vmatpush1.msra.mxu0 0.0
        %1661 = vmatprep.subr.mxu0 0.0
        %1662 = vmatpush1.msra.mxu0 0.0
        %1663 = vmatprep.subr.mxu0 0.0
        %1664 = vmatpush1.msra.mxu0 0.0
        %1665 = vmatprep.subr.mxu0 0.0
        %1666 = vmatpush1.msra.mxu0 0.0
        %1667 = vmatprep.subr.mxu0 0.0
        %1668 = vmatpush1.msra.mxu0 0.0
        %1669 = vmatprep.subr.mxu0 0.0
        %1670 = vmatpush1.msra.mxu0 0.0
        %1671 = vmatprep.subr.mxu0 0.0
        %1672 = vmatpush1.msra.mxu0 0.0
        %1673 = vmatprep.subr.mxu0 0.0
        %1674 = vmatpush1.msra.mxu0 0.0
        %1675 = vmatprep.subr.mxu0 0.0
        %1676 = vmatpush1.msra.mxu0 0.0
        %1677 = vmatprep.subr.mxu0 0.0
        %1678 = vmatpush1.msra.mxu0 0.0
        %1679 = vmatprep.subr.mxu0 0.0
        %1680 = vmatpush1.msra.mxu0 0.0
        %1681 = vmatprep.subr.mxu0 0.0
        %1682 = vmatpush1.msra.mxu0 0.0
        %1683 = vmatprep.subr.mxu0 0.0
        %1684 = vmatpush1.msra.mxu0 0.0
        %1685 = vmatprep.subr.mxu0 0.0
        %1686 = vmatpush1.msra.mxu0 0.0
        %1687 = vmatprep.subr.mxu0 0.0
        %1688 = vmatpush1.msra.mxu0 0.0
        %1689 = vmatprep.subr.mxu0 0.0
        %1690 = vmatpush1.msra.mxu0 0.0
        %1691 = vmatprep.subr.mxu0 0.0
        %1692 = vmatpush1.msra.mxu0 0.0
        %1693 = vmatprep.subr.mxu0 0.0
        %1694 = vmatpush1.msra.mxu0 0.0
        %1695 = vmatprep.subr.mxu0 0.0
        %1696 = vmatpush1.msra.mxu0 0.0
        %1697 = vmatprep.subr.mxu0 0.0
        %1698 = vmatpush1.msra.mxu0 0.0
        %1699 = vmatprep.subr.mxu0 0.0
        %1700 = vmatpush1.msra.mxu0 0.0
        %1701 = vmatprep.subr.mxu0 0.0
        %1702 = vmatpush1.msra.mxu0 0.0
        %1703 = vmatprep.subr.mxu0 0.0
        %1704 = vmatpush1.msra.mxu0 0.0
        %1705 = vmatprep.subr.mxu0 0.0
        %1706 = vmatpush1.msra.mxu0 0.0
        %1707 = vmatprep.mubr.f32.mxu0 0.0
        %1708 = vmatmul.mubr.f32.gmra.mrb[0].mxu0 %v1632
        %v1709 = vpop.f32.mrb[0].mxu0
        %v1710 = vadd.f32 0.0, %v1709
        %v1711 = vpop.f32.mrb[0].mxu0
        %v1712 = vadd.f32 0.0, %v1711
        %1713 = vmatprep.mubr.f32.mxu0 0.0
        %1714 = vmatmul.mubr.f32.gmra.mrb[0].mxu0 %v1635
        %v1715 = vpop.f32.mrb[0].mxu0
        %v1716 = vadd.f32 0.0, %v1715
        %v1717 = vpop.f32.mrb[0].mxu0
        %v1718 = vadd.f32 0.0, %v1717
        %1719 = vmatprep.mubr.f32.mxu0 0.0
        %1720 = vmatmul.mubr.f32.gmra.mrb[0].mxu0 %v1638
        %v1721 = vpop.f32.mrb[0].mxu0
        %v1722 = vadd.f32 0.0, %v1721
        %v1723 = vpop.f32.mrb[0].mxu0
        %v1724 = vadd.f32 0.0, %v1723
        %1725 = vmatprep.mubr.f32.mxu0 0.0
        %1726 = vmatmul.mubr.f32.gmra.mrb[0].mxu0 %v1641
        %v1727 = vpop.f32.mrb[0].mxu0
        %v1728 = vadd.f32 0.0, %v1727
        %v1729 = vpop.f32.mrb[0].mxu0
        %v1730 = vadd.f32 0.0, %v1729
        %1731 = vdwg.mxu0
        %v1733 = vsel %vm1630, %v1492, 0
        %v1736 = vsel %vm1630, %v1493, 0
        %v1739 = vsel %vm1630, %v1494, 0
        %v1741 = vsel %vm1630, %v1495, 0
        %1743 = vmatprep.subr.mxu0 %v1502
        %1744 = vmatpush1.msra.mxu0 %v1501
        %1745 = vmatprep.subr.mxu0 %v1504
        %1746 = vmatpush1.msra.mxu0 %v1503
        %1747 = vmatprep.subr.mxu0 %v1506
        %1748 = vmatpush1.msra.mxu0 %v1505
        %1749 = vmatprep.subr.mxu0 %v1508
        %1750 = vmatpush1.msra.mxu0 %v1507
        %1751 = vmatprep.subr.mxu0 %v1510
        %1752 = vmatpush1.msra.mxu0 %v1509
        %1753 = vmatprep.subr.mxu0 %v1512
        %1754 = vmatpush1.msra.mxu0 %v1511
        %1755 = vmatprep.subr.mxu0 0.0
        %1756 = vmatpush1.msra.mxu0 0.0
        %1757 = vmatprep.subr.mxu0 0.0
        %1758 = vmatpush1.msra.mxu0 0.0
        %1759 = vmatprep.subr.mxu0 0.0
        %1760 = vmatpush1.msra.mxu0 0.0
        %1761 = vmatprep.subr.mxu0 0.0
        %1762 = vmatpush1.msra.mxu0 0.0
        %1763 = vmatprep.subr.mxu0 0.0
        %1764 = vmatpush1.msra.mxu0 0.0
        %1765 = vmatprep.subr.mxu0 0.0
        %1766 = vmatpush1.msra.mxu0 0.0
        %1767 = vmatprep.subr.mxu0 0.0
        %1768 = vmatpush1.msra.mxu0 0.0
        %1769 = vmatprep.subr.mxu0 0.0
        %1770 = vmatpush1.msra.mxu0 0.0
        %1771 = vmatprep.subr.mxu0 0.0
        %1772 = vmatpush1.msra.mxu0 0.0
        %1773 = vmatprep.subr.mxu0 0.0
        %1774 = vmatpush1.msra.mxu0 0.0
        %1775 = vmatprep.subr.mxu0 0.0
        %1776 = vmatpush1.msra.mxu0 0.0
        %1777 = vmatprep.subr.mxu0 0.0
        %1778 = vmatpush1.msra.mxu0 0.0
        %1779 = vmatprep.subr.mxu0 0.0
        %1780 = vmatpush1.msra.mxu0 0.0
        %1781 = vmatprep.subr.mxu0 0.0
        %1782 = vmatpush1.msra.mxu0 0.0
        %1783 = vmatprep.subr.mxu0 0.0
        %1784 = vmatpush1.msra.mxu0 0.0
        %1785 = vmatprep.subr.mxu0 0.0
        %1786 = vmatpush1.msra.mxu0 0.0
        %1787 = vmatprep.subr.mxu0 0.0
        %1788 = vmatpush1.msra.mxu0 0.0
        %1789 = vmatprep.subr.mxu0 0.0
        %1790 = vmatpush1.msra.mxu0 0.0
        %1791 = vmatprep.subr.mxu0 0.0
        %1792 = vmatpush1.msra.mxu0 0.0
        %1793 = vmatprep.subr.mxu0 0.0
        %1794 = vmatpush1.msra.mxu0 0.0
        %1795 = vmatprep.subr.mxu0 0.0
        %1796 = vmatpush1.msra.mxu0 0.0
        %1797 = vmatprep.subr.mxu0 0.0
        %1798 = vmatpush1.msra.mxu0 0.0
        %1799 = vmatprep.subr.mxu0 0.0
        %1800 = vmatpush1.msra.mxu0 0.0
        %1801 = vmatprep.subr.mxu0 0.0
        %1802 = vmatpush1.msra.mxu0 0.0
        %1803 = vmatprep.subr.mxu0 0.0
        %1804 = vmatpush1.msra.mxu0 0.0
        %1805 = vmatprep.subr.mxu0 0.0
        %1806 = vmatpush1.msra.mxu0 0.0
        %1807 = vmatprep.mubr.f32.mxu0 0.0
        %1808 = vmatmul.mubr.f32.gmra.mrb[0].mxu0 %v1733
        %v1809 = vpop.f32.mrb[0].mxu0
        %v1810 = vadd.f32 %v1710, %v1809
        %v1811 = vpop.f32.mrb[0].mxu0
        %v1812 = vadd.f32 %v1712, %v1811
        %1813 = vmatprep.mubr.f32.mxu0 0.0
        %1814 = vmatmul.mubr.f32.gmra.mrb[0].mxu0 %v1736
        %v1815 = vpop.f32.mrb[0].mxu0
        %v1816 = vadd.f32 %v1716, %v1815
        %v1817 = vpop.f32.mrb[0].mxu0
        %v1818 = vadd.f32 %v1718, %v1817
        %1819 = vmatprep.mubr.f32.mxu0 0.0
        %1820 = vmatmul.mubr.f32.gmra.mrb[0].mxu0 %v1739
        %v1821 = vpop.f32.mrb[0].mxu0
        %v1822 = vadd.f32 %v1722, %v1821
        %v1823 = vpop.f32.mrb[0].mxu0
        %v1824 = vadd.f32 %v1724, %v1823
        %1825 = vmatprep.mubr.f32.mxu0 0.0
        %1826 = vmatmul.mubr.f32.gmra.mrb[0].mxu0 %v1741
        %v1827 = vpop.f32.mrb[0].mxu0
        %v1828 = vadd.f32 %v1728, %v1827
        %v1829 = vpop.f32.mrb[0].mxu0
        %v1830 = vadd.f32 %v1730, %v1829
        %1831 = vdwg.mxu0
        %s1832 = scalar_lea.vmem %s21, 32
        %v1833 = vld [vmem:[%s1832] sm:$0xff]
        %v1834 = vld [vmem:[%s1832 + $0x8] sm:$0xff]
        %v1835 = vld [vmem:[%s1832 + $0x10] sm:$0xff]
        %v1836 = vld [vmem:[%s1832 + $0x18] sm:$0x3f]
        %v1838 = vsel %vm871, %v1833, 0
        %v1841 = vsel %vm871, %v1834, 0
        %v1844 = vsel %vm871, %v1835, 0
        %v1847 = vsel %vm871, %v1836, 0
        %1849 = vmatprep.subr.mxu0 0.0
        %1850 = vmatpush1.msra.mxu0 %v1492
        %1851 = vmatprep.subr.mxu0 0.0
        %1852 = vmatpush1.msra.mxu0 %v1493
        %1853 = vmatprep.subr.mxu0 0.0
        %1854 = vmatpush1.msra.mxu0 %v1494
        %1855 = vmatprep.subr.mxu0 0.0
        %1856 = vmatpush1.msra.mxu0 %v1530
        %1857 = vmatprep.subr.mxu0 0.0
        %1858 = vmatpush1.msra.mxu0 0.0
        %1859 = vmatprep.subr.mxu0 0.0
        %1860 = vmatpush1.msra.mxu0 0.0
        %1861 = vmatprep.subr.mxu0 0.0
        %1862 = vmatpush1.msra.mxu0 0.0
        %1863 = vmatprep.subr.mxu0 0.0
        %1864 = vmatpush1.msra.mxu0 0.0
        %1865 = vmatprep.subr.mxu0 0.0
        %1866 = vmatpush1.msra.mxu0 0.0
        %1867 = vmatprep.subr.mxu0 0.0
        %1868 = vmatpush1.msra.mxu0 0.0
        %1869 = vmatprep.subr.mxu0 0.0
        %1870 = vmatpush1.msra.mxu0 0.0
        %1871 = vmatprep.subr.mxu0 0.0
        %1872 = vmatpush1.msra.mxu0 0.0
        %1873 = vmatprep.subr.mxu0 0.0
        %1874 = vmatpush1.msra.mxu0 0.0
        %1875 = vmatprep.subr.mxu0 0.0
        %1876 = vmatpush1.msra.mxu0 0.0
        %1877 = vmatprep.subr.mxu0 0.0
        %1878 = vmatpush1.msra.mxu0 0.0
        %1879 = vmatprep.subr.mxu0 0.0
        %1880 = vmatpush1.msra.mxu0 0.0
        %1881 = vmatprep.subr.mxu0 0.0
        %1882 = vmatpush1.msra.mxu0 0.0
        %1883 = vmatprep.subr.mxu0 0.0
        %1884 = vmatpush1.msra.mxu0 0.0
        %1885 = vmatprep.subr.mxu0 0.0
        %1886 = vmatpush1.msra.mxu0 0.0
        %1887 = vmatprep.subr.mxu0 0.0
        %1888 = vmatpush1.msra.mxu0 0.0
        %1889 = vmatprep.subr.mxu0 0.0
        %1890 = vmatpush1.msra.mxu0 0.0
        %1891 = vmatprep.subr.mxu0 0.0
        %1892 = vmatpush1.msra.mxu0 0.0
        %1893 = vmatprep.subr.mxu0 0.0
        %1894 = vmatpush1.msra.mxu0 0.0
        %1895 = vmatprep.subr.mxu0 0.0
        %1896 = vmatpush1.msra.mxu0 0.0
        %1897 = vmatprep.subr.mxu0 0.0
        %1898 = vmatpush1.msra.mxu0 0.0
        %1899 = vmatprep.subr.mxu0 0.0
        %1900 = vmatpush1.msra.mxu0 0.0
        %1901 = vmatprep.subr.mxu0 0.0
        %1902 = vmatpush1.msra.mxu0 0.0
        %1903 = vmatprep.subr.mxu0 0.0
        %1904 = vmatpush1.msra.mxu0 0.0
        %1905 = vmatprep.subr.mxu0 0.0
        %1906 = vmatpush1.msra.mxu0 0.0
        %1907 = vmatprep.subr.mxu0 0.0
        %1908 = vmatpush1.msra.mxu0 0.0
        %1909 = vmatprep.subr.mxu0 0.0
        %1910 = vmatpush1.msra.mxu0 0.0
        %1911 = vmatprep.subr.mxu0 0.0
        %1912 = vmatpush1.msra.mxu0 0.0
        %1913 = vmatprep.mubr.f32.mxu0 0.0
        %1914 = vmatmul.mubr.f32.gmra.mrb[0].mxu0 %v1838
        %v1915 = vpop.f32.mrb[0].mxu0
        %v1916 = vadd.f32 0.0, %v1915
        %v1917 = vpop.f32.mrb[0].mxu0
        %1918 = vmatprep.mubr.f32.mxu0 0.0
        %1919 = vmatmul.mubr.f32.gmra.mrb[0].mxu0 %v1841
        %v1920 = vpop.f32.mrb[0].mxu0
        %v1921 = vadd.f32 0.0, %v1920
        %v1922 = vpop.f32.mrb[0].mxu0
        %1923 = vmatprep.mubr.f32.mxu0 0.0
        %1924 = vmatmul.mubr.f32.gmra.mrb[0].mxu0 %v1844
        %v1925 = vpop.f32.mrb[0].mxu0
        %v1926 = vadd.f32 0.0, %v1925
        %v1927 = vpop.f32.mrb[0].mxu0
        %1928 = vmatprep.mubr.f32.mxu0 0.0
        %1929 = vmatmul.mubr.f32.gmra.mrb[0].mxu0 %v1847
        %v1930 = vpop.f32.mrb[0].mxu0
        %v1931 = vadd.f32 0.0, %v1930
        %v1932 = vpop.f32.mrb[0].mxu0
        %1933 = vdwg.mxu0
        %v1934 = vld [vmem:[%s8] sm:$0xff]
        %v1935 = vld [vmem:[%s8 + $0x8] sm:$0xff]
        %v1936 = vld [vmem:[%s8 + $0x10] sm:$0xff]
        %v1937 = vld [vmem:[%s8 + $0x18] sm:$0xff]
        %v1938 = vld [vmem:[%s8 + $0x20] sm:$0xff]
        %v1939 = vld [vmem:[%s8 + $0x28] sm:$0xff]
        %v1940 = vld [vmem:[%s8 + $0x30] sm:$0xff]
        %v1941 = vld [vmem:[%s8 + $0x38] sm:$0xff]
        %v1942 = vld [vmem:[%s8 + $0x40] sm:$0xff]
        %v1943 = vld [vmem:[%s8 + $0x48] sm:$0xff]
        %v1944 = vld [vmem:[%s8 + $0x50] sm:$0xff]
        %v1945 = vld [vmem:[%s8 + $0x58] sm:$0xff]
        %v1947 = vsel %vm1630, %v1916, 0
        %v1950 = vsel %vm1630, %v1921, 0
        %v1953 = vsel %vm1630, %v1926, 0
        %v1956 = vsel %vm1630, %v1931, 0
        %1958 = vmatprep.subr.mxu0 %v1935
        %1959 = vmatpush1.msra.mxu0 %v1934
        %1960 = vmatprep.subr.mxu0 %v1937
        %1961 = vmatpush1.msra.mxu0 %v1936
        %1962 = vmatprep.subr.mxu0 %v1939
        %1963 = vmatpush1.msra.mxu0 %v1938
        %1964 = vmatprep.subr.mxu0 %v1941
        %1965 = vmatpush1.msra.mxu0 %v1940
        %1966 = vmatprep.subr.mxu0 %v1943
        %1967 = vmatpush1.msra.mxu0 %v1942
        %1968 = vmatprep.subr.mxu0 %v1945
        %1969 = vmatpush1.msra.mxu0 %v1944
        %1970 = vmatprep.subr.mxu0 0.0
        %1971 = vmatpush1.msra.mxu0 0.0
        %1972 = vmatprep.subr.mxu0 0.0
        %1973 = vmatpush1.msra.mxu0 0.0
        %1974 = vmatprep.subr.mxu0 0.0
        %1975 = vmatpush1.msra.mxu0 0.0
        %1976 = vmatprep.subr.mxu0 0.0
        %1977 = vmatpush1.msra.mxu0 0.0
        %1978 = vmatprep.subr.mxu0 0.0
        %1979 = vmatpush1.msra.mxu0 0.0
        %1980 = vmatprep.subr.mxu0 0.0
        %1981 = vmatpush1.msra.mxu0 0.0
        %1982 = vmatprep.subr.mxu0 0.0
        %1983 = vmatpush1.msra.mxu0 0.0
        %1984 = vmatprep.subr.mxu0 0.0
        %1985 = vmatpush1.msra.mxu0 0.0
        %1986 = vmatprep.subr.mxu0 0.0
        %1987 = vmatpush1.msra.mxu0 0.0
        %1988 = vmatprep.subr.mxu0 0.0
        %1989 = vmatpush1.msra.mxu0 0.0
        %1990 = vmatprep.subr.mxu0 0.0
        %1991 = vmatpush1.msra.mxu0 0.0
        %1992 = vmatprep.subr.mxu0 0.0
        %1993 = vmatpush1.msra.mxu0 0.0
        %1994 = vmatprep.subr.mxu0 0.0
        %1995 = vmatpush1.msra.mxu0 0.0
        %1996 = vmatprep.subr.mxu0 0.0
        %1997 = vmatpush1.msra.mxu0 0.0
        %1998 = vmatprep.subr.mxu0 0.0
        %1999 = vmatpush1.msra.mxu0 0.0
        %2000 = vmatprep.subr.mxu0 0.0
        %2001 = vmatpush1.msra.mxu0 0.0
        %2002 = vmatprep.subr.mxu0 0.0
        %2003 = vmatpush1.msra.mxu0 0.0
        %2004 = vmatprep.subr.mxu0 0.0
        %2005 = vmatpush1.msra.mxu0 0.0
        %2006 = vmatprep.subr.mxu0 0.0
        %2007 = vmatpush1.msra.mxu0 0.0
        %2008 = vmatprep.subr.mxu0 0.0
        %2009 = vmatpush1.msra.mxu0 0.0
        %2010 = vmatprep.subr.mxu0 0.0
        %2011 = vmatpush1.msra.mxu0 0.0
        %2012 = vmatprep.subr.mxu0 0.0
        %2013 = vmatpush1.msra.mxu0 0.0
        %2014 = vmatprep.subr.mxu0 0.0
        %2015 = vmatpush1.msra.mxu0 0.0
        %2016 = vmatprep.subr.mxu0 0.0
        %2017 = vmatpush1.msra.mxu0 0.0
        %2018 = vmatprep.subr.mxu0 0.0
        %2019 = vmatpush1.msra.mxu0 0.0
        %2020 = vmatprep.subr.mxu0 0.0
        %2021 = vmatpush1.msra.mxu0 0.0
        %2022 = vmatprep.mubr.f32.mxu0 0.0
        %2023 = vmatmul.mubr.f32.gmra.mrb[0].mxu0 %v1947
        %v2024 = vpop.f32.mrb[0].mxu0
        %v2025 = vadd.f32 0.0, %v2024
        %v2026 = vpop.f32.mrb[0].mxu0
        %v2027 = vadd.f32 0.0, %v2026
        %2028 = vmatprep.mubr.f32.mxu0 0.0
        %2029 = vmatmul.mubr.f32.gmra.mrb[0].mxu0 %v1950
        %v2030 = vpop.f32.mrb[0].mxu0
        %v2031 = vadd.f32 0.0, %v2030
        %v2032 = vpop.f32.mrb[0].mxu0
        %v2033 = vadd.f32 0.0, %v2032
        %2034 = vmatprep.mubr.f32.mxu0 0.0
        %2035 = vmatmul.mubr.f32.gmra.mrb[0].mxu0 %v1953
        %v2036 = vpop.f32.mrb[0].mxu0
        %v2037 = vadd.f32 0.0, %v2036
        %v2038 = vpop.f32.mrb[0].mxu0
        %v2039 = vadd.f32 0.0, %v2038
        %2040 = vmatprep.mubr.f32.mxu0 0.0
        %2041 = vmatmul.mubr.f32.gmra.mrb[0].mxu0 %v1956
        %v2042 = vpop.f32.mrb[0].mxu0
        %v2043 = vadd.f32 0.0, %v2042
        %v2044 = vpop.f32.mrb[0].mxu0
        %v2045 = vadd.f32 0.0, %v2044
        %2046 = vdwg.mxu0
        %v2047 = vadd.f32 %v1810, %v2025
        %v2048 = vadd.f32 %v1812, %v2027
        %v2049 = vadd.f32 %v1816, %v2031
        %v2050 = vadd.f32 %v1818, %v2033
        %v2051 = vadd.f32 %v1822, %v2037
        %v2052 = vadd.f32 %v1824, %v2039
        %v2053 = vadd.f32 %v1828, %v2043
        %v2054 = vadd.f32 %v1830, %v2045
        %v2055 = vld [vmem:[%s9] sm:$0x3]
        %v2057 = vlaneseq
        %v2058 = vshrl.u32 %v2057, 7
        %v2059 = vsub.s32 0, %v2058
        %v2060 = vrot.slane %v2055, %v2059
        %v2061 = vlaneseq
        %v2062 = vshrl.u32 %v2061, 7
        %v2063 = vsub.s32 1, %v2062
        %v2064 = vrot.slane %v2055, %v2063
        %v2067 = vadd.f32 %v2047, %v2060
        %v2068 = vadd.f32 %v2048, %v2064
        %v2069 = vadd.f32 %v2049, %v2060
        %v2070 = vadd.f32 %v2050, %v2064
        %v2071 = vadd.f32 %v2051, %v2060
        %v2072 = vadd.f32 %v2052, %v2064
        %v2073 = vadd.f32 %v2053, %v2060
        %v2074 = vadd.f32 %v2054, %v2064
        %vm2075 = vcmp.gt.f32.partialorder %v2067, 0.0
        %vm2076 = vcmp.gt.f32.partialorder %v2068, 0.0
        %vm2077 = vcmp.gt.f32.partialorder %v2069, 0.0
        %vm2078 = vcmp.gt.f32.partialorder %v2070, 0.0
        %vm2079 = vcmp.gt.f32.partialorder %v2071, 0.0
        %vm2080 = vcmp.gt.f32.partialorder %v2072, 0.0
        %vm2081 = vcmp.gt.f32.partialorder %v2073, 0.0
        %vm2082 = vcmp.gt.f32.partialorder %v2074, 0.0
        %v2083 = vmul.f32 %v2067, 0.01
        %v2084 = vmul.f32 %v2068, 0.01
        %v2085 = vmul.f32 %v2069, 0.01
        %v2086 = vmul.f32 %v2070, 0.01
        %v2087 = vmul.f32 %v2071, 0.01
        %v2088 = vmul.f32 %v2072, 0.01
        %v2089 = vmul.f32 %v2073, 0.01
        %v2090 = vmul.f32 %v2074, 0.01
        %v2091 = vsel %vm2075, %v2067, %v2083
        %v2092 = vsel %vm2076, %v2068, %v2084
        %v2093 = vsel %vm2077, %v2069, %v2085
        %v2094 = vsel %vm2078, %v2070, %v2086
        %v2095 = vsel %vm2079, %v2071, %v2087
        %v2096 = vsel %vm2080, %v2072, %v2088
        %v2097 = vsel %vm2081, %v2073, %v2089
        %v2098 = vsel %vm2082, %v2074, %v2090
        %v2099 = vadd.f32 %v2091, %v2093
        %v2100 = vadd.f32 %v2099, %v2095
        %v2101 = vsel %vm884, %v2097, 0.0
        %v2102 = vadd.f32 %v2100, %v2101
        %v2103 = vrot.slane %v2102, 4
        %v2104 = vadd.f32 %v2102, %v2103
        %v2105 = vrot.slane %v2104, 2
        %v2106 = vadd.f32 %v2104, %v2105
        %v2107 = vrot.slane %v2106, 1
        %v2108 = vadd.f32 %v2106, %v2107
        %v2109 = vadd.f32 %v2092, %v2094
        %v2110 = vadd.f32 %v2109, %v2096
        %v2111 = vsel %vm884, %v2098, 0.0
        %v2112 = vadd.f32 %v2110, %v2111
        %v2113 = vrot.slane %v2112, 4
        %v2114 = vadd.f32 %v2112, %v2113
        %v2115 = vrot.slane %v2114, 2
        %v2116 = vadd.f32 %v2114, %v2115
        %v2117 = vrot.slane %v2116, 1
        %v2118 = vadd.f32 %v2116, %v2117
        %v2119 = vrcp.pop 30.0
        %v2120 = vmul.f32 %v2108, %v2119
        %v2121 = vmul.f32 %v2118, %v2119
        %v2122 = vsub.f32 %v2091, %v2120
        %v2123 = vsub.f32 %v2092, %v2121
        %v2124 = vsub.f32 %v2093, %v2120
        %v2125 = vsub.f32 %v2094, %v2121
        %v2126 = vsub.f32 %v2095, %v2120
        %v2127 = vsub.f32 %v2096, %v2121
        %v2128 = vsub.f32 %v2097, %v2120
        %v2129 = vsub.f32 %v2098, %v2121
        %v2130 = vmul.f32 %v2122, %v2122
        %v2131 = vmul.f32 %v2123, %v2123
        %v2132 = vmul.f32 %v2124, %v2124
        %v2133 = vmul.f32 %v2125, %v2125
        %v2134 = vmul.f32 %v2126, %v2126
        %v2135 = vmul.f32 %v2127, %v2127
        %v2136 = vmul.f32 %v2128, %v2128
        %v2137 = vmul.f32 %v2129, %v2129
        %v2138 = vadd.f32 %v2130, %v2132
        %v2139 = vadd.f32 %v2138, %v2134
        %v2140 = vsel %vm884, %v2136, 0.0
        %v2141 = vadd.f32 %v2139, %v2140
        %v2142 = vrot.slane %v2141, 4
        %v2143 = vadd.f32 %v2141, %v2142
        %v2144 = vrot.slane %v2143, 2
        %v2145 = vadd.f32 %v2143, %v2144
        %v2146 = vrot.slane %v2145, 1
        %v2147 = vadd.f32 %v2145, %v2146
        %v2148 = vadd.f32 %v2131, %v2133
        %v2149 = vadd.f32 %v2148, %v2135
        %v2150 = vsel %vm884, %v2137, 0.0
        %v2151 = vadd.f32 %v2149, %v2150
        %v2152 = vrot.slane %v2151, 4
        %v2153 = vadd.f32 %v2151, %v2152
        %v2154 = vrot.slane %v2153, 2
        %v2155 = vadd.f32 %v2153, %v2154
        %v2156 = vrot.slane %v2155, 1
        %v2157 = vadd.f32 %v2155, %v2156
        %v2158 = vmul.f32 %v2147, %v2119
        %v2159 = vmul.f32 %v2157, %v2119
        %v2160 = vadd.f32 %v2158, 1e-05
        %v2161 = vadd.f32 %v2159, 1e-05
        %v2162 = vrsqrt.pop %v2160
        %v2163 = vrsqrt.pop %v2161
        %v2164 = vmul.f32 %v2122, %v2162
        %v2165 = vmul.f32 %v2123, %v2163
        %v2166 = vmul.f32 %v2124, %v2162
        %v2167 = vmul.f32 %v2125, %v2163
        %v2168 = vmul.f32 %v2126, %v2162
        %v2169 = vmul.f32 %v2127, %v2163
        %v2170 = vmul.f32 %v2128, %v2162
        %v2171 = vmul.f32 %v2129, %v2163
        %2173 = vset.pattern.permute.xlu0 0
        %2174 = vperm.xlu0 %2173, %v1496
        %v2175 = vpop.permute.xlu0 %2174
        %2178 = vset.pattern.permute.xlu0 0
        %2179 = vperm.xlu0 %2178, %v1497
        %v2180 = vpop.permute.xlu0 %2179
        %2183 = vset.pattern.permute.xlu0 0
        %2184 = vperm.xlu0 %2183, %v1498
        %v2185 = vpop.permute.xlu0 %2184
        %2188 = vset.pattern.permute.xlu0 0
        %2189 = vperm.xlu0 %2188, %v1499
        %v2190 = vpop.permute.xlu0 %2189
        %v2192 = vmul.f32 %v2164, %v2175
        %v2193 = vmul.f32 %v2165, %v2175
        %v2194 = vmul.f32 %v2166, %v2180
        %v2195 = vmul.f32 %v2167, %v2180
        %v2196 = vmul.f32 %v2168, %v2185
        %v2197 = vmul.f32 %v2169, %v2185
        %v2198 = vmul.f32 %v2170, %v2190
        %v2199 = vmul.f32 %v2171, %v2190
        %2200 = vset.pattern.permute.xlu0 1
        %2201 = vperm.xlu0 %2200, %v1496
        %v2202 = vpop.permute.xlu0 %2201
        %2204 = vset.pattern.permute.xlu0 1
        %2205 = vperm.xlu0 %2204, %v1497
        %v2206 = vpop.permute.xlu0 %2205
        %2208 = vset.pattern.permute.xlu0 1
        %2209 = vperm.xlu0 %2208, %v1498
        %v2210 = vpop.permute.xlu0 %2209
        %2212 = vset.pattern.permute.xlu0 1
        %2213 = vperm.xlu0 %2212, %v1499
        %v2214 = vpop.permute.xlu0 %2213
        %v2216 = vadd.f32 %v2192, %v2202
        %v2217 = vadd.f32 %v2193, %v2202
        %v2218 = vadd.f32 %v2194, %v2206
        %v2219 = vadd.f32 %v2195, %v2206
        %v2220 = vadd.f32 %v2196, %v2210
        %v2221 = vadd.f32 %v2197, %v2210
        %v2222 = vadd.f32 %v2198, %v2214
        %v2223 = vadd.f32 %v2199, %v2214
        %v2224 = vld [vmem:[%s10] sm:$0xff]
        %v2225 = vld [vmem:[%s10 + $0x8] sm:$0xff]
        %v2226 = vld [vmem:[%s10 + $0x10] sm:$0xff]
        %v2227 = vld [vmem:[%s10 + $0x18] sm:$0xff]
        %v2228 = vld [vmem:[%s10 + $0x20] sm:$0xff]
        %v2229 = vld [vmem:[%s10 + $0x28] sm:$0xff]
        %v2230 = vld [vmem:[%s10 + $0x30] sm:$0xff]
        %v2231 = vld [vmem:[%s10 + $0x38] sm:$0xff]
        %v2232 = vld [vmem:[%s10 + $0x40] sm:$0xff]
        %v2233 = vld [vmem:[%s10 + $0x48] sm:$0xff]
        %v2234 = vld [vmem:[%s10 + $0x50] sm:$0xff]
        %v2235 = vld [vmem:[%s10 + $0x58] sm:$0xff]
        %v2236 = vld [vmem:[%s11] sm:$0x3]
        %v2238 = vlaneseq
        %v2239 = vshrl.u32 %v2238, 7
        %v2240 = vsub.s32 0, %v2239
        %v2241 = vrot.slane %v2236, %v2240
        %v2242 = vlaneseq
        %v2243 = vshrl.u32 %v2242, 7
        %v2244 = vsub.s32 1, %v2243
        %v2245 = vrot.slane %v2236, %v2244
        %2248 = vmatprep.subr.mxu0 %v2225
        %2249 = vmatpush1.msra.mxu0 %v2224
        %2250 = vmatprep.subr.mxu0 %v2227
        %2251 = vmatpush1.msra.mxu0 %v2226
        %2252 = vmatprep.subr.mxu0 %v2229
        %2253 = vmatpush1.msra.mxu0 %v2228
        %2254 = vmatprep.subr.mxu0 %v2231
        %2255 = vmatpush1.msra.mxu0 %v2230
        %2256 = vmatprep.subr.mxu0 %v2233
        %2257 = vmatpush1.msra.mxu0 %v2232
        %2258 = vmatprep.subr.mxu0 %v2235
        %2259 = vmatpush1.msra.mxu0 %v2234
        %2260 = vmatprep.subr.mxu0 0.0
        %2261 = vmatpush1.msra.mxu0 0.0
        %2262 = vmatprep.subr.mxu0 0.0
        %2263 = vmatpush1.msra.mxu0 0.0
        %2264 = vmatprep.subr.mxu0 0.0
        %2265 = vmatpush1.msra.mxu0 0.0
        %2266 = vmatprep.subr.mxu0 0.0
        %2267 = vmatpush1.msra.mxu0 0.0
        %2268 = vmatprep.subr.mxu0 0.0
        %2269 = vmatpush1.msra.mxu0 0.0
        %2270 = vmatprep.subr.mxu0 0.0
        %2271 = vmatpush1.msra.mxu0 0.0
        %2272 = vmatprep.subr.mxu0 0.0
        %2273 = vmatpush1.msra.mxu0 0.0
        %2274 = vmatprep.subr.mxu0 0.0
        %2275 = vmatpush1.msra.mxu0 0.0
        %2276 = vmatprep.subr.mxu0 0.0
        %2277 = vmatpush1.msra.mxu0 0.0
        %2278 = vmatprep.subr.mxu0 0.0
        %2279 = vmatpush1.msra.mxu0 0.0
        %2280 = vmatprep.subr.mxu0 0.0
        %2281 = vmatpush1.msra.mxu0 0.0
        %2282 = vmatprep.subr.mxu0 0.0
        %2283 = vmatpush1.msra.mxu0 0.0
        %2284 = vmatprep.subr.mxu0 0.0
        %2285 = vmatpush1.msra.mxu0 0.0
        %2286 = vmatprep.subr.mxu0 0.0
        %2287 = vmatpush1.msra.mxu0 0.0
        %2288 = vmatprep.subr.mxu0 0.0
        %2289 = vmatpush1.msra.mxu0 0.0
        %2290 = vmatprep.subr.mxu0 0.0
        %2291 = vmatpush1.msra.mxu0 0.0
        %2292 = vmatprep.subr.mxu0 0.0
        %2293 = vmatpush1.msra.mxu0 0.0
        %2294 = vmatprep.subr.mxu0 0.0
        %2295 = vmatpush1.msra.mxu0 0.0
        %2296 = vmatprep.subr.mxu0 0.0
        %2297 = vmatpush1.msra.mxu0 0.0
        %2298 = vmatprep.subr.mxu0 0.0
        %2299 = vmatpush1.msra.mxu0 0.0
        %2300 = vmatprep.subr.mxu0 0.0
        %2301 = vmatpush1.msra.mxu0 0.0
        %2302 = vmatprep.subr.mxu0 0.0
        %2303 = vmatpush1.msra.mxu0 0.0
        %2304 = vmatprep.subr.mxu0 0.0
        %2305 = vmatpush1.msra.mxu0 0.0
        %2306 = vmatprep.subr.mxu0 0.0
        %2307 = vmatpush1.msra.mxu0 0.0
        %2308 = vmatprep.subr.mxu0 0.0
        %2309 = vmatpush1.msra.mxu0 0.0
        %2310 = vmatprep.subr.mxu0 0.0
        %2311 = vmatpush1.msra.mxu0 0.0
        %2312 = vmatprep.mubr.f32.mxu0 0.0
        %2313 = vmatmul.mubr.f32.gmra.mrb[0].mxu0 %v1733
        %v2314 = vpop.f32.mrb[0].mxu0
        %v2315 = vadd.f32 %v2241, %v2314
        %v2316 = vpop.f32.mrb[0].mxu0
        %v2317 = vadd.f32 %v2245, %v2316
        %2318 = vmatprep.mubr.f32.mxu0 0.0
        %2319 = vmatmul.mubr.f32.gmra.mrb[0].mxu0 %v1736
        %v2320 = vpop.f32.mrb[0].mxu0
        %v2321 = vadd.f32 %v2241, %v2320
        %v2322 = vpop.f32.mrb[0].mxu0
        %v2323 = vadd.f32 %v2245, %v2322
        %2324 = vmatprep.mubr.f32.mxu0 0.0
        %2325 = vmatmul.mubr.f32.gmra.mrb[0].mxu0 %v1739
        %v2326 = vpop.f32.mrb[0].mxu0
        %v2327 = vadd.f32 %v2241, %v2326
        %v2328 = vpop.f32.mrb[0].mxu0
        %v2329 = vadd.f32 %v2245, %v2328
        %2330 = vmatprep.mubr.f32.mxu0 0.0
        %2331 = vmatmul.mubr.f32.gmra.mrb[0].mxu0 %v1741
        %v2332 = vpop.f32.mrb[0].mxu0
        %v2333 = vadd.f32 %v2241, %v2332
        %v2334 = vpop.f32.mrb[0].mxu0
        %v2335 = vadd.f32 %v2245, %v2334
        %2336 = vdwg.mxu0
        %v2337 = vadd.f32 %v2216, %v2315
        %v2338 = vadd.f32 %v2217, %v2317
        %v2339 = vadd.f32 %v2218, %v2321
        %v2340 = vadd.f32 %v2219, %v2323
        %v2341 = vadd.f32 %v2220, %v2327
        %v2342 = vadd.f32 %v2221, %v2329
        %v2343 = vadd.f32 %v2222, %v2333
        %v2344 = vadd.f32 %v2223, %v2335
        %v2345 = vmax.f32 %v2337, 0.0
        %v2346 = vmax.f32 %v2338, 0.0
        %v2347 = vmax.f32 %v2339, 0.0
        %v2348 = vmax.f32 %v2340, 0.0
        %v2349 = vmax.f32 %v2341, 0.0
        %v2350 = vmax.f32 %v2342, 0.0
        %v2351 = vmax.f32 %v2343, 0.0
        %v2352 = vmax.f32 %v2344, 0.0
        %s2353 = scalar_lea.vmem %s12, 512
        %v2354 = vld [vmem:[%s2353] sm:$0xff]
        %v2355 = vld [vmem:[%s2353 + $0x8] sm:$0xff]
        %v2356 = vld [vmem:[%s2353 + $0x10] sm:$0xff]
        %v2357 = vld [vmem:[%s2353 + $0x18] sm:$0xff]
        %v2358 = vld [vmem:[%s2353 + $0x20] sm:$0xff]
        %v2359 = vld [vmem:[%s2353 + $0x28] sm:$0xff]
        %v2360 = vld [vmem:[%s2353 + $0x30] sm:$0xff]
        %v2361 = vld [vmem:[%s2353 + $0x38] sm:$0xff]
        %v2362 = vld [vmem:[%s2353 + $0x40] sm:$0xff]
        %v2363 = vld [vmem:[%s2353 + $0x48] sm:$0xff]
        %v2364 = vld [vmem:[%s2353 + $0x50] sm:$0xff]
        %v2365 = vld [vmem:[%s2353 + $0x58] sm:$0xff]
        %v2366 = vld [vmem:[%s2353 + $0x60] sm:$0xff]
        %v2367 = vld [vmem:[%s2353 + $0x68] sm:$0xff]
        %v2368 = vld [vmem:[%s2353 + $0x70] sm:$0xff]
        %v2369 = vld [vmem:[%s2353 + $0x78] sm:$0xff]
        %v2370 = vld [vmem:[%s2353 + $0x80] sm:$0xff]
        %v2371 = vld [vmem:[%s2353 + $0x88] sm:$0xff]
        %v2372 = vld [vmem:[%s2353 + $0x90] sm:$0xff]
        %v2373 = vld [vmem:[%s2353 + $0x98] sm:$0xff]
        %v2374 = vld [vmem:[%s2353 + $0xa0] sm:$0xff]
        %v2375 = vld [vmem:[%s2353 + $0xa8] sm:$0xff]
        %v2376 = vld [vmem:[%s2353 + $0xb0] sm:$0xff]
        %v2377 = vld [vmem:[%s2353 + $0xb8] sm:$0xff]
        %v2378 = vld [vmem:[%s2353 + $0xc0] sm:$0xff]
        %v2379 = vld [vmem:[%s2353 + $0xc8] sm:$0xff]
        %v2380 = vld [vmem:[%s2353 + $0xd0] sm:$0xff]
        %v2381 = vld [vmem:[%s2353 + $0xd8] sm:$0xff]
        %v2382 = vld [vmem:[%s2353 + $0xe0] sm:$0xff]
        %v2383 = vld [vmem:[%s2353 + $0xe8] sm:$0xff]
        %v2384 = vld [vmem:[%s2353 + $0xf0] sm:$0xff]
        %v2385 = vld [vmem:[%s2353 + $0xf8] sm:$0xff]
        %v2387 = vsel %vm884, %v2351, 0
        %v2390 = vsel %vm884, %v2352, 0
        %2392 = vmatprep.subr.mxu0 %v2346
        %2393 = vmatpush1.msra.mxu0 %v2345
        %2394 = vmatprep.subr.mxu0 %v2348
        %2395 = vmatpush1.msra.mxu0 %v2347
        %2396 = vmatprep.subr.mxu0 %v2350
        %2397 = vmatpush1.msra.mxu0 %v2349
        %2398 = vmatprep.subr.mxu0 %v2390
        %2399 = vmatpush1.msra.mxu0 %v2387
        %2400 = vmatprep.subr.mxu0 0.0
        %2401 = vmatpush1.msra.mxu0 0.0
        %2402 = vmatprep.subr.mxu0 0.0
        %2403 = vmatpush1.msra.mxu0 0.0
        %2404 = vmatprep.subr.mxu0 0.0
        %2405 = vmatpush1.msra.mxu0 0.0
        %2406 = vmatprep.subr.mxu0 0.0
        %2407 = vmatpush1.msra.mxu0 0.0
        %2408 = vmatprep.subr.mxu0 0.0
        %2409 = vmatpush1.msra.mxu0 0.0
        %2410 = vmatprep.subr.mxu0 0.0
        %2411 = vmatpush1.msra.mxu0 0.0
        %2412 = vmatprep.subr.mxu0 0.0
        %2413 = vmatpush1.msra.mxu0 0.0
        %2414 = vmatprep.subr.mxu0 0.0
        %2415 = vmatpush1.msra.mxu0 0.0
        %2416 = vmatprep.subr.mxu0 0.0
        %2417 = vmatpush1.msra.mxu0 0.0
        %2418 = vmatprep.subr.mxu0 0.0
        %2419 = vmatpush1.msra.mxu0 0.0
        %2420 = vmatprep.subr.mxu0 0.0
        %2421 = vmatpush1.msra.mxu0 0.0
        %2422 = vmatprep.subr.mxu0 0.0
        %2423 = vmatpush1.msra.mxu0 0.0
        %2424 = vmatprep.subr.mxu0 0.0
        %2425 = vmatpush1.msra.mxu0 0.0
        %2426 = vmatprep.subr.mxu0 0.0
        %2427 = vmatpush1.msra.mxu0 0.0
        %2428 = vmatprep.subr.mxu0 0.0
        %2429 = vmatpush1.msra.mxu0 0.0
        %2430 = vmatprep.subr.mxu0 0.0
        %2431 = vmatpush1.msra.mxu0 0.0
        %2432 = vmatprep.subr.mxu0 0.0
        %2433 = vmatpush1.msra.mxu0 0.0
        %2434 = vmatprep.subr.mxu0 0.0
        %2435 = vmatpush1.msra.mxu0 0.0
        %2436 = vmatprep.subr.mxu0 0.0
        %2437 = vmatpush1.msra.mxu0 0.0
        %2438 = vmatprep.subr.mxu0 0.0
        %2439 = vmatpush1.msra.mxu0 0.0
        %2440 = vmatprep.subr.mxu0 0.0
        %2441 = vmatpush1.msra.mxu0 0.0
        %2442 = vmatprep.subr.mxu0 0.0
        %2443 = vmatpush1.msra.mxu0 0.0
        %2444 = vmatprep.subr.mxu0 0.0
        %2445 = vmatpush1.msra.mxu0 0.0
        %2446 = vmatprep.subr.mxu0 0.0
        %2447 = vmatpush1.msra.mxu0 0.0
        %2448 = vmatprep.subr.mxu0 0.0
        %2449 = vmatpush1.msra.mxu0 0.0
        %2450 = vmatprep.subr.mxu0 0.0
        %2451 = vmatpush1.msra.mxu0 0.0
        %2452 = vmatprep.subr.mxu0 0.0
        %2453 = vmatpush1.msra.mxu0 0.0
        %2454 = vmatprep.subr.mxu0 0.0
        %2455 = vmatpush1.msra.mxu0 0.0
        %2456 = vmatprep.mubr.f32.mxu0 0.0
        %2457 = vmatmul.mubr.f32.gmra.mrb[0].mxu0 %v1838
        %v2458 = vpop.f32.mrb[0].mxu0
        %v2459 = vadd.f32 0.0, %v2458
        %v2460 = vpop.f32.mrb[0].mxu0
        %v2461 = vadd.f32 0.0, %v2460
        %2462 = vmatprep.mubr.f32.mxu0 0.0
        %2463 = vmatmul.mubr.f32.gmra.mrb[0].mxu0 %v1841
        %v2464 = vpop.f32.mrb[0].mxu0
        %v2465 = vadd.f32 0.0, %v2464
        %v2466 = vpop.f32.mrb[0].mxu0
        %v2467 = vadd.f32 0.0, %v2466
        %2468 = vmatprep.mubr.f32.mxu0 0.0
        %2469 = vmatmul.mubr.f32.gmra.mrb[0].mxu0 %v1844
        %v2470 = vpop.f32.mrb[0].mxu0
        %v2471 = vadd.f32 0.0, %v2470
        %v2472 = vpop.f32.mrb[0].mxu0
        %v2473 = vadd.f32 0.0, %v2472
        %2474 = vmatprep.mubr.f32.mxu0 0.0
        %2475 = vmatmul.mubr.f32.gmra.mrb[0].mxu0 %v1847
        %v2476 = vpop.f32.mrb[0].mxu0
        %v2477 = vadd.f32 0.0, %v2476
        %v2478 = vpop.f32.mrb[0].mxu0
        %v2479 = vadd.f32 0.0, %v2478
        %2480 = vdwg.mxu0
        %s2481 = scalar_lea.vmem %s12, 256
        %v2482 = vld [vmem:[%s2481] sm:$0xff]
        %v2483 = vld [vmem:[%s2481 + $0x8] sm:$0xff]
        %v2484 = vld [vmem:[%s2481 + $0x10] sm:$0xff]
        %v2485 = vld [vmem:[%s2481 + $0x18] sm:$0xff]
        %v2486 = vld [vmem:[%s2481 + $0x20] sm:$0xff]
        %v2487 = vld [vmem:[%s2481 + $0x28] sm:$0xff]
        %v2488 = vld [vmem:[%s2481 + $0x30] sm:$0xff]
        %v2489 = vld [vmem:[%s2481 + $0x38] sm:$0xff]
        %v2490 = vld [vmem:[%s2481 + $0x40] sm:$0xff]
        %v2491 = vld [vmem:[%s2481 + $0x48] sm:$0xff]
        %v2492 = vld [vmem:[%s2481 + $0x50] sm:$0xff]
        %v2493 = vld [vmem:[%s2481 + $0x58] sm:$0xff]
        %v2494 = vld [vmem:[%s2481 + $0x60] sm:$0xff]
        %v2495 = vld [vmem:[%s2481 + $0x68] sm:$0xff]
        %v2496 = vld [vmem:[%s2481 + $0x70] sm:$0xff]
        %v2497 = vld [vmem:[%s2481 + $0x78] sm:$0xff]
        %v2498 = vld [vmem:[%s2481 + $0x80] sm:$0xff]
        %v2499 = vld [vmem:[%s2481 + $0x88] sm:$0xff]
        %v2500 = vld [vmem:[%s2481 + $0x90] sm:$0xff]
        %v2501 = vld [vmem:[%s2481 + $0x98] sm:$0xff]
        %v2502 = vld [vmem:[%s2481 + $0xa0] sm:$0xff]
        %v2503 = vld [vmem:[%s2481 + $0xa8] sm:$0xff]
        %v2504 = vld [vmem:[%s2481 + $0xb0] sm:$0xff]
        %v2505 = vld [vmem:[%s2481 + $0xb8] sm:$0xff]
        %v2506 = vld [vmem:[%s2481 + $0xc0] sm:$0xff]
        %v2507 = vld [vmem:[%s2481 + $0xc8] sm:$0xff]
        %v2508 = vld [vmem:[%s2481 + $0xd0] sm:$0xff]
        %v2509 = vld [vmem:[%s2481 + $0xd8] sm:$0xff]
        %v2510 = vld [vmem:[%s2481 + $0xe0] sm:$0xff]
        %v2511 = vld [vmem:[%s2481 + $0xe8] sm:$0xff]
        %v2512 = vld [vmem:[%s2481 + $0xf0] sm:$0xff]
        %v2513 = vld [vmem:[%s2481 + $0xf8] sm:$0xff]
        %2514 = vmatprep.subr.mxu0 0.0
        %2515 = vmatpush1.msra.mxu0 %v2482
        %2516 = vmatprep.subr.mxu0 0.0
        %2517 = vmatpush1.msra.mxu0 %v2483
        %2518 = vmatprep.subr.mxu0 0.0
        %2519 = vmatpush1.msra.mxu0 %v2484
        %2520 = vmatprep.subr.mxu0 0.0
        %2521 = vmatpush1.msra.mxu0 %v2485
        %2522 = vmatprep.subr.mxu0 0.0
        %2523 = vmatpush1.msra.mxu0 %v2486
        %2524 = vmatprep.subr.mxu0 0.0
        %2525 = vmatpush1.msra.mxu0 %v2487
        %2526 = vmatprep.subr.mxu0 0.0
        %2527 = vmatpush1.msra.mxu0 %v2488
        %2528 = vmatprep.subr.mxu0 0.0
        %2529 = vmatpush1.msra.mxu0 %v2489
        %2530 = vmatprep.subr.mxu0 0.0
        %2531 = vmatpush1.msra.mxu0 %v2490
        %2532 = vmatprep.subr.mxu0 0.0
        %2533 = vmatpush1.msra.mxu0 %v2491
        %2534 = vmatprep.subr.mxu0 0.0
        %2535 = vmatpush1.msra.mxu0 %v2492
        %2536 = vmatprep.subr.mxu0 0.0
        %2537 = vmatpush1.msra.mxu0 %v2493
        %2538 = vmatprep.subr.mxu0 0.0
        %2539 = vmatpush1.msra.mxu0 %v2494
        %2540 = vmatprep.subr.mxu0 0.0
        %2541 = vmatpush1.msra.mxu0 %v2495
        %2542 = vmatprep.subr.mxu0 0.0
        %2543 = vmatpush1.msra.mxu0 %v2496
        %2544 = vmatprep.subr.mxu0 0.0
        %2545 = vmatpush1.msra.mxu0 %v2497
        %2546 = vmatprep.subr.mxu0 0.0
        %2547 = vmatpush1.msra.mxu0 %v2498
        %2548 = vmatprep.subr.mxu0 0.0
        %2549 = vmatpush1.msra.mxu0 %v2499
        %2550 = vmatprep.subr.mxu0 0.0
        %2551 = vmatpush1.msra.mxu0 %v2500
        %2552 = vmatprep.subr.mxu0 0.0
        %2553 = vmatpush1.msra.mxu0 %v2501
        %2554 = vmatprep.subr.mxu0 0.0
        %2555 = vmatpush1.msra.mxu0 %v2502
        %2556 = vmatprep.subr.mxu0 0.0
        %2557 = vmatpush1.msra.mxu0 %v2503
        %2558 = vmatprep.subr.mxu0 0.0
        %2559 = vmatpush1.msra.mxu0 %v2504
        %2560 = vmatprep.subr.mxu0 0.0
        %2561 = vmatpush1.msra.mxu0 %v2505
        %2562 = vmatprep.subr.mxu0 0.0
        %2563 = vmatpush1.msra.mxu0 %v2506
        %2564 = vmatprep.subr.mxu0 0.0
        %2565 = vmatpush1.msra.mxu0 %v2507
        %2566 = vmatprep.subr.mxu0 0.0
        %2567 = vmatpush1.msra.mxu0 %v2508
        %2568 = vmatprep.subr.mxu0 0.0
        %2569 = vmatpush1.msra.mxu0 %v2509
        %2570 = vmatprep.subr.mxu0 0.0
        %2571 = vmatpush1.msra.mxu0 %v2510
        %2572 = vmatprep.subr.mxu0 0.0
        %2573 = vmatpush1.msra.mxu0 %v2511
        %2574 = vmatprep.subr.mxu0 0.0
        %2575 = vmatpush1.msra.mxu0 %v2512
        %2576 = vmatprep.subr.mxu0 0.0
        %2577 = vmatpush1.msra.mxu0 %v2513
        %2578 = vmatprep.mubr.f32.mxu0 %v2461
        %2579 = vmatmul.mubr.f32.gmra.mrb[0].mxu0 %v2459
        %v2580 = vpop.f32.mrb[0].mxu0
        %v2581 = vadd.f32 0.0, %v2580
        %v2582 = vpop.f32.mrb[0].mxu0
        %2583 = vmatprep.mubr.f32.mxu0 %v2467
        %2584 = vmatmul.mubr.f32.gmra.mrb[0].mxu0 %v2465
        %v2585 = vpop.f32.mrb[0].mxu0
        %v2586 = vadd.f32 0.0, %v2585
        %v2587 = vpop.f32.mrb[0].mxu0
        %2588 = vmatprep.mubr.f32.mxu0 %v2473
        %2589 = vmatmul.mubr.f32.gmra.mrb[0].mxu0 %v2471
        %v2590 = vpop.f32.mrb[0].mxu0
        %v2591 = vadd.f32 0.0, %v2590
        %v2592 = vpop.f32.mrb[0].mxu0
        %2593 = vmatprep.mubr.f32.mxu0 %v2479
        %2594 = vmatmul.mubr.f32.gmra.mrb[0].mxu0 %v2477
        %v2595 = vpop.f32.mrb[0].mxu0
        %v2596 = vadd.f32 0.0, %v2595
        %v2597 = vpop.f32.mrb[0].mxu0
        %2598 = vdwg.mxu0
        %2599 = vmatprep.subr.mxu0 0.0
        %2600 = vmatpush1.msra.mxu0 %v2354
        %2601 = vmatprep.subr.mxu0 0.0
        %2602 = vmatpush1.msra.mxu0 %v2355
        %2603 = vmatprep.subr.mxu0 0.0
        %2604 = vmatpush1.msra.mxu0 %v2356
        %2605 = vmatprep.subr.mxu0 0.0
        %2606 = vmatpush1.msra.mxu0 %v2357
        %2607 = vmatprep.subr.mxu0 0.0
        %2608 = vmatpush1.msra.mxu0 %v2358
        %2609 = vmatprep.subr.mxu0 0.0
        %2610 = vmatpush1.msra.mxu0 %v2359
        %2611 = vmatprep.subr.mxu0 0.0
        %2612 = vmatpush1.msra.mxu0 %v2360
        %2613 = vmatprep.subr.mxu0 0.0
        %2614 = vmatpush1.msra.mxu0 %v2361
        %2615 = vmatprep.subr.mxu0 0.0
        %2616 = vmatpush1.msra.mxu0 %v2362
        %2617 = vmatprep.subr.mxu0 0.0
        %2618 = vmatpush1.msra.mxu0 %v2363
        %2619 = vmatprep.subr.mxu0 0.0
        %2620 = vmatpush1.msra.mxu0 %v2364
        %2621 = vmatprep.subr.mxu0 0.0
        %2622 = vmatpush1.msra.mxu0 %v2365
        %2623 = vmatprep.subr.mxu0 0.0
        %2624 = vmatpush1.msra.mxu0 %v2366
        %2625 = vmatprep.subr.mxu0 0.0
        %2626 = vmatpush1.msra.mxu0 %v2367
        %2627 = vmatprep.subr.mxu0 0.0
        %2628 = vmatpush1.msra.mxu0 %v2368
        %2629 = vmatprep.subr.mxu0 0.0
        %2630 = vmatpush1.msra.mxu0 %v2369
        %2631 = vmatprep.subr.mxu0 0.0
        %2632 = vmatpush1.msra.mxu0 %v2370
        %2633 = vmatprep.subr.mxu0 0.0
        %2634 = vmatpush1.msra.mxu0 %v2371
        %2635 = vmatprep.subr.mxu0 0.0
        %2636 = vmatpush1.msra.mxu0 %v2372
        %2637 = vmatprep.subr.mxu0 0.0
        %2638 = vmatpush1.msra.mxu0 %v2373
        %2639 = vmatprep.subr.mxu0 0.0
        %2640 = vmatpush1.msra.mxu0 %v2374
        %2641 = vmatprep.subr.mxu0 0.0
        %2642 = vmatpush1.msra.mxu0 %v2375
        %2643 = vmatprep.subr.mxu0 0.0
        %2644 = vmatpush1.msra.mxu0 %v2376
        %2645 = vmatprep.subr.mxu0 0.0
        %2646 = vmatpush1.msra.mxu0 %v2377
        %2647 = vmatprep.subr.mxu0 0.0
        %2648 = vmatpush1.msra.mxu0 %v2378
        %2649 = vmatprep.subr.mxu0 0.0
        %2650 = vmatpush1.msra.mxu0 %v2379
        %2651 = vmatprep.subr.mxu0 0.0
        %2652 = vmatpush1.msra.mxu0 %v2380
        %2653 = vmatprep.subr.mxu0 0.0
        %2654 = vmatpush1.msra.mxu0 %v2381
        %2655 = vmatprep.subr.mxu0 0.0
        %2656 = vmatpush1.msra.mxu0 %v2382
        %2657 = vmatprep.subr.mxu0 0.0
        %2658 = vmatpush1.msra.mxu0 %v2383
        %2659 = vmatprep.subr.mxu0 0.0
        %2660 = vmatpush1.msra.mxu0 %v2384
        %2661 = vmatprep.subr.mxu0 0.0
        %2662 = vmatpush1.msra.mxu0 %v2385
        %2663 = vmatprep.mubr.f32.mxu0 %v2346
        %2664 = vmatmul.mubr.f32.gmra.mrb[0].mxu0 %v2345
        %v2665 = vpop.f32.mrb[0].mxu0
        %v2666 = vadd.f32 %v2581, %v2665
        %v2667 = vpop.f32.mrb[0].mxu0
        %2668 = vmatprep.mubr.f32.mxu0 %v2348
        %2669 = vmatmul.mubr.f32.gmra.mrb[0].mxu0 %v2347
        %v2670 = vpop.f32.mrb[0].mxu0
        %v2671 = vadd.f32 %v2586, %v2670
        %v2672 = vpop.f32.mrb[0].mxu0
        %2673 = vmatprep.mubr.f32.mxu0 %v2350
        %2674 = vmatmul.mubr.f32.gmra.mrb[0].mxu0 %v2349
        %v2675 = vpop.f32.mrb[0].mxu0
        %v2676 = vadd.f32 %v2591, %v2675
        %v2677 = vpop.f32.mrb[0].mxu0
        %2678 = vmatprep.mubr.f32.mxu0 %v2352
        %2679 = vmatmul.mubr.f32.gmra.mrb[0].mxu0 %v2351
        %v2680 = vpop.f32.mrb[0].mxu0
        %v2681 = vadd.f32 %v2596, %v2680
        %v2682 = vpop.f32.mrb[0].mxu0
        %2683 = vdwg.mxu0
        %s2684 = scalar_lea.vmem %s21, 64
        %v2685 = vld [vmem:[%s2684] sm:$0xff]
        %v2686 = vld [vmem:[%s2684 + $0x8] sm:$0xff]
        %v2687 = vld [vmem:[%s2684 + $0x10] sm:$0xff]
        %v2688 = vld [vmem:[%s2684 + $0x18] sm:$0x3f]
        %v2690 = vsel %vm871, %v2685, 0
        %v2693 = vsel %vm871, %v2686, 0
        %v2696 = vsel %vm871, %v2687, 0
        %v2699 = vsel %vm871, %v2688, 0
        %2701 = vmatprep.subr.mxu0 %v2346
        %2702 = vmatpush1.msra.mxu0 %v2345
        %2703 = vmatprep.subr.mxu0 %v2348
        %2704 = vmatpush1.msra.mxu0 %v2347
        %2705 = vmatprep.subr.mxu0 %v2350
        %2706 = vmatpush1.msra.mxu0 %v2349
        %2707 = vmatprep.subr.mxu0 %v2390
        %2708 = vmatpush1.msra.mxu0 %v2387
        %2709 = vmatprep.subr.mxu0 0.0
        %2710 = vmatpush1.msra.mxu0 0.0
        %2711 = vmatprep.subr.mxu0 0.0
        %2712 = vmatpush1.msra.mxu0 0.0
        %2713 = vmatprep.subr.mxu0 0.0
        %2714 = vmatpush1.msra.mxu0 0.0
        %2715 = vmatprep.subr.mxu0 0.0
        %2716 = vmatpush1.msra.mxu0 0.0
        %2717 = vmatprep.subr.mxu0 0.0
        %2718 = vmatpush1.msra.mxu0 0.0
        %2719 = vmatprep.subr.mxu0 0.0
        %2720 = vmatpush1.msra.mxu0 0.0
        %2721 = vmatprep.subr.mxu0 0.0
        %2722 = vmatpush1.msra.mxu0 0.0
        %2723 = vmatprep.subr.mxu0 0.0
        %2724 = vmatpush1.msra.mxu0 0.0
        %2725 = vmatprep.subr.mxu0 0.0
        %2726 = vmatpush1.msra.mxu0 0.0
        %2727 = vmatprep.subr.mxu0 0.0
        %2728 = vmatpush1.msra.mxu0 0.0
        %2729 = vmatprep.subr.mxu0 0.0
        %2730 = vmatpush1.msra.mxu0 0.0
        %2731 = vmatprep.subr.mxu0 0.0
        %2732 = vmatpush1.msra.mxu0 0.0
        %2733 = vmatprep.subr.mxu0 0.0
        %2734 = vmatpush1.msra.mxu0 0.0
        %2735 = vmatprep.subr.mxu0 0.0
        %2736 = vmatpush1.msra.mxu0 0.0
        %2737 = vmatprep.subr.mxu0 0.0
        %2738 = vmatpush1.msra.mxu0 0.0
        %2739 = vmatprep.subr.mxu0 0.0
        %2740 = vmatpush1.msra.mxu0 0.0
        %2741 = vmatprep.subr.mxu0 0.0
        %2742 = vmatpush1.msra.mxu0 0.0
        %2743 = vmatprep.subr.mxu0 0.0
        %2744 = vmatpush1.msra.mxu0 0.0
        %2745 = vmatprep.subr.mxu0 0.0
        %2746 = vmatpush1.msra.mxu0 0.0
        %2747 = vmatprep.subr.mxu0 0.0
        %2748 = vmatpush1.msra.mxu0 0.0
        %2749 = vmatprep.subr.mxu0 0.0
        %2750 = vmatpush1.msra.mxu0 0.0
        %2751 = vmatprep.subr.mxu0 0.0
        %2752 = vmatpush1.msra.mxu0 0.0
        %2753 = vmatprep.subr.mxu0 0.0
        %2754 = vmatpush1.msra.mxu0 0.0
        %2755 = vmatprep.subr.mxu0 0.0
        %2756 = vmatpush1.msra.mxu0 0.0
        %2757 = vmatprep.subr.mxu0 0.0
        %2758 = vmatpush1.msra.mxu0 0.0
        %2759 = vmatprep.subr.mxu0 0.0
        %2760 = vmatpush1.msra.mxu0 0.0
        %2761 = vmatprep.subr.mxu0 0.0
        %2762 = vmatpush1.msra.mxu0 0.0
        %2763 = vmatprep.subr.mxu0 0.0
        %2764 = vmatpush1.msra.mxu0 0.0
        %2765 = vmatprep.mubr.f32.mxu0 0.0
        %2766 = vmatmul.mubr.f32.gmra.mrb[0].mxu0 %v2690
        %v2767 = vpop.f32.mrb[0].mxu0
        %v2768 = vadd.f32 0.0, %v2767
        %v2769 = vpop.f32.mrb[0].mxu0
        %v2770 = vadd.f32 0.0, %v2769
        %2771 = vmatprep.mubr.f32.mxu0 0.0
        %2772 = vmatmul.mubr.f32.gmra.mrb[0].mxu0 %v2693
        %v2773 = vpop.f32.mrb[0].mxu0
        %v2774 = vadd.f32 0.0, %v2773
        %v2775 = vpop.f32.mrb[0].mxu0
        %v2776 = vadd.f32 0.0, %v2775
        %2777 = vmatprep.mubr.f32.mxu0 0.0
        %2778 = vmatmul.mubr.f32.gmra.mrb[0].mxu0 %v2696
        %v2779 = vpop.f32.mrb[0].mxu0
        %v2780 = vadd.f32 0.0, %v2779
        %v2781 = vpop.f32.mrb[0].mxu0
        %v2782 = vadd.f32 0.0, %v2781
        %2783 = vmatprep.mubr.f32.mxu0 0.0
        %2784 = vmatmul.mubr.f32.gmra.mrb[0].mxu0 %v2699
        %v2785 = vpop.f32.mrb[0].mxu0
        %v2786 = vadd.f32 0.0, %v2785
        %v2787 = vpop.f32.mrb[0].mxu0
        %v2788 = vadd.f32 0.0, %v2787
        %2789 = vdwg.mxu0
        %v2790 = vld [vmem:[%s12] sm:$0xff]
        %v2791 = vld [vmem:[%s12 + $0x8] sm:$0xff]
        %v2792 = vld [vmem:[%s12 + $0x10] sm:$0xff]
        %v2793 = vld [vmem:[%s12 + $0x18] sm:$0xff]
        %v2794 = vld [vmem:[%s12 + $0x20] sm:$0xff]
        %v2795 = vld [vmem:[%s12 + $0x28] sm:$0xff]
        %v2796 = vld [vmem:[%s12 + $0x30] sm:$0xff]
        %v2797 = vld [vmem:[%s12 + $0x38] sm:$0xff]
        %v2798 = vld [vmem:[%s12 + $0x40] sm:$0xff]
        %v2799 = vld [vmem:[%s12 + $0x48] sm:$0xff]
        %v2800 = vld [vmem:[%s12 + $0x50] sm:$0xff]
        %v2801 = vld [vmem:[%s12 + $0x58] sm:$0xff]
        %v2802 = vld [vmem:[%s12 + $0x60] sm:$0xff]
        %v2803 = vld [vmem:[%s12 + $0x68] sm:$0xff]
        %v2804 = vld [vmem:[%s12 + $0x70] sm:$0xff]
        %v2805 = vld [vmem:[%s12 + $0x78] sm:$0xff]
        %v2806 = vld [vmem:[%s12 + $0x80] sm:$0xff]
        %v2807 = vld [vmem:[%s12 + $0x88] sm:$0xff]
        %v2808 = vld [vmem:[%s12 + $0x90] sm:$0xff]
        %v2809 = vld [vmem:[%s12 + $0x98] sm:$0xff]
        %v2810 = vld [vmem:[%s12 + $0xa0] sm:$0xff]
        %v2811 = vld [vmem:[%s12 + $0xa8] sm:$0xff]
        %v2812 = vld [vmem:[%s12 + $0xb0] sm:$0xff]
        %v2813 = vld [vmem:[%s12 + $0xb8] sm:$0xff]
        %v2814 = vld [vmem:[%s12 + $0xc0] sm:$0xff]
        %v2815 = vld [vmem:[%s12 + $0xc8] sm:$0xff]
        %v2816 = vld [vmem:[%s12 + $0xd0] sm:$0xff]
        %v2817 = vld [vmem:[%s12 + $0xd8] sm:$0xff]
        %v2818 = vld [vmem:[%s12 + $0xe0] sm:$0xff]
        %v2819 = vld [vmem:[%s12 + $0xe8] sm:$0xff]
        %v2820 = vld [vmem:[%s12 + $0xf0] sm:$0xff]
        %v2821 = vld [vmem:[%s12 + $0xf8] sm:$0xff]
        %2822 = vmatprep.subr.mxu0 0.0
        %2823 = vmatpush1.msra.mxu0 %v2790
        %2824 = vmatprep.subr.mxu0 0.0
        %2825 = vmatpush1.msra.mxu0 %v2791
        %2826 = vmatprep.subr.mxu0 0.0
        %2827 = vmatpush1.msra.mxu0 %v2792
        %2828 = vmatprep.subr.mxu0 0.0
        %2829 = vmatpush1.msra.mxu0 %v2793
        %2830 = vmatprep.subr.mxu0 0.0
        %2831 = vmatpush1.msra.mxu0 %v2794
        %2832 = vmatprep.subr.mxu0 0.0
        %2833 = vmatpush1.msra.mxu0 %v2795
        %2834 = vmatprep.subr.mxu0 0.0
        %2835 = vmatpush1.msra.mxu0 %v2796
        %2836 = vmatprep.subr.mxu0 0.0
        %2837 = vmatpush1.msra.mxu0 %v2797
        %2838 = vmatprep.subr.mxu0 0.0
        %2839 = vmatpush1.msra.mxu0 %v2798
        %2840 = vmatprep.subr.mxu0 0.0
        %2841 = vmatpush1.msra.mxu0 %v2799
        %2842 = vmatprep.subr.mxu0 0.0
        %2843 = vmatpush1.msra.mxu0 %v2800
        %2844 = vmatprep.subr.mxu0 0.0
        %2845 = vmatpush1.msra.mxu0 %v2801
        %2846 = vmatprep.subr.mxu0 0.0
        %2847 = vmatpush1.msra.mxu0 %v2802
        %2848 = vmatprep.subr.mxu0 0.0
        %2849 = vmatpush1.msra.mxu0 %v2803
        %2850 = vmatprep.subr.mxu0 0.0
        %2851 = vmatpush1.msra.mxu0 %v2804
        %2852 = vmatprep.subr.mxu0 0.0
        %2853 = vmatpush1.msra.mxu0 %v2805
        %2854 = vmatprep.subr.mxu0 0.0
        %2855 = vmatpush1.msra.mxu0 %v2806
        %2856 = vmatprep.subr.mxu0 0.0
        %2857 = vmatpush1.msra.mxu0 %v2807
        %2858 = vmatprep.subr.mxu0 0.0
        %2859 = vmatpush1.msra.mxu0 %v2808
        %2860 = vmatprep.subr.mxu0 0.0
        %2861 = vmatpush1.msra.mxu0 %v2809
        %2862 = vmatprep.subr.mxu0 0.0
        %2863 = vmatpush1.msra.mxu0 %v2810
        %2864 = vmatprep.subr.mxu0 0.0
        %2865 = vmatpush1.msra.mxu0 %v2811
        %2866 = vmatprep.subr.mxu0 0.0
        %2867 = vmatpush1.msra.mxu0 %v2812
        %2868 = vmatprep.subr.mxu0 0.0
        %2869 = vmatpush1.msra.mxu0 %v2813
        %2870 = vmatprep.subr.mxu0 0.0
        %2871 = vmatpush1.msra.mxu0 %v2814
        %2872 = vmatprep.subr.mxu0 0.0
        %2873 = vmatpush1.msra.mxu0 %v2815
        %2874 = vmatprep.subr.mxu0 0.0
        %2875 = vmatpush1.msra.mxu0 %v2816
        %2876 = vmatprep.subr.mxu0 0.0
        %2877 = vmatpush1.msra.mxu0 %v2817
        %2878 = vmatprep.subr.mxu0 0.0
        %2879 = vmatpush1.msra.mxu0 %v2818
        %2880 = vmatprep.subr.mxu0 0.0
        %2881 = vmatpush1.msra.mxu0 %v2819
        %2882 = vmatprep.subr.mxu0 0.0
        %2883 = vmatpush1.msra.mxu0 %v2820
        %2884 = vmatprep.subr.mxu0 0.0
        %2885 = vmatpush1.msra.mxu0 %v2821
        %2886 = vmatprep.mubr.f32.mxu0 %v2770
        %2887 = vmatmul.mubr.f32.gmra.mrb[0].mxu0 %v2768
        %v2888 = vpop.f32.mrb[0].mxu0
        %v2889 = vadd.f32 0.0, %v2888
        %v2890 = vpop.f32.mrb[0].mxu0
        %2891 = vmatprep.mubr.f32.mxu0 %v2776
        %2892 = vmatmul.mubr.f32.gmra.mrb[0].mxu0 %v2774
        %v2893 = vpop.f32.mrb[0].mxu0
        %v2894 = vadd.f32 0.0, %v2893
        %v2895 = vpop.f32.mrb[0].mxu0
        %2896 = vmatprep.mubr.f32.mxu0 %v2782
        %2897 = vmatmul.mubr.f32.gmra.mrb[0].mxu0 %v2780
        %v2898 = vpop.f32.mrb[0].mxu0
        %v2899 = vadd.f32 0.0, %v2898
        %v2900 = vpop.f32.mrb[0].mxu0
        %2901 = vmatprep.mubr.f32.mxu0 %v2788
        %2902 = vmatmul.mubr.f32.gmra.mrb[0].mxu0 %v2786
        %v2903 = vpop.f32.mrb[0].mxu0
        %v2904 = vadd.f32 0.0, %v2903
        %v2905 = vpop.f32.mrb[0].mxu0
        %2906 = vdwg.mxu0
        %v2907 = vadd.f32 %v2666, %v2889
        %v2908 = vadd.f32 %v2671, %v2894
        %v2909 = vadd.f32 %v2676, %v2899
        %v2910 = vadd.f32 %v2681, %v2904
        %v2911 = vld [vmem:[%s13] sm:$0x1]
        %v2913 = vlaneseq
        %v2914 = vshrl.u32 %v2913, 7
        %v2915 = vsub.s32 0, %v2914
        %v2916 = vrot.slane %v2911, %v2915
        %v2918 = vadd.f32 %v2907, %v2916
        %v2919 = vadd.f32 %v2908, %v2916
        %v2920 = vadd.f32 %v2909, %v2916
        %v2921 = vadd.f32 %v2910, %v2916
        %vm2922 = vcmp.gt.f32.partialorder %v2918, 0.0
        %vm2923 = vcmp.gt.f32.partialorder %v2919, 0.0
        %vm2924 = vcmp.gt.f32.partialorder %v2920, 0.0
        %vm2925 = vcmp.gt.f32.partialorder %v2921, 0.0
        %v2926 = vmul.f32 %v2918, 0.01
        %v2927 = vmul.f32 %v2919, 0.01
        %v2928 = vmul.f32 %v2920, 0.01
        %v2929 = vmul.f32 %v2921, 0.01
        %v2930 = vsel %vm2922, %v2918, %v2926
        %v2931 = vsel %vm2923, %v2919, %v2927
        %v2932 = vsel %vm2924, %v2920, %v2928
        %v2933 = vsel %vm2925, %v2921, %v2929
        %v2934 = vadd.f32 %v2930, %v2931
        %v2935 = vadd.f32 %v2934, %v2932
        %v2936 = vsel %vm884, %v2933, 0.0
        %v2937 = vadd.f32 %v2935, %v2936
        %v2938 = vrot.slane %v2937, 4
        %v2939 = vadd.f32 %v2937, %v2938
        %v2940 = vrot.slane %v2939, 2
        %v2941 = vadd.f32 %v2939, %v2940
        %v2942 = vrot.slane %v2941, 1
        %v2943 = vadd.f32 %v2941, %v2942
        %v2944 = vmul.f32 %v2943, %v2119
        %v2945 = vsub.f32 %v2930, %v2944
        %v2946 = vsub.f32 %v2931, %v2944
        %v2947 = vsub.f32 %v2932, %v2944
        %v2948 = vsub.f32 %v2933, %v2944
        %v2949 = vmul.f32 %v2945, %v2945
        %v2950 = vmul.f32 %v2946, %v2946
        %v2951 = vmul.f32 %v2947, %v2947
        %v2952 = vmul.f32 %v2948, %v2948
        %v2953 = vadd.f32 %v2949, %v2950
        %v2954 = vadd.f32 %v2953, %v2951
        %v2955 = vsel %vm884, %v2952, 0.0
        %v2956 = vadd.f32 %v2954, %v2955
        %v2957 = vrot.slane %v2956, 4
        %v2958 = vadd.f32 %v2956, %v2957
        %v2959 = vrot.slane %v2958, 2
        %v2960 = vadd.f32 %v2958, %v2959
        %v2961 = vrot.slane %v2960, 1
        %v2962 = vadd.f32 %v2960, %v2961
        %v2963 = vmul.f32 %v2962, %v2119
        %v2964 = vadd.f32 %v2963, 1e-05
        %v2965 = vrsqrt.pop %v2964
        %v2966 = vmul.f32 %v2945, %v2965
        %v2967 = vmul.f32 %v2946, %v2965
        %v2968 = vmul.f32 %v2947, %v2965
        %v2969 = vmul.f32 %v2948, %v2965
        %2970 = vset.pattern.permute.xlu0 2
        %2971 = vperm.xlu0 %2970, %v1496
        %v2972 = vpop.permute.xlu0 %2971
        %2974 = vset.pattern.permute.xlu0 2
        %2975 = vperm.xlu0 %2974, %v1497
        %v2976 = vpop.permute.xlu0 %2975
        %2978 = vset.pattern.permute.xlu0 2
        %2979 = vperm.xlu0 %2978, %v1498
        %v2980 = vpop.permute.xlu0 %2979
        %2982 = vset.pattern.permute.xlu0 2
        %2983 = vperm.xlu0 %2982, %v1499
        %v2984 = vpop.permute.xlu0 %2983
        %v2986 = vmul.f32 %v2966, %v2972
        %v2987 = vmul.f32 %v2967, %v2976
        %v2988 = vmul.f32 %v2968, %v2980
        %v2989 = vmul.f32 %v2969, %v2984
        %2990 = vset.pattern.permute.xlu0 3
        %2991 = vperm.xlu0 %2990, %v1496
        %v2992 = vpop.permute.xlu0 %2991
        %2994 = vset.pattern.permute.xlu0 3
        %2995 = vperm.xlu0 %2994, %v1497
        %v2996 = vpop.permute.xlu0 %2995
        %2998 = vset.pattern.permute.xlu0 3
        %2999 = vperm.xlu0 %2998, %v1498
        %v3000 = vpop.permute.xlu0 %2999
        %3002 = vset.pattern.permute.xlu0 3
        %3003 = vperm.xlu0 %3002, %v1499
        %v3004 = vpop.permute.xlu0 %3003
        %v3006 = vadd.f32 %v2986, %v2992
        %v3007 = vadd.f32 %v2987, %v2996
        %v3008 = vadd.f32 %v2988, %v3000
        %v3009 = vadd.f32 %v2989, %v3004
        %v3010 = vld [vmem:[%s14] sm:$0xff]
        %v3011 = vld [vmem:[%s14 + $0x8] sm:$0xff]
        %v3012 = vld [vmem:[%s14 + $0x10] sm:$0xff]
        %v3013 = vld [vmem:[%s14 + $0x18] sm:$0xff]
        %v3014 = vld [vmem:[%s14 + $0x20] sm:$0xff]
        %v3015 = vld [vmem:[%s14 + $0x28] sm:$0xff]
        %v3016 = vld [vmem:[%s14 + $0x30] sm:$0xff]
        %v3017 = vld [vmem:[%s14 + $0x38] sm:$0xff]
        %v3018 = vld [vmem:[%s14 + $0x40] sm:$0xff]
        %v3019 = vld [vmem:[%s14 + $0x48] sm:$0xff]
        %v3020 = vld [vmem:[%s14 + $0x50] sm:$0xff]
        %v3021 = vld [vmem:[%s14 + $0x58] sm:$0xff]
        %v3022 = vld [vmem:[%s14 + $0x60] sm:$0xff]
        %v3023 = vld [vmem:[%s14 + $0x68] sm:$0xff]
        %v3024 = vld [vmem:[%s14 + $0x70] sm:$0xff]
        %v3025 = vld [vmem:[%s14 + $0x78] sm:$0xff]
        %v3026 = vld [vmem:[%s14 + $0x80] sm:$0xff]
        %v3027 = vld [vmem:[%s14 + $0x88] sm:$0xff]
        %v3028 = vld [vmem:[%s14 + $0x90] sm:$0xff]
        %v3029 = vld [vmem:[%s14 + $0x98] sm:$0xff]
        %v3030 = vld [vmem:[%s14 + $0xa0] sm:$0xff]
        %v3031 = vld [vmem:[%s14 + $0xa8] sm:$0xff]
        %v3032 = vld [vmem:[%s14 + $0xb0] sm:$0xff]
        %v3033 = vld [vmem:[%s14 + $0xb8] sm:$0xff]
        %v3034 = vld [vmem:[%s14 + $0xc0] sm:$0xff]
        %v3035 = vld [vmem:[%s14 + $0xc8] sm:$0xff]
        %v3036 = vld [vmem:[%s14 + $0xd0] sm:$0xff]
        %v3037 = vld [vmem:[%s14 + $0xd8] sm:$0xff]
        %v3038 = vld [vmem:[%s14 + $0xe0] sm:$0xff]
        %v3039 = vld [vmem:[%s14 + $0xe8] sm:$0xff]
        %v3040 = vld [vmem:[%s14 + $0xf0] sm:$0xff]
        %v3041 = vld [vmem:[%s14 + $0xf8] sm:$0xff]
        %v3042 = vld [vmem:[%s15] sm:$0x1]
        %v3044 = vlaneseq
        %v3045 = vshrl.u32 %v3044, 7
        %v3046 = vsub.s32 0, %v3045
        %v3047 = vrot.slane %v3042, %v3046
        %3049 = vmatprep.subr.mxu0 0.0
        %3050 = vmatpush1.msra.mxu0 %v3010
        %3051 = vmatprep.subr.mxu0 0.0
        %3052 = vmatpush1.msra.mxu0 %v3011
        %3053 = vmatprep.subr.mxu0 0.0
        %3054 = vmatpush1.msra.mxu0 %v3012
        %3055 = vmatprep.subr.mxu0 0.0
        %3056 = vmatpush1.msra.mxu0 %v3013
        %3057 = vmatprep.subr.mxu0 0.0
        %3058 = vmatpush1.msra.mxu0 %v3014
        %3059 = vmatprep.subr.mxu0 0.0
        %3060 = vmatpush1.msra.mxu0 %v3015
        %3061 = vmatprep.subr.mxu0 0.0
        %3062 = vmatpush1.msra.mxu0 %v3016
        %3063 = vmatprep.subr.mxu0 0.0
        %3064 = vmatpush1.msra.mxu0 %v3017
        %3065 = vmatprep.subr.mxu0 0.0
        %3066 = vmatpush1.msra.mxu0 %v3018
        %3067 = vmatprep.subr.mxu0 0.0
        %3068 = vmatpush1.msra.mxu0 %v3019
        %3069 = vmatprep.subr.mxu0 0.0
        %3070 = vmatpush1.msra.mxu0 %v3020
        %3071 = vmatprep.subr.mxu0 0.0
        %3072 = vmatpush1.msra.mxu0 %v3021
        %3073 = vmatprep.subr.mxu0 0.0
        %3074 = vmatpush1.msra.mxu0 %v3022
        %3075 = vmatprep.subr.mxu0 0.0
        %3076 = vmatpush1.msra.mxu0 %v3023
        %3077 = vmatprep.subr.mxu0 0.0
        %3078 = vmatpush1.msra.mxu0 %v3024
        %3079 = vmatprep.subr.mxu0 0.0
        %3080 = vmatpush1.msra.mxu0 %v3025
        %3081 = vmatprep.subr.mxu0 0.0
        %3082 = vmatpush1.msra.mxu0 %v3026
        %3083 = vmatprep.subr.mxu0 0.0
        %3084 = vmatpush1.msra.mxu0 %v3027
        %3085 = vmatprep.subr.mxu0 0.0
        %3086 = vmatpush1.msra.mxu0 %v3028
        %3087 = vmatprep.subr.mxu0 0.0
        %3088 = vmatpush1.msra.mxu0 %v3029
        %3089 = vmatprep.subr.mxu0 0.0
        %3090 = vmatpush1.msra.mxu0 %v3030
        %3091 = vmatprep.subr.mxu0 0.0
        %3092 = vmatpush1.msra.mxu0 %v3031
        %3093 = vmatprep.subr.mxu0 0.0
        %3094 = vmatpush1.msra.mxu0 %v3032
        %3095 = vmatprep.subr.mxu0 0.0
        %3096 = vmatpush1.msra.mxu0 %v3033
        %3097 = vmatprep.subr.mxu0 0.0
        %3098 = vmatpush1.msra.mxu0 %v3034
        %3099 = vmatprep.subr.mxu0 0.0
        %3100 = vmatpush1.msra.mxu0 %v3035
        %3101 = vmatprep.subr.mxu0 0.0
        %3102 = vmatpush1.msra.mxu0 %v3036
        %3103 = vmatprep.subr.mxu0 0.0
        %3104 = vmatpush1.msra.mxu0 %v3037
        %3105 = vmatprep.subr.mxu0 0.0
        %3106 = vmatpush1.msra.mxu0 %v3038
        %3107 = vmatprep.subr.mxu0 0.0
        %3108 = vmatpush1.msra.mxu0 %v3039
        %3109 = vmatprep.subr.mxu0 0.0
        %3110 = vmatpush1.msra.mxu0 %v3040
        %3111 = vmatprep.subr.mxu0 0.0
        %3112 = vmatpush1.msra.mxu0 %v3041
        %3113 = vmatprep.mubr.f32.mxu0 %v2346
        %3114 = vmatmul.mubr.f32.gmra.mrb[0].mxu0 %v2345
        %v3115 = vpop.f32.mrb[0].mxu0
        %v3116 = vadd.f32 %v3047, %v3115
        %v3117 = vpop.f32.mrb[0].mxu0
        %3118 = vmatprep.mubr.f32.mxu0 %v2348
        %3119 = vmatmul.mubr.f32.gmra.mrb[0].mxu0 %v2347
        %v3120 = vpop.f32.mrb[0].mxu0
        %v3121 = vadd.f32 %v3047, %v3120
        %v3122 = vpop.f32.mrb[0].mxu0
        %3123 = vmatprep.mubr.f32.mxu0 %v2350
        %3124 = vmatmul.mubr.f32.gmra.mrb[0].mxu0 %v2349
        %v3125 = vpop.f32.mrb[0].mxu0
        %v3126 = vadd.f32 %v3047, %v3125
        %v3127 = vpop.f32.mrb[0].mxu0
        %3128 = vmatprep.mubr.f32.mxu0 %v2352
        %3129 = vmatmul.mubr.f32.gmra.mrb[0].mxu0 %v2351
        %v3130 = vpop.f32.mrb[0].mxu0
        %v3131 = vadd.f32 %v3047, %v3130
        %v3132 = vpop.f32.mrb[0].mxu0
        %3133 = vdwg.mxu0
        %v3134 = vadd.f32 %v3006, %v3116
        %v3135 = vadd.f32 %v3007, %v3121
        %v3136 = vadd.f32 %v3008, %v3126
        %v3137 = vadd.f32 %v3009, %v3131
        %v3138 = vmax.f32 %v3134, 0.0
        %v3139 = vmax.f32 %v3135, 0.0
        %v3140 = vmax.f32 %v3136, 0.0
        %v3141 = vmax.f32 %v3137, 0.0
        %s3142 = scalar_lea.vmem %s16, 256
        %v3143 = vld [vmem:[%s3142] sm:$0xff]
        %v3144 = vld [vmem:[%s3142 + $0x8] sm:$0xff]
        %v3145 = vld [vmem:[%s3142 + $0x10] sm:$0xff]
        %v3146 = vld [vmem:[%s3142 + $0x18] sm:$0xff]
        %v3147 = vld [vmem:[%s3142 + $0x20] sm:$0xff]
        %v3148 = vld [vmem:[%s3142 + $0x28] sm:$0xff]
        %v3149 = vld [vmem:[%s3142 + $0x30] sm:$0xff]
        %v3150 = vld [vmem:[%s3142 + $0x38] sm:$0xff]
        %v3151 = vld [vmem:[%s3142 + $0x40] sm:$0xff]
        %v3152 = vld [vmem:[%s3142 + $0x48] sm:$0xff]
        %v3153 = vld [vmem:[%s3142 + $0x50] sm:$0xff]
        %v3154 = vld [vmem:[%s3142 + $0x58] sm:$0xff]
        %v3155 = vld [vmem:[%s3142 + $0x60] sm:$0xff]
        %v3156 = vld [vmem:[%s3142 + $0x68] sm:$0xff]
        %v3157 = vld [vmem:[%s3142 + $0x70] sm:$0xff]
        %v3158 = vld [vmem:[%s3142 + $0x78] sm:$0xff]
        %v3160 = vsel %vm884, %v3141, 0
        %3162 = vmatprep.subr.mxu0 0.0
        %3163 = vmatpush1.msra.mxu0 %v3138
        %3164 = vmatprep.subr.mxu0 0.0
        %3165 = vmatpush1.msra.mxu0 %v3139
        %3166 = vmatprep.subr.mxu0 0.0
        %3167 = vmatpush1.msra.mxu0 %v3140
        %3168 = vmatprep.subr.mxu0 0.0
        %3169 = vmatpush1.msra.mxu0 %v3160
        %3170 = vmatprep.subr.mxu0 0.0
        %3171 = vmatpush1.msra.mxu0 0.0
        %3172 = vmatprep.subr.mxu0 0.0
        %3173 = vmatpush1.msra.mxu0 0.0
        %3174 = vmatprep.subr.mxu0 0.0
        %3175 = vmatpush1.msra.mxu0 0.0
        %3176 = vmatprep.subr.mxu0 0.0
        %3177 = vmatpush1.msra.mxu0 0.0
        %3178 = vmatprep.subr.mxu0 0.0
        %3179 = vmatpush1.msra.mxu0 0.0
        %3180 = vmatprep.subr.mxu0 0.0
        %3181 = vmatpush1.msra.mxu0 0.0
        %3182 = vmatprep.subr.mxu0 0.0
        %3183 = vmatpush1.msra.mxu0 0.0
        %3184 = vmatprep.subr.mxu0 0.0
        %3185 = vmatpush1.msra.mxu0 0.0
        %3186 = vmatprep.subr.mxu0 0.0
        %3187 = vmatpush1.msra.mxu0 0.0
        %3188 = vmatprep.subr.mxu0 0.0
        %3189 = vmatpush1.msra.mxu0 0.0
        %3190 = vmatprep.subr.mxu0 0.0
        %3191 = vmatpush1.msra.mxu0 0.0
        %3192 = vmatprep.subr.mxu0 0.0
        %3193 = vmatpush1.msra.mxu0 0.0
        %3194 = vmatprep.subr.mxu0 0.0
        %3195 = vmatpush1.msra.mxu0 0.0
        %3196 = vmatprep.subr.mxu0 0.0
        %3197 = vmatpush1.msra.mxu0 0.0
        %3198 = vmatprep.subr.mxu0 0.0
        %3199 = vmatpush1.msra.mxu0 0.0
        %3200 = vmatprep.subr.mxu0 0.0
        %3201 = vmatpush1.msra.mxu0 0.0
        %3202 = vmatprep.subr.mxu0 0.0
        %3203 = vmatpush1.msra.mxu0 0.0
        %3204 = vmatprep.subr.mxu0 0.0
        %3205 = vmatpush1.msra.mxu0 0.0
        %3206 = vmatprep.subr.mxu0 0.0
        %3207 = vmatpush1.msra.mxu0 0.0
        %3208 = vmatprep.subr.mxu0 0.0
        %3209 = vmatpush1.msra.mxu0 0.0
        %3210 = vmatprep.subr.mxu0 0.0
        %3211 = vmatpush1.msra.mxu0 0.0
        %3212 = vmatprep.subr.mxu0 0.0
        %3213 = vmatpush1.msra.mxu0 0.0
        %3214 = vmatprep.subr.mxu0 0.0
        %3215 = vmatpush1.msra.mxu0 0.0
        %3216 = vmatprep.subr.mxu0 0.0
        %3217 = vmatpush1.msra.mxu0 0.0
        %3218 = vmatprep.subr.mxu0 0.0
        %3219 = vmatpush1.msra.mxu0 0.0
        %3220 = vmatprep.subr.mxu0 0.0
        %3221 = vmatpush1.msra.mxu0 0.0
        %3222 = vmatprep.subr.mxu0 0.0
        %3223 = vmatpush1.msra.mxu0 0.0
        %3224 = vmatprep.subr.mxu0 0.0
        %3225 = vmatpush1.msra.mxu0 0.0
        %3226 = vmatprep.mubr.f32.mxu0 0.0
        %3227 = vmatmul.mubr.f32.gmra.mrb[0].mxu0 %v2690
        %v3228 = vpop.f32.mrb[0].mxu0
        %v3229 = vadd.f32 0.0, %v3228
        %v3230 = vpop.f32.mrb[0].mxu0
        %3231 = vmatprep.mubr.f32.mxu0 0.0
        %3232 = vmatmul.mubr.f32.gmra.mrb[0].mxu0 %v2693
        %v3233 = vpop.f32.mrb[0].mxu0
        %v3234 = vadd.f32 0.0, %v3233
        %v3235 = vpop.f32.mrb[0].mxu0
        %3236 = vmatprep.mubr.f32.mxu0 0.0
        %3237 = vmatmul.mubr.f32.gmra.mrb[0].mxu0 %v2696
        %v3238 = vpop.f32.mrb[0].mxu0
        %v3239 = vadd.f32 0.0, %v3238
        %v3240 = vpop.f32.mrb[0].mxu0
        %3241 = vmatprep.mubr.f32.mxu0 0.0
        %3242 = vmatmul.mubr.f32.gmra.mrb[0].mxu0 %v2699
        %v3243 = vpop.f32.mrb[0].mxu0
        %v3244 = vadd.f32 0.0, %v3243
        %v3245 = vpop.f32.mrb[0].mxu0
        %3246 = vdwg.mxu0
        %s3247 = scalar_lea.vmem %s16, 128
        %v3248 = vld [vmem:[%s3247] sm:$0xff]
        %v3249 = vld [vmem:[%s3247 + $0x8] sm:$0xff]
        %v3250 = vld [vmem:[%s3247 + $0x10] sm:$0xff]
        %v3251 = vld [vmem:[%s3247 + $0x18] sm:$0xff]
        %v3252 = vld [vmem:[%s3247 + $0x20] sm:$0xff]
        %v3253 = vld [vmem:[%s3247 + $0x28] sm:$0xff]
        %v3254 = vld [vmem:[%s3247 + $0x30] sm:$0xff]
        %v3255 = vld [vmem:[%s3247 + $0x38] sm:$0xff]
        %v3256 = vld [vmem:[%s3247 + $0x40] sm:$0xff]
        %v3257 = vld [vmem:[%s3247 + $0x48] sm:$0xff]
        %v3258 = vld [vmem:[%s3247 + $0x50] sm:$0xff]
        %v3259 = vld [vmem:[%s3247 + $0x58] sm:$0xff]
        %v3260 = vld [vmem:[%s3247 + $0x60] sm:$0xff]
        %v3261 = vld [vmem:[%s3247 + $0x68] sm:$0xff]
        %v3262 = vld [vmem:[%s3247 + $0x70] sm:$0xff]
        %v3263 = vld [vmem:[%s3247 + $0x78] sm:$0xff]
        %3264 = vmatprep.subr.mxu0 0.0
        %3265 = vmatpush1.msra.mxu0 %v3248
        %3266 = vmatprep.subr.mxu0 0.0
        %3267 = vmatpush1.msra.mxu0 %v3249
        %3268 = vmatprep.subr.mxu0 0.0
        %3269 = vmatpush1.msra.mxu0 %v3250
        %3270 = vmatprep.subr.mxu0 0.0
        %3271 = vmatpush1.msra.mxu0 %v3251
        %3272 = vmatprep.subr.mxu0 0.0
        %3273 = vmatpush1.msra.mxu0 %v3252
        %3274 = vmatprep.subr.mxu0 0.0
        %3275 = vmatpush1.msra.mxu0 %v3253
        %3276 = vmatprep.subr.mxu0 0.0
        %3277 = vmatpush1.msra.mxu0 %v3254
        %3278 = vmatprep.subr.mxu0 0.0
        %3279 = vmatpush1.msra.mxu0 %v3255
        %3280 = vmatprep.subr.mxu0 0.0
        %3281 = vmatpush1.msra.mxu0 %v3256
        %3282 = vmatprep.subr.mxu0 0.0
        %3283 = vmatpush1.msra.mxu0 %v3257
        %3284 = vmatprep.subr.mxu0 0.0
        %3285 = vmatpush1.msra.mxu0 %v3258
        %3286 = vmatprep.subr.mxu0 0.0
        %3287 = vmatpush1.msra.mxu0 %v3259
        %3288 = vmatprep.subr.mxu0 0.0
        %3289 = vmatpush1.msra.mxu0 %v3260
        %3290 = vmatprep.subr.mxu0 0.0
        %3291 = vmatpush1.msra.mxu0 %v3261
        %3292 = vmatprep.subr.mxu0 0.0
        %3293 = vmatpush1.msra.mxu0 %v3262
        %3294 = vmatprep.subr.mxu0 0.0
        %3295 = vmatpush1.msra.mxu0 %v3263
        %3296 = vmatprep.subr.mxu0 0.0
        %3297 = vmatpush1.msra.mxu0 0.0
        %3298 = vmatprep.subr.mxu0 0.0
        %3299 = vmatpush1.msra.mxu0 0.0
        %3300 = vmatprep.subr.mxu0 0.0
        %3301 = vmatpush1.msra.mxu0 0.0
        %3302 = vmatprep.subr.mxu0 0.0
        %3303 = vmatpush1.msra.mxu0 0.0
        %3304 = vmatprep.subr.mxu0 0.0
        %3305 = vmatpush1.msra.mxu0 0.0
        %3306 = vmatprep.subr.mxu0 0.0
        %3307 = vmatpush1.msra.mxu0 0.0
        %3308 = vmatprep.subr.mxu0 0.0
        %3309 = vmatpush1.msra.mxu0 0.0
        %3310 = vmatprep.subr.mxu0 0.0
        %3311 = vmatpush1.msra.mxu0 0.0
        %3312 = vmatprep.subr.mxu0 0.0
        %3313 = vmatpush1.msra.mxu0 0.0
        %3314 = vmatprep.subr.mxu0 0.0
        %3315 = vmatpush1.msra.mxu0 0.0
        %3316 = vmatprep.subr.mxu0 0.0
        %3317 = vmatpush1.msra.mxu0 0.0
        %3318 = vmatprep.subr.mxu0 0.0
        %3319 = vmatpush1.msra.mxu0 0.0
        %3320 = vmatprep.subr.mxu0 0.0
        %3321 = vmatpush1.msra.mxu0 0.0
        %3322 = vmatprep.subr.mxu0 0.0
        %3323 = vmatpush1.msra.mxu0 0.0
        %3324 = vmatprep.subr.mxu0 0.0
        %3325 = vmatpush1.msra.mxu0 0.0
        %3326 = vmatprep.subr.mxu0 0.0
        %3327 = vmatpush1.msra.mxu0 0.0
        %3328 = vmatprep.mubr.f32.mxu0 0.0
        %3329 = vmatmul.mubr.f32.gmra.mrb[0].mxu0 %v3229
        %v3330 = vpop.f32.mrb[0].mxu0
        %v3331 = vadd.f32 0.0, %v3330
        %v3332 = vpop.f32.mrb[0].mxu0
        %3333 = vmatprep.mubr.f32.mxu0 0.0
        %3334 = vmatmul.mubr.f32.gmra.mrb[0].mxu0 %v3234
        %v3335 = vpop.f32.mrb[0].mxu0
        %v3336 = vadd.f32 0.0, %v3335
        %v3337 = vpop.f32.mrb[0].mxu0
        %3338 = vmatprep.mubr.f32.mxu0 0.0
        %3339 = vmatmul.mubr.f32.gmra.mrb[0].mxu0 %v3239
        %v3340 = vpop.f32.mrb[0].mxu0
        %v3341 = vadd.f32 0.0, %v3340
        %v3342 = vpop.f32.mrb[0].mxu0
        %3343 = vmatprep.mubr.f32.mxu0 0.0
        %3344 = vmatmul.mubr.f32.gmra.mrb[0].mxu0 %v3244
        %v3345 = vpop.f32.mrb[0].mxu0
        %v3346 = vadd.f32 0.0, %v3345
        %v3347 = vpop.f32.mrb[0].mxu0
        %3348 = vdwg.mxu0
        %3349 = vmatprep.subr.mxu0 0.0
        %3350 = vmatpush1.msra.mxu0 %v3143
        %3351 = vmatprep.subr.mxu0 0.0
        %3352 = vmatpush1.msra.mxu0 %v3144
        %3353 = vmatprep.subr.mxu0 0.0
        %3354 = vmatpush1.msra.mxu0 %v3145
        %3355 = vmatprep.subr.mxu0 0.0
        %3356 = vmatpush1.msra.mxu0 %v3146
        %3357 = vmatprep.subr.mxu0 0.0
        %3358 = vmatpush1.msra.mxu0 %v3147
        %3359 = vmatprep.subr.mxu0 0.0
        %3360 = vmatpush1.msra.mxu0 %v3148
        %3361 = vmatprep.subr.mxu0 0.0
        %3362 = vmatpush1.msra.mxu0 %v3149
        %3363 = vmatprep.subr.mxu0 0.0
        %3364 = vmatpush1.msra.mxu0 %v3150
        %3365 = vmatprep.subr.mxu0 0.0
        %3366 = vmatpush1.msra.mxu0 %v3151
        %3367 = vmatprep.subr.mxu0 0.0
        %3368 = vmatpush1.msra.mxu0 %v3152
        %3369 = vmatprep.subr.mxu0 0.0
        %3370 = vmatpush1.msra.mxu0 %v3153
        %3371 = vmatprep.subr.mxu0 0.0
        %3372 = vmatpush1.msra.mxu0 %v3154
        %3373 = vmatprep.subr.mxu0 0.0
        %3374 = vmatpush1.msra.mxu0 %v3155
        %3375 = vmatprep.subr.mxu0 0.0
        %3376 = vmatpush1.msra.mxu0 %v3156
        %3377 = vmatprep.subr.mxu0 0.0
        %3378 = vmatpush1.msra.mxu0 %v3157
        %3379 = vmatprep.subr.mxu0 0.0
        %3380 = vmatpush1.msra.mxu0 %v3158
        %3381 = vmatprep.subr.mxu0 0.0
        %3382 = vmatpush1.msra.mxu0 0.0
        %3383 = vmatprep.subr.mxu0 0.0
        %3384 = vmatpush1.msra.mxu0 0.0
        %3385 = vmatprep.subr.mxu0 0.0
        %3386 = vmatpush1.msra.mxu0 0.0
        %3387 = vmatprep.subr.mxu0 0.0
        %3388 = vmatpush1.msra.mxu0 0.0
        %3389 = vmatprep.subr.mxu0 0.0
        %3390 = vmatpush1.msra.mxu0 0.0
        %3391 = vmatprep.subr.mxu0 0.0
        %3392 = vmatpush1.msra.mxu0 0.0
        %3393 = vmatprep.subr.mxu0 0.0
        %3394 = vmatpush1.msra.mxu0 0.0
        %3395 = vmatprep.subr.mxu0 0.0
        %3396 = vmatpush1.msra.mxu0 0.0
        %3397 = vmatprep.subr.mxu0 0.0
        %3398 = vmatpush1.msra.mxu0 0.0
        %3399 = vmatprep.subr.mxu0 0.0
        %3400 = vmatpush1.msra.mxu0 0.0
        %3401 = vmatprep.subr.mxu0 0.0
        %3402 = vmatpush1.msra.mxu0 0.0
        %3403 = vmatprep.subr.mxu0 0.0
        %3404 = vmatpush1.msra.mxu0 0.0
        %3405 = vmatprep.subr.mxu0 0.0
        %3406 = vmatpush1.msra.mxu0 0.0
        %3407 = vmatprep.subr.mxu0 0.0
        %3408 = vmatpush1.msra.mxu0 0.0
        %3409 = vmatprep.subr.mxu0 0.0
        %3410 = vmatpush1.msra.mxu0 0.0
        %3411 = vmatprep.subr.mxu0 0.0
        %3412 = vmatpush1.msra.mxu0 0.0
        %3413 = vmatprep.mubr.f32.mxu0 0.0
        %3414 = vmatmul.mubr.f32.gmra.mrb[0].mxu0 %v3138
        %v3415 = vpop.f32.mrb[0].mxu0
        %v3416 = vadd.f32 %v3331, %v3415
        %v3417 = vpop.f32.mrb[0].mxu0
        %3418 = vmatprep.mubr.f32.mxu0 0.0
        %3419 = vmatmul.mubr.f32.gmra.mrb[0].mxu0 %v3139
        %v3420 = vpop.f32.mrb[0].mxu0
        %v3421 = vadd.f32 %v3336, %v3420
        %v3422 = vpop.f32.mrb[0].mxu0
        %3423 = vmatprep.mubr.f32.mxu0 0.0
        %3424 = vmatmul.mubr.f32.gmra.mrb[0].mxu0 %v3140
        %v3425 = vpop.f32.mrb[0].mxu0
        %v3426 = vadd.f32 %v3341, %v3425
        %v3427 = vpop.f32.mrb[0].mxu0
        %3428 = vmatprep.mubr.f32.mxu0 0.0
        %3429 = vmatmul.mubr.f32.gmra.mrb[0].mxu0 %v3141
        %v3430 = vpop.f32.mrb[0].mxu0
        %v3431 = vadd.f32 %v3346, %v3430
        %v3432 = vpop.f32.mrb[0].mxu0
        %3433 = vdwg.mxu0
        %s3434 = scalar_lea.vmem %s21, 96
        %v3435 = vld [vmem:[%s3434] sm:$0xff]
        %v3436 = vld [vmem:[%s3434 + $0x8] sm:$0xff]
        %v3437 = vld [vmem:[%s3434 + $0x10] sm:$0xff]
        %v3438 = vld [vmem:[%s3434 + $0x18] sm:$0x3f]
        %v3440 = vsel %vm871, %v3435, 0
        %v3443 = vsel %vm871, %v3436, 0
        %v3446 = vsel %vm871, %v3437, 0
        %v3449 = vsel %vm871, %v3438, 0
        %3451 = vmatprep.subr.mxu0 0.0
        %3452 = vmatpush1.msra.mxu0 %v3138
        %3453 = vmatprep.subr.mxu0 0.0
        %3454 = vmatpush1.msra.mxu0 %v3139
        %3455 = vmatprep.subr.mxu0 0.0
        %3456 = vmatpush1.msra.mxu0 %v3140
        %3457 = vmatprep.subr.mxu0 0.0
        %3458 = vmatpush1.msra.mxu0 %v3160
        %3459 = vmatprep.subr.mxu0 0.0
        %3460 = vmatpush1.msra.mxu0 0.0
        %3461 = vmatprep.subr.mxu0 0.0
        %3462 = vmatpush1.msra.mxu0 0.0
        %3463 = vmatprep.subr.mxu0 0.0
        %3464 = vmatpush1.msra.mxu0 0.0
        %3465 = vmatprep.subr.mxu0 0.0
        %3466 = vmatpush1.msra.mxu0 0.0
        %3467 = vmatprep.subr.mxu0 0.0
        %3468 = vmatpush1.msra.mxu0 0.0
        %3469 = vmatprep.subr.mxu0 0.0
        %3470 = vmatpush1.msra.mxu0 0.0
        %3471 = vmatprep.subr.mxu0 0.0
        %3472 = vmatpush1.msra.mxu0 0.0
        %3473 = vmatprep.subr.mxu0 0.0
        %3474 = vmatpush1.msra.mxu0 0.0
        %3475 = vmatprep.subr.mxu0 0.0
        %3476 = vmatpush1.msra.mxu0 0.0
        %3477 = vmatprep.subr.mxu0 0.0
        %3478 = vmatpush1.msra.mxu0 0.0
        %3479 = vmatprep.subr.mxu0 0.0
        %3480 = vmatpush1.msra.mxu0 0.0
        %3481 = vmatprep.subr.mxu0 0.0
        %3482 = vmatpush1.msra.mxu0 0.0
        %3483 = vmatprep.subr.mxu0 0.0
        %3484 = vmatpush1.msra.mxu0 0.0
        %3485 = vmatprep.subr.mxu0 0.0
        %3486 = vmatpush1.msra.mxu0 0.0
        %3487 = vmatprep.subr.mxu0 0.0
        %3488 = vmatpush1.msra.mxu0 0.0
        %3489 = vmatprep.subr.mxu0 0.0
        %3490 = vmatpush1.msra.mxu0 0.0
        %3491 = vmatprep.subr.mxu0 0.0
        %3492 = vmatpush1.msra.mxu0 0.0
        %3493 = vmatprep.subr.mxu0 0.0
        %3494 = vmatpush1.msra.mxu0 0.0
        %3495 = vmatprep.subr.mxu0 0.0
        %3496 = vmatpush1.msra.mxu0 0.0
        %3497 = vmatprep.subr.mxu0 0.0
        %3498 = vmatpush1.msra.mxu0 0.0
        %3499 = vmatprep.subr.mxu0 0.0
        %3500 = vmatpush1.msra.mxu0 0.0
        %3501 = vmatprep.subr.mxu0 0.0
        %3502 = vmatpush1.msra.mxu0 0.0
        %3503 = vmatprep.subr.mxu0 0.0
        %3504 = vmatpush1.msra.mxu0 0.0
        %3505 = vmatprep.subr.mxu0 0.0
        %3506 = vmatpush1.msra.mxu0 0.0
        %3507 = vmatprep.subr.mxu0 0.0
        %3508 = vmatpush1.msra.mxu0 0.0
        %3509 = vmatprep.subr.mxu0 0.0
        %3510 = vmatpush1.msra.mxu0 0.0
        %3511 = vmatprep.subr.mxu0 0.0
        %3512 = vmatpush1.msra.mxu0 0.0
        %3513 = vmatprep.subr.mxu0 0.0
        %3514 = vmatpush1.msra.mxu0 0.0
        %3515 = vmatprep.mubr.f32.mxu0 0.0
        %3516 = vmatmul.mubr.f32.gmra.mrb[0].mxu0 %v3440
        %v3517 = vpop.f32.mrb[0].mxu0
        %v3518 = vadd.f32 0.0, %v3517
        %v3519 = vpop.f32.mrb[0].mxu0
        %3520 = vmatprep.mubr.f32.mxu0 0.0
        %3521 = vmatmul.mubr.f32.gmra.mrb[0].mxu0 %v3443
        %v3522 = vpop.f32.mrb[0].mxu0
        %v3523 = vadd.f32 0.0, %v3522
        %v3524 = vpop.f32.mrb[0].mxu0
        %3525 = vmatprep.mubr.f32.mxu0 0.0
        %3526 = vmatmul.mubr.f32.gmra.mrb[0].mxu0 %v3446
        %v3527 = vpop.f32.mrb[0].mxu0
        %v3528 = vadd.f32 0.0, %v3527
        %v3529 = vpop.f32.mrb[0].mxu0
        %3530 = vmatprep.mubr.f32.mxu0 0.0
        %3531 = vmatmul.mubr.f32.gmra.mrb[0].mxu0 %v3449
        %v3532 = vpop.f32.mrb[0].mxu0
        %v3533 = vadd.f32 0.0, %v3532
        %v3534 = vpop.f32.mrb[0].mxu0
        %3535 = vdwg.mxu0
        %v3536 = vld [vmem:[%s16] sm:$0xff]
        %v3537 = vld [vmem:[%s16 + $0x8] sm:$0xff]
        %v3538 = vld [vmem:[%s16 + $0x10] sm:$0xff]
        %v3539 = vld [vmem:[%s16 + $0x18] sm:$0xff]
        %v3540 = vld [vmem:[%s16 + $0x20] sm:$0xff]
        %v3541 = vld [vmem:[%s16 + $0x28] sm:$0xff]
        %v3542 = vld [vmem:[%s16 + $0x30] sm:$0xff]
        %v3543 = vld [vmem:[%s16 + $0x38] sm:$0xff]
        %v3544 = vld [vmem:[%s16 + $0x40] sm:$0xff]
        %v3545 = vld [vmem:[%s16 + $0x48] sm:$0xff]
        %v3546 = vld [vmem:[%s16 + $0x50] sm:$0xff]
        %v3547 = vld [vmem:[%s16 + $0x58] sm:$0xff]
        %v3548 = vld [vmem:[%s16 + $0x60] sm:$0xff]
        %v3549 = vld [vmem:[%s16 + $0x68] sm:$0xff]
        %v3550 = vld [vmem:[%s16 + $0x70] sm:$0xff]
        %v3551 = vld [vmem:[%s16 + $0x78] sm:$0xff]
        %3552 = vmatprep.subr.mxu0 0.0
        %3553 = vmatpush1.msra.mxu0 %v3536
        %3554 = vmatprep.subr.mxu0 0.0
        %3555 = vmatpush1.msra.mxu0 %v3537
        %3556 = vmatprep.subr.mxu0 0.0
        %3557 = vmatpush1.msra.mxu0 %v3538
        %3558 = vmatprep.subr.mxu0 0.0
        %3559 = vmatpush1.msra.mxu0 %v3539
        %3560 = vmatprep.subr.mxu0 0.0
        %3561 = vmatpush1.msra.mxu0 %v3540
        %3562 = vmatprep.subr.mxu0 0.0
        %3563 = vmatpush1.msra.mxu0 %v3541
        %3564 = vmatprep.subr.mxu0 0.0
        %3565 = vmatpush1.msra.mxu0 %v3542
        %3566 = vmatprep.subr.mxu0 0.0
        %3567 = vmatpush1.msra.mxu0 %v3543
        %3568 = vmatprep.subr.mxu0 0.0
        %3569 = vmatpush1.msra.mxu0 %v3544
        %3570 = vmatprep.subr.mxu0 0.0
        %3571 = vmatpush1.msra.mxu0 %v3545
        %3572 = vmatprep.subr.mxu0 0.0
        %3573 = vmatpush1.msra.mxu0 %v3546
        %3574 = vmatprep.subr.mxu0 0.0
        %3575 = vmatpush1.msra.mxu0 %v3547
        %3576 = vmatprep.subr.mxu0 0.0
        %3577 = vmatpush1.msra.mxu0 %v3548
        %3578 = vmatprep.subr.mxu0 0.0
        %3579 = vmatpush1.msra.mxu0 %v3549
        %3580 = vmatprep.subr.mxu0 0.0
        %3581 = vmatpush1.msra.mxu0 %v3550
        %3582 = vmatprep.subr.mxu0 0.0
        %3583 = vmatpush1.msra.mxu0 %v3551
        %3584 = vmatprep.subr.mxu0 0.0
        %3585 = vmatpush1.msra.mxu0 0.0
        %3586 = vmatprep.subr.mxu0 0.0
        %3587 = vmatpush1.msra.mxu0 0.0
        %3588 = vmatprep.subr.mxu0 0.0
        %3589 = vmatpush1.msra.mxu0 0.0
        %3590 = vmatprep.subr.mxu0 0.0
        %3591 = vmatpush1.msra.mxu0 0.0
        %3592 = vmatprep.subr.mxu0 0.0
        %3593 = vmatpush1.msra.mxu0 0.0
        %3594 = vmatprep.subr.mxu0 0.0
        %3595 = vmatpush1.msra.mxu0 0.0
        %3596 = vmatprep.subr.mxu0 0.0
        %3597 = vmatpush1.msra.mxu0 0.0
        %3598 = vmatprep.subr.mxu0 0.0
        %3599 = vmatpush1.msra.mxu0 0.0
        %3600 = vmatprep.subr.mxu0 0.0
        %3601 = vmatpush1.msra.mxu0 0.0
        %3602 = vmatprep.subr.mxu0 0.0
        %3603 = vmatpush1.msra.mxu0 0.0
        %3604 = vmatprep.subr.mxu0 0.0
        %3605 = vmatpush1.msra.mxu0 0.0
        %3606 = vmatprep.subr.mxu0 0.0
        %3607 = vmatpush1.msra.mxu0 0.0
        %3608 = vmatprep.subr.mxu0 0.0
        %3609 = vmatpush1.msra.mxu0 0.0
        %3610 = vmatprep.subr.mxu0 0.0
        %3611 = vmatpush1.msra.mxu0 0.0
        %3612 = vmatprep.subr.mxu0 0.0
        %3613 = vmatpush1.msra.mxu0 0.0
        %3614 = vmatprep.subr.mxu0 0.0
        %3615 = vmatpush1.msra.mxu0 0.0
        %3616 = vmatprep.mubr.f32.mxu0 0.0
        %3617 = vmatmul.mubr.f32.gmra.mrb[0].mxu0 %v3518
        %v3618 = vpop.f32.mrb[0].mxu0
        %v3619 = vadd.f32 0.0, %v3618
        %v3620 = vpop.f32.mrb[0].mxu0
        %3621 = vmatprep.mubr.f32.mxu0 0.0
        %3622 = vmatmul.mubr.f32.gmra.mrb[0].mxu0 %v3523
        %v3623 = vpop.f32.mrb[0].mxu0
        %v3624 = vadd.f32 0.0, %v3623
        %v3625 = vpop.f32.mrb[0].mxu0
        %3626 = vmatprep.mubr.f32.mxu0 0.0
        %3627 = vmatmul.mubr.f32.gmra.mrb[0].mxu0 %v3528
        %v3628 = vpop.f32.mrb[0].mxu0
        %v3629 = vadd.f32 0.0, %v3628
        %v3630 = vpop.f32.mrb[0].mxu0
        %3631 = vmatprep.mubr.f32.mxu0 0.0
        %3632 = vmatmul.mubr.f32.gmra.mrb[0].mxu0 %v3533
        %v3633 = vpop.f32.mrb[0].mxu0
        %v3634 = vadd.f32 0.0, %v3633
        %v3635 = vpop.f32.mrb[0].mxu0
        %3636 = vdwg.mxu0
        %v3637 = vadd.f32 %v3416, %v3619
        %v3638 = vadd.f32 %v3421, %v3624
        %v3639 = vadd.f32 %v3426, %v3629
        %v3640 = vadd.f32 %v3431, %v3634
        %v3641 = vld [vmem:[%s17] sm:$0x1]
        %v3643 = vlaneseq
        %v3644 = vshrl.u32 %v3643, 7
        %v3645 = vsub.s32 0, %v3644
        %v3646 = vrot.slane %v3641, %v3645
        %v3648 = vadd.f32 %v3637, %v3646
        %v3649 = vadd.f32 %v3638, %v3646
        %v3650 = vadd.f32 %v3639, %v3646
        %v3651 = vadd.f32 %v3640, %v3646
        %vm3652 = vcmp.gt.f32.partialorder %v3648, 0.0
        %vm3653 = vcmp.gt.f32.partialorder %v3649, 0.0
        %vm3654 = vcmp.gt.f32.partialorder %v3650, 0.0
        %vm3655 = vcmp.gt.f32.partialorder %v3651, 0.0
        %v3656 = vmul.f32 %v3648, 0.01
        %v3657 = vmul.f32 %v3649, 0.01
        %v3658 = vmul.f32 %v3650, 0.01
        %v3659 = vmul.f32 %v3651, 0.01
        %v3660 = vsel %vm3652, %v3648, %v3656
        %v3661 = vsel %vm3653, %v3649, %v3657
        %v3662 = vsel %vm3654, %v3650, %v3658
        %v3663 = vsel %vm3655, %v3651, %v3659
        %vm3664 = vcmask 523264
        %v3665 = vsel %vm3664, %v3660, 0.0
        %v3666 = vsel %vm3664, %v3661, 0.0
        %v3667 = vadd.f32 %v3665, %v3666
        %v3668 = vsel %vm3664, %v3662, 0.0
        %v3669 = vadd.f32 %v3667, %v3668
        %vm3670 = vcmask 521216
        %v3671 = vsel %vm3670, %v3663, 0.0
        %v3672 = vadd.f32 %v3669, %v3671
        %v3673 = vrot.slane %v3672, 4
        %v3674 = vadd.f32 %v3672, %v3673
        %v3675 = vrot.slane %v3674, 2
        %v3676 = vadd.f32 %v3674, %v3675
        %v3677 = vrot.slane %v3676, 1
        %v3678 = vadd.f32 %v3676, %v3677
        %v3679 = vmul.f32 %v3678, %v2119
        %v3680 = vsub.f32 %v3660, %v3679
        %v3681 = vsub.f32 %v3661, %v3679
        %v3682 = vsub.f32 %v3662, %v3679
        %v3683 = vsub.f32 %v3663, %v3679
        %v3684 = vmul.f32 %v3680, %v3680
        %v3685 = vmul.f32 %v3681, %v3681
        %v3686 = vmul.f32 %v3682, %v3682
        %v3687 = vmul.f32 %v3683, %v3683
        %v3688 = vsel %vm3664, %v3684, 0.0
        %v3689 = vsel %vm3664, %v3685, 0.0
        %v3690 = vadd.f32 %v3688, %v3689
        %v3691 = vsel %vm3664, %v3686, 0.0
        %v3692 = vadd.f32 %v3690, %v3691
        %v3693 = vsel %vm3670, %v3687, 0.0
        %v3694 = vadd.f32 %v3692, %v3693
        %v3695 = vrot.slane %v3694, 4
        %v3696 = vadd.f32 %v3694, %v3695
        %v3697 = vrot.slane %v3696, 2
        %v3698 = vadd.f32 %v3696, %v3697
        %v3699 = vrot.slane %v3698, 1
        %v3700 = vadd.f32 %v3698, %v3699
        %v3701 = vmul.f32 %v3700, %v2119
        %v3702 = vadd.f32 %v3701, 1e-05
        %v3703 = vrsqrt.pop %v3702
        %v3704 = vmul.f32 %v3680, %v3703
        %v3705 = vmul.f32 %v3681, %v3703
        %v3706 = vmul.f32 %v3682, %v3703
        %v3707 = vmul.f32 %v3683, %v3703
        %3708 = vset.pattern.permute.xlu0 4
        %3709 = vperm.xlu0 %3708, %v1496
        %v3710 = vpop.permute.xlu0 %3709
        %3712 = vset.pattern.permute.xlu0 4
        %3713 = vperm.xlu0 %3712, %v1497
        %v3714 = vpop.permute.xlu0 %3713
        %3716 = vset.pattern.permute.xlu0 4
        %3717 = vperm.xlu0 %3716, %v1498
        %v3718 = vpop.permute.xlu0 %3717
        %3720 = vset.pattern.permute.xlu0 4
        %3721 = vperm.xlu0 %3720, %v1499
        %v3722 = vpop.permute.xlu0 %3721
        %v3724 = vmul.f32 %v3704, %v3710
        %v3725 = vmul.f32 %v3705, %v3714
        %v3726 = vmul.f32 %v3706, %v3718
        %v3727 = vmul.f32 %v3707, %v3722
        %3728 = vset.pattern.permute.xlu0 5
        %3729 = vperm.xlu0 %3728, %v1496
        %v3730 = vpop.permute.xlu0 %3729
        %3732 = vset.pattern.permute.xlu0 5
        %3733 = vperm.xlu0 %3732, %v1497
        %v3734 = vpop.permute.xlu0 %3733
        %3736 = vset.pattern.permute.xlu0 5
        %3737 = vperm.xlu0 %3736, %v1498
        %v3738 = vpop.permute.xlu0 %3737
        %3740 = vset.pattern.permute.xlu0 5
        %3741 = vperm.xlu0 %3740, %v1499
        %v3742 = vpop.permute.xlu0 %3741
        %v3744 = vadd.f32 %v3724, %v3730
        %v3745 = vadd.f32 %v3725, %v3734
        %v3746 = vadd.f32 %v3726, %v3738
        %v3747 = vadd.f32 %v3727, %v3742
        %v3748 = vld [vmem:[%s18] sm:$0xff]
        %v3749 = vld [vmem:[%s18 + $0x8] sm:$0xff]
        %v3750 = vld [vmem:[%s18 + $0x10] sm:$0xff]
        %v3751 = vld [vmem:[%s18 + $0x18] sm:$0xff]
        %v3752 = vld [vmem:[%s18 + $0x20] sm:$0xff]
        %v3753 = vld [vmem:[%s18 + $0x28] sm:$0xff]
        %v3754 = vld [vmem:[%s18 + $0x30] sm:$0xff]
        %v3755 = vld [vmem:[%s18 + $0x38] sm:$0xff]
        %v3756 = vld [vmem:[%s18 + $0x40] sm:$0xff]
        %v3757 = vld [vmem:[%s18 + $0x48] sm:$0xff]
        %v3758 = vld [vmem:[%s18 + $0x50] sm:$0xff]
        %v3759 = vld [vmem:[%s18 + $0x58] sm:$0xff]
        %v3760 = vld [vmem:[%s18 + $0x60] sm:$0xff]
        %v3761 = vld [vmem:[%s18 + $0x68] sm:$0xff]
        %v3762 = vld [vmem:[%s18 + $0x70] sm:$0xff]
        %v3763 = vld [vmem:[%s18 + $0x78] sm:$0xff]
        %v3764 = vld [vmem:[%s19] sm:$0x1]
        %v3766 = vlaneseq
        %v3767 = vshrl.u32 %v3766, 7
        %v3768 = vsub.s32 0, %v3767
        %v3769 = vrot.slane %v3764, %v3768
        %3771 = vmatprep.subr.mxu0 0.0
        %3772 = vmatpush1.msra.mxu0 %v3748
        %3773 = vmatprep.subr.mxu0 0.0
        %3774 = vmatpush1.msra.mxu0 %v3749
        %3775 = vmatprep.subr.mxu0 0.0
        %3776 = vmatpush1.msra.mxu0 %v3750
        %3777 = vmatprep.subr.mxu0 0.0
        %3778 = vmatpush1.msra.mxu0 %v3751
        %3779 = vmatprep.subr.mxu0 0.0
        %3780 = vmatpush1.msra.mxu0 %v3752
        %3781 = vmatprep.subr.mxu0 0.0
        %3782 = vmatpush1.msra.mxu0 %v3753
        %3783 = vmatprep.subr.mxu0 0.0
        %3784 = vmatpush1.msra.mxu0 %v3754
        %3785 = vmatprep.subr.mxu0 0.0
        %3786 = vmatpush1.msra.mxu0 %v3755
        %3787 = vmatprep.subr.mxu0 0.0
        %3788 = vmatpush1.msra.mxu0 %v3756
        %3789 = vmatprep.subr.mxu0 0.0
        %3790 = vmatpush1.msra.mxu0 %v3757
        %3791 = vmatprep.subr.mxu0 0.0
        %3792 = vmatpush1.msra.mxu0 %v3758
        %3793 = vmatprep.subr.mxu0 0.0
        %3794 = vmatpush1.msra.mxu0 %v3759
        %3795 = vmatprep.subr.mxu0 0.0
        %3796 = vmatpush1.msra.mxu0 %v3760
        %3797 = vmatprep.subr.mxu0 0.0
        %3798 = vmatpush1.msra.mxu0 %v3761
        %3799 = vmatprep.subr.mxu0 0.0
        %3800 = vmatpush1.msra.mxu0 %v3762
        %3801 = vmatprep.subr.mxu0 0.0
        %3802 = vmatpush1.msra.mxu0 %v3763
        %3803 = vmatprep.subr.mxu0 0.0
        %3804 = vmatpush1.msra.mxu0 0.0
        %3805 = vmatprep.subr.mxu0 0.0
        %3806 = vmatpush1.msra.mxu0 0.0
        %3807 = vmatprep.subr.mxu0 0.0
        %3808 = vmatpush1.msra.mxu0 0.0
        %3809 = vmatprep.subr.mxu0 0.0
        %3810 = vmatpush1.msra.mxu0 0.0
        %3811 = vmatprep.subr.mxu0 0.0
        %3812 = vmatpush1.msra.mxu0 0.0
        %3813 = vmatprep.subr.mxu0 0.0
        %3814 = vmatpush1.msra.mxu0 0.0
        %3815 = vmatprep.subr.mxu0 0.0
        %3816 = vmatpush1.msra.mxu0 0.0
        %3817 = vmatprep.subr.mxu0 0.0
        %3818 = vmatpush1.msra.mxu0 0.0
        %3819 = vmatprep.subr.mxu0 0.0
        %3820 = vmatpush1.msra.mxu0 0.0
        %3821 = vmatprep.subr.mxu0 0.0
        %3822 = vmatpush1.msra.mxu0 0.0
        %3823 = vmatprep.subr.mxu0 0.0
        %3824 = vmatpush1.msra.mxu0 0.0
        %3825 = vmatprep.subr.mxu0 0.0
        %3826 = vmatpush1.msra.mxu0 0.0
        %3827 = vmatprep.subr.mxu0 0.0
        %3828 = vmatpush1.msra.mxu0 0.0
        %3829 = vmatprep.subr.mxu0 0.0
        %3830 = vmatpush1.msra.mxu0 0.0
        %3831 = vmatprep.subr.mxu0 0.0
        %3832 = vmatpush1.msra.mxu0 0.0
        %3833 = vmatprep.subr.mxu0 0.0
        %3834 = vmatpush1.msra.mxu0 0.0
        %3835 = vmatprep.mubr.f32.mxu0 0.0
        %3836 = vmatmul.mubr.f32.gmra.mrb[0].mxu0 %v3138
        %v3837 = vpop.f32.mrb[0].mxu0
        %v3838 = vadd.f32 %v3769, %v3837
        %v3839 = vpop.f32.mrb[0].mxu0
        %3840 = vmatprep.mubr.f32.mxu0 0.0
        %3841 = vmatmul.mubr.f32.gmra.mrb[0].mxu0 %v3139
        %v3842 = vpop.f32.mrb[0].mxu0
        %v3843 = vadd.f32 %v3769, %v3842
        %v3844 = vpop.f32.mrb[0].mxu0
        %3845 = vmatprep.mubr.f32.mxu0 0.0
        %3846 = vmatmul.mubr.f32.gmra.mrb[0].mxu0 %v3140
        %v3847 = vpop.f32.mrb[0].mxu0
        %v3848 = vadd.f32 %v3769, %v3847
        %v3849 = vpop.f32.mrb[0].mxu0
        %3850 = vmatprep.mubr.f32.mxu0 0.0
        %3851 = vmatmul.mubr.f32.gmra.mrb[0].mxu0 %v3141
        %v3852 = vpop.f32.mrb[0].mxu0
        %v3853 = vadd.f32 %v3769, %v3852
        %v3854 = vpop.f32.mrb[0].mxu0
        %3855 = vdwg.mxu0
        %v3856 = vadd.f32 %v3744, %v3838
        %v3857 = vadd.f32 %v3745, %v3843
        %v3858 = vadd.f32 %v3746, %v3848
        %v3859 = vadd.f32 %v3747, %v3853
        %v3860 = vmax.f32 %v3856, 0.0
        %v3861 = vmax.f32 %v3857, 0.0
        %v3862 = vmax.f32 %v3858, 0.0
        %v3863 = vmax.f32 %v3859, 0.0
        %v3864 = vld [vmem:[%s22] sm:$0xff]
        %v3865 = vld [vmem:[%s22 + $0x8] sm:$0xff]
        %v3866 = vld [vmem:[%s22 + $0x10] sm:$0xff]
        %v3867 = vld [vmem:[%s22 + $0x18] sm:$0xff]
        %v3868 = vld [vmem:[%s22 + $0x20] sm:$0xff]
        %v3869 = vld [vmem:[%s22 + $0x28] sm:$0xff]
        %v3870 = vld [vmem:[%s22 + $0x30] sm:$0xff]
        %v3871 = vld [vmem:[%s22 + $0x38] sm:$0xff]
        %v3872 = vld [vmem:[%s22 + $0x40] sm:$0xff]
        %v3873 = vld [vmem:[%s22 + $0x48] sm:$0xff]
        %v3874 = vld [vmem:[%s22 + $0x50] sm:$0xff]
        %v3875 = vld [vmem:[%s22 + $0x58] sm:$0xff]
        %v3876 = vld [vmem:[%s22 + $0x60] sm:$0xff]
        %v3877 = vld [vmem:[%s22 + $0x68] sm:$0xff]
        %v3878 = vld [vmem:[%s22 + $0x70] sm:$0xff]
        %v3879 = vld [vmem:[%s22 + $0x78] sm:$0xff]
        %v3880 = vld [vmem:[%s22 + $0x80] sm:$0xff]
        %v3881 = vld [vmem:[%s22 + $0x88] sm:$0xff]
        %v3882 = vld [vmem:[%s22 + $0x90] sm:$0xff]
        %v3883 = vld [vmem:[%s22 + $0x98] sm:$0xff]
        %v3884 = vld [vmem:[%s22 + $0xa0] sm:$0xff]
        %v3885 = vld [vmem:[%s22 + $0xa8] sm:$0xff]
        %v3886 = vld [vmem:[%s22 + $0xb0] sm:$0xff]
        %v3887 = vld [vmem:[%s22 + $0xb8] sm:$0xff]
        %v3888 = vld [vmem:[%s22 + $0xc0] sm:$0xff]
        %v3889 = vld [vmem:[%s22 + $0xc8] sm:$0xff]
        %v3890 = vld [vmem:[%s22 + $0xd0] sm:$0xff]
        %v3891 = vld [vmem:[%s22 + $0xd8] sm:$0xff]
        %v3892 = vld [vmem:[%s22 + $0xe0] sm:$0xff]
        %v3893 = vld [vmem:[%s22 + $0xe8] sm:$0xff]
        %v3894 = vld [vmem:[%s22 + $0xf0] sm:$0xff]
        %v3895 = vld [vmem:[%s22 + $0xf8] sm:$0xff]
        %v3896 = vld [vmem:[%s22 + $0x100] sm:$0xff]
        %v3897 = vld [vmem:[%s22 + $0x108] sm:$0xff]
        %v3898 = vld [vmem:[%s22 + $0x110] sm:$0xff]
        %v3899 = vld [vmem:[%s22 + $0x118] sm:$0xff]
        %v3900 = vld [vmem:[%s22 + $0x120] sm:$0xff]
        %v3901 = vld [vmem:[%s22 + $0x128] sm:$0xff]
        %v3902 = vld [vmem:[%s22 + $0x130] sm:$0xff]
        %v3903 = vld [vmem:[%s22 + $0x138] sm:$0xff]
        %v3904 = vld [vmem:[%s22 + $0x140] sm:$0xff]
        %v3905 = vld [vmem:[%s22 + $0x148] sm:$0xff]
        %v3906 = vld [vmem:[%s22 + $0x150] sm:$0xff]
        %v3907 = vld [vmem:[%s22 + $0x158] sm:$0xff]
        %v3908 = vld [vmem:[%s22 + $0x160] sm:$0xff]
        %v3909 = vld [vmem:[%s22 + $0x168] sm:$0xff]
        %v3910 = vld [vmem:[%s22 + $0x170] sm:$0xff]
        %v3911 = vld [vmem:[%s22 + $0x178] sm:$0xff]
        %v3912 = vld [vmem:[%s22 + $0x180] sm:$0xff]
        %v3913 = vld [vmem:[%s22 + $0x188] sm:$0xff]
        %v3914 = vld [vmem:[%s22 + $0x190] sm:$0xff]
        %v3915 = vld [vmem:[%s22 + $0x198] sm:$0xff]
        %v3916 = vld [vmem:[%s22 + $0x1a0] sm:$0xff]
        %v3917 = vld [vmem:[%s22 + $0x1a8] sm:$0xff]
        %v3918 = vld [vmem:[%s22 + $0x1b0] sm:$0xff]
        %v3919 = vld [vmem:[%s22 + $0x1b8] sm:$0xff]
        %v3920 = vld [vmem:[%s22 + $0x1c0] sm:$0xff]
        %v3921 = vld [vmem:[%s22 + $0x1c8] sm:$0xff]
        %v3922 = vld [vmem:[%s22 + $0x1d0] sm:$0xff]
        %v3923 = vld [vmem:[%s22 + $0x1d8] sm:$0xff]
        %v3924 = vld [vmem:[%s22 + $0x1e0] sm:$0xff]
        %v3925 = vld [vmem:[%s22 + $0x1e8] sm:$0xff]
        %v3926 = vld [vmem:[%s22 + $0x1f0] sm:$0xff]
        %v3927 = vld [vmem:[%s22 + $0x1f8] sm:$0xff]
        %v3928 = vld [vmem:[%s22 + $0x200] sm:$0xff]
        %v3929 = vld [vmem:[%s22 + $0x208] sm:$0xff]
        %v3930 = vld [vmem:[%s22 + $0x210] sm:$0xff]
        %v3931 = vld [vmem:[%s22 + $0x218] sm:$0xff]
        %v3932 = vld [vmem:[%s22 + $0x220] sm:$0xff]
        %v3933 = vld [vmem:[%s22 + $0x228] sm:$0xff]
        %v3934 = vld [vmem:[%s22 + $0x230] sm:$0xff]
        %v3935 = vld [vmem:[%s22 + $0x238] sm:$0xff]
        %v3936 = vld [vmem:[%s22 + $0x240] sm:$0xff]
        %v3937 = vld [vmem:[%s22 + $0x248] sm:$0xff]
        %v3938 = vld [vmem:[%s22 + $0x250] sm:$0xff]
        %v3939 = vld [vmem:[%s22 + $0x258] sm:$0xff]
        %v3940 = vld [vmem:[%s22 + $0x260] sm:$0xff]
        %v3941 = vld [vmem:[%s22 + $0x268] sm:$0xff]
        %v3942 = vld [vmem:[%s22 + $0x270] sm:$0xff]
        %v3943 = vld [vmem:[%s22 + $0x278] sm:$0xff]
        %v3944 = vld [vmem:[%s22 + $0x280] sm:$0xff]
        %v3945 = vld [vmem:[%s22 + $0x288] sm:$0xff]
        %v3946 = vld [vmem:[%s22 + $0x290] sm:$0xff]
        %v3947 = vld [vmem:[%s22 + $0x298] sm:$0xff]
        %v3948 = vld [vmem:[%s22 + $0x2a0] sm:$0xff]
        %v3949 = vld [vmem:[%s22 + $0x2a8] sm:$0xff]
        %v3950 = vld [vmem:[%s22 + $0x2b0] sm:$0xff]
        %v3951 = vld [vmem:[%s22 + $0x2b8] sm:$0xff]
        %v3952 = vld [vmem:[%s22 + $0x2c0] sm:$0xff]
        %v3953 = vld [vmem:[%s22 + $0x2c8] sm:$0xff]
        %v3954 = vld [vmem:[%s22 + $0x2d0] sm:$0xff]
        %v3955 = vld [vmem:[%s22 + $0x2d8] sm:$0xff]
        %v3956 = vld [vmem:[%s22 + $0x2e0] sm:$0xff]
        %v3957 = vld [vmem:[%s22 + $0x2e8] sm:$0xff]
        %v3958 = vld [vmem:[%s22 + $0x2f0] sm:$0xff]
        %v3959 = vld [vmem:[%s22 + $0x2f8] sm:$0xff]
        %v3960 = vld [vmem:[%s22 + $0x300] sm:$0xff]
        %v3961 = vld [vmem:[%s22 + $0x308] sm:$0xff]
        %v3962 = vld [vmem:[%s22 + $0x310] sm:$0xff]
        %v3963 = vld [vmem:[%s22 + $0x318] sm:$0xff]
        %v3964 = vld [vmem:[%s22 + $0x320] sm:$0xff]
        %v3965 = vld [vmem:[%s22 + $0x328] sm:$0xff]
        %v3966 = vld [vmem:[%s22 + $0x330] sm:$0xff]
        %v3967 = vld [vmem:[%s22 + $0x338] sm:$0xff]
        %v3968 = vld [vmem:[%s22 + $0x340] sm:$0xff]
        %v3969 = vld [vmem:[%s22 + $0x348] sm:$0xff]
        %v3970 = vld [vmem:[%s22 + $0x350] sm:$0xff]
        %v3971 = vld [vmem:[%s22 + $0x358] sm:$0xff]
        %v3972 = vld [vmem:[%s22 + $0x360] sm:$0xff]
        %v3973 = vld [vmem:[%s22 + $0x368] sm:$0xff]
        %v3974 = vld [vmem:[%s22 + $0x370] sm:$0xff]
        %v3975 = vld [vmem:[%s22 + $0x378] sm:$0xff]
        %v3976 = vld [vmem:[%s22 + $0x380] sm:$0xff]
        %v3977 = vld [vmem:[%s22 + $0x388] sm:$0xff]
        %v3978 = vld [vmem:[%s22 + $0x390] sm:$0xff]
        %v3979 = vld [vmem:[%s22 + $0x398] sm:$0xff]
        %v3980 = vld [vmem:[%s22 + $0x3a0] sm:$0xff]
        %v3981 = vld [vmem:[%s22 + $0x3a8] sm:$0xff]
        %v3982 = vld [vmem:[%s22 + $0x3b0] sm:$0xff]
        %v3983 = vld [vmem:[%s22 + $0x3b8] sm:$0xff]
        %v3984 = vld [vmem:[%s22 + $0x3c0] sm:$0xff]
        %v3985 = vld [vmem:[%s22 + $0x3c8] sm:$0xff]
        %v3986 = vld [vmem:[%s22 + $0x3d0] sm:$0xff]
        %v3987 = vld [vmem:[%s22 + $0x3d8] sm:$0xff]
        %v3988 = vld [vmem:[%s22 + $0x3e0] sm:$0xff]
        %v3989 = vld [vmem:[%s22 + $0x3e8] sm:$0xff]
        %v3990 = vld [vmem:[%s22 + $0x3f0] sm:$0xff]
        %v3991 = vld [vmem:[%s22 + $0x3f8] sm:$0xff]
        %v3992 = vld [vmem:[%s22 + $0x400] sm:$0xff]
        %v3993 = vld [vmem:[%s22 + $0x408] sm:$0xff]
        %v3994 = vld [vmem:[%s22 + $0x410] sm:$0xff]
        %v3995 = vld [vmem:[%s22 + $0x418] sm:$0xff]
        %v3996 = vld [vmem:[%s22 + $0x420] sm:$0xff]
        %v3997 = vld [vmem:[%s22 + $0x428] sm:$0xff]
        %v3998 = vld [vmem:[%s22 + $0x430] sm:$0xff]
        %v3999 = vld [vmem:[%s22 + $0x438] sm:$0xff]
        %v4001 = vsel %vm3664, %v3860, 0
        %v4004 = vsel %vm3664, %v3861, 0
        %v4007 = vsel %vm3664, %v3862, 0
        %v4010 = vsel %vm3664, %v3863, 0
        %4012 = vmatprep.subr.mxu0 %v3865
        %4013 = vmatpush1.msra.mxu0 %v3864
        %4014 = vmatprep.subr.mxu0 %v3882
        %4015 = vmatpush1.msra.mxu0 %v3881
        %4016 = vmatprep.subr.mxu0 %v3899
        %4017 = vmatpush1.msra.mxu0 %v3898
        %4018 = vmatprep.subr.mxu0 %v3916
        %4019 = vmatpush1.msra.mxu0 %v3915
        %4020 = vmatprep.subr.mxu0 %v3933
        %4021 = vmatpush1.msra.mxu0 %v3932
        %4022 = vmatprep.subr.mxu0 %v3950
        %4023 = vmatpush1.msra.mxu0 %v3949
        %4024 = vmatprep.subr.mxu0 %v3967
        %4025 = vmatpush1.msra.mxu0 %v3966
        %4026 = vmatprep.subr.mxu0 %v3984
        %4027 = vmatpush1.msra.mxu0 %v3983
        %4028 = vmatprep.subr.mxu0 0.0
        %4029 = vmatpush1.msra.mxu0 0.0
        %4030 = vmatprep.subr.mxu0 0.0
        %4031 = vmatpush1.msra.mxu0 0.0
        %4032 = vmatprep.subr.mxu0 0.0
        %4033 = vmatpush1.msra.mxu0 0.0
        %4034 = vmatprep.subr.mxu0 0.0
        %4035 = vmatpush1.msra.mxu0 0.0
        %4036 = vmatprep.subr.mxu0 0.0
        %4037 = vmatpush1.msra.mxu0 0.0
        %4038 = vmatprep.subr.mxu0 0.0
        %4039 = vmatpush1.msra.mxu0 0.0
        %4040 = vmatprep.subr.mxu0 0.0
        %4041 = vmatpush1.msra.mxu0 0.0
        %4042 = vmatprep.subr.mxu0 0.0
        %4043 = vmatpush1.msra.mxu0 0.0
        %4044 = vmatprep.subr.mxu0 0.0
        %4045 = vmatpush1.msra.mxu0 0.0
        %4046 = vmatprep.subr.mxu0 0.0
        %4047 = vmatpush1.msra.mxu0 0.0
        %4048 = vmatprep.subr.mxu0 0.0
        %4049 = vmatpush1.msra.mxu0 0.0
        %4050 = vmatprep.subr.mxu0 0.0
        %4051 = vmatpush1.msra.mxu0 0.0
        %4052 = vmatprep.subr.mxu0 0.0
        %4053 = vmatpush1.msra.mxu0 0.0
        %4054 = vmatprep.subr.mxu0 0.0
        %4055 = vmatpush1.msra.mxu0 0.0
        %4056 = vmatprep.subr.mxu0 0.0
        %4057 = vmatpush1.msra.mxu0 0.0
        %4058 = vmatprep.subr.mxu0 0.0
        %4059 = vmatpush1.msra.mxu0 0.0
        %4060 = vmatprep.subr.mxu0 0.0
        %4061 = vmatpush1.msra.mxu0 0.0
        %4062 = vmatprep.subr.mxu0 0.0
        %4063 = vmatpush1.msra.mxu0 0.0
        %4064 = vmatprep.subr.mxu0 0.0
        %4065 = vmatpush1.msra.mxu0 0.0
        %4066 = vmatprep.subr.mxu0 0.0
        %4067 = vmatpush1.msra.mxu0 0.0
        %4068 = vmatprep.subr.mxu0 0.0
        %4069 = vmatpush1.msra.mxu0 0.0
        %4070 = vmatprep.subr.mxu0 0.0
        %4071 = vmatpush1.msra.mxu0 0.0
        %4072 = vmatprep.subr.mxu0 0.0
        %4073 = vmatpush1.msra.mxu0 0.0
        %4074 = vmatprep.subr.mxu0 0.0
        %4075 = vmatpush1.msra.mxu0 0.0
        %4076 = vmatprep.mubr.f32.mxu0 0.0
        %4077 = vmatmul.mubr.f32.gmra.mrb[0].mxu0 %v4001
        %v4078 = vpop.f32.mrb[0].mxu0
        %v4079 = vadd.f32 0.0, %v4078
        %v4080 = vpop.f32.mrb[0].mxu0
        %v4081 = vadd.f32 0.0, %v4080
        %4082 = vmatprep.mubr.f32.mxu0 0.0
        %4083 = vmatmul.mubr.f32.gmra.mrb[0].mxu0 %v4004
        %v4084 = vpop.f32.mrb[0].mxu0
        %v4085 = vadd.f32 0.0, %v4084
        %v4086 = vpop.f32.mrb[0].mxu0
        %v4087 = vadd.f32 0.0, %v4086
        %4088 = vmatprep.mubr.f32.mxu0 0.0
        %4089 = vmatmul.mubr.f32.gmra.mrb[0].mxu0 %v4007
        %v4090 = vpop.f32.mrb[0].mxu0
        %v4091 = vadd.f32 0.0, %v4090
        %v4092 = vpop.f32.mrb[0].mxu0
        %v4093 = vadd.f32 0.0, %v4092
        %4094 = vmatprep.mubr.f32.mxu0 0.0
        %4095 = vmatmul.mubr.f32.gmra.mrb[0].mxu0 %v4010
        %v4096 = vpop.f32.mrb[0].mxu0
        %v4097 = vadd.f32 0.0, %v4096
        %v4098 = vpop.f32.mrb[0].mxu0
        %v4099 = vadd.f32 0.0, %v4098
        %4100 = vdwg.mxu0
        %4101 = vmatprep.subr.mxu0 %v3867
        %4102 = vmatpush1.msra.mxu0 %v3866
        %4103 = vmatprep.subr.mxu0 %v3884
        %4104 = vmatpush1.msra.mxu0 %v3883
        %4105 = vmatprep.subr.mxu0 %v3901
        %4106 = vmatpush1.msra.mxu0 %v3900
        %4107 = vmatprep.subr.mxu0 %v3918
        %4108 = vmatpush1.msra.mxu0 %v3917
        %4109 = vmatprep.subr.mxu0 %v3935
        %4110 = vmatpush1.msra.mxu0 %v3934
        %4111 = vmatprep.subr.mxu0 %v3952
        %4112 = vmatpush1.msra.mxu0 %v3951
        %4113 = vmatprep.subr.mxu0 %v3969
        %4114 = vmatpush1.msra.mxu0 %v3968
        %4115 = vmatprep.subr.mxu0 %v3986
        %4116 = vmatpush1.msra.mxu0 %v3985
        %4117 = vmatprep.subr.mxu0 0.0
        %4118 = vmatpush1.msra.mxu0 0.0
        %4119 = vmatprep.subr.mxu0 0.0
        %4120 = vmatpush1.msra.mxu0 0.0
        %4121 = vmatprep.subr.mxu0 0.0
        %4122 = vmatpush1.msra.mxu0 0.0
        %4123 = vmatprep.subr.mxu0 0.0
        %4124 = vmatpush1.msra.mxu0 0.0
        %4125 = vmatprep.subr.mxu0 0.0
        %4126 = vmatpush1.msra.mxu0 0.0
        %4127 = vmatprep.subr.mxu0 0.0
        %4128 = vmatpush1.msra.mxu0 0.0
        %4129 = vmatprep.subr.mxu0 0.0
        %4130 = vmatpush1.msra.mxu0 0.0
        %4131 = vmatprep.subr.mxu0 0.0
        %4132 = vmatpush1.msra.mxu0 0.0
        %4133 = vmatprep.subr.mxu0 0.0
        %4134 = vmatpush1.msra.mxu0 0.0
        %4135 = vmatprep.subr.mxu0 0.0
        %4136 = vmatpush1.msra.mxu0 0.0
        %4137 = vmatprep.subr.mxu0 0.0
        %4138 = vmatpush1.msra.mxu0 0.0
        %4139 = vmatprep.subr.mxu0 0.0
        %4140 = vmatpush1.msra.mxu0 0.0
        %4141 = vmatprep.subr.mxu0 0.0
        %4142 = vmatpush1.msra.mxu0 0.0
        %4143 = vmatprep.subr.mxu0 0.0
        %4144 = vmatpush1.msra.mxu0 0.0
        %4145 = vmatprep.subr.mxu0 0.0
        %4146 = vmatpush1.msra.mxu0 0.0
        %4147 = vmatprep.subr.mxu0 0.0
        %4148 = vmatpush1.msra.mxu0 0.0
        %4149 = vmatprep.subr.mxu0 0.0
        %4150 = vmatpush1.msra.mxu0 0.0
        %4151 = vmatprep.subr.mxu0 0.0
        %4152 = vmatpush1.msra.mxu0 0.0
        %4153 = vmatprep.subr.mxu0 0.0
        %4154 = vmatpush1.msra.mxu0 0.0
        %4155 = vmatprep.subr.mxu0 0.0
        %4156 = vmatpush1.msra.mxu0 0.0
        %4157 = vmatprep.subr.mxu0 0.0
        %4158 = vmatpush1.msra.mxu0 0.0
        %4159 = vmatprep.subr.mxu0 0.0
        %4160 = vmatpush1.msra.mxu0 0.0
        %4161 = vmatprep.subr.mxu0 0.0
        %4162 = vmatpush1.msra.mxu0 0.0
        %4163 = vmatprep.subr.mxu0 0.0
        %4164 = vmatpush1.msra.mxu0 0.0
        %4165 = vmatprep.mubr.f32.mxu0 0.0
        %4166 = vmatmul.mubr.f32.gmra.mrb[0].mxu0 %v4001
        %v4167 = vpop.f32.mrb[0].mxu0
        %v4168 = vadd.f32 0.0, %v4167
        %v4169 = vpop.f32.mrb[0].mxu0
        %v4170 = vadd.f32 0.0, %v4169
        %4171 = vmatprep.mubr.f32.mxu0 0.0
        %4172 = vmatmul.mubr.f32.gmra.mrb[0].mxu0 %v4004
        %v4173 = vpop.f32.mrb[0].mxu0
        %v4174 = vadd.f32 0.0, %v4173
        %v4175 = vpop.f32.mrb[0].mxu0
        %v4176 = vadd.f32 0.0, %v4175
        %4177 = vmatprep.mubr.f32.mxu0 0.0
        %4178 = vmatmul.mubr.f32.gmra.mrb[0].mxu0 %v4007
        %v4179 = vpop.f32.mrb[0].mxu0
        %v4180 = vadd.f32 0.0, %v4179
        %v4181 = vpop.f32.mrb[0].mxu0
        %v4182 = vadd.f32 0.0, %v4181
        %4183 = vmatprep.mubr.f32.mxu0 0.0
        %4184 = vmatmul.mubr.f32.gmra.mrb[0].mxu0 %v4010
        %v4185 = vpop.f32.mrb[0].mxu0
        %v4186 = vadd.f32 0.0, %v4185
        %v4187 = vpop.f32.mrb[0].mxu0
        %v4188 = vadd.f32 0.0, %v4187
        %4189 = vdwg.mxu0
        %4190 = vmatprep.subr.mxu0 %v3869
        %4191 = vmatpush1.msra.mxu0 %v3868
        %4192 = vmatprep.subr.mxu0 %v3886
        %4193 = vmatpush1.msra.mxu0 %v3885
        %4194 = vmatprep.subr.mxu0 %v3903
        %4195 = vmatpush1.msra.mxu0 %v3902
        %4196 = vmatprep.subr.mxu0 %v3920
        %4197 = vmatpush1.msra.mxu0 %v3919
        %4198 = vmatprep.subr.mxu0 %v3937
        %4199 = vmatpush1.msra.mxu0 %v3936
        %4200 = vmatprep.subr.mxu0 %v3954
        %4201 = vmatpush1.msra.mxu0 %v3953
        %4202 = vmatprep.subr.mxu0 %v3971
        %4203 = vmatpush1.msra.mxu0 %v3970
        %4204 = vmatprep.subr.mxu0 %v3988
        %4205 = vmatpush1.msra.mxu0 %v3987
        %4206 = vmatprep.subr.mxu0 0.0
        %4207 = vmatpush1.msra.mxu0 0.0
        %4208 = vmatprep.subr.mxu0 0.0
        %4209 = vmatpush1.msra.mxu0 0.0
        %4210 = vmatprep.subr.mxu0 0.0
        %4211 = vmatpush1.msra.mxu0 0.0
        %4212 = vmatprep.subr.mxu0 0.0
        %4213 = vmatpush1.msra.mxu0 0.0
        %4214 = vmatprep.subr.mxu0 0.0
        %4215 = vmatpush1.msra.mxu0 0.0
        %4216 = vmatprep.subr.mxu0 0.0
        %4217 = vmatpush1.msra.mxu0 0.0
        %4218 = vmatprep.subr.mxu0 0.0
        %4219 = vmatpush1.msra.mxu0 0.0
        %4220 = vmatprep.subr.mxu0 0.0
        %4221 = vmatpush1.msra.mxu0 0.0
        %4222 = vmatprep.subr.mxu0 0.0
        %4223 = vmatpush1.msra.mxu0 0.0
        %4224 = vmatprep.subr.mxu0 0.0
        %4225 = vmatpush1.msra.mxu0 0.0
        %4226 = vmatprep.subr.mxu0 0.0
        %4227 = vmatpush1.msra.mxu0 0.0
        %4228 = vmatprep.subr.mxu0 0.0
        %4229 = vmatpush1.msra.mxu0 0.0
        %4230 = vmatprep.subr.mxu0 0.0
        %4231 = vmatpush1.msra.mxu0 0.0
        %4232 = vmatprep.subr.mxu0 0.0
        %4233 = vmatpush1.msra.mxu0 0.0
        %4234 = vmatprep.subr.mxu0 0.0
        %4235 = vmatpush1.msra.mxu0 0.0
        %4236 = vmatprep.subr.mxu0 0.0
        %4237 = vmatpush1.msra.mxu0 0.0
        %4238 = vmatprep.subr.mxu0 0.0
        %4239 = vmatpush1.msra.mxu0 0.0
        %4240 = vmatprep.subr.mxu0 0.0
        %4241 = vmatpush1.msra.mxu0 0.0
        %4242 = vmatprep.subr.mxu0 0.0
        %4243 = vmatpush1.msra.mxu0 0.0
        %4244 = vmatprep.subr.mxu0 0.0
        %4245 = vmatpush1.msra.mxu0 0.0
        %4246 = vmatprep.subr.mxu0 0.0
        %4247 = vmatpush1.msra.mxu0 0.0
        %4248 = vmatprep.subr.mxu0 0.0
        %4249 = vmatpush1.msra.mxu0 0.0
        %4250 = vmatprep.subr.mxu0 0.0
        %4251 = vmatpush1.msra.mxu0 0.0
        %4252 = vmatprep.subr.mxu0 0.0
        %4253 = vmatpush1.msra.mxu0 0.0
        %4254 = vmatprep.mubr.f32.mxu0 0.0
        %4255 = vmatmul.mubr.f32.gmra.mrb[0].mxu0 %v4001
        %v4256 = vpop.f32.mrb[0].mxu0
        %v4257 = vadd.f32 0.0, %v4256
        %v4258 = vpop.f32.mrb[0].mxu0
        %v4259 = vadd.f32 0.0, %v4258
        %4260 = vmatprep.mubr.f32.mxu0 0.0
        %4261 = vmatmul.mubr.f32.gmra.mrb[0].mxu0 %v4004
        %v4262 = vpop.f32.mrb[0].mxu0
        %v4263 = vadd.f32 0.0, %v4262
        %v4264 = vpop.f32.mrb[0].mxu0
        %v4265 = vadd.f32 0.0, %v4264
        %4266 = vmatprep.mubr.f32.mxu0 0.0
        %4267 = vmatmul.mubr.f32.gmra.mrb[0].mxu0 %v4007
        %v4268 = vpop.f32.mrb[0].mxu0
        %v4269 = vadd.f32 0.0, %v4268
        %v4270 = vpop.f32.mrb[0].mxu0
        %v4271 = vadd.f32 0.0, %v4270
        %4272 = vmatprep.mubr.f32.mxu0 0.0
        %4273 = vmatmul.mubr.f32.gmra.mrb[0].mxu0 %v4010
        %v4274 = vpop.f32.mrb[0].mxu0
        %v4275 = vadd.f32 0.0, %v4274
        %v4276 = vpop.f32.mrb[0].mxu0
        %v4277 = vadd.f32 0.0, %v4276
        %4278 = vdwg.mxu0
        %4279 = vmatprep.subr.mxu0 %v3871
        %4280 = vmatpush1.msra.mxu0 %v3870
        %4281 = vmatprep.subr.mxu0 %v3888
        %4282 = vmatpush1.msra.mxu0 %v3887
        %4283 = vmatprep.subr.mxu0 %v3905
        %4284 = vmatpush1.msra.mxu0 %v3904
        %4285 = vmatprep.subr.mxu0 %v3922
        %4286 = vmatpush1.msra.mxu0 %v3921
        %4287 = vmatprep.subr.mxu0 %v3939
        %4288 = vmatpush1.msra.mxu0 %v3938
        %4289 = vmatprep.subr.mxu0 %v3956
        %4290 = vmatpush1.msra.mxu0 %v3955
        %4291 = vmatprep.subr.mxu0 %v3973
        %4292 = vmatpush1.msra.mxu0 %v3972
        %4293 = vmatprep.subr.mxu0 %v3990
        %4294 = vmatpush1.msra.mxu0 %v3989
        %4295 = vmatprep.subr.mxu0 0.0
        %4296 = vmatpush1.msra.mxu0 0.0
        %4297 = vmatprep.subr.mxu0 0.0
        %4298 = vmatpush1.msra.mxu0 0.0
        %4299 = vmatprep.subr.mxu0 0.0
        %4300 = vmatpush1.msra.mxu0 0.0
        %4301 = vmatprep.subr.mxu0 0.0
        %4302 = vmatpush1.msra.mxu0 0.0
        %4303 = vmatprep.subr.mxu0 0.0
        %4304 = vmatpush1.msra.mxu0 0.0
        %4305 = vmatprep.subr.mxu0 0.0
        %4306 = vmatpush1.msra.mxu0 0.0
        %4307 = vmatprep.subr.mxu0 0.0
        %4308 = vmatpush1.msra.mxu0 0.0
        %4309 = vmatprep.subr.mxu0 0.0
        %4310 = vmatpush1.msra.mxu0 0.0
        %4311 = vmatprep.subr.mxu0 0.0
        %4312 = vmatpush1.msra.mxu0 0.0
        %4313 = vmatprep.subr.mxu0 0.0
        %4314 = vmatpush1.msra.mxu0 0.0
        %4315 = vmatprep.subr.mxu0 0.0
        %4316 = vmatpush1.msra.mxu0 0.0
        %4317 = vmatprep.subr.mxu0 0.0
        %4318 = vmatpush1.msra.mxu0 0.0
        %4319 = vmatprep.subr.mxu0 0.0
        %4320 = vmatpush1.msra.mxu0 0.0
        %4321 = vmatprep.subr.mxu0 0.0
        %4322 = vmatpush1.msra.mxu0 0.0
        %4323 = vmatprep.subr.mxu0 0.0
        %4324 = vmatpush1.msra.mxu0 0.0
        %4325 = vmatprep.subr.mxu0 0.0
        %4326 = vmatpush1.msra.mxu0 0.0
        %4327 = vmatprep.subr.mxu0 0.0
        %4328 = vmatpush1.msra.mxu0 0.0
        %4329 = vmatprep.subr.mxu0 0.0
        %4330 = vmatpush1.msra.mxu0 0.0
        %4331 = vmatprep.subr.mxu0 0.0
        %4332 = vmatpush1.msra.mxu0 0.0
        %4333 = vmatprep.subr.mxu0 0.0
        %4334 = vmatpush1.msra.mxu0 0.0
        %4335 = vmatprep.subr.mxu0 0.0
        %4336 = vmatpush1.msra.mxu0 0.0
        %4337 = vmatprep.subr.mxu0 0.0
        %4338 = vmatpush1.msra.mxu0 0.0
        %4339 = vmatprep.subr.mxu0 0.0
        %4340 = vmatpush1.msra.mxu0 0.0
        %4341 = vmatprep.subr.mxu0 0.0
        %4342 = vmatpush1.msra.mxu0 0.0
        %4343 = vmatprep.mubr.f32.mxu0 0.0
        %4344 = vmatmul.mubr.f32.gmra.mrb[0].mxu0 %v4001
        %v4345 = vpop.f32.mrb[0].mxu0
        %v4346 = vadd.f32 0.0, %v4345
        %v4347 = vpop.f32.mrb[0].mxu0
        %v4348 = vadd.f32 0.0, %v4347
        %4349 = vmatprep.mubr.f32.mxu0 0.0
        %4350 = vmatmul.mubr.f32.gmra.mrb[0].mxu0 %v4004
        %v4351 = vpop.f32.mrb[0].mxu0
        %v4352 = vadd.f32 0.0, %v4351
        %v4353 = vpop.f32.mrb[0].mxu0
        %v4354 = vadd.f32 0.0, %v4353
        %4355 = vmatprep.mubr.f32.mxu0 0.0
        %4356 = vmatmul.mubr.f32.gmra.mrb[0].mxu0 %v4007
        %v4357 = vpop.f32.mrb[0].mxu0
        %v4358 = vadd.f32 0.0, %v4357
        %v4359 = vpop.f32.mrb[0].mxu0
        %v4360 = vadd.f32 0.0, %v4359
        %4361 = vmatprep.mubr.f32.mxu0 0.0
        %4362 = vmatmul.mubr.f32.gmra.mrb[0].mxu0 %v4010
        %v4363 = vpop.f32.mrb[0].mxu0
        %v4364 = vadd.f32 0.0, %v4363
        %v4365 = vpop.f32.mrb[0].mxu0
        %v4366 = vadd.f32 0.0, %v4365
        %4367 = vdwg.mxu0
        %4368 = vmatprep.subr.mxu0 %v3873
        %4369 = vmatpush1.msra.mxu0 %v3872
        %4370 = vmatprep.subr.mxu0 %v3890
        %4371 = vmatpush1.msra.mxu0 %v3889
        %4372 = vmatprep.subr.mxu0 %v3907
        %4373 = vmatpush1.msra.mxu0 %v3906
        %4374 = vmatprep.subr.mxu0 %v3924
        %4375 = vmatpush1.msra.mxu0 %v3923
        %4376 = vmatprep.subr.mxu0 %v3941
        %4377 = vmatpush1.msra.mxu0 %v3940
        %4378 = vmatprep.subr.mxu0 %v3958
        %4379 = vmatpush1.msra.mxu0 %v3957
        %4380 = vmatprep.subr.mxu0 %v3975
        %4381 = vmatpush1.msra.mxu0 %v3974
        %4382 = vmatprep.subr.mxu0 %v3992
        %4383 = vmatpush1.msra.mxu0 %v3991
        %4384 = vmatprep.subr.mxu0 0.0
        %4385 = vmatpush1.msra.mxu0 0.0
        %4386 = vmatprep.subr.mxu0 0.0
        %4387 = vmatpush1.msra.mxu0 0.0
        %4388 = vmatprep.subr.mxu0 0.0
        %4389 = vmatpush1.msra.mxu0 0.0
        %4390 = vmatprep.subr.mxu0 0.0
        %4391 = vmatpush1.msra.mxu0 0.0
        %4392 = vmatprep.subr.mxu0 0.0
        %4393 = vmatpush1.msra.mxu0 0.0
        %4394 = vmatprep.subr.mxu0 0.0
        %4395 = vmatpush1.msra.mxu0 0.0
        %4396 = vmatprep.subr.mxu0 0.0
        %4397 = vmatpush1.msra.mxu0 0.0
        %4398 = vmatprep.subr.mxu0 0.0
        %4399 = vmatpush1.msra.mxu0 0.0
        %4400 = vmatprep.subr.mxu0 0.0
        %4401 = vmatpush1.msra.mxu0 0.0
        %4402 = vmatprep.subr.mxu0 0.0
        %4403 = vmatpush1.msra.mxu0 0.0
        %4404 = vmatprep.subr.mxu0 0.0
        %4405 = vmatpush1.msra.mxu0 0.0
        %4406 = vmatprep.subr.mxu0 0.0
        %4407 = vmatpush1.msra.mxu0 0.0
        %4408 = vmatprep.subr.mxu0 0.0
        %4409 = vmatpush1.msra.mxu0 0.0
        %4410 = vmatprep.subr.mxu0 0.0
        %4411 = vmatpush1.msra.mxu0 0.0
        %4412 = vmatprep.subr.mxu0 0.0
        %4413 = vmatpush1.msra.mxu0 0.0
        %4414 = vmatprep.subr.mxu0 0.0
        %4415 = vmatpush1.msra.mxu0 0.0
        %4416 = vmatprep.subr.mxu0 0.0
        %4417 = vmatpush1.msra.mxu0 0.0
        %4418 = vmatprep.subr.mxu0 0.0
        %4419 = vmatpush1.msra.mxu0 0.0
        %4420 = vmatprep.subr.mxu0 0.0
        %4421 = vmatpush1.msra.mxu0 0.0
        %4422 = vmatprep.subr.mxu0 0.0
        %4423 = vmatpush1.msra.mxu0 0.0
        %4424 = vmatprep.subr.mxu0 0.0
        %4425 = vmatpush1.msra.mxu0 0.0
        %4426 = vmatprep.subr.mxu0 0.0
        %4427 = vmatpush1.msra.mxu0 0.0
        %4428 = vmatprep.subr.mxu0 0.0
        %4429 = vmatpush1.msra.mxu0 0.0
        %4430 = vmatprep.subr.mxu0 0.0
        %4431 = vmatpush1.msra.mxu0 0.0
        %4432 = vmatprep.mubr.f32.mxu0 0.0
        %4433 = vmatmul.mubr.f32.gmra.mrb[0].mxu0 %v4001
        %v4434 = vpop.f32.mrb[0].mxu0
        %v4435 = vadd.f32 0.0, %v4434
        %v4436 = vpop.f32.mrb[0].mxu0
        %v4437 = vadd.f32 0.0, %v4436
        %4438 = vmatprep.mubr.f32.mxu0 0.0
        %4439 = vmatmul.mubr.f32.gmra.mrb[0].mxu0 %v4004
        %v4440 = vpop.f32.mrb[0].mxu0
        %v4441 = vadd.f32 0.0, %v4440
        %v4442 = vpop.f32.mrb[0].mxu0
        %v4443 = vadd.f32 0.0, %v4442
        %4444 = vmatprep.mubr.f32.mxu0 0.0
        %4445 = vmatmul.mubr.f32.gmra.mrb[0].mxu0 %v4007
        %v4446 = vpop.f32.mrb[0].mxu0
        %v4447 = vadd.f32 0.0, %v4446
        %v4448 = vpop.f32.mrb[0].mxu0
        %v4449 = vadd.f32 0.0, %v4448
        %4450 = vmatprep.mubr.f32.mxu0 0.0
        %4451 = vmatmul.mubr.f32.gmra.mrb[0].mxu0 %v4010
        %v4452 = vpop.f32.mrb[0].mxu0
        %v4453 = vadd.f32 0.0, %v4452
        %v4454 = vpop.f32.mrb[0].mxu0
        %v4455 = vadd.f32 0.0, %v4454
        %4456 = vdwg.mxu0
        %4457 = vmatprep.subr.mxu0 %v3875
        %4458 = vmatpush1.msra.mxu0 %v3874
        %4459 = vmatprep.subr.mxu0 %v3892
        %4460 = vmatpush1.msra.mxu0 %v3891
        %4461 = vmatprep.subr.mxu0 %v3909
        %4462 = vmatpush1.msra.mxu0 %v3908
        %4463 = vmatprep.subr.mxu0 %v3926
        %4464 = vmatpush1.msra.mxu0 %v3925
        %4465 = vmatprep.subr.mxu0 %v3943
        %4466 = vmatpush1.msra.mxu0 %v3942
        %4467 = vmatprep.subr.mxu0 %v3960
        %4468 = vmatpush1.msra.mxu0 %v3959
        %4469 = vmatprep.subr.mxu0 %v3977
        %4470 = vmatpush1.msra.mxu0 %v3976
        %4471 = vmatprep.subr.mxu0 %v3994
        %4472 = vmatpush1.msra.mxu0 %v3993
        %4473 = vmatprep.subr.mxu0 0.0
        %4474 = vmatpush1.msra.mxu0 0.0
        %4475 = vmatprep.subr.mxu0 0.0
        %4476 = vmatpush1.msra.mxu0 0.0
        %4477 = vmatprep.subr.mxu0 0.0
        %4478 = vmatpush1.msra.mxu0 0.0
        %4479 = vmatprep.subr.mxu0 0.0
        %4480 = vmatpush1.msra.mxu0 0.0
        %4481 = vmatprep.subr.mxu0 0.0
        %4482 = vmatpush1.msra.mxu0 0.0
        %4483 = vmatprep.subr.mxu0 0.0
        %4484 = vmatpush1.msra.mxu0 0.0
        %4485 = vmatprep.subr.mxu0 0.0
        %4486 = vmatpush1.msra.mxu0 0.0
        %4487 = vmatprep.subr.mxu0 0.0
        %4488 = vmatpush1.msra.mxu0 0.0
        %4489 = vmatprep.subr.mxu0 0.0
        %4490 = vmatpush1.msra.mxu0 0.0
        %4491 = vmatprep.subr.mxu0 0.0
        %4492 = vmatpush1.msra.mxu0 0.0
        %4493 = vmatprep.subr.mxu0 0.0
        %4494 = vmatpush1.msra.mxu0 0.0
        %4495 = vmatprep.subr.mxu0 0.0
        %4496 = vmatpush1.msra.mxu0 0.0
        %4497 = vmatprep.subr.mxu0 0.0
        %4498 = vmatpush1.msra.mxu0 0.0
        %4499 = vmatprep.subr.mxu0 0.0
        %4500 = vmatpush1.msra.mxu0 0.0
        %4501 = vmatprep.subr.mxu0 0.0
        %4502 = vmatpush1.msra.mxu0 0.0
        %4503 = vmatprep.subr.mxu0 0.0
        %4504 = vmatpush1.msra.mxu0 0.0
        %4505 = vmatprep.subr.mxu0 0.0
        %4506 = vmatpush1.msra.mxu0 0.0
        %4507 = vmatprep.subr.mxu0 0.0
        %4508 = vmatpush1.msra.mxu0 0.0
        %4509 = vmatprep.subr.mxu0 0.0
        %4510 = vmatpush1.msra.mxu0 0.0
        %4511 = vmatprep.subr.mxu0 0.0
        %4512 = vmatpush1.msra.mxu0 0.0
        %4513 = vmatprep.subr.mxu0 0.0
        %4514 = vmatpush1.msra.mxu0 0.0
        %4515 = vmatprep.subr.mxu0 0.0
        %4516 = vmatpush1.msra.mxu0 0.0
        %4517 = vmatprep.subr.mxu0 0.0
        %4518 = vmatpush1.msra.mxu0 0.0
        %4519 = vmatprep.subr.mxu0 0.0
        %4520 = vmatpush1.msra.mxu0 0.0
        %4521 = vmatprep.mubr.f32.mxu0 0.0
        %4522 = vmatmul.mubr.f32.gmra.mrb[0].mxu0 %v4001
        %v4523 = vpop.f32.mrb[0].mxu0
        %v4524 = vadd.f32 0.0, %v4523
        %v4525 = vpop.f32.mrb[0].mxu0
        %v4526 = vadd.f32 0.0, %v4525
        %4527 = vmatprep.mubr.f32.mxu0 0.0
        %4528 = vmatmul.mubr.f32.gmra.mrb[0].mxu0 %v4004
        %v4529 = vpop.f32.mrb[0].mxu0
        %v4530 = vadd.f32 0.0, %v4529
        %v4531 = vpop.f32.mrb[0].mxu0
        %v4532 = vadd.f32 0.0, %v4531
        %4533 = vmatprep.mubr.f32.mxu0 0.0
        %4534 = vmatmul.mubr.f32.gmra.mrb[0].mxu0 %v4007
        %v4535 = vpop.f32.mrb[0].mxu0
        %v4536 = vadd.f32 0.0, %v4535
        %v4537 = vpop.f32.mrb[0].mxu0
        %v4538 = vadd.f32 0.0, %v4537
        %4539 = vmatprep.mubr.f32.mxu0 0.0
        %4540 = vmatmul.mubr.f32.gmra.mrb[0].mxu0 %v4010
        %v4541 = vpop.f32.mrb[0].mxu0
        %v4542 = vadd.f32 0.0, %v4541
        %v4543 = vpop.f32.mrb[0].mxu0
        %v4544 = vadd.f32 0.0, %v4543
        %4545 = vdwg.mxu0
        %4546 = vmatprep.subr.mxu0 %v3877
        %4547 = vmatpush1.msra.mxu0 %v3876
        %4548 = vmatprep.subr.mxu0 %v3894
        %4549 = vmatpush1.msra.mxu0 %v3893
        %4550 = vmatprep.subr.mxu0 %v3911
        %4551 = vmatpush1.msra.mxu0 %v3910
        %4552 = vmatprep.subr.mxu0 %v3928
        %4553 = vmatpush1.msra.mxu0 %v3927
        %4554 = vmatprep.subr.mxu0 %v3945
        %4555 = vmatpush1.msra.mxu0 %v3944
        %4556 = vmatprep.subr.mxu0 %v3962
        %4557 = vmatpush1.msra.mxu0 %v3961
        %4558 = vmatprep.subr.mxu0 %v3979
        %4559 = vmatpush1.msra.mxu0 %v3978
        %4560 = vmatprep.subr.mxu0 %v3996
        %4561 = vmatpush1.msra.mxu0 %v3995
        %4562 = vmatprep.subr.mxu0 0.0
        %4563 = vmatpush1.msra.mxu0 0.0
        %4564 = vmatprep.subr.mxu0 0.0
        %4565 = vmatpush1.msra.mxu0 0.0
        %4566 = vmatprep.subr.mxu0 0.0
        %4567 = vmatpush1.msra.mxu0 0.0
        %4568 = vmatprep.subr.mxu0 0.0
        %4569 = vmatpush1.msra.mxu0 0.0
        %4570 = vmatprep.subr.mxu0 0.0
        %4571 = vmatpush1.msra.mxu0 0.0
        %4572 = vmatprep.subr.mxu0 0.0
        %4573 = vmatpush1.msra.mxu0 0.0
        %4574 = vmatprep.subr.mxu0 0.0
        %4575 = vmatpush1.msra.mxu0 0.0
        %4576 = vmatprep.subr.mxu0 0.0
        %4577 = vmatpush1.msra.mxu0 0.0
        %4578 = vmatprep.subr.mxu0 0.0
        %4579 = vmatpush1.msra.mxu0 0.0
        %4580 = vmatprep.subr.mxu0 0.0
        %4581 = vmatpush1.msra.mxu0 0.0
        %4582 = vmatprep.subr.mxu0 0.0
        %4583 = vmatpush1.msra.mxu0 0.0
        %4584 = vmatprep.subr.mxu0 0.0
        %4585 = vmatpush1.msra.mxu0 0.0
        %4586 = vmatprep.subr.mxu0 0.0
        %4587 = vmatpush1.msra.mxu0 0.0
        %4588 = vmatprep.subr.mxu0 0.0
        %4589 = vmatpush1.msra.mxu0 0.0
        %4590 = vmatprep.subr.mxu0 0.0
        %4591 = vmatpush1.msra.mxu0 0.0
        %4592 = vmatprep.subr.mxu0 0.0
        %4593 = vmatpush1.msra.mxu0 0.0
        %4594 = vmatprep.subr.mxu0 0.0
        %4595 = vmatpush1.msra.mxu0 0.0
        %4596 = vmatprep.subr.mxu0 0.0
        %4597 = vmatpush1.msra.mxu0 0.0
        %4598 = vmatprep.subr.mxu0 0.0
        %4599 = vmatpush1.msra.mxu0 0.0
        %4600 = vmatprep.subr.mxu0 0.0
        %4601 = vmatpush1.msra.mxu0 0.0
        %4602 = vmatprep.subr.mxu0 0.0
        %4603 = vmatpush1.msra.mxu0 0.0
        %4604 = vmatprep.subr.mxu0 0.0
        %4605 = vmatpush1.msra.mxu0 0.0
        %4606 = vmatprep.subr.mxu0 0.0
        %4607 = vmatpush1.msra.mxu0 0.0
        %4608 = vmatprep.subr.mxu0 0.0
        %4609 = vmatpush1.msra.mxu0 0.0
        %4610 = vmatprep.mubr.f32.mxu0 0.0
        %4611 = vmatmul.mubr.f32.gmra.mrb[0].mxu0 %v4001
        %v4612 = vpop.f32.mrb[0].mxu0
        %v4613 = vadd.f32 0.0, %v4612
        %v4614 = vpop.f32.mrb[0].mxu0
        %v4615 = vadd.f32 0.0, %v4614
        %4616 = vmatprep.mubr.f32.mxu0 0.0
        %4617 = vmatmul.mubr.f32.gmra.mrb[0].mxu0 %v4004
        %v4618 = vpop.f32.mrb[0].mxu0
        %v4619 = vadd.f32 0.0, %v4618
        %v4620 = vpop.f32.mrb[0].mxu0
        %v4621 = vadd.f32 0.0, %v4620
        %4622 = vmatprep.mubr.f32.mxu0 0.0
        %4623 = vmatmul.mubr.f32.gmra.mrb[0].mxu0 %v4007
        %v4624 = vpop.f32.mrb[0].mxu0
        %v4625 = vadd.f32 0.0, %v4624
        %v4626 = vpop.f32.mrb[0].mxu0
        %v4627 = vadd.f32 0.0, %v4626
        %4628 = vmatprep.mubr.f32.mxu0 0.0
        %4629 = vmatmul.mubr.f32.gmra.mrb[0].mxu0 %v4010
        %v4630 = vpop.f32.mrb[0].mxu0
        %v4631 = vadd.f32 0.0, %v4630
        %v4632 = vpop.f32.mrb[0].mxu0
        %v4633 = vadd.f32 0.0, %v4632
        %4634 = vdwg.mxu0
        %4635 = vmatprep.subr.mxu0 %v3879
        %4636 = vmatpush1.msra.mxu0 %v3878
        %4637 = vmatprep.subr.mxu0 %v3896
        %4638 = vmatpush1.msra.mxu0 %v3895
        %4639 = vmatprep.subr.mxu0 %v3913
        %4640 = vmatpush1.msra.mxu0 %v3912
        %4641 = vmatprep.subr.mxu0 %v3930
        %4642 = vmatpush1.msra.mxu0 %v3929
        %4643 = vmatprep.subr.mxu0 %v3947
        %4644 = vmatpush1.msra.mxu0 %v3946
        %4645 = vmatprep.subr.mxu0 %v3964
        %4646 = vmatpush1.msra.mxu0 %v3963
        %4647 = vmatprep.subr.mxu0 %v3981
        %4648 = vmatpush1.msra.mxu0 %v3980
        %4649 = vmatprep.subr.mxu0 %v3998
        %4650 = vmatpush1.msra.mxu0 %v3997
        %4651 = vmatprep.subr.mxu0 0.0
        %4652 = vmatpush1.msra.mxu0 0.0
        %4653 = vmatprep.subr.mxu0 0.0
        %4654 = vmatpush1.msra.mxu0 0.0
        %4655 = vmatprep.subr.mxu0 0.0
        %4656 = vmatpush1.msra.mxu0 0.0
        %4657 = vmatprep.subr.mxu0 0.0
        %4658 = vmatpush1.msra.mxu0 0.0
        %4659 = vmatprep.subr.mxu0 0.0
        %4660 = vmatpush1.msra.mxu0 0.0
        %4661 = vmatprep.subr.mxu0 0.0
        %4662 = vmatpush1.msra.mxu0 0.0
        %4663 = vmatprep.subr.mxu0 0.0
        %4664 = vmatpush1.msra.mxu0 0.0
        %4665 = vmatprep.subr.mxu0 0.0
        %4666 = vmatpush1.msra.mxu0 0.0
        %4667 = vmatprep.subr.mxu0 0.0
        %4668 = vmatpush1.msra.mxu0 0.0
        %4669 = vmatprep.subr.mxu0 0.0
        %4670 = vmatpush1.msra.mxu0 0.0
        %4671 = vmatprep.subr.mxu0 0.0
        %4672 = vmatpush1.msra.mxu0 0.0
        %4673 = vmatprep.subr.mxu0 0.0
        %4674 = vmatpush1.msra.mxu0 0.0
        %4675 = vmatprep.subr.mxu0 0.0
        %4676 = vmatpush1.msra.mxu0 0.0
        %4677 = vmatprep.subr.mxu0 0.0
        %4678 = vmatpush1.msra.mxu0 0.0
        %4679 = vmatprep.subr.mxu0 0.0
        %4680 = vmatpush1.msra.mxu0 0.0
        %4681 = vmatprep.subr.mxu0 0.0
        %4682 = vmatpush1.msra.mxu0 0.0
        %4683 = vmatprep.subr.mxu0 0.0
        %4684 = vmatpush1.msra.mxu0 0.0
        %4685 = vmatprep.subr.mxu0 0.0
        %4686 = vmatpush1.msra.mxu0 0.0
        %4687 = vmatprep.subr.mxu0 0.0
        %4688 = vmatpush1.msra.mxu0 0.0
        %4689 = vmatprep.subr.mxu0 0.0
        %4690 = vmatpush1.msra.mxu0 0.0
        %4691 = vmatprep.subr.mxu0 0.0
        %4692 = vmatpush1.msra.mxu0 0.0
        %4693 = vmatprep.subr.mxu0 0.0
        %4694 = vmatpush1.msra.mxu0 0.0
        %4695 = vmatprep.subr.mxu0 0.0
        %4696 = vmatpush1.msra.mxu0 0.0
        %4697 = vmatprep.subr.mxu0 0.0
        %4698 = vmatpush1.msra.mxu0 0.0
        %4699 = vmatprep.mubr.f32.mxu0 0.0
        %4700 = vmatmul.mubr.f32.gmra.mrb[0].mxu0 %v4001
        %v4701 = vpop.f32.mrb[0].mxu0
        %v4702 = vadd.f32 0.0, %v4701
        %v4703 = vpop.f32.mrb[0].mxu0
        %v4704 = vadd.f32 0.0, %v4703
        %4705 = vmatprep.mubr.f32.mxu0 0.0
        %4706 = vmatmul.mubr.f32.gmra.mrb[0].mxu0 %v4004
        %v4707 = vpop.f32.mrb[0].mxu0
        %v4708 = vadd.f32 0.0, %v4707
        %v4709 = vpop.f32.mrb[0].mxu0
        %v4710 = vadd.f32 0.0, %v4709
        %4711 = vmatprep.mubr.f32.mxu0 0.0
        %4712 = vmatmul.mubr.f32.gmra.mrb[0].mxu0 %v4007
        %v4713 = vpop.f32.mrb[0].mxu0
        %v4714 = vadd.f32 0.0, %v4713
        %v4715 = vpop.f32.mrb[0].mxu0
        %v4716 = vadd.f32 0.0, %v4715
        %4717 = vmatprep.mubr.f32.mxu0 0.0
        %4718 = vmatmul.mubr.f32.gmra.mrb[0].mxu0 %v4010
        %v4719 = vpop.f32.mrb[0].mxu0
        %v4720 = vadd.f32 0.0, %v4719
        %v4721 = vpop.f32.mrb[0].mxu0
        %v4722 = vadd.f32 0.0, %v4721
        %4723 = vdwg.mxu0
        %4724 = vmatprep.subr.mxu0 0.0
        %4725 = vmatpush1.msra.mxu0 %v3880
        %4726 = vmatprep.subr.mxu0 0.0
        %4727 = vmatpush1.msra.mxu0 %v3897
        %4728 = vmatprep.subr.mxu0 0.0
        %4729 = vmatpush1.msra.mxu0 %v3914
        %4730 = vmatprep.subr.mxu0 0.0
        %4731 = vmatpush1.msra.mxu0 %v3931
        %4732 = vmatprep.subr.mxu0 0.0
        %4733 = vmatpush1.msra.mxu0 %v3948
        %4734 = vmatprep.subr.mxu0 0.0
        %4735 = vmatpush1.msra.mxu0 %v3965
        %4736 = vmatprep.subr.mxu0 0.0
        %4737 = vmatpush1.msra.mxu0 %v3982
        %4738 = vmatprep.subr.mxu0 0.0
        %4739 = vmatpush1.msra.mxu0 %v3999
        %4740 = vmatprep.subr.mxu0 0.0
        %4741 = vmatpush1.msra.mxu0 0.0
        %4742 = vmatprep.subr.mxu0 0.0
        %4743 = vmatpush1.msra.mxu0 0.0
        %4744 = vmatprep.subr.mxu0 0.0
        %4745 = vmatpush1.msra.mxu0 0.0
        %4746 = vmatprep.subr.mxu0 0.0
        %4747 = vmatpush1.msra.mxu0 0.0
        %4748 = vmatprep.subr.mxu0 0.0
        %4749 = vmatpush1.msra.mxu0 0.0
        %4750 = vmatprep.subr.mxu0 0.0
        %4751 = vmatpush1.msra.mxu0 0.0
        %4752 = vmatprep.subr.mxu0 0.0
        %4753 = vmatpush1.msra.mxu0 0.0
        %4754 = vmatprep.subr.mxu0 0.0
        %4755 = vmatpush1.msra.mxu0 0.0
        %4756 = vmatprep.subr.mxu0 0.0
        %4757 = vmatpush1.msra.mxu0 0.0
        %4758 = vmatprep.subr.mxu0 0.0
        %4759 = vmatpush1.msra.mxu0 0.0
        %4760 = vmatprep.subr.mxu0 0.0
        %4761 = vmatpush1.msra.mxu0 0.0
        %4762 = vmatprep.subr.mxu0 0.0
        %4763 = vmatpush1.msra.mxu0 0.0
        %4764 = vmatprep.subr.mxu0 0.0
        %4765 = vmatpush1.msra.mxu0 0.0
        %4766 = vmatprep.subr.mxu0 0.0
        %4767 = vmatpush1.msra.mxu0 0.0
        %4768 = vmatprep.subr.mxu0 0.0
        %4769 = vmatpush1.msra.mxu0 0.0
        %4770 = vmatprep.subr.mxu0 0.0
        %4771 = vmatpush1.msra.mxu0 0.0
        %4772 = vmatprep.subr.mxu0 0.0
        %4773 = vmatpush1.msra.mxu0 0.0
        %4774 = vmatprep.subr.mxu0 0.0
        %4775 = vmatpush1.msra.mxu0 0.0
        %4776 = vmatprep.subr.mxu0 0.0
        %4777 = vmatpush1.msra.mxu0 0.0
        %4778 = vmatprep.subr.mxu0 0.0
        %4779 = vmatpush1.msra.mxu0 0.0
        %4780 = vmatprep.subr.mxu0 0.0
        %4781 = vmatpush1.msra.mxu0 0.0
        %4782 = vmatprep.subr.mxu0 0.0
        %4783 = vmatpush1.msra.mxu0 0.0
        %4784 = vmatprep.subr.mxu0 0.0
        %4785 = vmatpush1.msra.mxu0 0.0
        %4786 = vmatprep.subr.mxu0 0.0
        %4787 = vmatpush1.msra.mxu0 0.0
        %4788 = vmatprep.mubr.f32.mxu0 0.0
        %4789 = vmatmul.mubr.f32.gmra.mrb[0].mxu0 %v4001
        %v4790 = vpop.f32.mrb[0].mxu0
        %v4791 = vadd.f32 0.0, %v4790
        %v4792 = vpop.f32.mrb[0].mxu0
        %4793 = vmatprep.mubr.f32.mxu0 0.0
        %4794 = vmatmul.mubr.f32.gmra.mrb[0].mxu0 %v4004
        %v4795 = vpop.f32.mrb[0].mxu0
        %v4796 = vadd.f32 0.0, %v4795
        %v4797 = vpop.f32.mrb[0].mxu0
        %4798 = vmatprep.mubr.f32.mxu0 0.0
        %4799 = vmatmul.mubr.f32.gmra.mrb[0].mxu0 %v4007
        %v4800 = vpop.f32.mrb[0].mxu0
        %v4801 = vadd.f32 0.0, %v4800
        %v4802 = vpop.f32.mrb[0].mxu0
        %4803 = vmatprep.mubr.f32.mxu0 0.0
        %4804 = vmatmul.mubr.f32.gmra.mrb[0].mxu0 %v4010
        %v4805 = vpop.f32.mrb[0].mxu0
        %v4806 = vadd.f32 0.0, %v4805
        %v4807 = vpop.f32.mrb[0].mxu0
        %4808 = vdwg.mxu0
        %v4809 = vlaneseq
        %v4810 = vand.u32 %v4809, 127
        %v4811 = vadd.s32 %v4810, 128
        %v4812 = vadd.s32 %v4810, 256
        %v4813 = vadd.s32 %v4810, 384
        %v4814 = vadd.s32 %v4810, 512
        %v4815 = vadd.s32 %v4810, 640
        %v4816 = vadd.s32 %v4810, 768
        %v4817 = vadd.s32 %v4810, 896
        %v4818 = vadd.s32 %v4810, 1024
        %v4819 = vadd.s32 %v4810, 1152
        %v4820 = vadd.s32 %v4810, 1280
        %v4821 = vadd.s32 %v4810, 1408
        %v4822 = vadd.s32 %v4810, 1536
        %v4823 = vadd.s32 %v4810, 1664
        %v4824 = vadd.s32 %v4810, 1792
        %v4825 = vadd.s32 %v4810, 1920
        %v4826 = vadd.s32 %v4810, 2048
        %v4827 = vlaneseq
        %v4828 = vshrl.u32 %v4827, 7
        %v4829 = vadd.s32 %v4828, 8
        %v4830 = vadd.s32 %v4828, 16
        %v4831 = vadd.s32 %v4828, 24
        %v4832 = vmul.u32 %v4828, 72
        %v4833 = vmul.u32 %v4829, 72
        %v4834 = vmul.u32 %v4830, 72
        %v4835 = vmul.u32 %v4831, 72
        %v4836 = vsub.s32 %v4810, %v4832
        %v4837 = vsub.s32 %v4811, %v4832
        %v4838 = vsub.s32 %v4812, %v4832
        %v4839 = vsub.s32 %v4813, %v4832
        %v4840 = vsub.s32 %v4814, %v4832
        %v4841 = vsub.s32 %v4815, %v4832
        %v4842 = vsub.s32 %v4816, %v4832
        %v4843 = vsub.s32 %v4817, %v4832
        %v4844 = vsub.s32 %v4818, %v4832
        %v4845 = vsub.s32 %v4819, %v4832
        %v4846 = vsub.s32 %v4820, %v4832
        %v4847 = vsub.s32 %v4821, %v4832
        %v4848 = vsub.s32 %v4822, %v4832
        %v4849 = vsub.s32 %v4823, %v4832
        %v4850 = vsub.s32 %v4824, %v4832
        %v4851 = vsub.s32 %v4825, %v4832
        %v4852 = vsub.s32 %v4826, %v4832
        %v4853 = vsub.s32 %v4810, %v4833
        %v4854 = vsub.s32 %v4811, %v4833
        %v4855 = vsub.s32 %v4812, %v4833
        %v4856 = vsub.s32 %v4813, %v4833
        %v4857 = vsub.s32 %v4814, %v4833
        %v4858 = vsub.s32 %v4815, %v4833
        %v4859 = vsub.s32 %v4816, %v4833
        %v4860 = vsub.s32 %v4817, %v4833
        %v4861 = vsub.s32 %v4818, %v4833
        %v4862 = vsub.s32 %v4819, %v4833
        %v4863 = vsub.s32 %v4820, %v4833
        %v4864 = vsub.s32 %v4821, %v4833
        %v4865 = vsub.s32 %v4822, %v4833
        %v4866 = vsub.s32 %v4823, %v4833
        %v4867 = vsub.s32 %v4824, %v4833
        %v4868 = vsub.s32 %v4825, %v4833
        %v4869 = vsub.s32 %v4826, %v4833
        %v4870 = vsub.s32 %v4810, %v4834
        %v4871 = vsub.s32 %v4811, %v4834
        %v4872 = vsub.s32 %v4812, %v4834
        %v4873 = vsub.s32 %v4813, %v4834
        %v4874 = vsub.s32 %v4814, %v4834
        %v4875 = vsub.s32 %v4815, %v4834
        %v4876 = vsub.s32 %v4816, %v4834
        %v4877 = vsub.s32 %v4817, %v4834
        %v4878 = vsub.s32 %v4818, %v4834
        %v4879 = vsub.s32 %v4819, %v4834
        %v4880 = vsub.s32 %v4820, %v4834
        %v4881 = vsub.s32 %v4821, %v4834
        %v4882 = vsub.s32 %v4822, %v4834
        %v4883 = vsub.s32 %v4823, %v4834
        %v4884 = vsub.s32 %v4824, %v4834
        %v4885 = vsub.s32 %v4825, %v4834
        %v4886 = vsub.s32 %v4826, %v4834
        %v4887 = vsub.s32 %v4810, %v4835
        %v4888 = vsub.s32 %v4811, %v4835
        %v4889 = vsub.s32 %v4812, %v4835
        %v4890 = vsub.s32 %v4813, %v4835
        %v4891 = vsub.s32 %v4814, %v4835
        %v4892 = vsub.s32 %v4815, %v4835
        %v4893 = vsub.s32 %v4816, %v4835
        %v4894 = vsub.s32 %v4817, %v4835
        %v4895 = vsub.s32 %v4818, %v4835
        %v4896 = vsub.s32 %v4819, %v4835
        %v4897 = vsub.s32 %v4820, %v4835
        %v4898 = vsub.s32 %v4821, %v4835
        %v4899 = vsub.s32 %v4822, %v4835
        %v4900 = vsub.s32 %v4823, %v4835
        %v4901 = vsub.s32 %v4824, %v4835
        %v4902 = vsub.s32 %v4825, %v4835
        %v4903 = vsub.s32 %v4826, %v4835
        %vm4904 = vcmp.ge.s32.totalorder %v4836, 0
        %vm4905 = vcmp.ge.s32.totalorder %v4837, 0
        %vm4906 = vcmp.ge.s32.totalorder %v4838, 0
        %vm4907 = vcmp.ge.s32.totalorder %v4839, 0
        %vm4908 = vcmp.ge.s32.totalorder %v4840, 0
        %vm4909 = vcmp.ge.s32.totalorder %v4841, 0
        %vm4910 = vcmp.ge.s32.totalorder %v4842, 0
        %vm4911 = vcmp.ge.s32.totalorder %v4843, 0
        %vm4912 = vcmp.ge.s32.totalorder %v4844, 0
        %vm4913 = vcmp.ge.s32.totalorder %v4845, 0
        %vm4914 = vcmp.ge.s32.totalorder %v4846, 0
        %vm4915 = vcmp.ge.s32.totalorder %v4847, 0
        %vm4916 = vcmp.ge.s32.totalorder %v4848, 0
        %vm4917 = vcmp.ge.s32.totalorder %v4849, 0
        %vm4918 = vcmp.ge.s32.totalorder %v4850, 0
        %vm4919 = vcmp.ge.s32.totalorder %v4851, 0
        %vm4920 = vcmp.ge.s32.totalorder %v4852, 0
        %vm4921 = vcmp.ge.s32.totalorder %v4853, 0
        %vm4922 = vcmp.ge.s32.totalorder %v4854, 0
        %vm4923 = vcmp.ge.s32.totalorder %v4855, 0
        %vm4924 = vcmp.ge.s32.totalorder %v4856, 0
        %vm4925 = vcmp.ge.s32.totalorder %v4857, 0
        %vm4926 = vcmp.ge.s32.totalorder %v4858, 0
        %vm4927 = vcmp.ge.s32.totalorder %v4859, 0
        %vm4928 = vcmp.ge.s32.totalorder %v4860, 0
        %vm4929 = vcmp.ge.s32.totalorder %v4861, 0
        %vm4930 = vcmp.ge.s32.totalorder %v4862, 0
        %vm4931 = vcmp.ge.s32.totalorder %v4863, 0
        %vm4932 = vcmp.ge.s32.totalorder %v4864, 0
        %vm4933 = vcmp.ge.s32.totalorder %v4865, 0
        %vm4934 = vcmp.ge.s32.totalorder %v4866, 0
        %vm4935 = vcmp.ge.s32.totalorder %v4867, 0
        %vm4936 = vcmp.ge.s32.totalorder %v4868, 0
        %vm4937 = vcmp.ge.s32.totalorder %v4869, 0
        %vm4938 = vcmp.ge.s32.totalorder %v4870, 0
        %vm4939 = vcmp.ge.s32.totalorder %v4871, 0
        %vm4940 = vcmp.ge.s32.totalorder %v4872, 0
        %vm4941 = vcmp.ge.s32.totalorder %v4873, 0
        %vm4942 = vcmp.ge.s32.totalorder %v4874, 0
        %vm4943 = vcmp.ge.s32.totalorder %v4875, 0
        %vm4944 = vcmp.ge.s32.totalorder %v4876, 0
        %vm4945 = vcmp.ge.s32.totalorder %v4877, 0
        %vm4946 = vcmp.ge.s32.totalorder %v4878, 0
        %vm4947 = vcmp.ge.s32.totalorder %v4879, 0
        %vm4948 = vcmp.ge.s32.totalorder %v4880, 0
        %vm4949 = vcmp.ge.s32.totalorder %v4881, 0
        %vm4950 = vcmp.ge.s32.totalorder %v4882, 0
        %vm4951 = vcmp.ge.s32.totalorder %v4883, 0
        %vm4952 = vcmp.ge.s32.totalorder %v4884, 0
        %vm4953 = vcmp.ge.s32.totalorder %v4885, 0
        %vm4954 = vcmp.ge.s32.totalorder %v4886, 0
        %vm4955 = vcmp.ge.s32.totalorder %v4887, 0
        %vm4956 = vcmp.ge.s32.totalorder %v4888, 0
        %vm4957 = vcmp.ge.s32.totalorder %v4889, 0
        %vm4958 = vcmp.ge.s32.totalorder %v4890, 0
        %vm4959 = vcmp.ge.s32.totalorder %v4891, 0
        %vm4960 = vcmp.ge.s32.totalorder %v4892, 0
        %vm4961 = vcmp.ge.s32.totalorder %v4893, 0
        %vm4962 = vcmp.ge.s32.totalorder %v4894, 0
        %vm4963 = vcmp.ge.s32.totalorder %v4895, 0
        %vm4964 = vcmp.ge.s32.totalorder %v4896, 0
        %vm4965 = vcmp.ge.s32.totalorder %v4897, 0
        %vm4966 = vcmp.ge.s32.totalorder %v4898, 0
        %vm4967 = vcmp.ge.s32.totalorder %v4899, 0
        %vm4968 = vcmp.ge.s32.totalorder %v4900, 0
        %vm4969 = vcmp.ge.s32.totalorder %v4901, 0
        %vm4970 = vcmp.ge.s32.totalorder %v4902, 0
        %vm4971 = vcmp.ge.s32.totalorder %v4903, 0
        %vm4972 = vcmp.lt.s32.totalorder %v4836, 72
        %vm4973 = vcmp.lt.s32.totalorder %v4837, 72
        %vm4974 = vcmp.lt.s32.totalorder %v4838, 72
        %vm4975 = vcmp.lt.s32.totalorder %v4839, 72
        %vm4976 = vcmp.lt.s32.totalorder %v4840, 72
        %vm4977 = vcmp.lt.s32.totalorder %v4841, 72
        %vm4978 = vcmp.lt.s32.totalorder %v4842, 72
        %vm4979 = vcmp.lt.s32.totalorder %v4843, 72
        %vm4980 = vcmp.lt.s32.totalorder %v4844, 72
        %vm4981 = vcmp.lt.s32.totalorder %v4845, 72
        %vm4982 = vcmp.lt.s32.totalorder %v4846, 72
        %vm4983 = vcmp.lt.s32.totalorder %v4847, 72
        %vm4984 = vcmp.lt.s32.totalorder %v4848, 72
        %vm4985 = vcmp.lt.s32.totalorder %v4849, 72
        %vm4986 = vcmp.lt.s32.totalorder %v4850, 72
        %vm4987 = vcmp.lt.s32.totalorder %v4851, 72
        %vm4988 = vcmp.lt.s32.totalorder %v4852, 72
        %vm4989 = vcmp.lt.s32.totalorder %v4853, 72
        %vm4990 = vcmp.lt.s32.totalorder %v4854, 72
        %vm4991 = vcmp.lt.s32.totalorder %v4855, 72
        %vm4992 = vcmp.lt.s32.totalorder %v4856, 72
        %vm4993 = vcmp.lt.s32.totalorder %v4857, 72
        %vm4994 = vcmp.lt.s32.totalorder %v4858, 72
        %vm4995 = vcmp.lt.s32.totalorder %v4859, 72
        %vm4996 = vcmp.lt.s32.totalorder %v4860, 72
        %vm4997 = vcmp.lt.s32.totalorder %v4861, 72
        %vm4998 = vcmp.lt.s32.totalorder %v4862, 72
        %vm4999 = vcmp.lt.s32.totalorder %v4863, 72
        %vm5000 = vcmp.lt.s32.totalorder %v4864, 72
        %vm5001 = vcmp.lt.s32.totalorder %v4865, 72
        %vm5002 = vcmp.lt.s32.totalorder %v4866, 72
        %vm5003 = vcmp.lt.s32.totalorder %v4867, 72
        %vm5004 = vcmp.lt.s32.totalorder %v4868, 72
        %vm5005 = vcmp.lt.s32.totalorder %v4869, 72
        %vm5006 = vcmp.lt.s32.totalorder %v4870, 72
        %vm5007 = vcmp.lt.s32.totalorder %v4871, 72
        %vm5008 = vcmp.lt.s32.totalorder %v4872, 72
        %vm5009 = vcmp.lt.s32.totalorder %v4873, 72
        %vm5010 = vcmp.lt.s32.totalorder %v4874, 72
        %vm5011 = vcmp.lt.s32.totalorder %v4875, 72
        %vm5012 = vcmp.lt.s32.totalorder %v4876, 72
        %vm5013 = vcmp.lt.s32.totalorder %v4877, 72
        %vm5014 = vcmp.lt.s32.totalorder %v4878, 72
        %vm5015 = vcmp.lt.s32.totalorder %v4879, 72
        %vm5016 = vcmp.lt.s32.totalorder %v4880, 72
        %vm5017 = vcmp.lt.s32.totalorder %v4881, 72
        %vm5018 = vcmp.lt.s32.totalorder %v4882, 72
        %vm5019 = vcmp.lt.s32.totalorder %v4883, 72
        %vm5020 = vcmp.lt.s32.totalorder %v4884, 72
        %vm5021 = vcmp.lt.s32.totalorder %v4885, 72
        %vm5022 = vcmp.lt.s32.totalorder %v4886, 72
        %vm5023 = vcmp.lt.s32.totalorder %v4887, 72
        %vm5024 = vcmp.lt.s32.totalorder %v4888, 72
        %vm5025 = vcmp.lt.s32.totalorder %v4889, 72
        %vm5026 = vcmp.lt.s32.totalorder %v4890, 72
        %vm5027 = vcmp.lt.s32.totalorder %v4891, 72
        %vm5028 = vcmp.lt.s32.totalorder %v4892, 72
        %vm5029 = vcmp.lt.s32.totalorder %v4893, 72
        %vm5030 = vcmp.lt.s32.totalorder %v4894, 72
        %vm5031 = vcmp.lt.s32.totalorder %v4895, 72
        %vm5032 = vcmp.lt.s32.totalorder %v4896, 72
        %vm5033 = vcmp.lt.s32.totalorder %v4897, 72
        %vm5034 = vcmp.lt.s32.totalorder %v4898, 72
        %vm5035 = vcmp.lt.s32.totalorder %v4899, 72
        %vm5036 = vcmp.lt.s32.totalorder %v4900, 72
        %vm5037 = vcmp.lt.s32.totalorder %v4901, 72
        %vm5038 = vcmp.lt.s32.totalorder %v4902, 72
        %vm5039 = vcmp.lt.s32.totalorder %v4903, 72
        %vm5040 = vmand %vm4904, %vm4972
        %vm5041 = vmand %vm4905, %vm4973
        %vm5042 = vmand %vm4906, %vm4974
        %vm5043 = vmand %vm4907, %vm4975
        %vm5044 = vmand %vm4908, %vm4976
        %vm5045 = vmand %vm4909, %vm4977
        %vm5046 = vmand %vm4910, %vm4978
        %vm5047 = vmand %vm4911, %vm4979
        %vm5048 = vmand %vm4912, %vm4980
        %vm5049 = vmand %vm4913, %vm4981
        %vm5050 = vmand %vm4914, %vm4982
        %vm5051 = vmand %vm4915, %vm4983
        %vm5052 = vmand %vm4916, %vm4984
        %vm5053 = vmand %vm4917, %vm4985
        %vm5054 = vmand %vm4918, %vm4986
        %vm5055 = vmand %vm4919, %vm4987
        %vm5056 = vmand %vm4920, %vm4988
        %vm5057 = vmand %vm4921, %vm4989
        %vm5058 = vmand %vm4922, %vm4990
        %vm5059 = vmand %vm4923, %vm4991
        %vm5060 = vmand %vm4924, %vm4992
        %vm5061 = vmand %vm4925, %vm4993
        %vm5062 = vmand %vm4926, %vm4994
        %vm5063 = vmand %vm4927, %vm4995
        %vm5064 = vmand %vm4928, %vm4996
        %vm5065 = vmand %vm4929, %vm4997
        %vm5066 = vmand %vm4930, %vm4998
        %vm5067 = vmand %vm4931, %vm4999
        %vm5068 = vmand %vm4932, %vm5000
        %vm5069 = vmand %vm4933, %vm5001
        %vm5070 = vmand %vm4934, %vm5002
        %vm5071 = vmand %vm4935, %vm5003
        %vm5072 = vmand %vm4936, %vm5004
        %vm5073 = vmand %vm4937, %vm5005
        %vm5074 = vmand %vm4938, %vm5006
        %vm5075 = vmand %vm4939, %vm5007
        %vm5076 = vmand %vm4940, %vm5008
        %vm5077 = vmand %vm4941, %vm5009
        %vm5078 = vmand %vm4942, %vm5010
        %vm5079 = vmand %vm4943, %vm5011
        %vm5080 = vmand %vm4944, %vm5012
        %vm5081 = vmand %vm4945, %vm5013
        %vm5082 = vmand %vm4946, %vm5014
        %vm5083 = vmand %vm4947, %vm5015
        %vm5084 = vmand %vm4948, %vm5016
        %vm5085 = vmand %vm4949, %vm5017
        %vm5086 = vmand %vm4950, %vm5018
        %vm5087 = vmand %vm4951, %vm5019
        %vm5088 = vmand %vm4952, %vm5020
        %vm5089 = vmand %vm4953, %vm5021
        %vm5090 = vmand %vm4954, %vm5022
        %vm5091 = vmand %vm4955, %vm5023
        %vm5092 = vmand %vm4956, %vm5024
        %vm5093 = vmand %vm4957, %vm5025
        %vm5094 = vmand %vm4958, %vm5026
        %vm5095 = vmand %vm4959, %vm5027
        %vm5096 = vmand %vm4960, %vm5028
        %vm5097 = vmand %vm4961, %vm5029
        %vm5098 = vmand %vm4962, %vm5030
        %vm5099 = vmand %vm4963, %vm5031
        %vm5100 = vmand %vm4964, %vm5032
        %vm5101 = vmand %vm4965, %vm5033
        %vm5102 = vmand %vm4966, %vm5034
        %vm5103 = vmand %vm4967, %vm5035
        %vm5104 = vmand %vm4968, %vm5036
        %vm5105 = vmand %vm4969, %vm5037
        %vm5106 = vmand %vm4970, %vm5038
        %vm5107 = vmand %vm4971, %vm5039
        %v5108 = vsel %vm5040, %v4079, 0.0
        %v5109 = vsel %vm5041, %v4081, 0.0
        %v5110 = vsel %vm5042, %v4168, 0.0
        %v5111 = vsel %vm5043, %v4170, 0.0
        %v5112 = vsel %vm5044, %v4257, 0.0
        %v5113 = vsel %vm5045, %v4259, 0.0
        %v5114 = vsel %vm5046, %v4346, 0.0
        %v5115 = vsel %vm5047, %v4348, 0.0
        %v5116 = vsel %vm5048, %v4435, 0.0
        %v5117 = vsel %vm5049, %v4437, 0.0
        %v5118 = vsel %vm5050, %v4524, 0.0
        %v5119 = vsel %vm5051, %v4526, 0.0
        %v5120 = vsel %vm5052, %v4613, 0.0
        %v5121 = vsel %vm5053, %v4615, 0.0
        %v5122 = vsel %vm5054, %v4702, 0.0
        %v5123 = vsel %vm5055, %v4704, 0.0
        %v5124 = vsel %vm5056, %v4791, 0.0
        %v5125 = vsel %vm5057, %v4085, 0.0
        %v5126 = vsel %vm5058, %v4087, 0.0
        %v5127 = vsel %vm5059, %v4174, 0.0
        %v5128 = vsel %vm5060, %v4176, 0.0
        %v5129 = vsel %vm5061, %v4263, 0.0
        %v5130 = vsel %vm5062, %v4265, 0.0
        %v5131 = vsel %vm5063, %v4352, 0.0
        %v5132 = vsel %vm5064, %v4354, 0.0
        %v5133 = vsel %vm5065, %v4441, 0.0
        %v5134 = vsel %vm5066, %v4443, 0.0
        %v5135 = vsel %vm5067, %v4530, 0.0
        %v5136 = vsel %vm5068, %v4532, 0.0
        %v5137 = vsel %vm5069, %v4619, 0.0
        %v5138 = vsel %vm5070, %v4621, 0.0
        %v5139 = vsel %vm5071, %v4708, 0.0
        %v5140 = vsel %vm5072, %v4710, 0.0
        %v5141 = vsel %vm5073, %v4796, 0.0
        %v5142 = vsel %vm5074, %v4091, 0.0
        %v5143 = vsel %vm5075, %v4093, 0.0
        %v5144 = vsel %vm5076, %v4180, 0.0
        %v5145 = vsel %vm5077, %v4182, 0.0
        %v5146 = vsel %vm5078, %v4269, 0.0
        %v5147 = vsel %vm5079, %v4271, 0.0
        %v5148 = vsel %vm5080, %v4358, 0.0
        %v5149 = vsel %vm5081, %v4360, 0.0
        %v5150 = vsel %vm5082, %v4447, 0.0
        %v5151 = vsel %vm5083, %v4449, 0.0
        %v5152 = vsel %vm5084, %v4536, 0.0
        %v5153 = vsel %vm5085, %v4538, 0.0
        %v5154 = vsel %vm5086, %v4625, 0.0
        %v5155 = vsel %vm5087, %v4627, 0.0
        %v5156 = vsel %vm5088, %v4714, 0.0
        %v5157 = vsel %vm5089, %v4716, 0.0
        %v5158 = vsel %vm5090, %v4801, 0.0
        %v5159 = vsel %vm5091, %v4097, 0.0
        %v5160 = vsel %vm5092, %v4099, 0.0
        %v5161 = vsel %vm5093, %v4186, 0.0
        %v5162 = vsel %vm5094, %v4188, 0.0
        %v5163 = vsel %vm5095, %v4275, 0.0
        %v5164 = vsel %vm5096, %v4277, 0.0
        %v5165 = vsel %vm5097, %v4364, 0.0
        %v5166 = vsel %vm5098, %v4366, 0.0
        %v5167 = vsel %vm5099, %v4453, 0.0
        %v5168 = vsel %vm5100, %v4455, 0.0
        %v5169 = vsel %vm5101, %v4542, 0.0
        %v5170 = vsel %vm5102, %v4544, 0.0
        %v5171 = vsel %vm5103, %v4631, 0.0
        %v5172 = vsel %vm5104, %v4633, 0.0
        %v5173 = vsel %vm5105, %v4720, 0.0
        %v5174 = vsel %vm5106, %v4722, 0.0
        %v5175 = vsel %vm5107, %v4806, 0.0
        %v5176 = vadd.f32 %v5108, %v5125
        %v5177 = vadd.f32 %v5176, %v5142
        %v5178 = vsel %vm884, %v5159, 0.0
        %v5179 = vadd.f32 %v5177, %v5178
        %v5180 = vrot.slane %v5179, 4
        %v5181 = vadd.f32 %v5179, %v5180
        %v5182 = vrot.slane %v5181, 2
        %v5183 = vadd.f32 %v5181, %v5182
        %v5184 = vrot.slane %v5183, 1
        %v5185 = vadd.f32 %v5183, %v5184
        %v5186 = vadd.f32 %v5109, %v5126
        %v5187 = vadd.f32 %v5186, %v5143
        %v5188 = vsel %vm884, %v5160, 0.0
        %v5189 = vadd.f32 %v5187, %v5188
        %v5190 = vrot.slane %v5189, 4
        %v5191 = vadd.f32 %v5189, %v5190
        %v5192 = vrot.slane %v5191, 2
        %v5193 = vadd.f32 %v5191, %v5192
        %v5194 = vrot.slane %v5193, 1
        %v5195 = vadd.f32 %v5193, %v5194
        %v5196 = vadd.f32 %v5110, %v5127
        %v5197 = vadd.f32 %v5196, %v5144
        %v5198 = vsel %vm884, %v5161, 0.0
        %v5199 = vadd.f32 %v5197, %v5198
        %v5200 = vrot.slane %v5199, 4
        %v5201 = vadd.f32 %v5199, %v5200
        %v5202 = vrot.slane %v5201, 2
        %v5203 = vadd.f32 %v5201, %v5202
        %v5204 = vrot.slane %v5203, 1
        %v5205 = vadd.f32 %v5203, %v5204
        %v5206 = vadd.f32 %v5111, %v5128
        %v5207 = vadd.f32 %v5206, %v5145
        %v5208 = vsel %vm884, %v5162, 0.0
        %v5209 = vadd.f32 %v5207, %v5208
        %v5210 = vrot.slane %v5209, 4
        %v5211 = vadd.f32 %v5209, %v5210
        %v5212 = vrot.slane %v5211, 2
        %v5213 = vadd.f32 %v5211, %v5212
        %v5214 = vrot.slane %v5213, 1
        %v5215 = vadd.f32 %v5213, %v5214
        %v5216 = vadd.f32 %v5112, %v5129
        %v5217 = vadd.f32 %v5216, %v5146
        %v5218 = vsel %vm884, %v5163, 0.0
        %v5219 = vadd.f32 %v5217, %v5218
        %v5220 = vrot.slane %v5219, 4
        %v5221 = vadd.f32 %v5219, %v5220
        %v5222 = vrot.slane %v5221, 2
        %v5223 = vadd.f32 %v5221, %v5222
        %v5224 = vrot.slane %v5223, 1
        %v5225 = vadd.f32 %v5223, %v5224
        %v5226 = vadd.f32 %v5113, %v5130
        %v5227 = vadd.f32 %v5226, %v5147
        %v5228 = vsel %vm884, %v5164, 0.0
        %v5229 = vadd.f32 %v5227, %v5228
        %v5230 = vrot.slane %v5229, 4
        %v5231 = vadd.f32 %v5229, %v5230
        %v5232 = vrot.slane %v5231, 2
        %v5233 = vadd.f32 %v5231, %v5232
        %v5234 = vrot.slane %v5233, 1
        %v5235 = vadd.f32 %v5233, %v5234
        %v5236 = vadd.f32 %v5114, %v5131
        %v5237 = vadd.f32 %v5236, %v5148
        %v5238 = vsel %vm884, %v5165, 0.0
        %v5239 = vadd.f32 %v5237, %v5238
        %v5240 = vrot.slane %v5239, 4
        %v5241 = vadd.f32 %v5239, %v5240
        %v5242 = vrot.slane %v5241, 2
        %v5243 = vadd.f32 %v5241, %v5242
        %v5244 = vrot.slane %v5243, 1
        %v5245 = vadd.f32 %v5243, %v5244
        %v5246 = vadd.f32 %v5115, %v5132
        %v5247 = vadd.f32 %v5246, %v5149
        %v5248 = vsel %vm884, %v5166, 0.0
        %v5249 = vadd.f32 %v5247, %v5248
        %v5250 = vrot.slane %v5249, 4
        %v5251 = vadd.f32 %v5249, %v5250
        %v5252 = vrot.slane %v5251, 2
        %v5253 = vadd.f32 %v5251, %v5252
        %v5254 = vrot.slane %v5253, 1
        %v5255 = vadd.f32 %v5253, %v5254
        %v5256 = vadd.f32 %v5116, %v5133
        %v5257 = vadd.f32 %v5256, %v5150
        %v5258 = vsel %vm884, %v5167, 0.0
        %v5259 = vadd.f32 %v5257, %v5258
        %v5260 = vrot.slane %v5259, 4
        %v5261 = vadd.f32 %v5259, %v5260
        %v5262 = vrot.slane %v5261, 2
        %v5263 = vadd.f32 %v5261, %v5262
        %v5264 = vrot.slane %v5263, 1
        %v5265 = vadd.f32 %v5263, %v5264
        %v5266 = vadd.f32 %v5117, %v5134
        %v5267 = vadd.f32 %v5266, %v5151
        %v5268 = vsel %vm884, %v5168, 0.0
        %v5269 = vadd.f32 %v5267, %v5268
        %v5270 = vrot.slane %v5269, 4
        %v5271 = vadd.f32 %v5269, %v5270
        %v5272 = vrot.slane %v5271, 2
        %v5273 = vadd.f32 %v5271, %v5272
        %v5274 = vrot.slane %v5273, 1
        %v5275 = vadd.f32 %v5273, %v5274
        %v5276 = vadd.f32 %v5118, %v5135
        %v5277 = vadd.f32 %v5276, %v5152
        %v5278 = vsel %vm884, %v5169, 0.0
        %v5279 = vadd.f32 %v5277, %v5278
        %v5280 = vrot.slane %v5279, 4
        %v5281 = vadd.f32 %v5279, %v5280
        %v5282 = vrot.slane %v5281, 2
        %v5283 = vadd.f32 %v5281, %v5282
        %v5284 = vrot.slane %v5283, 1
        %v5285 = vadd.f32 %v5283, %v5284
        %v5286 = vadd.f32 %v5119, %v5136
        %v5287 = vadd.f32 %v5286, %v5153
        %v5288 = vsel %vm884, %v5170, 0.0
        %v5289 = vadd.f32 %v5287, %v5288
        %v5290 = vrot.slane %v5289, 4
        %v5291 = vadd.f32 %v5289, %v5290
        %v5292 = vrot.slane %v5291, 2
        %v5293 = vadd.f32 %v5291, %v5292
        %v5294 = vrot.slane %v5293, 1
        %v5295 = vadd.f32 %v5293, %v5294
        %v5296 = vadd.f32 %v5120, %v5137
        %v5297 = vadd.f32 %v5296, %v5154
        %v5298 = vsel %vm884, %v5171, 0.0
        %v5299 = vadd.f32 %v5297, %v5298
        %v5300 = vrot.slane %v5299, 4
        %v5301 = vadd.f32 %v5299, %v5300
        %v5302 = vrot.slane %v5301, 2
        %v5303 = vadd.f32 %v5301, %v5302
        %v5304 = vrot.slane %v5303, 1
        %v5305 = vadd.f32 %v5303, %v5304
        %v5306 = vadd.f32 %v5121, %v5138
        %v5307 = vadd.f32 %v5306, %v5155
        %v5308 = vsel %vm884, %v5172, 0.0
        %v5309 = vadd.f32 %v5307, %v5308
        %v5310 = vrot.slane %v5309, 4
        %v5311 = vadd.f32 %v5309, %v5310
        %v5312 = vrot.slane %v5311, 2
        %v5313 = vadd.f32 %v5311, %v5312
        %v5314 = vrot.slane %v5313, 1
        %v5315 = vadd.f32 %v5313, %v5314
        %v5316 = vadd.f32 %v5122, %v5139
        %v5317 = vadd.f32 %v5316, %v5156
        %v5318 = vsel %vm884, %v5173, 0.0
        %v5319 = vadd.f32 %v5317, %v5318
        %v5320 = vrot.slane %v5319, 4
        %v5321 = vadd.f32 %v5319, %v5320
        %v5322 = vrot.slane %v5321, 2
        %v5323 = vadd.f32 %v5321, %v5322
        %v5324 = vrot.slane %v5323, 1
        %v5325 = vadd.f32 %v5323, %v5324
        %v5326 = vadd.f32 %v5123, %v5140
        %v5327 = vadd.f32 %v5326, %v5157
        %v5328 = vsel %vm884, %v5174, 0.0
        %v5329 = vadd.f32 %v5327, %v5328
        %v5330 = vrot.slane %v5329, 4
        %v5331 = vadd.f32 %v5329, %v5330
        %v5332 = vrot.slane %v5331, 2
        %v5333 = vadd.f32 %v5331, %v5332
        %v5334 = vrot.slane %v5333, 1
        %v5335 = vadd.f32 %v5333, %v5334
        %vm5336 = vcmask 916480
        %v5337 = vsel %vm5336, %v5124, 0.0
        %v5338 = vsel %vm5336, %v5141, 0.0
        %v5339 = vadd.f32 %v5337, %v5338
        %v5340 = vsel %vm5336, %v5158, 0.0
        %v5341 = vadd.f32 %v5339, %v5340
        %vm5342 = vcmask 914432
        %v5343 = vsel %vm5342, %v5175, 0.0
        %v5344 = vadd.f32 %v5341, %v5343
        %v5345 = vrot.slane %v5344, 4
        %v5346 = vadd.f32 %v5344, %v5345
        %v5347 = vrot.slane %v5346, 2
        %v5348 = vadd.f32 %v5346, %v5347
        %v5349 = vrot.slane %v5348, 1
        %v5350 = vadd.f32 %v5348, %v5349
        %v5351 = vld [vmem:[%s23] sm:$0xff]
        %v5352 = vld [vmem:[%s23 + $0x8] sm:$0xff]
        %v5353 = vld [vmem:[%s23 + $0x10] sm:$0xff]
        %v5354 = vld [vmem:[%s23 + $0x18] sm:$0xff]
        %v5355 = vld [vmem:[%s23 + $0x20] sm:$0xff]
        %v5356 = vld [vmem:[%s23 + $0x28] sm:$0xff]
        %v5357 = vld [vmem:[%s23 + $0x30] sm:$0xff]
        %v5358 = vld [vmem:[%s23 + $0x38] sm:$0xff]
        %v5359 = vld [vmem:[%s23 + $0x40] sm:$0xff]
        %v5360 = vld [vmem:[%s23 + $0x48] sm:$0xff]
        %v5361 = vld [vmem:[%s23 + $0x50] sm:$0xff]
        %v5362 = vld [vmem:[%s23 + $0x58] sm:$0xff]
        %v5363 = vld [vmem:[%s23 + $0x60] sm:$0xff]
        %v5364 = vld [vmem:[%s23 + $0x68] sm:$0xff]
        %v5365 = vld [vmem:[%s23 + $0x70] sm:$0xff]
        %v5366 = vld [vmem:[%s23 + $0x78] sm:$0xff]
        %v5367 = vld [vmem:[%s23 + $0x80] sm:$0xff]
        %v5368 = vld [vmem:[%s23 + $0x88] sm:$0xff]
        %v5369 = vld [vmem:[%s23 + $0x90] sm:$0xff]
        %v5370 = vld [vmem:[%s23 + $0x98] sm:$0xff]
        %v5371 = vld [vmem:[%s23 + $0xa0] sm:$0xff]
        %v5372 = vld [vmem:[%s23 + $0xa8] sm:$0xff]
        %v5373 = vld [vmem:[%s23 + $0xb0] sm:$0xff]
        %v5374 = vld [vmem:[%s23 + $0xb8] sm:$0xff]
        %v5375 = vld [vmem:[%s23 + $0xc0] sm:$0xff]
        %v5376 = vld [vmem:[%s23 + $0xc8] sm:$0xff]
        %v5377 = vld [vmem:[%s23 + $0xd0] sm:$0xff]
        %v5378 = vld [vmem:[%s23 + $0xd8] sm:$0xff]
        %v5379 = vld [vmem:[%s23 + $0xe0] sm:$0xff]
        %v5380 = vld [vmem:[%s23 + $0xe8] sm:$0xff]
        %v5381 = vld [vmem:[%s23 + $0xf0] sm:$0xff]
        %v5382 = vld [vmem:[%s23 + $0xf8] sm:$0xff]
        %v5383 = vld [vmem:[%s23 + $0x100] sm:$0xff]
        %v5384 = vld [vmem:[%s23 + $0x108] sm:$0xff]
        %v5385 = vld [vmem:[%s23 + $0x110] sm:$0xff]
        %v5386 = vld [vmem:[%s23 + $0x118] sm:$0xff]
        %v5387 = vld [vmem:[%s23 + $0x120] sm:$0xff]
        %v5388 = vld [vmem:[%s23 + $0x128] sm:$0xff]
        %v5389 = vld [vmem:[%s23 + $0x130] sm:$0xff]
        %v5390 = vld [vmem:[%s23 + $0x138] sm:$0xff]
        %v5391 = vld [vmem:[%s23 + $0x140] sm:$0xff]
        %v5392 = vld [vmem:[%s23 + $0x148] sm:$0xff]
        %v5393 = vld [vmem:[%s23 + $0x150] sm:$0xff]
        %v5394 = vld [vmem:[%s23 + $0x158] sm:$0xff]
        %v5395 = vld [vmem:[%s23 + $0x160] sm:$0xff]
        %v5396 = vld [vmem:[%s23 + $0x168] sm:$0xff]
        %v5397 = vld [vmem:[%s23 + $0x170] sm:$0xff]
        %v5398 = vld [vmem:[%s23 + $0x178] sm:$0xff]
        %v5399 = vld [vmem:[%s23 + $0x180] sm:$0xff]
        %v5400 = vld [vmem:[%s23 + $0x188] sm:$0xff]
        %v5401 = vld [vmem:[%s23 + $0x190] sm:$0xff]
        %v5402 = vld [vmem:[%s23 + $0x198] sm:$0xff]
        %v5403 = vld [vmem:[%s23 + $0x1a0] sm:$0xff]
        %v5404 = vld [vmem:[%s23 + $0x1a8] sm:$0xff]
        %v5405 = vld [vmem:[%s23 + $0x1b0] sm:$0xff]
        %v5406 = vld [vmem:[%s23 + $0x1b8] sm:$0xff]
        %v5407 = vld [vmem:[%s23 + $0x1c0] sm:$0xff]
        %v5408 = vld [vmem:[%s23 + $0x1c8] sm:$0xff]
        %v5409 = vld [vmem:[%s23 + $0x1d0] sm:$0xff]
        %v5410 = vld [vmem:[%s23 + $0x1d8] sm:$0xff]
        %v5411 = vld [vmem:[%s23 + $0x1e0] sm:$0xff]
        %v5412 = vld [vmem:[%s23 + $0x1e8] sm:$0xff]
        %v5413 = vld [vmem:[%s23 + $0x1f0] sm:$0xff]
        %v5414 = vld [vmem:[%s23 + $0x1f8] sm:$0xff]
        %v5415 = vld [vmem:[%s23 + $0x200] sm:$0xff]
        %v5416 = vld [vmem:[%s23 + $0x208] sm:$0xff]
        %v5417 = vld [vmem:[%s23 + $0x210] sm:$0xff]
        %v5418 = vld [vmem:[%s23 + $0x218] sm:$0xff]
        %v5419 = vld [vmem:[%s23 + $0x220] sm:$0xff]
        %v5420 = vld [vmem:[%s23 + $0x228] sm:$0xff]
        %v5421 = vld [vmem:[%s23 + $0x230] sm:$0xff]
        %v5422 = vld [vmem:[%s23 + $0x238] sm:$0xff]
        %v5423 = vld [vmem:[%s23 + $0x240] sm:$0xff]
        %v5424 = vld [vmem:[%s23 + $0x248] sm:$0xff]
        %v5425 = vld [vmem:[%s23 + $0x250] sm:$0xff]
        %v5426 = vld [vmem:[%s23 + $0x258] sm:$0xff]
        %v5427 = vld [vmem:[%s23 + $0x260] sm:$0xff]
        %v5428 = vld [vmem:[%s23 + $0x268] sm:$0xff]
        %v5429 = vld [vmem:[%s23 + $0x270] sm:$0xff]
        %v5430 = vld [vmem:[%s23 + $0x278] sm:$0xff]
        %v5431 = vld [vmem:[%s23 + $0x280] sm:$0xff]
        %v5432 = vld [vmem:[%s23 + $0x288] sm:$0xff]
        %v5433 = vld [vmem:[%s23 + $0x290] sm:$0xff]
        %v5434 = vld [vmem:[%s23 + $0x298] sm:$0xff]
        %v5435 = vld [vmem:[%s23 + $0x2a0] sm:$0xff]
        %v5436 = vld [vmem:[%s23 + $0x2a8] sm:$0xff]
        %v5437 = vld [vmem:[%s23 + $0x2b0] sm:$0xff]
        %v5438 = vld [vmem:[%s23 + $0x2b8] sm:$0xff]
        %v5439 = vld [vmem:[%s23 + $0x2c0] sm:$0xff]
        %v5440 = vld [vmem:[%s23 + $0x2c8] sm:$0xff]
        %v5441 = vld [vmem:[%s23 + $0x2d0] sm:$0xff]
        %v5442 = vld [vmem:[%s23 + $0x2d8] sm:$0xff]
        %v5443 = vld [vmem:[%s23 + $0x2e0] sm:$0xff]
        %v5444 = vld [vmem:[%s23 + $0x2e8] sm:$0xff]
        %v5445 = vld [vmem:[%s23 + $0x2f0] sm:$0xff]
        %v5446 = vld [vmem:[%s23 + $0x2f8] sm:$0xff]
        %v5447 = vld [vmem:[%s23 + $0x300] sm:$0xff]
        %v5448 = vld [vmem:[%s23 + $0x308] sm:$0xff]
        %v5449 = vld [vmem:[%s23 + $0x310] sm:$0xff]
        %v5450 = vld [vmem:[%s23 + $0x318] sm:$0xff]
        %v5451 = vld [vmem:[%s23 + $0x320] sm:$0xff]
        %v5452 = vld [vmem:[%s23 + $0x328] sm:$0xff]
        %v5453 = vld [vmem:[%s23 + $0x330] sm:$0xff]
        %v5454 = vld [vmem:[%s23 + $0x338] sm:$0xff]
        %v5455 = vld [vmem:[%s23 + $0x340] sm:$0xff]
        %v5456 = vld [vmem:[%s23 + $0x348] sm:$0xff]
        %v5457 = vld [vmem:[%s23 + $0x350] sm:$0xff]
        %v5458 = vld [vmem:[%s23 + $0x358] sm:$0xff]
        %v5459 = vld [vmem:[%s23 + $0x360] sm:$0xff]
        %v5460 = vld [vmem:[%s23 + $0x368] sm:$0xff]
        %v5461 = vld [vmem:[%s23 + $0x370] sm:$0xff]
        %v5462 = vld [vmem:[%s23 + $0x378] sm:$0xff]
        %v5463 = vld [vmem:[%s23 + $0x380] sm:$0xff]
        %v5464 = vld [vmem:[%s23 + $0x388] sm:$0xff]
        %v5465 = vld [vmem:[%s23 + $0x390] sm:$0xff]
        %v5466 = vld [vmem:[%s23 + $0x398] sm:$0xff]
        %v5467 = vld [vmem:[%s23 + $0x3a0] sm:$0xff]
        %v5468 = vld [vmem:[%s23 + $0x3a8] sm:$0xff]
        %v5469 = vld [vmem:[%s23 + $0x3b0] sm:$0xff]
        %v5470 = vld [vmem:[%s23 + $0x3b8] sm:$0xff]
        %v5471 = vld [vmem:[%s23 + $0x3c0] sm:$0xff]
        %v5472 = vld [vmem:[%s23 + $0x3c8] sm:$0xff]
        %v5473 = vld [vmem:[%s23 + $0x3d0] sm:$0xff]
        %v5474 = vld [vmem:[%s23 + $0x3d8] sm:$0xff]
        %v5475 = vld [vmem:[%s23 + $0x3e0] sm:$0xff]
        %v5476 = vld [vmem:[%s23 + $0x3e8] sm:$0xff]
        %v5477 = vld [vmem:[%s23 + $0x3f0] sm:$0xff]
        %v5478 = vld [vmem:[%s23 + $0x3f8] sm:$0xff]
        %v5479 = vld [vmem:[%s23 + $0x400] sm:$0xff]
        %v5480 = vld [vmem:[%s23 + $0x408] sm:$0xff]
        %v5481 = vld [vmem:[%s23 + $0x410] sm:$0xff]
        %v5482 = vld [vmem:[%s23 + $0x418] sm:$0xff]
        %v5483 = vld [vmem:[%s23 + $0x420] sm:$0xff]
        %v5484 = vld [vmem:[%s23 + $0x428] sm:$0xff]
        %v5485 = vld [vmem:[%s23 + $0x430] sm:$0xff]
        %v5486 = vld [vmem:[%s23 + $0x438] sm:$0xff]
        %v5487 = vld [vmem:[%s23 + $0x440] sm:$0xff]
        %v5488 = vld [vmem:[%s23 + $0x448] sm:$0xff]
        %v5489 = vld [vmem:[%s23 + $0x450] sm:$0xff]
        %v5490 = vld [vmem:[%s23 + $0x458] sm:$0xff]
        %v5491 = vld [vmem:[%s23 + $0x460] sm:$0xff]
        %v5492 = vld [vmem:[%s23 + $0x468] sm:$0xff]
        %v5493 = vld [vmem:[%s23 + $0x470] sm:$0xff]
        %v5494 = vld [vmem:[%s23 + $0x478] sm:$0xff]
        %v5495 = vld [vmem:[%s23 + $0x480] sm:$0xff]
        %v5496 = vld [vmem:[%s23 + $0x488] sm:$0xff]
        %v5497 = vld [vmem:[%s23 + $0x490] sm:$0xff]
        %v5498 = vld [vmem:[%s23 + $0x498] sm:$0xff]
        %v5499 = vld [vmem:[%s23 + $0x4a0] sm:$0xff]
        %v5500 = vld [vmem:[%s23 + $0x4a8] sm:$0xff]
        %v5501 = vld [vmem:[%s23 + $0x4b0] sm:$0xff]
        %v5502 = vld [vmem:[%s23 + $0x4b8] sm:$0xff]
        %v5503 = vld [vmem:[%s23 + $0x4c0] sm:$0xff]
        %v5504 = vld [vmem:[%s23 + $0x4c8] sm:$0xff]
        %v5505 = vld [vmem:[%s23 + $0x4d0] sm:$0xff]
        %v5506 = vld [vmem:[%s23 + $0x4d8] sm:$0xff]
        %v5507 = vld [vmem:[%s23 + $0x4e0] sm:$0xff]
        %v5508 = vld [vmem:[%s23 + $0x4e8] sm:$0xff]
        %v5509 = vld [vmem:[%s23 + $0x4f0] sm:$0xff]
        %v5510 = vld [vmem:[%s23 + $0x4f8] sm:$0xff]
        %v5511 = vld [vmem:[%s23 + $0x500] sm:$0xff]
        %v5512 = vld [vmem:[%s23 + $0x508] sm:$0xff]
        %v5513 = vld [vmem:[%s23 + $0x510] sm:$0xff]
        %v5514 = vld [vmem:[%s23 + $0x518] sm:$0xff]
        %v5515 = vld [vmem:[%s23 + $0x520] sm:$0xff]
        %v5516 = vld [vmem:[%s23 + $0x528] sm:$0xff]
        %v5517 = vld [vmem:[%s23 + $0x530] sm:$0xff]
        %v5518 = vld [vmem:[%s23 + $0x538] sm:$0xff]
        %v5519 = vld [vmem:[%s23 + $0x540] sm:$0xff]
        %v5520 = vld [vmem:[%s23 + $0x548] sm:$0xff]
        %v5521 = vld [vmem:[%s23 + $0x550] sm:$0xff]
        %v5522 = vld [vmem:[%s23 + $0x558] sm:$0xff]
        %v5523 = vld [vmem:[%s23 + $0x560] sm:$0xff]
        %v5524 = vld [vmem:[%s23 + $0x568] sm:$0xff]
        %v5525 = vld [vmem:[%s23 + $0x570] sm:$0xff]
        %v5526 = vld [vmem:[%s23 + $0x578] sm:$0xff]
        %v5527 = vld [vmem:[%s23 + $0x580] sm:$0xff]
        %v5528 = vld [vmem:[%s23 + $0x588] sm:$0xff]
        %v5529 = vld [vmem:[%s23 + $0x590] sm:$0xff]
        %v5530 = vld [vmem:[%s23 + $0x598] sm:$0xff]
        %v5531 = vld [vmem:[%s23 + $0x5a0] sm:$0xff]
        %v5532 = vld [vmem:[%s23 + $0x5a8] sm:$0xff]
        %v5533 = vld [vmem:[%s23 + $0x5b0] sm:$0xff]
        %v5534 = vld [vmem:[%s23 + $0x5b8] sm:$0xff]
        %v5535 = vld [vmem:[%s23 + $0x5c0] sm:$0xff]
        %v5536 = vld [vmem:[%s23 + $0x5c8] sm:$0xff]
        %v5537 = vld [vmem:[%s23 + $0x5d0] sm:$0xff]
        %v5538 = vld [vmem:[%s23 + $0x5d8] sm:$0xff]
        %v5539 = vld [vmem:[%s23 + $0x5e0] sm:$0xff]
        %v5540 = vld [vmem:[%s23 + $0x5e8] sm:$0xff]
        %v5541 = vld [vmem:[%s23 + $0x5f0] sm:$0xff]
        %v5542 = vld [vmem:[%s23 + $0x5f8] sm:$0xff]
        %v5543 = vld [vmem:[%s23 + $0x600] sm:$0xff]
        %v5544 = vld [vmem:[%s23 + $0x608] sm:$0xff]
        %v5545 = vld [vmem:[%s23 + $0x610] sm:$0xff]
        %v5546 = vld [vmem:[%s23 + $0x618] sm:$0xff]
        %v5547 = vld [vmem:[%s23 + $0x620] sm:$0xff]
        %v5548 = vld [vmem:[%s23 + $0x628] sm:$0xff]
        %v5549 = vld [vmem:[%s23 + $0x630] sm:$0xff]
        %v5550 = vld [vmem:[%s23 + $0x638] sm:$0xff]
        %v5551 = vld [vmem:[%s23 + $0x640] sm:$0xff]
        %v5552 = vld [vmem:[%s23 + $0x648] sm:$0xff]
        %v5553 = vld [vmem:[%s23 + $0x650] sm:$0xff]
        %v5554 = vld [vmem:[%s23 + $0x658] sm:$0xff]
        %v5555 = vld [vmem:[%s23 + $0x660] sm:$0xff]
        %v5556 = vld [vmem:[%s23 + $0x668] sm:$0xff]
        %v5557 = vld [vmem:[%s23 + $0x670] sm:$0xff]
        %v5558 = vld [vmem:[%s23 + $0x678] sm:$0xff]
        %v5559 = vld [vmem:[%s23 + $0x680] sm:$0xff]
        %v5560 = vld [vmem:[%s23 + $0x688] sm:$0xff]
        %v5561 = vld [vmem:[%s23 + $0x690] sm:$0xff]
        %v5562 = vld [vmem:[%s23 + $0x698] sm:$0xff]
        %v5563 = vld [vmem:[%s23 + $0x6a0] sm:$0xff]
        %v5564 = vld [vmem:[%s23 + $0x6a8] sm:$0xff]
        %v5565 = vld [vmem:[%s23 + $0x6b0] sm:$0xff]
        %v5566 = vld [vmem:[%s23 + $0x6b8] sm:$0xff]
        %v5567 = vld [vmem:[%s23 + $0x6c0] sm:$0xff]
        %v5568 = vld [vmem:[%s23 + $0x6c8] sm:$0xff]
        %v5569 = vld [vmem:[%s23 + $0x6d0] sm:$0xff]
        %v5570 = vld [vmem:[%s23 + $0x6d8] sm:$0xff]
        %v5571 = vld [vmem:[%s23 + $0x6e0] sm:$0xff]
        %v5572 = vld [vmem:[%s23 + $0x6e8] sm:$0xff]
        %v5573 = vld [vmem:[%s23 + $0x6f0] sm:$0xff]
        %v5574 = vld [vmem:[%s23 + $0x6f8] sm:$0xff]
        %v5575 = vld [vmem:[%s23 + $0x700] sm:$0xff]
        %v5576 = vld [vmem:[%s23 + $0x708] sm:$0xff]
        %v5577 = vld [vmem:[%s23 + $0x710] sm:$0xff]
        %v5578 = vld [vmem:[%s23 + $0x718] sm:$0xff]
        %v5579 = vld [vmem:[%s23 + $0x720] sm:$0xff]
        %v5580 = vld [vmem:[%s23 + $0x728] sm:$0xff]
        %v5581 = vld [vmem:[%s23 + $0x730] sm:$0xff]
        %v5582 = vld [vmem:[%s23 + $0x738] sm:$0xff]
        %v5583 = vld [vmem:[%s23 + $0x740] sm:$0xff]
        %v5584 = vld [vmem:[%s23 + $0x748] sm:$0xff]
        %v5585 = vld [vmem:[%s23 + $0x750] sm:$0xff]
        %v5586 = vld [vmem:[%s23 + $0x758] sm:$0xff]
        %v5587 = vld [vmem:[%s23 + $0x760] sm:$0xff]
        %v5588 = vld [vmem:[%s23 + $0x768] sm:$0xff]
        %v5589 = vld [vmem:[%s23 + $0x770] sm:$0xff]
        %v5590 = vld [vmem:[%s23 + $0x778] sm:$0xff]
        %v5591 = vld [vmem:[%s23 + $0x780] sm:$0xff]
        %v5592 = vld [vmem:[%s23 + $0x788] sm:$0xff]
        %v5593 = vld [vmem:[%s23 + $0x790] sm:$0xff]
        %v5594 = vld [vmem:[%s23 + $0x798] sm:$0xff]
        %v5595 = vld [vmem:[%s23 + $0x7a0] sm:$0xff]
        %v5596 = vld [vmem:[%s23 + $0x7a8] sm:$0xff]
        %v5597 = vld [vmem:[%s23 + $0x7b0] sm:$0xff]
        %v5598 = vld [vmem:[%s23 + $0x7b8] sm:$0xff]
        %v5599 = vld [vmem:[%s23 + $0x7c0] sm:$0xff]
        %v5600 = vld [vmem:[%s23 + $0x7c8] sm:$0xff]
        %v5601 = vld [vmem:[%s23 + $0x7d0] sm:$0xff]
        %v5602 = vld [vmem:[%s23 + $0x7d8] sm:$0xff]
        %v5603 = vld [vmem:[%s23 + $0x7e0] sm:$0xff]
        %v5604 = vld [vmem:[%s23 + $0x7e8] sm:$0xff]
        %v5605 = vld [vmem:[%s23 + $0x7f0] sm:$0xff]
        %v5606 = vld [vmem:[%s23 + $0x7f8] sm:$0xff]
        %v5607 = vld [vmem:[%s23 + $0x800] sm:$0xff]
        %v5608 = vld [vmem:[%s23 + $0x808] sm:$0xff]
        %v5609 = vld [vmem:[%s23 + $0x810] sm:$0xff]
        %v5610 = vld [vmem:[%s23 + $0x818] sm:$0xff]
        %v5611 = vld [vmem:[%s23 + $0x820] sm:$0xff]
        %v5612 = vld [vmem:[%s23 + $0x828] sm:$0xff]
        %v5613 = vld [vmem:[%s23 + $0x830] sm:$0xff]
        %v5614 = vld [vmem:[%s23 + $0x838] sm:$0xff]
        %v5615 = vld [vmem:[%s23 + $0x840] sm:$0xff]
        %v5616 = vld [vmem:[%s23 + $0x848] sm:$0xff]
        %v5617 = vld [vmem:[%s23 + $0x850] sm:$0xff]
        %v5618 = vld [vmem:[%s23 + $0x858] sm:$0xff]
        %v5619 = vld [vmem:[%s23 + $0x860] sm:$0xff]
        %v5620 = vld [vmem:[%s23 + $0x868] sm:$0xff]
        %v5621 = vld [vmem:[%s24] sm:$0x1]
        %v5623 = vsel %vm5336, %v5350, 0
        %5625 = vmatprep.subr.mxu0 0.0
        %5626 = vmatpush1.msra.mxu0 %v5351
        %5627 = vmatprep.subr.mxu0 0.0
        %5628 = vmatpush1.msra.mxu0 %v5352
        %5629 = vmatprep.subr.mxu0 0.0
        %5630 = vmatpush1.msra.mxu0 %v5353
        %5631 = vmatprep.subr.mxu0 0.0
        %5632 = vmatpush1.msra.mxu0 %v5354
        %5633 = vmatprep.subr.mxu0 0.0
        %5634 = vmatpush1.msra.mxu0 %v5355
        %5635 = vmatprep.subr.mxu0 0.0
        %5636 = vmatpush1.msra.mxu0 %v5356
        %5637 = vmatprep.subr.mxu0 0.0
        %5638 = vmatpush1.msra.mxu0 %v5357
        %5639 = vmatprep.subr.mxu0 0.0
        %5640 = vmatpush1.msra.mxu0 %v5358
        %5641 = vmatprep.subr.mxu0 0.0
        %5642 = vmatpush1.msra.mxu0 %v5359
        %5643 = vmatprep.subr.mxu0 0.0
        %5644 = vmatpush1.msra.mxu0 %v5360
        %5645 = vmatprep.subr.mxu0 0.0
        %5646 = vmatpush1.msra.mxu0 %v5361
        %5647 = vmatprep.subr.mxu0 0.0
        %5648 = vmatpush1.msra.mxu0 %v5362
        %5649 = vmatprep.subr.mxu0 0.0
        %5650 = vmatpush1.msra.mxu0 %v5363
        %5651 = vmatprep.subr.mxu0 0.0
        %5652 = vmatpush1.msra.mxu0 %v5364
        %5653 = vmatprep.subr.mxu0 0.0
        %5654 = vmatpush1.msra.mxu0 %v5365
        %5655 = vmatprep.subr.mxu0 0.0
        %5656 = vmatpush1.msra.mxu0 %v5366
        %5657 = vmatprep.subr.mxu0 0.0
        %5658 = vmatpush1.msra.mxu0 %v5367
        %5659 = vmatprep.subr.mxu0 0.0
        %5660 = vmatpush1.msra.mxu0 %v5368
        %5661 = vmatprep.subr.mxu0 0.0
        %5662 = vmatpush1.msra.mxu0 %v5369
        %5663 = vmatprep.subr.mxu0 0.0
        %5664 = vmatpush1.msra.mxu0 %v5370
        %5665 = vmatprep.subr.mxu0 0.0
        %5666 = vmatpush1.msra.mxu0 %v5371
        %5667 = vmatprep.subr.mxu0 0.0
        %5668 = vmatpush1.msra.mxu0 %v5372
        %5669 = vmatprep.subr.mxu0 0.0
        %5670 = vmatpush1.msra.mxu0 %v5373
        %5671 = vmatprep.subr.mxu0 0.0
        %5672 = vmatpush1.msra.mxu0 %v5374
        %5673 = vmatprep.subr.mxu0 0.0
        %5674 = vmatpush1.msra.mxu0 %v5375
        %5675 = vmatprep.subr.mxu0 0.0
        %5676 = vmatpush1.msra.mxu0 %v5376
        %5677 = vmatprep.subr.mxu0 0.0
        %5678 = vmatpush1.msra.mxu0 %v5377
        %5679 = vmatprep.subr.mxu0 0.0
        %5680 = vmatpush1.msra.mxu0 %v5378
        %5681 = vmatprep.subr.mxu0 0.0
        %5682 = vmatpush1.msra.mxu0 %v5379
        %5683 = vmatprep.subr.mxu0 0.0
        %5684 = vmatpush1.msra.mxu0 %v5380
        %5685 = vmatprep.subr.mxu0 0.0
        %5686 = vmatpush1.msra.mxu0 %v5381
        %5687 = vmatprep.subr.mxu0 0.0
        %5688 = vmatpush1.msra.mxu0 %v5382
        %5689 = vmatprep.mubr.f32.mxu0 %v5195
        %5690 = vmatmul.mubr.f32.gmra.mrb[0].mxu0 %v5185
        %v5691 = vpop.f32.mrb[0].mxu0
        %v5692 = vadd.f32 %v5621, %v5691
        %v5693 = vpop.f32.mrb[0].mxu0
        %5694 = vdwg.mxu0
        %5695 = vmatprep.subr.mxu0 0.0
        %5696 = vmatpush1.msra.mxu0 %v5383
        %5697 = vmatprep.subr.mxu0 0.0
        %5698 = vmatpush1.msra.mxu0 %v5384
        %5699 = vmatprep.subr.mxu0 0.0
        %5700 = vmatpush1.msra.mxu0 %v5385
        %5701 = vmatprep.subr.mxu0 0.0
        %5702 = vmatpush1.msra.mxu0 %v5386
        %5703 = vmatprep.subr.mxu0 0.0
        %5704 = vmatpush1.msra.mxu0 %v5387
        %5705 = vmatprep.subr.mxu0 0.0
        %5706 = vmatpush1.msra.mxu0 %v5388
        %5707 = vmatprep.subr.mxu0 0.0
        %5708 = vmatpush1.msra.mxu0 %v5389
        %5709 = vmatprep.subr.mxu0 0.0
        %5710 = vmatpush1.msra.mxu0 %v5390
        %5711 = vmatprep.subr.mxu0 0.0
        %5712 = vmatpush1.msra.mxu0 %v5391
        %5713 = vmatprep.subr.mxu0 0.0
        %5714 = vmatpush1.msra.mxu0 %v5392
        %5715 = vmatprep.subr.mxu0 0.0
        %5716 = vmatpush1.msra.mxu0 %v5393
        %5717 = vmatprep.subr.mxu0 0.0
        %5718 = vmatpush1.msra.mxu0 %v5394
        %5719 = vmatprep.subr.mxu0 0.0
        %5720 = vmatpush1.msra.mxu0 %v5395
        %5721 = vmatprep.subr.mxu0 0.0
        %5722 = vmatpush1.msra.mxu0 %v5396
        %5723 = vmatprep.subr.mxu0 0.0
        %5724 = vmatpush1.msra.mxu0 %v5397
        %5725 = vmatprep.subr.mxu0 0.0
        %5726 = vmatpush1.msra.mxu0 %v5398
        %5727 = vmatprep.subr.mxu0 0.0
        %5728 = vmatpush1.msra.mxu0 %v5399
        %5729 = vmatprep.subr.mxu0 0.0
        %5730 = vmatpush1.msra.mxu0 %v5400
        %5731 = vmatprep.subr.mxu0 0.0
        %5732 = vmatpush1.msra.mxu0 %v5401
        %5733 = vmatprep.subr.mxu0 0.0
        %5734 = vmatpush1.msra.mxu0 %v5402
        %5735 = vmatprep.subr.mxu0 0.0
        %5736 = vmatpush1.msra.mxu0 %v5403
        %5737 = vmatprep.subr.mxu0 0.0
        %5738 = vmatpush1.msra.mxu0 %v5404
        %5739 = vmatprep.subr.mxu0 0.0
        %5740 = vmatpush1.msra.mxu0 %v5405
        %5741 = vmatprep.subr.mxu0 0.0
        %5742 = vmatpush1.msra.mxu0 %v5406
        %5743 = vmatprep.subr.mxu0 0.0
        %5744 = vmatpush1.msra.mxu0 %v5407
        %5745 = vmatprep.subr.mxu0 0.0
        %5746 = vmatpush1.msra.mxu0 %v5408
        %5747 = vmatprep.subr.mxu0 0.0
        %5748 = vmatpush1.msra.mxu0 %v5409
        %5749 = vmatprep.subr.mxu0 0.0
        %5750 = vmatpush1.msra.mxu0 %v5410
        %5751 = vmatprep.subr.mxu0 0.0
        %5752 = vmatpush1.msra.mxu0 %v5411
        %5753 = vmatprep.subr.mxu0 0.0
        %5754 = vmatpush1.msra.mxu0 %v5412
        %5755 = vmatprep.subr.mxu0 0.0
        %5756 = vmatpush1.msra.mxu0 %v5413
        %5757 = vmatprep.subr.mxu0 0.0
        %5758 = vmatpush1.msra.mxu0 %v5414
        %5759 = vmatprep.mubr.f32.mxu0 %v5215
        %5760 = vmatmul.mubr.f32.gmra.mrb[0].mxu0 %v5205
        %v5761 = vpop.f32.mrb[0].mxu0
        %v5762 = vadd.f32 %v5692, %v5761
        %v5763 = vpop.f32.mrb[0].mxu0
        %5764 = vdwg.mxu0
        %5765 = vmatprep.subr.mxu0 0.0
        %5766 = vmatpush1.msra.mxu0 %v5415
        %5767 = vmatprep.subr.mxu0 0.0
        %5768 = vmatpush1.msra.mxu0 %v5416
        %5769 = vmatprep.subr.mxu0 0.0
        %5770 = vmatpush1.msra.mxu0 %v5417
        %5771 = vmatprep.subr.mxu0 0.0
        %5772 = vmatpush1.msra.mxu0 %v5418
        %5773 = vmatprep.subr.mxu0 0.0
        %5774 = vmatpush1.msra.mxu0 %v5419
        %5775 = vmatprep.subr.mxu0 0.0
        %5776 = vmatpush1.msra.mxu0 %v5420
        %5777 = vmatprep.subr.mxu0 0.0
        %5778 = vmatpush1.msra.mxu0 %v5421
        %5779 = vmatprep.subr.mxu0 0.0
        %5780 = vmatpush1.msra.mxu0 %v5422
        %5781 = vmatprep.subr.mxu0 0.0
        %5782 = vmatpush1.msra.mxu0 %v5423
        %5783 = vmatprep.subr.mxu0 0.0
        %5784 = vmatpush1.msra.mxu0 %v5424
        %5785 = vmatprep.subr.mxu0 0.0
        %5786 = vmatpush1.msra.mxu0 %v5425
        %5787 = vmatprep.subr.mxu0 0.0
        %5788 = vmatpush1.msra.mxu0 %v5426
        %5789 = vmatprep.subr.mxu0 0.0
        %5790 = vmatpush1.msra.mxu0 %v5427
        %5791 = vmatprep.subr.mxu0 0.0
        %5792 = vmatpush1.msra.mxu0 %v5428
        %5793 = vmatprep.subr.mxu0 0.0
        %5794 = vmatpush1.msra.mxu0 %v5429
        %5795 = vmatprep.subr.mxu0 0.0
        %5796 = vmatpush1.msra.mxu0 %v5430
        %5797 = vmatprep.subr.mxu0 0.0
        %5798 = vmatpush1.msra.mxu0 %v5431
        %5799 = vmatprep.subr.mxu0 0.0
        %5800 = vmatpush1.msra.mxu0 %v5432
        %5801 = vmatprep.subr.mxu0 0.0
        %5802 = vmatpush1.msra.mxu0 %v5433
        %5803 = vmatprep.subr.mxu0 0.0
        %5804 = vmatpush1.msra.mxu0 %v5434
        %5805 = vmatprep.subr.mxu0 0.0
        %5806 = vmatpush1.msra.mxu0 %v5435
        %5807 = vmatprep.subr.mxu0 0.0
        %5808 = vmatpush1.msra.mxu0 %v5436
        %5809 = vmatprep.subr.mxu0 0.0
        %5810 = vmatpush1.msra.mxu0 %v5437
        %5811 = vmatprep.subr.mxu0 0.0
        %5812 = vmatpush1.msra.mxu0 %v5438
        %5813 = vmatprep.subr.mxu0 0.0
        %5814 = vmatpush1.msra.mxu0 %v5439
        %5815 = vmatprep.subr.mxu0 0.0
        %5816 = vmatpush1.msra.mxu0 %v5440
        %5817 = vmatprep.subr.mxu0 0.0
        %5818 = vmatpush1.msra.mxu0 %v5441
        %5819 = vmatprep.subr.mxu0 0.0
        %5820 = vmatpush1.msra.mxu0 %v5442
        %5821 = vmatprep.subr.mxu0 0.0
        %5822 = vmatpush1.msra.mxu0 %v5443
        %5823 = vmatprep.subr.mxu0 0.0
        %5824 = vmatpush1.msra.mxu0 %v5444
        %5825 = vmatprep.subr.mxu0 0.0
        %5826 = vmatpush1.msra.mxu0 %v5445
        %5827 = vmatprep.subr.mxu0 0.0
        %5828 = vmatpush1.msra.mxu0 %v5446
        %5829 = vmatprep.mubr.f32.mxu0 %v5235
        %5830 = vmatmul.mubr.f32.gmra.mrb[0].mxu0 %v5225
        %v5831 = vpop.f32.mrb[0].mxu0
        %v5832 = vadd.f32 %v5762, %v5831
        %v5833 = vpop.f32.mrb[0].mxu0
        %5834 = vdwg.mxu0
        %5835 = vmatprep.subr.mxu0 0.0
        %5836 = vmatpush1.msra.mxu0 %v5447
        %5837 = vmatprep.subr.mxu0 0.0
        %5838 = vmatpush1.msra.mxu0 %v5448
        %5839 = vmatprep.subr.mxu0 0.0
        %5840 = vmatpush1.msra.mxu0 %v5449
        %5841 = vmatprep.subr.mxu0 0.0
        %5842 = vmatpush1.msra.mxu0 %v5450
        %5843 = vmatprep.subr.mxu0 0.0
        %5844 = vmatpush1.msra.mxu0 %v5451
        %5845 = vmatprep.subr.mxu0 0.0
        %5846 = vmatpush1.msra.mxu0 %v5452
        %5847 = vmatprep.subr.mxu0 0.0
        %5848 = vmatpush1.msra.mxu0 %v5453
        %5849 = vmatprep.subr.mxu0 0.0
        %5850 = vmatpush1.msra.mxu0 %v5454
        %5851 = vmatprep.subr.mxu0 0.0
        %5852 = vmatpush1.msra.mxu0 %v5455
        %5853 = vmatprep.subr.mxu0 0.0
        %5854 = vmatpush1.msra.mxu0 %v5456
        %5855 = vmatprep.subr.mxu0 0.0
        %5856 = vmatpush1.msra.mxu0 %v5457
        %5857 = vmatprep.subr.mxu0 0.0
        %5858 = vmatpush1.msra.mxu0 %v5458
        %5859 = vmatprep.subr.mxu0 0.0
        %5860 = vmatpush1.msra.mxu0 %v5459
        %5861 = vmatprep.subr.mxu0 0.0
        %5862 = vmatpush1.msra.mxu0 %v5460
        %5863 = vmatprep.subr.mxu0 0.0
        %5864 = vmatpush1.msra.mxu0 %v5461
        %5865 = vmatprep.subr.mxu0 0.0
        %5866 = vmatpush1.msra.mxu0 %v5462
        %5867 = vmatprep.subr.mxu0 0.0
        %5868 = vmatpush1.msra.mxu0 %v5463
        %5869 = vmatprep.subr.mxu0 0.0
        %5870 = vmatpush1.msra.mxu0 %v5464
        %5871 = vmatprep.subr.mxu0 0.0
        %5872 = vmatpush1.msra.mxu0 %v5465
        %5873 = vmatprep.subr.mxu0 0.0
        %5874 = vmatpush1.msra.mxu0 %v5466
        %5875 = vmatprep.subr.mxu0 0.0
        %5876 = vmatpush1.msra.mxu0 %v5467
        %5877 = vmatprep.subr.mxu0 0.0
        %5878 = vmatpush1.msra.mxu0 %v5468
        %5879 = vmatprep.subr.mxu0 0.0
        %5880 = vmatpush1.msra.mxu0 %v5469
        %5881 = vmatprep.subr.mxu0 0.0
        %5882 = vmatpush1.msra.mxu0 %v5470
        %5883 = vmatprep.subr.mxu0 0.0
        %5884 = vmatpush1.msra.mxu0 %v5471
        %5885 = vmatprep.subr.mxu0 0.0
        %5886 = vmatpush1.msra.mxu0 %v5472
        %5887 = vmatprep.subr.mxu0 0.0
        %5888 = vmatpush1.msra.mxu0 %v5473
        %5889 = vmatprep.subr.mxu0 0.0
        %5890 = vmatpush1.msra.mxu0 %v5474
        %5891 = vmatprep.subr.mxu0 0.0
        %5892 = vmatpush1.msra.mxu0 %v5475
        %5893 = vmatprep.subr.mxu0 0.0
        %5894 = vmatpush1.msra.mxu0 %v5476
        %5895 = vmatprep.subr.mxu0 0.0
        %5896 = vmatpush1.msra.mxu0 %v5477
        %5897 = vmatprep.subr.mxu0 0.0
        %5898 = vmatpush1.msra.mxu0 %v5478
        %5899 = vmatprep.mubr.f32.mxu0 %v5255
        %5900 = vmatmul.mubr.f32.gmra.mrb[0].mxu0 %v5245
        %v5901 = vpop.f32.mrb[0].mxu0
        %v5902 = vadd.f32 %v5832, %v5901
        %v5903 = vpop.f32.mrb[0].mxu0
        %5904 = vdwg.mxu0
        %5905 = vmatprep.subr.mxu0 0.0
        %5906 = vmatpush1.msra.mxu0 %v5479
        %5907 = vmatprep.subr.mxu0 0.0
        %5908 = vmatpush1.msra.mxu0 %v5480
        %5909 = vmatprep.subr.mxu0 0.0
        %5910 = vmatpush1.msra.mxu0 %v5481
        %5911 = vmatprep.subr.mxu0 0.0
        %5912 = vmatpush1.msra.mxu0 %v5482
        %5913 = vmatprep.subr.mxu0 0.0
        %5914 = vmatpush1.msra.mxu0 %v5483
        %5915 = vmatprep.subr.mxu0 0.0
        %5916 = vmatpush1.msra.mxu0 %v5484
        %5917 = vmatprep.subr.mxu0 0.0
        %5918 = vmatpush1.msra.mxu0 %v5485
        %5919 = vmatprep.subr.mxu0 0.0
        %5920 = vmatpush1.msra.mxu0 %v5486
        %5921 = vmatprep.subr.mxu0 0.0
        %5922 = vmatpush1.msra.mxu0 %v5487
        %5923 = vmatprep.subr.mxu0 0.0
        %5924 = vmatpush1.msra.mxu0 %v5488
        %5925 = vmatprep.subr.mxu0 0.0
        %5926 = vmatpush1.msra.mxu0 %v5489
        %5927 = vmatprep.subr.mxu0 0.0
        %5928 = vmatpush1.msra.mxu0 %v5490
        %5929 = vmatprep.subr.mxu0 0.0
        %5930 = vmatpush1.msra.mxu0 %v5491
        %5931 = vmatprep.subr.mxu0 0.0
        %5932 = vmatpush1.msra.mxu0 %v5492
        %5933 = vmatprep.subr.mxu0 0.0
        %5934 = vmatpush1.msra.mxu0 %v5493
        %5935 = vmatprep.subr.mxu0 0.0
        %5936 = vmatpush1.msra.mxu0 %v5494
        %5937 = vmatprep.subr.mxu0 0.0
        %5938 = vmatpush1.msra.mxu0 %v5495
        %5939 = vmatprep.subr.mxu0 0.0
        %5940 = vmatpush1.msra.mxu0 %v5496
        %5941 = vmatprep.subr.mxu0 0.0
        %5942 = vmatpush1.msra.mxu0 %v5497
        %5943 = vmatprep.subr.mxu0 0.0
        %5944 = vmatpush1.msra.mxu0 %v5498
        %5945 = vmatprep.subr.mxu0 0.0
        %5946 = vmatpush1.msra.mxu0 %v5499
        %5947 = vmatprep.subr.mxu0 0.0
        %5948 = vmatpush1.msra.mxu0 %v5500
        %5949 = vmatprep.subr.mxu0 0.0
        %5950 = vmatpush1.msra.mxu0 %v5501
        %5951 = vmatprep.subr.mxu0 0.0
        %5952 = vmatpush1.msra.mxu0 %v5502
        %5953 = vmatprep.subr.mxu0 0.0
        %5954 = vmatpush1.msra.mxu0 %v5503
        %5955 = vmatprep.subr.mxu0 0.0
        %5956 = vmatpush1.msra.mxu0 %v5504
        %5957 = vmatprep.subr.mxu0 0.0
        %5958 = vmatpush1.msra.mxu0 %v5505
        %5959 = vmatprep.subr.mxu0 0.0
        %5960 = vmatpush1.msra.mxu0 %v5506
        %5961 = vmatprep.subr.mxu0 0.0
        %5962 = vmatpush1.msra.mxu0 %v5507
        %5963 = vmatprep.subr.mxu0 0.0
        %5964 = vmatpush1.msra.mxu0 %v5508
        %5965 = vmatprep.subr.mxu0 0.0
        %5966 = vmatpush1.msra.mxu0 %v5509
        %5967 = vmatprep.subr.mxu0 0.0
        %5968 = vmatpush1.msra.mxu0 %v5510
        %5969 = vmatprep.mubr.f32.mxu0 %v5275
        %5970 = vmatmul.mubr.f32.gmra.mrb[0].mxu0 %v5265
        %v5971 = vpop.f32.mrb[0].mxu0
        %v5972 = vadd.f32 %v5902, %v5971
        %v5973 = vpop.f32.mrb[0].mxu0
        %5974 = vdwg.mxu0
        %5975 = vmatprep.subr.mxu0 0.0
        %5976 = vmatpush1.msra.mxu0 %v5511
        %5977 = vmatprep.subr.mxu0 0.0
        %5978 = vmatpush1.msra.mxu0 %v5512
        %5979 = vmatprep.subr.mxu0 0.0
        %5980 = vmatpush1.msra.mxu0 %v5513
        %5981 = vmatprep.subr.mxu0 0.0
        %5982 = vmatpush1.msra.mxu0 %v5514
        %5983 = vmatprep.subr.mxu0 0.0
        %5984 = vmatpush1.msra.mxu0 %v5515
        %5985 = vmatprep.subr.mxu0 0.0
        %5986 = vmatpush1.msra.mxu0 %v5516
        %5987 = vmatprep.subr.mxu0 0.0
        %5988 = vmatpush1.msra.mxu0 %v5517
        %5989 = vmatprep.subr.mxu0 0.0
        %5990 = vmatpush1.msra.mxu0 %v5518
        %5991 = vmatprep.subr.mxu0 0.0
        %5992 = vmatpush1.msra.mxu0 %v5519
        %5993 = vmatprep.subr.mxu0 0.0
        %5994 = vmatpush1.msra.mxu0 %v5520
        %5995 = vmatprep.subr.mxu0 0.0
        %5996 = vmatpush1.msra.mxu0 %v5521
        %5997 = vmatprep.subr.mxu0 0.0
        %5998 = vmatpush1.msra.mxu0 %v5522
        %5999 = vmatprep.subr.mxu0 0.0
        %6000 = vmatpush1.msra.mxu0 %v5523
        %6001 = vmatprep.subr.mxu0 0.0
        %6002 = vmatpush1.msra.mxu0 %v5524
        %6003 = vmatprep.subr.mxu0 0.0
        %6004 = vmatpush1.msra.mxu0 %v5525
        %6005 = vmatprep.subr.mxu0 0.0
        %6006 = vmatpush1.msra.mxu0 %v5526
        %6007 = vmatprep.subr.mxu0 0.0
        %6008 = vmatpush1.msra.mxu0 %v5527
        %6009 = vmatprep.subr.mxu0 0.0
        %6010 = vmatpush1.msra.mxu0 %v5528
        %6011 = vmatprep.subr.mxu0 0.0
        %6012 = vmatpush1.msra.mxu0 %v5529
        %6013 = vmatprep.subr.mxu0 0.0
        %6014 = vmatpush1.msra.mxu0 %v5530
        %6015 = vmatprep.subr.mxu0 0.0
        %6016 = vmatpush1.msra.mxu0 %v5531
        %6017 = vmatprep.subr.mxu0 0.0
        %6018 = vmatpush1.msra.mxu0 %v5532
        %6019 = vmatprep.subr.mxu0 0.0
        %6020 = vmatpush1.msra.mxu0 %v5533
        %6021 = vmatprep.subr.mxu0 0.0
        %6022 = vmatpush1.msra.mxu0 %v5534
        %6023 = vmatprep.subr.mxu0 0.0
        %6024 = vmatpush1.msra.mxu0 %v5535
        %6025 = vmatprep.subr.mxu0 0.0
        %6026 = vmatpush1.msra.mxu0 %v5536
        %6027 = vmatprep.subr.mxu0 0.0
        %6028 = vmatpush1.msra.mxu0 %v5537
        %6029 = vmatprep.subr.mxu0 0.0
        %6030 = vmatpush1.msra.mxu0 %v5538
        %6031 = vmatprep.subr.mxu0 0.0
        %6032 = vmatpush1.msra.mxu0 %v5539
        %6033 = vmatprep.subr.mxu0 0.0
        %6034 = vmatpush1.msra.mxu0 %v5540
        %6035 = vmatprep.subr.mxu0 0.0
        %6036 = vmatpush1.msra.mxu0 %v5541
        %6037 = vmatprep.subr.mxu0 0.0
        %6038 = vmatpush1.msra.mxu0 %v5542
        %6039 = vmatprep.mubr.f32.mxu0 %v5295
        %6040 = vmatmul.mubr.f32.gmra.mrb[0].mxu0 %v5285
        %v6041 = vpop.f32.mrb[0].mxu0
        %v6042 = vadd.f32 %v5972, %v6041
        %v6043 = vpop.f32.mrb[0].mxu0
        %6044 = vdwg.mxu0
        %6045 = vmatprep.subr.mxu0 0.0
        %6046 = vmatpush1.msra.mxu0 %v5543
        %6047 = vmatprep.subr.mxu0 0.0
        %6048 = vmatpush1.msra.mxu0 %v5544
        %6049 = vmatprep.subr.mxu0 0.0
        %6050 = vmatpush1.msra.mxu0 %v5545
        %6051 = vmatprep.subr.mxu0 0.0
        %6052 = vmatpush1.msra.mxu0 %v5546
        %6053 = vmatprep.subr.mxu0 0.0
        %6054 = vmatpush1.msra.mxu0 %v5547
        %6055 = vmatprep.subr.mxu0 0.0
        %6056 = vmatpush1.msra.mxu0 %v5548
        %6057 = vmatprep.subr.mxu0 0.0
        %6058 = vmatpush1.msra.mxu0 %v5549
        %6059 = vmatprep.subr.mxu0 0.0
        %6060 = vmatpush1.msra.mxu0 %v5550
        %6061 = vmatprep.subr.mxu0 0.0
        %6062 = vmatpush1.msra.mxu0 %v5551
        %6063 = vmatprep.subr.mxu0 0.0
        %6064 = vmatpush1.msra.mxu0 %v5552
        %6065 = vmatprep.subr.mxu0 0.0
        %6066 = vmatpush1.msra.mxu0 %v5553
        %6067 = vmatprep.subr.mxu0 0.0
        %6068 = vmatpush1.msra.mxu0 %v5554
        %6069 = vmatprep.subr.mxu0 0.0
        %6070 = vmatpush1.msra.mxu0 %v5555
        %6071 = vmatprep.subr.mxu0 0.0
        %6072 = vmatpush1.msra.mxu0 %v5556
        %6073 = vmatprep.subr.mxu0 0.0
        %6074 = vmatpush1.msra.mxu0 %v5557
        %6075 = vmatprep.subr.mxu0 0.0
        %6076 = vmatpush1.msra.mxu0 %v5558
        %6077 = vmatprep.subr.mxu0 0.0
        %6078 = vmatpush1.msra.mxu0 %v5559
        %6079 = vmatprep.subr.mxu0 0.0
        %6080 = vmatpush1.msra.mxu0 %v5560
        %6081 = vmatprep.subr.mxu0 0.0
        %6082 = vmatpush1.msra.mxu0 %v5561
        %6083 = vmatprep.subr.mxu0 0.0
        %6084 = vmatpush1.msra.mxu0 %v5562
        %6085 = vmatprep.subr.mxu0 0.0
        %6086 = vmatpush1.msra.mxu0 %v5563
        %6087 = vmatprep.subr.mxu0 0.0
        %6088 = vmatpush1.msra.mxu0 %v5564
        %6089 = vmatprep.subr.mxu0 0.0
        %6090 = vmatpush1.msra.mxu0 %v5565
        %6091 = vmatprep.subr.mxu0 0.0
        %6092 = vmatpush1.msra.mxu0 %v5566
        %6093 = vmatprep.subr.mxu0 0.0
        %6094 = vmatpush1.msra.mxu0 %v5567
        %6095 = vmatprep.subr.mxu0 0.0
        %6096 = vmatpush1.msra.mxu0 %v5568
        %6097 = vmatprep.subr.mxu0 0.0
        %6098 = vmatpush1.msra.mxu0 %v5569
        %6099 = vmatprep.subr.mxu0 0.0
        %6100 = vmatpush1.msra.mxu0 %v5570
        %6101 = vmatprep.subr.mxu0 0.0
        %6102 = vmatpush1.msra.mxu0 %v5571
        %6103 = vmatprep.subr.mxu0 0.0
        %6104 = vmatpush1.msra.mxu0 %v5572
        %6105 = vmatprep.subr.mxu0 0.0
        %6106 = vmatpush1.msra.mxu0 %v5573
        %6107 = vmatprep.subr.mxu0 0.0
        %6108 = vmatpush1.msra.mxu0 %v5574
        %6109 = vmatprep.mubr.f32.mxu0 %v5315
        %6110 = vmatmul.mubr.f32.gmra.mrb[0].mxu0 %v5305
        %v6111 = vpop.f32.mrb[0].mxu0
        %v6112 = vadd.f32 %v6042, %v6111
        %v6113 = vpop.f32.mrb[0].mxu0
        %6114 = vdwg.mxu0
        %6115 = vmatprep.subr.mxu0 0.0
        %6116 = vmatpush1.msra.mxu0 %v5575
        %6117 = vmatprep.subr.mxu0 0.0
        %6118 = vmatpush1.msra.mxu0 %v5576
        %6119 = vmatprep.subr.mxu0 0.0
        %6120 = vmatpush1.msra.mxu0 %v5577
        %6121 = vmatprep.subr.mxu0 0.0
        %6122 = vmatpush1.msra.mxu0 %v5578
        %6123 = vmatprep.subr.mxu0 0.0
        %6124 = vmatpush1.msra.mxu0 %v5579
        %6125 = vmatprep.subr.mxu0 0.0
        %6126 = vmatpush1.msra.mxu0 %v5580
        %6127 = vmatprep.subr.mxu0 0.0
        %6128 = vmatpush1.msra.mxu0 %v5581
        %6129 = vmatprep.subr.mxu0 0.0
        %6130 = vmatpush1.msra.mxu0 %v5582
        %6131 = vmatprep.subr.mxu0 0.0
        %6132 = vmatpush1.msra.mxu0 %v5583
        %6133 = vmatprep.subr.mxu0 0.0
        %6134 = vmatpush1.msra.mxu0 %v5584
        %6135 = vmatprep.subr.mxu0 0.0
        %6136 = vmatpush1.msra.mxu0 %v5585
        %6137 = vmatprep.subr.mxu0 0.0
        %6138 = vmatpush1.msra.mxu0 %v5586
        %6139 = vmatprep.subr.mxu0 0.0
        %6140 = vmatpush1.msra.mxu0 %v5587
        %6141 = vmatprep.subr.mxu0 0.0
        %6142 = vmatpush1.msra.mxu0 %v5588
        %6143 = vmatprep.subr.mxu0 0.0
        %6144 = vmatpush1.msra.mxu0 %v5589
        %6145 = vmatprep.subr.mxu0 0.0
        %6146 = vmatpush1.msra.mxu0 %v5590
        %6147 = vmatprep.subr.mxu0 0.0
        %6148 = vmatpush1.msra.mxu0 %v5591
        %6149 = vmatprep.subr.mxu0 0.0
        %6150 = vmatpush1.msra.mxu0 %v5592
        %6151 = vmatprep.subr.mxu0 0.0
        %6152 = vmatpush1.msra.mxu0 %v5593
        %6153 = vmatprep.subr.mxu0 0.0
        %6154 = vmatpush1.msra.mxu0 %v5594
        %6155 = vmatprep.subr.mxu0 0.0
        %6156 = vmatpush1.msra.mxu0 %v5595
        %6157 = vmatprep.subr.mxu0 0.0
        %6158 = vmatpush1.msra.mxu0 %v5596
        %6159 = vmatprep.subr.mxu0 0.0
        %6160 = vmatpush1.msra.mxu0 %v5597
        %6161 = vmatprep.subr.mxu0 0.0
        %6162 = vmatpush1.msra.mxu0 %v5598
        %6163 = vmatprep.subr.mxu0 0.0
        %6164 = vmatpush1.msra.mxu0 %v5599
        %6165 = vmatprep.subr.mxu0 0.0
        %6166 = vmatpush1.msra.mxu0 %v5600
        %6167 = vmatprep.subr.mxu0 0.0
        %6168 = vmatpush1.msra.mxu0 %v5601
        %6169 = vmatprep.subr.mxu0 0.0
        %6170 = vmatpush1.msra.mxu0 %v5602
        %6171 = vmatprep.subr.mxu0 0.0
        %6172 = vmatpush1.msra.mxu0 %v5603
        %6173 = vmatprep.subr.mxu0 0.0
        %6174 = vmatpush1.msra.mxu0 %v5604
        %6175 = vmatprep.subr.mxu0 0.0
        %6176 = vmatpush1.msra.mxu0 %v5605
        %6177 = vmatprep.subr.mxu0 0.0
        %6178 = vmatpush1.msra.mxu0 %v5606
        %6179 = vmatprep.mubr.f32.mxu0 %v5335
        %6180 = vmatmul.mubr.f32.gmra.mrb[0].mxu0 %v5325
        %v6181 = vpop.f32.mrb[0].mxu0
        %v6182 = vadd.f32 %v6112, %v6181
        %v6183 = vpop.f32.mrb[0].mxu0
        %6184 = vdwg.mxu0
        %6185 = vmatprep.subr.mxu0 0.0
        %6186 = vmatpush1.msra.mxu0 %v5607
        %6187 = vmatprep.subr.mxu0 0.0
        %6188 = vmatpush1.msra.mxu0 %v5608
        %6189 = vmatprep.subr.mxu0 0.0
        %6190 = vmatpush1.msra.mxu0 %v5609
        %6191 = vmatprep.subr.mxu0 0.0
        %6192 = vmatpush1.msra.mxu0 %v5610
        %6193 = vmatprep.subr.mxu0 0.0
        %6194 = vmatpush1.msra.mxu0 %v5611
        %6195 = vmatprep.subr.mxu0 0.0
        %6196 = vmatpush1.msra.mxu0 %v5612
        %6197 = vmatprep.subr.mxu0 0.0
        %6198 = vmatpush1.msra.mxu0 %v5613
        %6199 = vmatprep.subr.mxu0 0.0
        %6200 = vmatpush1.msra.mxu0 %v5614
        %6201 = vmatprep.subr.mxu0 0.0
        %6202 = vmatpush1.msra.mxu0 %v5615
        %6203 = vmatprep.subr.mxu0 0.0
        %6204 = vmatpush1.msra.mxu0 %v5616
        %6205 = vmatprep.subr.mxu0 0.0
        %6206 = vmatpush1.msra.mxu0 %v5617
        %6207 = vmatprep.subr.mxu0 0.0
        %6208 = vmatpush1.msra.mxu0 %v5618
        %6209 = vmatprep.subr.mxu0 0.0
        %6210 = vmatpush1.msra.mxu0 %v5619
        %6211 = vmatprep.subr.mxu0 0.0
        %6212 = vmatpush1.msra.mxu0 %v5620
        %6213 = vmatprep.subr.mxu0 0.0
        %6214 = vmatpush1.msra.mxu0 0.0
        %6215 = vmatprep.subr.mxu0 0.0
        %6216 = vmatpush1.msra.mxu0 0.0
        %6217 = vmatprep.subr.mxu0 0.0
        %6218 = vmatpush1.msra.mxu0 0.0
        %6219 = vmatprep.subr.mxu0 0.0
        %6220 = vmatpush1.msra.mxu0 0.0
        %6221 = vmatprep.subr.mxu0 0.0
        %6222 = vmatpush1.msra.mxu0 0.0
        %6223 = vmatprep.subr.mxu0 0.0
        %6224 = vmatpush1.msra.mxu0 0.0
        %6225 = vmatprep.subr.mxu0 0.0
        %6226 = vmatpush1.msra.mxu0 0.0
        %6227 = vmatprep.subr.mxu0 0.0
        %6228 = vmatpush1.msra.mxu0 0.0
        %6229 = vmatprep.subr.mxu0 0.0
        %6230 = vmatpush1.msra.mxu0 0.0
        %6231 = vmatprep.subr.mxu0 0.0
        %6232 = vmatpush1.msra.mxu0 0.0
        %6233 = vmatprep.subr.mxu0 0.0
        %6234 = vmatpush1.msra.mxu0 0.0
        %6235 = vmatprep.subr.mxu0 0.0
        %6236 = vmatpush1.msra.mxu0 0.0
        %6237 = vmatprep.subr.mxu0 0.0
        %6238 = vmatpush1.msra.mxu0 0.0
        %6239 = vmatprep.subr.mxu0 0.0
        %6240 = vmatpush1.msra.mxu0 0.0
        %6241 = vmatprep.subr.mxu0 0.0
        %6242 = vmatpush1.msra.mxu0 0.0
        %6243 = vmatprep.subr.mxu0 0.0
        %6244 = vmatpush1.msra.mxu0 0.0
        %6245 = vmatprep.subr.mxu0 0.0
        %6246 = vmatpush1.msra.mxu0 0.0
        %6247 = vmatprep.subr.mxu0 0.0
        %6248 = vmatpush1.msra.mxu0 0.0
        %6249 = vmatprep.mubr.f32.mxu0 0.0
        %6250 = vmatmul.mubr.f32.gmra.mrb[0].mxu0 %v5623
        %v6251 = vpop.f32.mrb[0].mxu0
        %v6252 = vadd.f32 %v6182, %v6251
        %v6253 = vpop.f32.mrb[0].mxu0
        %6254 = vdwg.mxu0
        %v6255 = vld [vmem:[%s27] sm:$0x1]
        %v6256 = vsub.f32 %v6252, %v6255
        %v6257 = vld [vmem:[%s25] sm:$0xff]
        %v6258 = vld [vmem:[%s25 + $0x8] sm:$0xff]
        %v6259 = vld [vmem:[%s25 + $0x10] sm:$0xff]
        %v6260 = vld [vmem:[%s25 + $0x18] sm:$0xff]
        %v6261 = vld [vmem:[%s25 + $0x20] sm:$0xff]
        %v6262 = vld [vmem:[%s25 + $0x28] sm:$0xff]
        %v6263 = vld [vmem:[%s25 + $0x30] sm:$0xff]
        %v6264 = vld [vmem:[%s25 + $0x38] sm:$0xff]
        %v6265 = vld [vmem:[%s25 + $0x40] sm:$0xff]
        %v6266 = vld [vmem:[%s25 + $0x48] sm:$0xff]
        %v6267 = vld [vmem:[%s25 + $0x50] sm:$0xff]
        %v6268 = vld [vmem:[%s25 + $0x58] sm:$0xff]
        %v6269 = vld [vmem:[%s25 + $0x60] sm:$0xff]
        %v6270 = vld [vmem:[%s25 + $0x68] sm:$0xff]
        %v6271 = vld [vmem:[%s25 + $0x70] sm:$0xff]
        %v6272 = vld [vmem:[%s25 + $0x78] sm:$0xff]
        %v6273 = vld [vmem:[%s25 + $0x80] sm:$0xff]
        %v6274 = vld [vmem:[%s25 + $0x88] sm:$0xff]
        %v6275 = vld [vmem:[%s25 + $0x90] sm:$0xff]
        %v6276 = vld [vmem:[%s25 + $0x98] sm:$0xff]
        %v6277 = vld [vmem:[%s25 + $0xa0] sm:$0xff]
        %v6278 = vld [vmem:[%s25 + $0xa8] sm:$0xff]
        %v6279 = vld [vmem:[%s25 + $0xb0] sm:$0xff]
        %v6280 = vld [vmem:[%s25 + $0xb8] sm:$0xff]
        %v6281 = vld [vmem:[%s25 + $0xc0] sm:$0xff]
        %v6282 = vld [vmem:[%s25 + $0xc8] sm:$0xff]
        %v6283 = vld [vmem:[%s25 + $0xd0] sm:$0xff]
        %vm6284 = vcmask 588800
        %v6286 = vsel %vm6284, %v6256, 0
        %6288 = vmatprep.subr.mxu0 %v6258
        %6289 = vmatpush1.msra.mxu0 %v6257
        %6290 = vmatprep.subr.mxu0 %v6261
        %6291 = vmatpush1.msra.mxu0 %v6260
        %6292 = vmatprep.subr.mxu0 %v6264
        %6293 = vmatpush1.msra.mxu0 %v6263
        %6294 = vmatprep.subr.mxu0 %v6267
        %6295 = vmatpush1.msra.mxu0 %v6266
        %6296 = vmatprep.subr.mxu0 %v6270
        %6297 = vmatpush1.msra.mxu0 %v6269
        %6298 = vmatprep.subr.mxu0 %v6273
        %6299 = vmatpush1.msra.mxu0 %v6272
        %6300 = vmatprep.subr.mxu0 %v6276
        %6301 = vmatpush1.msra.mxu0 %v6275
        %6302 = vmatprep.subr.mxu0 %v6279
        %6303 = vmatpush1.msra.mxu0 %v6278
        %6304 = vmatprep.subr.mxu0 %v6282
        %6305 = vmatpush1.msra.mxu0 %v6281
        %6306 = vmatprep.subr.mxu0 0.0
        %6307 = vmatpush1.msra.mxu0 0.0
        %6308 = vmatprep.subr.mxu0 0.0
        %6309 = vmatpush1.msra.mxu0 0.0
        %6310 = vmatprep.subr.mxu0 0.0
        %6311 = vmatpush1.msra.mxu0 0.0
        %6312 = vmatprep.subr.mxu0 0.0
        %6313 = vmatpush1.msra.mxu0 0.0
        %6314 = vmatprep.subr.mxu0 0.0
        %6315 = vmatpush1.msra.mxu0 0.0
        %6316 = vmatprep.subr.mxu0 0.0
        %6317 = vmatpush1.msra.mxu0 0.0
        %6318 = vmatprep.subr.mxu0 0.0
        %6319 = vmatpush1.msra.mxu0 0.0
        %6320 = vmatprep.subr.mxu0 0.0
        %6321 = vmatpush1.msra.mxu0 0.0
        %6322 = vmatprep.subr.mxu0 0.0
        %6323 = vmatpush1.msra.mxu0 0.0
        %6324 = vmatprep.subr.mxu0 0.0
        %6325 = vmatpush1.msra.mxu0 0.0
        %6326 = vmatprep.subr.mxu0 0.0
        %6327 = vmatpush1.msra.mxu0 0.0
        %6328 = vmatprep.subr.mxu0 0.0
        %6329 = vmatpush1.msra.mxu0 0.0
        %6330 = vmatprep.subr.mxu0 0.0
        %6331 = vmatpush1.msra.mxu0 0.0
        %6332 = vmatprep.subr.mxu0 0.0
        %6333 = vmatpush1.msra.mxu0 0.0
        %6334 = vmatprep.subr.mxu0 0.0
        %6335 = vmatpush1.msra.mxu0 0.0
        %6336 = vmatprep.subr.mxu0 0.0
        %6337 = vmatpush1.msra.mxu0 0.0
        %6338 = vmatprep.subr.mxu0 0.0
        %6339 = vmatpush1.msra.mxu0 0.0
        %6340 = vmatprep.subr.mxu0 0.0
        %6341 = vmatpush1.msra.mxu0 0.0
        %6342 = vmatprep.subr.mxu0 0.0
        %6343 = vmatpush1.msra.mxu0 0.0
        %6344 = vmatprep.subr.mxu0 0.0
        %6345 = vmatpush1.msra.mxu0 0.0
        %6346 = vmatprep.subr.mxu0 0.0
        %6347 = vmatpush1.msra.mxu0 0.0
        %6348 = vmatprep.subr.mxu0 0.0
        %6349 = vmatpush1.msra.mxu0 0.0
        %6350 = vmatprep.subr.mxu0 0.0
        %6351 = vmatpush1.msra.mxu0 0.0
        %6352 = vmatprep.mubr.f32.mxu0 0.0
        %6353 = vmatmul.mubr.f32.gmra.mrb[0].mxu0 %v6286
        %v6354 = vpop.f32.mrb[0].mxu0
        %v6355 = vadd.f32 0.0, %v6354
        %v6356 = vpop.f32.mrb[0].mxu0
        %v6357 = vadd.f32 0.0, %v6356
        %6358 = vdwg.mxu0
        %6359 = vmatprep.subr.mxu0 0.0
        %6360 = vmatpush1.msra.mxu0 %v6259
        %6361 = vmatprep.subr.mxu0 0.0
        %6362 = vmatpush1.msra.mxu0 %v6262
        %6363 = vmatprep.subr.mxu0 0.0
        %6364 = vmatpush1.msra.mxu0 %v6265
        %6365 = vmatprep.subr.mxu0 0.0
        %6366 = vmatpush1.msra.mxu0 %v6268
        %6367 = vmatprep.subr.mxu0 0.0
        %6368 = vmatpush1.msra.mxu0 %v6271
        %6369 = vmatprep.subr.mxu0 0.0
        %6370 = vmatpush1.msra.mxu0 %v6274
        %6371 = vmatprep.subr.mxu0 0.0
        %6372 = vmatpush1.msra.mxu0 %v6277
        %6373 = vmatprep.subr.mxu0 0.0
        %6374 = vmatpush1.msra.mxu0 %v6280
        %6375 = vmatprep.subr.mxu0 0.0
        %6376 = vmatpush1.msra.mxu0 %v6283
        %6377 = vmatprep.subr.mxu0 0.0
        %6378 = vmatpush1.msra.mxu0 0.0
        %6379 = vmatprep.subr.mxu0 0.0
        %6380 = vmatpush1.msra.mxu0 0.0
        %6381 = vmatprep.subr.mxu0 0.0
        %6382 = vmatpush1.msra.mxu0 0.0
        %6383 = vmatprep.subr.mxu0 0.0
        %6384 = vmatpush1.msra.mxu0 0.0
        %6385 = vmatprep.subr.mxu0 0.0
        %6386 = vmatpush1.msra.mxu0 0.0
        %6387 = vmatprep.subr.mxu0 0.0
        %6388 = vmatpush1.msra.mxu0 0.0
        %6389 = vmatprep.subr.mxu0 0.0
        %6390 = vmatpush1.msra.mxu0 0.0
        %6391 = vmatprep.subr.mxu0 0.0
        %6392 = vmatpush1.msra.mxu0 0.0
        %6393 = vmatprep.subr.mxu0 0.0
        %6394 = vmatpush1.msra.mxu0 0.0
        %6395 = vmatprep.subr.mxu0 0.0
        %6396 = vmatpush1.msra.mxu0 0.0
        %6397 = vmatprep.subr.mxu0 0.0
        %6398 = vmatpush1.msra.mxu0 0.0
        %6399 = vmatprep.subr.mxu0 0.0
        %6400 = vmatpush1.msra.mxu0 0.0
        %6401 = vmatprep.subr.mxu0 0.0
        %6402 = vmatpush1.msra.mxu0 0.0
        %6403 = vmatprep.subr.mxu0 0.0
        %6404 = vmatpush1.msra.mxu0 0.0
        %6405 = vmatprep.subr.mxu0 0.0
        %6406 = vmatpush1.msra.mxu0 0.0
        %6407 = vmatprep.subr.mxu0 0.0
        %6408 = vmatpush1.msra.mxu0 0.0
        %6409 = vmatprep.subr.mxu0 0.0
        %6410 = vmatpush1.msra.mxu0 0.0
        %6411 = vmatprep.subr.mxu0 0.0
        %6412 = vmatpush1.msra.mxu0 0.0
        %6413 = vmatprep.subr.mxu0 0.0
        %6414 = vmatpush1.msra.mxu0 0.0
        %6415 = vmatprep.subr.mxu0 0.0
        %6416 = vmatpush1.msra.mxu0 0.0
        %6417 = vmatprep.subr.mxu0 0.0
        %6418 = vmatpush1.msra.mxu0 0.0
        %6419 = vmatprep.subr.mxu0 0.0
        %6420 = vmatpush1.msra.mxu0 0.0
        %6421 = vmatprep.subr.mxu0 0.0
        %6422 = vmatpush1.msra.mxu0 0.0
        %6423 = vmatprep.mubr.f32.mxu0 0.0
        %6424 = vmatmul.mubr.f32.gmra.mrb[0].mxu0 %v6286
        %v6425 = vpop.f32.mrb[0].mxu0
        %v6426 = vadd.f32 0.0, %v6425
        %v6427 = vpop.f32.mrb[0].mxu0
        %6428 = vdwg.mxu0
        %vm6429 = vcmp.gt.f32.partialorder %v6355, 1e-09
        %vm6430 = vcmp.gt.f32.partialorder %v6357, 1e-09
        %vm6431 = vcmp.gt.f32.partialorder %v6426, 1e-09
        %v6432 = vsel %vm6429, %v6355, 1.0
        %v6433 = vsel %vm6430, %v6357, 1.0
        %v6434 = vsel %vm6431, %v6426, 1.0
        %v6435 = vld [vmem:[%s26] sm:$0x7]
        %v6439 = vcombine.low %v6432, %v6433
        %v6441 = vunpack.c.l.s4 1966171168
        %v6442 = vunpack.c.0.s8 %v6441
        %v6443 = vlaneseq
        %v6444 = vshrl.u32 %v6443, 7
        %v6445 = vsub.s32 %v6442, %v6444
        %v6446 = vrot.slane %v6439, %v6445
        %v6448 = vunpack.c.l.s4 1966171168
        %v6449 = vunpack.c.0.s8 %v6448
        %v6450 = vlaneseq
        %v6451 = vshrl.u32 %v6450, 7
        %v6452 = vsub.s32 %v6449, %v6451
        %v6453 = vrot.slane %v6434, %v6452
        %v6454 = vcombine.low %v6446, %v6453
        %v6456 = vunpack.c.l.s4 1966171168
        %v6457 = vunpack.c.0.s8 %v6456
        %v6458 = vlaneseq
        %v6459 = vshrl.u32 %v6458, 7
        %v6460 = vsub.s32 %v6457, %v6459
        %v6461 = vrot.slane %v6454, %v6460
        %v6463 = vrcp.pop %v6461
        %v6464 = vmul.f32 %v6435, %v6463
        %v6466 = vlaneseq
        %v6467 = vshrl.u32 %v6466, 7
        %v6468 = vsub.s32 0, %v6467
        %v6469 = vrot.slane %v6464, %v6468
        %v6470 = vlaneseq
        %v6471 = vshrl.u32 %v6470, 7
        %v6472 = vsub.s32 1, %v6471
        %v6473 = vrot.slane %v6464, %v6472
        %v6474 = vlaneseq
        %v6475 = vshrl.u32 %v6474, 7
        %v6476 = vsub.s32 2, %v6475
        %v6477 = vrot.slane %v6464, %v6476
        %v6481 = vsel %vm6429, %v6469, 1e+30
        %v6482 = vsel %vm6430, %v6473, 1e+30
        %v6483 = vsel %vm6431, %v6477, 1e+30
        %vm6484 = vcmask 1040384
        %v6485 = vsel %vm6484, %v6481, inf
        %v6486 = vsel %vm6484, %v6482, inf
        %v6487 = vsel %vm6484, %v6483, inf
        %v6488 = vmin.f32 %v6485, %v6486
        %v6489 = vmin.f32 %v6488, %v6487
        %6490 = vmin.xlane.f32.xlu0 %v6489
        %v6491 = vpop.xlane.xlu0 %6490
        %v6492 = vmin.f32 %v6491, 1.0
        %v6493 = vmul.f32 %v6492, %v6256
        %v6494 = vadd.f32 %v6255, %v6493
        %vm6495 = vcmask 581632
        %6496 = vst.msk [vmem:[%s852] sm:$0x1] %vm6495, %v6494
        %s6497 = sand.u32 %s648, 1
        %s6498 = scalar_lea.sflag [#allocation3], %s6497
        %s6499 = sand.u32 %s648, 1
        %s6500 = scalar_lea.vmem [#allocation2], %s6499
        // Predicated region
        $region133: #{net_forward.1} parent=131 // pred_check
          %p6501 = pneg %p658
        $region134: #{net_forward.1} parent=131 // pred_check_branch
          %6503 = sbr.rel (%p6501) target = $region136
        $region135: #{net_forward.1} parent=131 // pred_region
          %s6505 = ssub.s32 16, 16
          %6506 = vsyncadd %s6498, %s6505
          %s6507 = smul.addr %s42, 16
          %s6508 = scalar_lea.hbm %s28, %s6507
          %s6510 = sshll.u32 %s6500, 4
          %s6511 = int_to_ptr.vmem [resolvable:$true] %s6510
          %6513 = dma.vmem_to_hbm [thread:$0]  %s6511, 16, %s6508, %s6498
        $region136: #{net_forward.1} parent=131 // pred_fallthru
          _
      $region132: #{net_forward.1} parent=5 // pred_fallthru
        _
      %p6514 = scmp.le.s32.totalorder 2, %s37
      // Predicated region
      $region137: #{net_forward.1} parent=5 // pred_check
        %p6515 = pneg %p6514
      $region138: #{net_forward.1} parent=5 // pred_check_branch
        %6517 = sbr.rel (%p6515) target = $region140
      $region139: #{net_forward.1} parent=5 // pred_region
        %s6518 = ssub.s32 %s37, 2
        // Predicated region
        $region141: #{net_forward.1} parent=139 // pred_check
          %p6519 = pneg %p664
        $region142: #{net_forward.1} parent=139 // pred_check_branch
          %6521 = sbr.rel (%p6519) target = $region144
        $region143: #{net_forward.1} parent=139 // pred_region
          %s6522 = sand.u32 %s649, 1
          %s6523 = scalar_lea.sflag [#allocation3], %s6522
          %s6524 = sand.u32 %s649, 1
          %s6525 = scalar_lea.vmem [#allocation2], %s6524
          %6526 = dma.done %s6523, 16
        $region144: #{net_forward.1} parent=139 // pred_fallthru
          _
      $region140: #{net_forward.1} parent=5 // pred_fallthru
        _
    $region6: #{net_forward.1} parent=1 // loop_footer
      %s41 = sadd.s32 1, %s37
    $region7: #{net_forward.1} parent=1 // loop_footer_branch
      %36 = sbr.rel target = $region3
    $region8: #{net_forward.1} parent=1 // loop_exit
      _
    %6527 = vsyncpa [#allocation3], 1
    %s6528 = scalar_lea.sflag [#allocation3], 1
    %6529 = vsyncpa %s6528, 1

</llo_original>
